<compile_context>
chip_gen: v5e
topology: v5e:2x2
jax: 0.10.0
libtpu: 0.0.40
codegen_flags: <defaults>
</compile_context>

<pallas_src>
import jax
import jax.numpy as jnp
from jax.experimental import pallas as pl
from jax.experimental.pallas import tpu as pltpu


def encoder_kernel(x_ref, w1_ref, b1_ref, w2_ref, b2_ref, wfc_ref, bfc_ref, o_ref):
    # x_ref : (Gt, L, 128) f32, lanes = [b8(8) major, c1(16) minor], 8 batch rows/lane group
    # w1_ref: (3, 128) f32 (conv1 taps, tiled x8)     b1_ref: (1, 128) f32
    # w2_ref: (384, 256) block-diagonal conv2 weight  b2_ref: (1, 256) f32
    # wfc_ref: (L2*C2, F) l-major FC weight           bfc_ref: (1, F) f32
    # o_ref : (Gt*8, F) f32
    x = x_ref[...]                                   # (Gt, L, 128)
    Gt, L, NL = x.shape
    G = o_ref.shape[0] // Gt                         # 8 batch rows packed into lanes
    C2 = w2_ref.shape[1] // G                        # 32
    F = o_ref.shape[1]                               # 128
    L1, L2 = L // 2, L // 4
    mxu_dtype = w2_ref.dtype                         # bf16 (default) or f32

    # ---- conv1 (k=3, pad=1, Cin=1) + ReLU : full-lane VPU broadcast MAC ----
    w1 = w1_ref[...]                                 # (3, 128)
    zx = jnp.zeros((Gt, 1, NL), x.dtype)
    x_m1 = jnp.concatenate([zx, x[:, :L - 1, :]], axis=1)   # x[l-1] (zero padded)
    x_p1 = jnp.concatenate([x[:, 1:, :], zx], axis=1)       # x[l+1] (zero padded)
    h1 = x_m1 * w1[0] + x * w1[1] + x_p1 * w1[2] + b1_ref[...]
    h1 = jnp.maximum(h1, 0.0)                        # (Gt, L, 128)

    # ---- MaxPool1d(2,2) on the VPU ----
    h1r = h1.reshape(Gt, L1, 2, NL)
    p1 = jnp.maximum(h1r[:, :, 0, :], h1r[:, :, 1, :])       # (Gt, L1, 128)

    # ---- conv2 (k=3, pad=1) + ReLU : ONE block-diagonal K=384, N=256 MXU matmul ----
    zp = jnp.zeros((Gt, 1, NL), p1.dtype)
    p_m1 = jnp.concatenate([zp, p1[:, :L1 - 1, :]], axis=1)
    p_p1 = jnp.concatenate([p1[:, 1:, :], zp], axis=1)
    cat = jnp.concatenate([p_m1, p1, p_p1], axis=-1)          # (Gt, L1, 384), lanes [k, b8, c1]
    cat2d = cat.reshape(Gt * L1, 3 * NL).astype(mxu_dtype)
    h2 = jnp.dot(cat2d, w2_ref[...],
                 preferred_element_type=jnp.float32) + b2_ref[...]
    h2 = jnp.maximum(h2, 0.0).reshape(Gt, L1, G * C2)         # (Gt, L1, 256), lanes [b8, c2]

    # ---- MaxPool1d(2,2) on the VPU ----
    h2r = h2.reshape(Gt, L2, 2, G * C2)
    p2 = jnp.maximum(h2r[:, :, 0, :], h2r[:, :, 1, :])        # (Gt, L2, 256)

    # ---- fused FC (+ReLU), wfc VMEM resident; per lane-packed batch row b8 ----
    wfc = wfc_ref[...]
    bfc = bfc_ref[...]
    outs = []
    for b8 in range(G):                                       # static 8-way unroll
        featb = p2[:, :, b8 * C2:(b8 + 1) * C2].reshape(Gt, L2 * C2)  # (Gt, 1600) l-major
        ob = jnp.dot(featb.astype(mxu_dtype), wfc,
                     preferred_element_type=jnp.float32) + bfc        # (Gt, F)
        outs.append(jnp.maximum(ob, 0.0))
    # (Gt, 8, F) -> (Gt*8, F) is layout-preserving (8 sublanes); lane-dense store.
    o_ref[...] = jnp.stack(outs, axis=1).reshape(Gt * G, F)


def frequency_encoder(x, w1, b1, w2, b2, wfc, bfc, *, block_b=128, mxu_bf16=True):
    """x: (B, 1, L) NCW (torch convention); weights in torch layouts:
       w1 (16,1,3), b1 (16,), w2 (32,16,3), b2 (32,), wfc (128, 32*(L//4)), bfc (128,)."""
    B, _, L = x.shape
    L1, L2 = L // 2, L // 4
    C1, C2, F = w1.shape[0], w2.shape[0], wfc.shape[0]
    G = 8                                   # batch rows folded into lanes (8*C1 = 128)
    assert G * C1 == 128, "conv1 lane packing assumes 16 output channels"

    G_total = pl.cdiv(B, G)                 # number of 8-row lane groups
    Gt = max(1, min(block_b // G, G_total)) # lane groups per grid step
    n_blocks = pl.cdiv(G_total, Gt)         # keep >=2 on v7x (2 TCs) when possible
    G_pad = n_blocks * Gt
    B_pad = G_pad * G
    Bt = Gt * G

    mxu_dtype = jnp.bfloat16 if mxu_bf16 else jnp.float32
    mxu_bytes = 2 if mxu_bf16 else 4

    # --- wrapper-side layout glue (plain XLA, tiny, done once per call) ---
    xf = x[:, 0, :].astype(jnp.float32)                               # (B, L)
    if B_pad != B:                                                    # pad only if needed
        xf = jnp.pad(xf, ((0, B_pad - B), (0, 0)))
    # pack 8 batch rows onto lanes, pre-broadcast over the 16 conv1 channels:
    # x_rep[g, l, b8*16 + c] = x[g*8 + b8, l]   -> dense 128-lane DMA blocks
    x_rep = jnp.repeat(jnp.transpose(xf.reshape(G_pad, G, L), (0, 2, 1)), C1, axis=-1)

    w1t = jnp.tile(jnp.transpose(w1[:, 0, :], (1, 0)), (1, G)).astype(jnp.float32)  # (3, 128)
    b1t = jnp.tile(b1.reshape(1, C1), (1, G)).astype(jnp.float32)                   # (1, 128)
    # block-diagonal conv2 weight: W[k*128 + b8*16 + c1, b8*32 + c2] = w2[c2, c1, k]
    w2t = jnp.transpose(w2, (2, 1, 0)).astype(jnp.float32)                          # (3, 16, 32)
    w2big = jnp.einsum('ab,kic->kaibc', jnp.eye(G, dtype=jnp.float32), w2t)
    w2big = w2big.reshape(3 * G * C1, G * C2).astype(mxu_dtype)                      # (384, 256)
    b2t = jnp.tile(b2.reshape(1, C2), (1, G)).astype(jnp.float32)                    # (1, 256)
    # torch .view flattens channel-major (idx = c*L2 + l); the kernel flattens
    # l-major (idx = l*C2 + c), so permute wfc rows once here.
    wfcp = jnp.transpose(wfc.reshape(F, C2, L2), (2, 1, 0)).reshape(L2 * C2, F)
    wfcp = wfcp.astype(mxu_dtype)
    bfcp = bfc.reshape(1, F).astype(jnp.float32)

    flops = 2 * B_pad * (L * 3 * C1 + L1 * 3 * C1 * C2 + L2 * C2 * F)
    bytes_accessed = (G_pad * L * 128 * 4 + 3 * 128 * 4 + 128 * 4
                      + 384 * 256 * mxu_bytes + 256 * 4
                      + L2 * C2 * F * mxu_bytes + F * 4 + B_pad * F * 4)
    # generous per-tile VMEM budget; ~(8 + 2*Gt) MB covers intermediates + resident weights,
    # capped under v7x's 64 MiB physical / v5e-v6e 128 MiB.
    vmem_limit = int(min(100 * 2**20, max(32 * 2**20, (8 + 2 * Gt) * 2**20)))

    out = pl.pallas_call(
        encoder_kernel,
        grid=(n_blocks,),
        in_specs=[
            pl.BlockSpec((Gt, L, G * C1), lambda i: (i, 0, 0)),       # lane-packed x tile
            pl.BlockSpec((3, G * C1), lambda i: (0, 0)),              # conv1 taps (tiled)
            pl.BlockSpec((1, G * C1), lambda i: (0, 0)),              # conv1 bias (tiled)
            pl.BlockSpec((3 * G * C1, G * C2), lambda i: (0, 0)),     # conv2 block-diag weight
            pl.BlockSpec((1, G * C2), lambda i: (0, 0)),              # conv2 bias (tiled)
            pl.BlockSpec((L2 * C2, F), lambda i: (0, 0)),             # fc weight (VMEM resident)
            pl.BlockSpec((1, F), lambda i: (0, 0)),                   # fc bias
        ],
        out_specs=pl.BlockSpec((Bt, F), lambda i: (i, 0)),            # lane-dense output
        out_shape=jax.ShapeDtypeStruct((B_pad, F), jnp.float32),
        compiler_params=pltpu.CompilerParams(
            dimension_semantics=("parallel",),
            vmem_limit_bytes=vmem_limit),
        cost_estimate=pl.CostEstimate(flops=flops, transcendentals=0,
                                      bytes_accessed=bytes_accessed),
    )(x_rep, w1t, b1t, w2big, b2t, wfcp, bfcp)
    return out[:B]


def ref_forward(x, w1, b1, w2, b2, wfc, bfc):
    """Pure-JAX reference matching the PyTorch forward exactly."""
    dn = ("NCH", "OIH", "NCH")
    h = jax.lax.conv_general_dilated(x, w1, (1,), ((1, 1),), dimension_numbers=dn)
    h = jax.nn.relu(h + b1[None, :, None])
    h = jax.lax.reduce_window(h, -jnp.inf, jax.lax.max, (1, 1, 2), (1, 1, 2), "VALID")
    h = jax.lax.conv_general_dilated(h, w2, (1,), ((1, 1),), dimension_numbers=dn)
    h = jax.nn.relu(h + b2[None, :, None])
    h = jax.lax.reduce_window(h, -jnp.inf, jax.lax.max, (1, 1, 2), (1, 1, 2), "VALID")
    h = h.reshape(h.shape[0], -1)
    return jax.nn.relu(h @ wfc.T + bfc)


if __name__ == "__main__":
    key = jax.random.PRNGKey(0)
    ks = jax.random.split(key, 8)
    B, L = 2, 200  # L=200 implied by fc1 = Linear(32*50, 128) after two /2 pools

    x = jax.random.normal(ks[0], (B, 1, L), jnp.float32)
    w1 = jax.random.normal(ks[1], (16, 1, 3), jnp.float32) * 0.30
    b1 = jax.random.normal(ks[2], (16,), jnp.float32) * 0.10
    w2 = jax.random.normal(ks[3], (32, 16, 3), jnp.float32) * 0.10
    b2 = jax.random.normal(ks[4], (32,), jnp.float32) * 0.10
    wfc = jax.random.normal(ks[5], (128, 32 * 50), jnp.float32) * 0.02
    bfc = jax.random.normal(ks[6], (128,), jnp.float32) * 0.10

    ref = ref_forward(x, w1, b1, w2, b2, wfc, bfc)

    # f32-MXU path: tight numerical check of the packed layout / block-diag conv2.
    out32 = jax.block_until_ready(
        frequency_encoder(x, w1, b1, w2, b2, wfc, bfc, mxu_bf16=False))
    assert out32.shape == (B, 128) and out32.dtype == jnp.float32
    err32 = float(jnp.max(jnp.abs(out32 - ref)))
    if err32 > 2e-3:
        raise SystemExit(f"f32 path mismatch vs reference: max abs err {err32:e}")

    # default bf16-MXU path (f32 accumulation): looser tolerance for the K=1600 FC.
    out = jax.block_until_ready(frequency_encoder(x, w1, b1, w2, b2, wfc, bfc))
    assert out.shape == (B, 128) and out.dtype == jnp.float32
    err = float(jnp.max(jnp.abs(out - ref)))
    if err > 5e-2:
        raise SystemExit(f"bf16 path mismatch vs reference: max abs err {err:e}")

    # multi-block + batch-padding path (2 grid steps, B not a multiple of the tile).
    B2 = 19
    x2 = jax.random.normal(ks[7], (B2, 1, L), jnp.float32)
    ref2 = ref_forward(x2, w1, b1, w2, b2, wfc, bfc)
    out2 = jax.block_until_ready(
        frequency_encoder(x2, w1, b1, w2, b2, wfc, bfc, block_b=16))
    err2 = float(jnp.max(jnp.abs(out2 - ref2)))
    if out2.shape != (B2, 128) or err2 > 5e-2:
        raise SystemExit(f"multi-block mismatch vs reference: max abs err {err2:e}")

    print("KERNEL_OK")
</pallas_src>

<mosaic_0001>
module attributes {stable_mosaic.version = 11 : i64} {
  func.func @encoder_kernel(%arg0: i32, %arg1: memref<1x200x128xf32, #tpu.memory_space<vmem>>, %arg2: memref<3x128xf32, #tpu.memory_space<vmem>>, %arg3: memref<1x128xf32, #tpu.memory_space<vmem>>, %arg4: memref<384x256xf32, #tpu.memory_space<vmem>>, %arg5: memref<1x256xf32, #tpu.memory_space<vmem>>, %arg6: memref<1600x128xf32, #tpu.memory_space<vmem>>, %arg7: memref<1x128xf32, #tpu.memory_space<vmem>>, %arg8: memref<8x128xf32, #tpu.memory_space<vmem>>) attributes {dimension_semantics = [#tpu.dimension_semantics<parallel>], iteration_bounds = array<i64: 1>, scalar_prefetch = 0 : i64, scratch_operands = 0 : i64, tpu.core_type = #tpu.core_type<tc>, window_params = [{transform_indices = @transform_0, window_bounds = array<i64: 1, 200, 128>}, {pipeline_mode = #tpu.pipeline_mode<synchronous>, transform_indices = @transform_1, window_bounds = array<i64: 3, 128>}, {pipeline_mode = #tpu.pipeline_mode<synchronous>, transform_indices = @transform_2, window_bounds = array<i64: 1, 128>}, {pipeline_mode = #tpu.pipeline_mode<synchronous>, transform_indices = @transform_3, window_bounds = array<i64: 384, 256>}, {pipeline_mode = #tpu.pipeline_mode<synchronous>, transform_indices = @transform_4, window_bounds = array<i64: 1, 256>}, {pipeline_mode = #tpu.pipeline_mode<synchronous>, transform_indices = @transform_5, window_bounds = array<i64: 1600, 128>}, {pipeline_mode = #tpu.pipeline_mode<synchronous>, transform_indices = @transform_6, window_bounds = array<i64: 1, 128>}, {transform_indices = @transform_7, window_bounds = array<i64: 8, 128>}]} {
    %c0 = arith.constant 0 : index
    %c0_0 = arith.constant 0 : index
    %c0_1 = arith.constant 0 : index
    %0 = vector.load %arg1[%c0, %c0_0, %c0_1] : memref<1x200x128xf32, #tpu.memory_space<vmem>>, vector<1x200x128xf32>
    %c0_2 = arith.constant 0 : index
    %c0_3 = arith.constant 0 : index
    %1 = vector.load %arg2[%c0_2, %c0_3] : memref<3x128xf32, #tpu.memory_space<vmem>>, vector<3x128xf32>
    %cst = arith.constant 0.000000e+00 : f32
    %2 = vector.broadcast %cst : f32 to vector<1x1x128xf32>
    %3 = vector.extract_strided_slice %0 {offsets = [0, 0, 0], sizes = [1, 199, 128], strides = [1, 1, 1]} : vector<1x200x128xf32> to vector<1x199x128xf32>
    %4 = tpu.concatenate %2, %3 in 1 : vector<1x1x128xf32>, vector<1x199x128xf32> -> vector<1x200x128xf32>
    %5 = vector.extract_strided_slice %0 {offsets = [0, 1, 0], sizes = [1, 199, 128], strides = [1, 1, 1]} : vector<1x200x128xf32> to vector<1x199x128xf32>
    %6 = tpu.concatenate %5, %2 in 1 : vector<1x199x128xf32>, vector<1x1x128xf32> -> vector<1x200x128xf32>
    %7 = vector.extract_strided_slice %1 {offsets = [0, 0], sizes = [1, 128], strides = [1, 1]} : vector<3x128xf32> to vector<1x128xf32>
    %8 = vector.shape_cast %7 : vector<1x128xf32> to vector<128xf32>
    %9 = vector.shape_cast %8 : vector<128xf32> to vector<1x1x128xf32>
    %10 = vector.broadcast %9 : vector<1x1x128xf32> to vector<1x200x128xf32>
    %11 = arith.mulf %4, %10 : vector<1x200x128xf32>
    %12 = vector.extract_strided_slice %1 {offsets = [1, 0], sizes = [1, 128], strides = [1, 1]} : vector<3x128xf32> to vector<1x128xf32>
    %13 = vector.shape_cast %12 : vector<1x128xf32> to vector<128xf32>
    %14 = vector.shape_cast %13 : vector<128xf32> to vector<1x1x128xf32>
    %15 = vector.broadcast %14 : vector<1x1x128xf32> to vector<1x200x128xf32>
    %16 = arith.mulf %0, %15 : vector<1x200x128xf32>
    %17 = arith.addf %11, %16 : vector<1x200x128xf32>
    %18 = vector.extract_strided_slice %1 {offsets = [2, 0], sizes = [1, 128], strides = [1, 1]} : vector<3x128xf32> to vector<1x128xf32>
    %19 = vector.shape_cast %18 : vector<1x128xf32> to vector<128xf32>
    %20 = vector.shape_cast %19 : vector<128xf32> to vector<1x1x128xf32>
    %21 = vector.broadcast %20 : vector<1x1x128xf32> to vector<1x200x128xf32>
    %22 = arith.mulf %6, %21 : vector<1x200x128xf32>
    %23 = arith.addf %17, %22 : vector<1x200x128xf32>
    %c0_4 = arith.constant 0 : index
    %c0_5 = arith.constant 0 : index
    %24 = vector.load %arg3[%c0_4, %c0_5] : memref<1x128xf32, #tpu.memory_space<vmem>>, vector<1x128xf32>
    %25 = vector.shape_cast %24 : vector<1x128xf32> to vector<1x1x128xf32>
    %26 = vector.broadcast %25 : vector<1x1x128xf32> to vector<1x200x128xf32>
    %27 = arith.addf %23, %26 : vector<1x200x128xf32>
    %cst_6 = arith.constant 0.000000e+00 : f32
    %28 = vector.broadcast %cst_6 : f32 to vector<1x200x128xf32>
    %29 = arith.maximumf %27, %28 : vector<1x200x128xf32>
    %30 = vector.shape_cast %29 : vector<1x200x128xf32> to vector<1x100x2x128xf32>
    %31 = vector.extract_strided_slice %30 {offsets = [0, 0, 0, 0], sizes = [1, 100, 1, 128], strides = [1, 1, 1, 1]} : vector<1x100x2x128xf32> to vector<1x100x1x128xf32>
    %32 = vector.shape_cast %31 : vector<1x100x1x128xf32> to vector<1x100x128xf32>
    %33 = vector.extract_strided_slice %30 {offsets = [0, 0, 1, 0], sizes = [1, 100, 1, 128], strides = [1, 1, 1, 1]} : vector<1x100x2x128xf32> to vector<1x100x1x128xf32>
    %34 = vector.shape_cast %33 : vector<1x100x1x128xf32> to vector<1x100x128xf32>
    %35 = arith.maximumf %32, %34 : vector<1x100x128xf32>
    %cst_7 = arith.constant 0.000000e+00 : f32
    %36 = vector.broadcast %cst_7 : f32 to vector<1x1x128xf32>
    %37 = vector.extract_strided_slice %35 {offsets = [0, 0, 0], sizes = [1, 99, 128], strides = [1, 1, 1]} : vector<1x100x128xf32> to vector<1x99x128xf32>
    %38 = tpu.concatenate %36, %37 in 1 : vector<1x1x128xf32>, vector<1x99x128xf32> -> vector<1x100x128xf32>
    %39 = vector.extract_strided_slice %35 {offsets = [0, 1, 0], sizes = [1, 99, 128], strides = [1, 1, 1]} : vector<1x100x128xf32> to vector<1x99x128xf32>
    %40 = tpu.concatenate %39, %36 in 1 : vector<1x99x128xf32>, vector<1x1x128xf32> -> vector<1x100x128xf32>
    %41 = tpu.concatenate %38, %35, %40 in 2 : vector<1x100x128xf32>, vector<1x100x128xf32>, vector<1x100x128xf32> -> vector<1x100x384xf32>
    %42 = vector.shape_cast %41 : vector<1x100x384xf32> to vector<100x384xf32>
    %c0_8 = arith.constant 0 : index
    %c0_9 = arith.constant 0 : index
    %43 = vector.load %arg4[%c0_8, %c0_9] : memref<384x256xf32, #tpu.memory_space<vmem>>, vector<384x256xf32>
    %cst_10 = arith.constant dense<0.000000e+00> : vector<100x256xf32>
    %44 = tpu.matmul %42, %43, %cst_10 {dimension_numbers = #tpu.dot_dimension_numbers<[1], [0], [0], [1], [0, 0, 1, 1], [], []>} : vector<100x384xf32>, vector<384x256xf32>, vector<100x256xf32> -> vector<100x256xf32>
    %c0_11 = arith.constant 0 : index
    %c0_12 = arith.constant 0 : index
    %45 = vector.load %arg5[%c0_11, %c0_12] : memref<1x256xf32, #tpu.memory_space<vmem>>, vector<1x256xf32>
    %46 = vector.broadcast %45 : vector<1x256xf32> to vector<100x256xf32>
    %47 = arith.addf %44, %46 : vector<100x256xf32>
    %cst_13 = arith.constant 0.000000e+00 : f32
    %48 = vector.broadcast %cst_13 : f32 to vector<100x256xf32>
    %49 = arith.maximumf %47, %48 : vector<100x256xf32>
    %50 = vector.shape_cast %49 : vector<100x256xf32> to vector<1x100x256xf32>
    %51 = vector.shape_cast %50 : vector<1x100x256xf32> to vector<1x50x2x256xf32>
    %52 = vector.extract_strided_slice %51 {offsets = [0, 0, 0, 0], sizes = [1, 50, 1, 256], strides = [1, 1, 1, 1]} : vector<1x50x2x256xf32> to vector<1x50x1x256xf32>
    %53 = vector.shape_cast %52 : vector<1x50x1x256xf32> to vector<1x50x256xf32>
    %54 = vector.extract_strided_slice %51 {offsets = [0, 0, 1, 0], sizes = [1, 50, 1, 256], strides = [1, 1, 1, 1]} : vector<1x50x2x256xf32> to vector<1x50x1x256xf32>
    %55 = vector.shape_cast %54 : vector<1x50x1x256xf32> to vector<1x50x256xf32>
    %56 = arith.maximumf %53, %55 : vector<1x50x256xf32>
    %c0_14 = arith.constant 0 : index
    %c0_15 = arith.constant 0 : index
    %57 = vector.load %arg6[%c0_14, %c0_15] : memref<1600x128xf32, #tpu.memory_space<vmem>>, vector<1600x128xf32>
    %c0_16 = arith.constant 0 : index
    %c0_17 = arith.constant 0 : index
    %58 = vector.load %arg7[%c0_16, %c0_17] : memref<1x128xf32, #tpu.memory_space<vmem>>, vector<1x128xf32>
    %59 = vector.extract_strided_slice %56 {offsets = [0, 0, 0], sizes = [1, 50, 32], strides = [1, 1, 1]} : vector<1x50x256xf32> to vector<1x50x32xf32>
    %60 = vector.shape_cast %59 : vector<1x50x32xf32> to vector<1x1600xf32>
    %cst_18 = arith.constant dense<0.000000e+00> : vector<1x128xf32>
    %61 = tpu.matmul %60, %57, %cst_18 {dimension_numbers = #tpu.dot_dimension_numbers<[1], [0], [0], [1], [0, 0, 1, 1], [], []>} : vector<1x1600xf32>, vector<1600x128xf32>, vector<1x128xf32> -> vector<1x128xf32>
    %62 = arith.addf %61, %58 : vector<1x128xf32>
    %cst_19 = arith.constant 0.000000e+00 : f32
    %63 = vector.broadcast %cst_19 : f32 to vector<1x128xf32>
    %64 = arith.maximumf %62, %63 : vector<1x128xf32>
    %65 = vector.extract_strided_slice %56 {offsets = [0, 0, 32], sizes = [1, 50, 32], strides = [1, 1, 1]} : vector<1x50x256xf32> to vector<1x50x32xf32>
    %66 = vector.shape_cast %65 : vector<1x50x32xf32> to vector<1x1600xf32>
    %cst_20 = arith.constant dense<0.000000e+00> : vector<1x128xf32>
    %67 = tpu.matmul %66, %57, %cst_20 {dimension_numbers = #tpu.dot_dimension_numbers<[1], [0], [0], [1], [0, 0, 1, 1], [], []>} : vector<1x1600xf32>, vector<1600x128xf32>, vector<1x128xf32> -> vector<1x128xf32>
    %68 = arith.addf %67, %58 : vector<1x128xf32>
    %cst_21 = arith.constant 0.000000e+00 : f32
    %69 = vector.broadcast %cst_21 : f32 to vector<1x128xf32>
    %70 = arith.maximumf %68, %69 : vector<1x128xf32>
    %71 = vector.extract_strided_slice %56 {offsets = [0, 0, 64], sizes = [1, 50, 32], strides = [1, 1, 1]} : vector<1x50x256xf32> to vector<1x50x32xf32>
    %72 = vector.shape_cast %71 : vector<1x50x32xf32> to vector<1x1600xf32>
    %cst_22 = arith.constant dense<0.000000e+00> : vector<1x128xf32>
    %73 = tpu.matmul %72, %57, %cst_22 {dimension_numbers = #tpu.dot_dimension_numbers<[1], [0], [0], [1], [0, 0, 1, 1], [], []>} : vector<1x1600xf32>, vector<1600x128xf32>, vector<1x128xf32> -> vector<1x128xf32>
    %74 = arith.addf %73, %58 : vector<1x128xf32>
    %cst_23 = arith.constant 0.000000e+00 : f32
    %75 = vector.broadcast %cst_23 : f32 to vector<1x128xf32>
    %76 = arith.maximumf %74, %75 : vector<1x128xf32>
    %77 = vector.extract_strided_slice %56 {offsets = [0, 0, 96], sizes = [1, 50, 32], strides = [1, 1, 1]} : vector<1x50x256xf32> to vector<1x50x32xf32>
    %78 = vector.shape_cast %77 : vector<1x50x32xf32> to vector<1x1600xf32>
    %cst_24 = arith.constant dense<0.000000e+00> : vector<1x128xf32>
    %79 = tpu.matmul %78, %57, %cst_24 {dimension_numbers = #tpu.dot_dimension_numbers<[1], [0], [0], [1], [0, 0, 1, 1], [], []>} : vector<1x1600xf32>, vector<1600x128xf32>, vector<1x128xf32> -> vector<1x128xf32>
    %80 = arith.addf %79, %58 : vector<1x128xf32>
    %cst_25 = arith.constant 0.000000e+00 : f32
    %81 = vector.broadcast %cst_25 : f32 to vector<1x128xf32>
    %82 = arith.maximumf %80, %81 : vector<1x128xf32>
    %83 = vector.extract_strided_slice %56 {offsets = [0, 0, 128], sizes = [1, 50, 32], strides = [1, 1, 1]} : vector<1x50x256xf32> to vector<1x50x32xf32>
    %84 = vector.shape_cast %83 : vector<1x50x32xf32> to vector<1x1600xf32>
    %cst_26 = arith.constant dense<0.000000e+00> : vector<1x128xf32>
    %85 = tpu.matmul %84, %57, %cst_26 {dimension_numbers = #tpu.dot_dimension_numbers<[1], [0], [0], [1], [0, 0, 1, 1], [], []>} : vector<1x1600xf32>, vector<1600x128xf32>, vector<1x128xf32> -> vector<1x128xf32>
    %86 = arith.addf %85, %58 : vector<1x128xf32>
    %cst_27 = arith.constant 0.000000e+00 : f32
    %87 = vector.broadcast %cst_27 : f32 to vector<1x128xf32>
    %88 = arith.maximumf %86, %87 : vector<1x128xf32>
    %89 = vector.extract_strided_slice %56 {offsets = [0, 0, 160], sizes = [1, 50, 32], strides = [1, 1, 1]} : vector<1x50x256xf32> to vector<1x50x32xf32>
    %90 = vector.shape_cast %89 : vector<1x50x32xf32> to vector<1x1600xf32>
    %cst_28 = arith.constant dense<0.000000e+00> : vector<1x128xf32>
    %91 = tpu.matmul %90, %57, %cst_28 {dimension_numbers = #tpu.dot_dimension_numbers<[1], [0], [0], [1], [0, 0, 1, 1], [], []>} : vector<1x1600xf32>, vector<1600x128xf32>, vector<1x128xf32> -> vector<1x128xf32>
    %92 = arith.addf %91, %58 : vector<1x128xf32>
    %cst_29 = arith.constant 0.000000e+00 : f32
    %93 = vector.broadcast %cst_29 : f32 to vector<1x128xf32>
    %94 = arith.maximumf %92, %93 : vector<1x128xf32>
    %95 = vector.extract_strided_slice %56 {offsets = [0, 0, 192], sizes = [1, 50, 32], strides = [1, 1, 1]} : vector<1x50x256xf32> to vector<1x50x32xf32>
    %96 = vector.shape_cast %95 : vector<1x50x32xf32> to vector<1x1600xf32>
    %cst_30 = arith.constant dense<0.000000e+00> : vector<1x128xf32>
    %97 = tpu.matmul %96, %57, %cst_30 {dimension_numbers = #tpu.dot_dimension_numbers<[1], [0], [0], [1], [0, 0, 1, 1], [], []>} : vector<1x1600xf32>, vector<1600x128xf32>, vector<1x128xf32> -> vector<1x128xf32>
    %98 = arith.addf %97, %58 : vector<1x128xf32>
    %cst_31 = arith.constant 0.000000e+00 : f32
    %99 = vector.broadcast %cst_31 : f32 to vector<1x128xf32>
    %100 = arith.maximumf %98, %99 : vector<1x128xf32>
    %101 = vector.extract_strided_slice %56 {offsets = [0, 0, 224], sizes = [1, 50, 32], strides = [1, 1, 1]} : vector<1x50x256xf32> to vector<1x50x32xf32>
    %102 = vector.shape_cast %101 : vector<1x50x32xf32> to vector<1x1600xf32>
    %cst_32 = arith.constant dense<0.000000e+00> : vector<1x128xf32>
    %103 = tpu.matmul %102, %57, %cst_32 {dimension_numbers = #tpu.dot_dimension_numbers<[1], [0], [0], [1], [0, 0, 1, 1], [], []>} : vector<1x1600xf32>, vector<1600x128xf32>, vector<1x128xf32> -> vector<1x128xf32>
    %104 = arith.addf %103, %58 : vector<1x128xf32>
    %cst_33 = arith.constant 0.000000e+00 : f32
    %105 = vector.broadcast %cst_33 : f32 to vector<1x128xf32>
    %106 = arith.maximumf %104, %105 : vector<1x128xf32>
    %107 = vector.shape_cast %64 : vector<1x128xf32> to vector<1x1x128xf32>
    %108 = vector.shape_cast %70 : vector<1x128xf32> to vector<1x1x128xf32>
    %109 = vector.shape_cast %76 : vector<1x128xf32> to vector<1x1x128xf32>
    %110 = vector.shape_cast %82 : vector<1x128xf32> to vector<1x1x128xf32>
    %111 = vector.shape_cast %88 : vector<1x128xf32> to vector<1x1x128xf32>
    %112 = vector.shape_cast %94 : vector<1x128xf32> to vector<1x1x128xf32>
    %113 = vector.shape_cast %100 : vector<1x128xf32> to vector<1x1x128xf32>
    %114 = vector.shape_cast %106 : vector<1x128xf32> to vector<1x1x128xf32>
    %115 = tpu.concatenate %107, %108, %109, %110, %111, %112, %113, %114 in 1 : vector<1x1x128xf32>, vector<1x1x128xf32>, vector<1x1x128xf32>, vector<1x1x128xf32>, vector<1x1x128xf32>, vector<1x1x128xf32>, vector<1x1x128xf32>, vector<1x1x128xf32> -> vector<1x8x128xf32>
    %116 = vector.shape_cast %115 : vector<1x8x128xf32> to vector<8x128xf32>
    %c0_34 = arith.constant 0 : index
    %c0_35 = arith.constant 0 : index
    %117 = vector.load %arg8[%c0_34, %c0_35] : memref<8x128xf32, #tpu.memory_space<vmem>>, vector<8x128xf32>
    tpu.vector_store %arg8[%c0_34, %c0_35], %116 {strides = array<i32>} : memref<8x128xf32, #tpu.memory_space<vmem>>, vector<8x128xf32>,
    return
  }
  func.func @transform_0(%arg0: i32) -> (i32, i32, i32) {
    %c0_i32 = arith.constant 0 : i32
    %c0_i32_0 = arith.constant 0 : i32
    %c0_i32_1 = arith.constant 0 : i32
    return %arg0, %c0_i32, %c0_i32_0 : i32, i32, i32
  }
  func.func @transform_1(%arg0: i32) -> (i32, i32) {
    %c0_i32 = arith.constant 0 : i32
    %c0_i32_0 = arith.constant 0 : i32
    %c0_i32_1 = arith.constant 0 : i32
    return %c0_i32, %c0_i32_0 : i32, i32
  }
  func.func @transform_2(%arg0: i32) -> (i32, i32) {
    %c0_i32 = arith.constant 0 : i32
    %c0_i32_0 = arith.constant 0 : i32
    %c0_i32_1 = arith.constant 0 : i32
    return %c0_i32, %c0_i32_0 : i32, i32
  }
  func.func @transform_3(%arg0: i32) -> (i32, i32) {
    %c0_i32 = arith.constant 0 : i32
    %c0_i32_0 = arith.constant 0 : i32
    %c0_i32_1 = arith.constant 0 : i32
    return %c0_i32, %c0_i32_0 : i32, i32
  }
  func.func @transform_4(%arg0: i32) -> (i32, i32) {
    %c0_i32 = arith.constant 0 : i32
    %c0_i32_0 = arith.constant 0 : i32
    %c0_i32_1 = arith.constant 0 : i32
    return %c0_i32, %c0_i32_0 : i32, i32
  }
  func.func @transform_5(%arg0: i32) -> (i32, i32) {
    %c0_i32 = arith.constant 0 : i32
    %c0_i32_0 = arith.constant 0 : i32
    %c0_i32_1 = arith.constant 0 : i32
    return %c0_i32, %c0_i32_0 : i32, i32
  }
  func.func @transform_6(%arg0: i32) -> (i32, i32) {
    %c0_i32 = arith.constant 0 : i32
    %c0_i32_0 = arith.constant 0 : i32
    %c0_i32_1 = arith.constant 0 : i32
    return %c0_i32, %c0_i32_0 : i32, i32
  }
  func.func @transform_7(%arg0: i32) -> (i32, i32) {
    %c0_i32 = arith.constant 0 : i32
    %c0_i32_0 = arith.constant 0 : i32
    return %arg0, %c0_i32 : i32, i32
  }
}

</mosaic_0001>

<llo_original>
// kernel: tpu_custom_call.1
$region0: #{tpu_custom_call.1}
  #allocation0 [shape = 'u32[]', space=smem, size = 0x4, offset = 0x4, fixed_abs, tag = 'smem constant byte address 0x4 - core index']
  #allocation1 [shape = 'u32[72,128]{1,0:T(1,128)}', space=vmem, size = 0x9000, scoped, tag = 'internal scratch']
  %s0 = inlined_call_operand.hbm [shape: f32[1,200,128], index: 0, kind: input, shape index: {}]
  %s1 = inlined_call_operand.hbm [shape: f32[3,128], index: 1, kind: input, shape index: {}]
  %s2 = inlined_call_operand.vmem [shape: f32[1,128], index: 2, kind: input, shape index: {}]
  %s3 = inlined_call_operand.hbm [shape: f32[384,256], index: 3, kind: input, shape index: {}]
  %s4 = inlined_call_operand.vmem [shape: f32[1,256], index: 4, kind: input, shape index: {}]
  %s5 = inlined_call_operand.hbm [shape: f32[1600,128], index: 5, kind: input, shape index: {}]
  %s6 = inlined_call_operand.vmem [shape: f32[1,128], index: 6, kind: input, shape index: {}]
  %s7 = inlined_call_operand.hbm [shape: f32[8,128], index: 7, kind: output, shape index: {}]
  %s8 = sld [smem:[#allocation0]]
  $region54: #{tpu_custom_call.1} parent=0
    _
  %s10 = ssub.s32 1, %s8
  %s11 = scalar_select 0, %s10, %s8
  $region1: #{tpu_custom_call.1} parent=0
    #allocation2 [shape = 'u8[102400]{0}', space=vmem, size = 0x19000, scoped, tag = 'input window, operand 0, single buffered']
    #allocation3 [shape = 's32[1]{0}', space=sflag, size = 0x4, scoped, tag = 'scoped memory for tpu_custom_call.1']
    #allocation4 [shape = 's32[1]{0}', space=sflag, size = 0x4, scoped, tag = 'scoped memory for tpu_custom_call.1']
    #allocation5 [shape = 'u8[2048]{0}', space=vmem, size = 0x800, scoped, tag = 'input window, operand 1, single buffered']
    #allocation6 [shape = 's32[1]{0}', space=sflag, size = 0x4, scoped, tag = 'scoped memory for tpu_custom_call.1']
    #allocation7 [shape = 'u8[393216]{0}', space=vmem, size = 0x60000, scoped, tag = 'input window, operand 3, single buffered']
    #allocation8 [shape = 'u8[819200]{0}', space=vmem, size = 0xc8000, scoped, tag = 'input window, operand 5, single buffered']
    #allocation9 [shape = 's32[1]{0}', space=sflag, size = 0x4, scoped, tag = 'scoped memory for tpu_custom_call.1']
    #allocation10 [shape = 'u8[4096]{0}', space=vmem, size = 0x1000, scoped, tag = 'output window, operand 0, single buffered']
    %12 = vsyncpa [#allocation3], 0
    %13 = vsyncpa [#allocation6], 0
    %14 = vsyncpa [#allocation9], 0
    %15 = vsyncpa [#allocation4], 0
    // Predicated region
    $region2: #{tpu_custom_call.1} parent=1 // pred_check
      _
    $region3: #{tpu_custom_call.1} parent=1 // pred_check_branch
      %17 = sbr.rel (0) target = $region5
    $region4: #{tpu_custom_call.1} parent=1 // pred_region
      %19 = vsyncadd [#allocation3], 0
      %s20 = sshll.u32 %s0, 4
      %s21 = int_to_ptr.hbm [resolvable:$true] %s20
      %s22 = sshll.u32 [#allocation2], 4
      %s23 = int_to_ptr.vmem [resolvable:$true] %s22
      %28 = dma.hbm_to_vmem [thread:$0]  %s21, 3200, %s23, [#allocation3], 128, 128, 8
    $region5: #{tpu_custom_call.1} parent=1 // pred_fallthru
      _
    // Predicated region
    $region6: #{tpu_custom_call.1} parent=1 // pred_check
      _
    $region7: #{tpu_custom_call.1} parent=1 // pred_check_branch
      %30 = sbr.rel (0) target = $region9
    $region8: #{tpu_custom_call.1} parent=1 // pred_region
      %32 = vsyncadd [#allocation6], 0
      %s34 = sshll.u32 %s1, 4
      %s35 = int_to_ptr.hbm [resolvable:$true] %s34
      %s36 = sshll.u32 [#allocation5], 4
      %s37 = int_to_ptr.vmem [resolvable:$true] %s36
      %39 = dma.hbm_to_vmem [thread:$0]  %s35, 64, %s37, [#allocation6]
    $region9: #{tpu_custom_call.1} parent=1 // pred_fallthru
      _
    // Predicated region
    $region10: #{tpu_custom_call.1} parent=1 // pred_check
      _
    $region11: #{tpu_custom_call.1} parent=1 // pred_check_branch
      %41 = sbr.rel (0) target = $region13
    $region12: #{tpu_custom_call.1} parent=1 // pred_region
      _
    $region13: #{tpu_custom_call.1} parent=1 // pred_fallthru
      _
    // Predicated region
    $region14: #{tpu_custom_call.1} parent=1 // pred_check
      _
    $region15: #{tpu_custom_call.1} parent=1 // pred_check_branch
      %43 = sbr.rel (0) target = $region17
    $region16: #{tpu_custom_call.1} parent=1 // pred_region
      %45 = vsyncadd [#allocation6], 0
      %s46 = sshll.u32 %s3, 4
      %s47 = int_to_ptr.hbm [resolvable:$true] %s46
      %s48 = sshll.u32 [#allocation7], 4
      %s49 = int_to_ptr.vmem [resolvable:$true] %s48
      %54 = dma.hbm_to_vmem [thread:$0]  %s47, 12288, %s49, [#allocation6], 256, 256, 16
    $region17: #{tpu_custom_call.1} parent=1 // pred_fallthru
      _
    // Predicated region
    $region18: #{tpu_custom_call.1} parent=1 // pred_check
      _
    $region19: #{tpu_custom_call.1} parent=1 // pred_check_branch
      %56 = sbr.rel (0) target = $region21
    $region20: #{tpu_custom_call.1} parent=1 // pred_region
      _
    $region21: #{tpu_custom_call.1} parent=1 // pred_fallthru
      _
    // Predicated region
    $region22: #{tpu_custom_call.1} parent=1 // pred_check
      _
    $region23: #{tpu_custom_call.1} parent=1 // pred_check_branch
      %58 = sbr.rel (0) target = $region25
    $region24: #{tpu_custom_call.1} parent=1 // pred_region
      %60 = vsyncadd [#allocation9], 0
      %s61 = sshll.u32 %s5, 4
      %s62 = int_to_ptr.hbm [resolvable:$true] %s61
      %s63 = sshll.u32 [#allocation8], 4
      %s64 = int_to_ptr.vmem [resolvable:$true] %s63
      %69 = dma.hbm_to_vmem [thread:$0]  %s62, 25600, %s64, [#allocation9], 128, 128, 8
    $region25: #{tpu_custom_call.1} parent=1 // pred_fallthru
      _
    // Predicated region
    $region26: #{tpu_custom_call.1} parent=1 // pred_check
      _
    $region27: #{tpu_custom_call.1} parent=1 // pred_check_branch
      %71 = sbr.rel (0) target = $region29
    $region28: #{tpu_custom_call.1} parent=1 // pred_region
      _
    $region29: #{tpu_custom_call.1} parent=1 // pred_fallthru
      _
    // Predicated region
    $region30: #{tpu_custom_call.1} parent=1 // pred_check
      _
    $region31: #{tpu_custom_call.1} parent=1 // pred_check_branch
      %73 = sbr.rel (0) target = $region33
    $region32: #{tpu_custom_call.1} parent=1 // pred_region
      %75 = dma.done [#allocation3], 3200
    $region33: #{tpu_custom_call.1} parent=1 // pred_fallthru
      _
    // Predicated region
    $region34: #{tpu_custom_call.1} parent=1 // pred_check
      _
    $region35: #{tpu_custom_call.1} parent=1 // pred_check_branch
      %77 = sbr.rel (0) target = $region37
    $region36: #{tpu_custom_call.1} parent=1 // pred_region
      %79 = dma.done [#allocation6], 64
    $region37: #{tpu_custom_call.1} parent=1 // pred_fallthru
      _
    // Predicated region
    $region38: #{tpu_custom_call.1} parent=1 // pred_check
      _
    $region39: #{tpu_custom_call.1} parent=1 // pred_check_branch
      %81 = sbr.rel (0) target = $region41
    $region40: #{tpu_custom_call.1} parent=1 // pred_region
      %83 = dma.done [#allocation6], 12288
    $region41: #{tpu_custom_call.1} parent=1 // pred_fallthru
      _
    // Predicated region
    $region42: #{tpu_custom_call.1} parent=1 // pred_check
      _
    $region43: #{tpu_custom_call.1} parent=1 // pred_check_branch
      %85 = sbr.rel (0) target = $region45
    $region44: #{tpu_custom_call.1} parent=1 // pred_region
      %87 = dma.done [#allocation9], 25600
    $region45: #{tpu_custom_call.1} parent=1 // pred_fallthru
      _
    %v88 = vld [vmem:[#allocation2] sm:$0xff]
    %v89 = vld [vmem:[#allocation2 + $0x8] sm:$0xff]
    %v90 = vld [vmem:[#allocation2 + $0x10] sm:$0xff]
    %v91 = vld [vmem:[#allocation2 + $0x18] sm:$0xff]
    %v92 = vld [vmem:[#allocation2 + $0x20] sm:$0xff]
    %v93 = vld [vmem:[#allocation2 + $0x28] sm:$0xff]
    %v94 = vld [vmem:[#allocation2 + $0x30] sm:$0xff]
    %v95 = vld [vmem:[#allocation2 + $0x38] sm:$0xff]
    %v96 = vld [vmem:[#allocation2 + $0x40] sm:$0xff]
    %v97 = vld [vmem:[#allocation2 + $0x48] sm:$0xff]
    %v98 = vld [vmem:[#allocation2 + $0x50] sm:$0xff]
    %v99 = vld [vmem:[#allocation2 + $0x58] sm:$0xff]
    %v100 = vld [vmem:[#allocation2 + $0x60] sm:$0xff]
    %v101 = vld [vmem:[#allocation2 + $0x68] sm:$0xff]
    %v102 = vld [vmem:[#allocation2 + $0x70] sm:$0xff]
    %v103 = vld [vmem:[#allocation2 + $0x78] sm:$0xff]
    %v104 = vld [vmem:[#allocation2 + $0x80] sm:$0xff]
    %v105 = vld [vmem:[#allocation2 + $0x88] sm:$0xff]
    %v106 = vld [vmem:[#allocation2 + $0x90] sm:$0xff]
    %v107 = vld [vmem:[#allocation2 + $0x98] sm:$0xff]
    %v108 = vld [vmem:[#allocation2 + $0xa0] sm:$0xff]
    %v109 = vld [vmem:[#allocation2 + $0xa8] sm:$0xff]
    %v110 = vld [vmem:[#allocation2 + $0xb0] sm:$0xff]
    %v111 = vld [vmem:[#allocation2 + $0xb8] sm:$0xff]
    %v112 = vld [vmem:[#allocation2 + $0xc0] sm:$0xff]
    %v113 = vld [vmem:[#allocation5] sm:$0x7]
    %vm139 = vcmask 1040384
    %v140 = vrot.slane %v88, 7
    %v141 = vrot.slane %v89, 7
    %v142 = vsel %vm139, %v140, %v141
    %v143 = vrot.slane %v90, 7
    %v144 = vsel %vm139, %v141, %v143
    %v145 = vrot.slane %v91, 7
    %v146 = vsel %vm139, %v143, %v145
    %v147 = vrot.slane %v92, 7
    %v148 = vsel %vm139, %v145, %v147
    %v149 = vrot.slane %v93, 7
    %v150 = vsel %vm139, %v147, %v149
    %v151 = vrot.slane %v94, 7
    %v152 = vsel %vm139, %v149, %v151
    %v153 = vrot.slane %v95, 7
    %v154 = vsel %vm139, %v151, %v153
    %v155 = vrot.slane %v96, 7
    %v156 = vsel %vm139, %v153, %v155
    %v157 = vrot.slane %v97, 7
    %v158 = vsel %vm139, %v155, %v157
    %v159 = vrot.slane %v98, 7
    %v160 = vsel %vm139, %v157, %v159
    %v161 = vrot.slane %v99, 7
    %v162 = vsel %vm139, %v159, %v161
    %v163 = vrot.slane %v100, 7
    %v164 = vsel %vm139, %v161, %v163
    %v165 = vrot.slane %v101, 7
    %v166 = vsel %vm139, %v163, %v165
    %v167 = vrot.slane %v102, 7
    %v168 = vsel %vm139, %v165, %v167
    %v169 = vrot.slane %v103, 7
    %v170 = vsel %vm139, %v167, %v169
    %v171 = vrot.slane %v104, 7
    %v172 = vsel %vm139, %v169, %v171
    %v173 = vrot.slane %v105, 7
    %v174 = vsel %vm139, %v171, %v173
    %v175 = vrot.slane %v106, 7
    %v176 = vsel %vm139, %v173, %v175
    %v177 = vrot.slane %v107, 7
    %v178 = vsel %vm139, %v175, %v177
    %v179 = vrot.slane %v108, 7
    %v180 = vsel %vm139, %v177, %v179
    %v181 = vrot.slane %v109, 7
    %v182 = vsel %vm139, %v179, %v181
    %v183 = vrot.slane %v110, 7
    %v184 = vsel %vm139, %v181, %v183
    %v185 = vrot.slane %v111, 7
    %v186 = vsel %vm139, %v183, %v185
    %v187 = vrot.slane %v112, 7
    %v188 = vsel %vm139, %v185, %v187
    %v214 = vsel %vm139, 0.0, %v140
    %vm215 = vcmask 1046528
    %v216 = vrot.slane %v88, 1
    %v217 = vrot.slane %v89, 1
    %v218 = vsel %vm215, %v216, %v217
    %v219 = vrot.slane %v90, 1
    %v220 = vsel %vm215, %v217, %v219
    %v221 = vrot.slane %v91, 1
    %v222 = vsel %vm215, %v219, %v221
    %v223 = vrot.slane %v92, 1
    %v224 = vsel %vm215, %v221, %v223
    %v225 = vrot.slane %v93, 1
    %v226 = vsel %vm215, %v223, %v225
    %v227 = vrot.slane %v94, 1
    %v228 = vsel %vm215, %v225, %v227
    %v229 = vrot.slane %v95, 1
    %v230 = vsel %vm215, %v227, %v229
    %v231 = vrot.slane %v96, 1
    %v232 = vsel %vm215, %v229, %v231
    %v233 = vrot.slane %v97, 1
    %v234 = vsel %vm215, %v231, %v233
    %v235 = vrot.slane %v98, 1
    %v236 = vsel %vm215, %v233, %v235
    %v237 = vrot.slane %v99, 1
    %v238 = vsel %vm215, %v235, %v237
    %v239 = vrot.slane %v100, 1
    %v240 = vsel %vm215, %v237, %v239
    %v241 = vrot.slane %v101, 1
    %v242 = vsel %vm215, %v239, %v241
    %v243 = vrot.slane %v102, 1
    %v244 = vsel %vm215, %v241, %v243
    %v245 = vrot.slane %v103, 1
    %v246 = vsel %vm215, %v243, %v245
    %v247 = vrot.slane %v104, 1
    %v248 = vsel %vm215, %v245, %v247
    %v249 = vrot.slane %v105, 1
    %v250 = vsel %vm215, %v247, %v249
    %v251 = vrot.slane %v106, 1
    %v252 = vsel %vm215, %v249, %v251
    %v253 = vrot.slane %v107, 1
    %v254 = vsel %vm215, %v251, %v253
    %v255 = vrot.slane %v108, 1
    %v256 = vsel %vm215, %v253, %v255
    %v257 = vrot.slane %v109, 1
    %v258 = vsel %vm215, %v255, %v257
    %v259 = vrot.slane %v110, 1
    %v260 = vsel %vm215, %v257, %v259
    %v261 = vrot.slane %v111, 1
    %v262 = vsel %vm215, %v259, %v261
    %v263 = vrot.slane %v112, 1
    %v264 = vsel %vm215, %v261, %v263
    %v290 = vsel %vm215, %v263, 0.0
    %v291 = vperm.slane %v113, 0
    %v292 = vmul.f32 %v214, %v291
    %v293 = vmul.f32 %v142, %v291
    %v294 = vmul.f32 %v144, %v291
    %v295 = vmul.f32 %v146, %v291
    %v296 = vmul.f32 %v148, %v291
    %v297 = vmul.f32 %v150, %v291
    %v298 = vmul.f32 %v152, %v291
    %v299 = vmul.f32 %v154, %v291
    %v300 = vmul.f32 %v156, %v291
    %v301 = vmul.f32 %v158, %v291
    %v302 = vmul.f32 %v160, %v291
    %v303 = vmul.f32 %v162, %v291
    %v304 = vmul.f32 %v164, %v291
    %v305 = vmul.f32 %v166, %v291
    %v306 = vmul.f32 %v168, %v291
    %v307 = vmul.f32 %v170, %v291
    %v308 = vmul.f32 %v172, %v291
    %v309 = vmul.f32 %v174, %v291
    %v310 = vmul.f32 %v176, %v291
    %v311 = vmul.f32 %v178, %v291
    %v312 = vmul.f32 %v180, %v291
    %v313 = vmul.f32 %v182, %v291
    %v314 = vmul.f32 %v184, %v291
    %v315 = vmul.f32 %v186, %v291
    %v316 = vmul.f32 %v188, %v291
    %v317 = vperm.slane %v113, 1
    %v318 = vmul.f32 %v88, %v317
    %v319 = vmul.f32 %v89, %v317
    %v320 = vmul.f32 %v90, %v317
    %v321 = vmul.f32 %v91, %v317
    %v322 = vmul.f32 %v92, %v317
    %v323 = vmul.f32 %v93, %v317
    %v324 = vmul.f32 %v94, %v317
    %v325 = vmul.f32 %v95, %v317
    %v326 = vmul.f32 %v96, %v317
    %v327 = vmul.f32 %v97, %v317
    %v328 = vmul.f32 %v98, %v317
    %v329 = vmul.f32 %v99, %v317
    %v330 = vmul.f32 %v100, %v317
    %v331 = vmul.f32 %v101, %v317
    %v332 = vmul.f32 %v102, %v317
    %v333 = vmul.f32 %v103, %v317
    %v334 = vmul.f32 %v104, %v317
    %v335 = vmul.f32 %v105, %v317
    %v336 = vmul.f32 %v106, %v317
    %v337 = vmul.f32 %v107, %v317
    %v338 = vmul.f32 %v108, %v317
    %v339 = vmul.f32 %v109, %v317
    %v340 = vmul.f32 %v110, %v317
    %v341 = vmul.f32 %v111, %v317
    %v342 = vmul.f32 %v112, %v317
    %v343 = vadd.f32 %v292, %v318
    %v344 = vadd.f32 %v293, %v319
    %v345 = vadd.f32 %v294, %v320
    %v346 = vadd.f32 %v295, %v321
    %v347 = vadd.f32 %v296, %v322
    %v348 = vadd.f32 %v297, %v323
    %v349 = vadd.f32 %v298, %v324
    %v350 = vadd.f32 %v299, %v325
    %v351 = vadd.f32 %v300, %v326
    %v352 = vadd.f32 %v301, %v327
    %v353 = vadd.f32 %v302, %v328
    %v354 = vadd.f32 %v303, %v329
    %v355 = vadd.f32 %v304, %v330
    %v356 = vadd.f32 %v305, %v331
    %v357 = vadd.f32 %v306, %v332
    %v358 = vadd.f32 %v307, %v333
    %v359 = vadd.f32 %v308, %v334
    %v360 = vadd.f32 %v309, %v335
    %v361 = vadd.f32 %v310, %v336
    %v362 = vadd.f32 %v311, %v337
    %v363 = vadd.f32 %v312, %v338
    %v364 = vadd.f32 %v313, %v339
    %v365 = vadd.f32 %v314, %v340
    %v366 = vadd.f32 %v315, %v341
    %v367 = vadd.f32 %v316, %v342
    %v368 = vperm.slane %v113, 2
    %v369 = vmul.f32 %v218, %v368
    %v370 = vmul.f32 %v220, %v368
    %v371 = vmul.f32 %v222, %v368
    %v372 = vmul.f32 %v224, %v368
    %v373 = vmul.f32 %v226, %v368
    %v374 = vmul.f32 %v228, %v368
    %v375 = vmul.f32 %v230, %v368
    %v376 = vmul.f32 %v232, %v368
    %v377 = vmul.f32 %v234, %v368
    %v378 = vmul.f32 %v236, %v368
    %v379 = vmul.f32 %v238, %v368
    %v380 = vmul.f32 %v240, %v368
    %v381 = vmul.f32 %v242, %v368
    %v382 = vmul.f32 %v244, %v368
    %v383 = vmul.f32 %v246, %v368
    %v384 = vmul.f32 %v248, %v368
    %v385 = vmul.f32 %v250, %v368
    %v386 = vmul.f32 %v252, %v368
    %v387 = vmul.f32 %v254, %v368
    %v388 = vmul.f32 %v256, %v368
    %v389 = vmul.f32 %v258, %v368
    %v390 = vmul.f32 %v260, %v368
    %v391 = vmul.f32 %v262, %v368
    %v392 = vmul.f32 %v264, %v368
    %v393 = vmul.f32 %v290, %v368
    %v394 = vadd.f32 %v343, %v369
    %v395 = vadd.f32 %v344, %v370
    %v396 = vadd.f32 %v345, %v371
    %v397 = vadd.f32 %v346, %v372
    %v398 = vadd.f32 %v347, %v373
    %v399 = vadd.f32 %v348, %v374
    %v400 = vadd.f32 %v349, %v375
    %v401 = vadd.f32 %v350, %v376
    %v402 = vadd.f32 %v351, %v377
    %v403 = vadd.f32 %v352, %v378
    %v404 = vadd.f32 %v353, %v379
    %v405 = vadd.f32 %v354, %v380
    %v406 = vadd.f32 %v355, %v381
    %v407 = vadd.f32 %v356, %v382
    %v408 = vadd.f32 %v357, %v383
    %v409 = vadd.f32 %v358, %v384
    %v410 = vadd.f32 %v359, %v385
    %v411 = vadd.f32 %v360, %v386
    %v412 = vadd.f32 %v361, %v387
    %v413 = vadd.f32 %v362, %v388
    %v414 = vadd.f32 %v363, %v389
    %v415 = vadd.f32 %v364, %v390
    %v416 = vadd.f32 %v365, %v391
    %v417 = vadd.f32 %v366, %v392
    %v418 = vadd.f32 %v367, %v393
    %v419 = vld [vmem:[%s2] sm:$0x1]
    %v421 = vperm.slane %v419, 0
    %v423 = vadd.f32 %v394, %v421
    %v424 = vadd.f32 %v395, %v421
    %v425 = vadd.f32 %v396, %v421
    %v426 = vadd.f32 %v397, %v421
    %v427 = vadd.f32 %v398, %v421
    %v428 = vadd.f32 %v399, %v421
    %v429 = vadd.f32 %v400, %v421
    %v430 = vadd.f32 %v401, %v421
    %v431 = vadd.f32 %v402, %v421
    %v432 = vadd.f32 %v403, %v421
    %v433 = vadd.f32 %v404, %v421
    %v434 = vadd.f32 %v405, %v421
    %v435 = vadd.f32 %v406, %v421
    %v436 = vadd.f32 %v407, %v421
    %v437 = vadd.f32 %v408, %v421
    %v438 = vadd.f32 %v409, %v421
    %v439 = vadd.f32 %v410, %v421
    %v440 = vadd.f32 %v411, %v421
    %v441 = vadd.f32 %v412, %v421
    %v442 = vadd.f32 %v413, %v421
    %v443 = vadd.f32 %v414, %v421
    %v444 = vadd.f32 %v415, %v421
    %v445 = vadd.f32 %v416, %v421
    %v446 = vadd.f32 %v417, %v421
    %v447 = vadd.f32 %v418, %v421
    %v448 = vmax.f32 %v423, 0.0
    %v449 = vmax.f32 %v424, 0.0
    %v450 = vmax.f32 %v425, 0.0
    %v451 = vmax.f32 %v426, 0.0
    %v452 = vmax.f32 %v427, 0.0
    %v453 = vmax.f32 %v428, 0.0
    %v454 = vmax.f32 %v429, 0.0
    %v455 = vmax.f32 %v430, 0.0
    %v456 = vmax.f32 %v431, 0.0
    %v457 = vmax.f32 %v432, 0.0
    %v458 = vmax.f32 %v433, 0.0
    %v459 = vmax.f32 %v434, 0.0
    %v460 = vmax.f32 %v435, 0.0
    %v461 = vmax.f32 %v436, 0.0
    %v462 = vmax.f32 %v437, 0.0
    %v463 = vmax.f32 %v438, 0.0
    %v464 = vmax.f32 %v439, 0.0
    %v465 = vmax.f32 %v440, 0.0
    %v466 = vmax.f32 %v441, 0.0
    %v467 = vmax.f32 %v442, 0.0
    %v468 = vmax.f32 %v443, 0.0
    %v469 = vmax.f32 %v444, 0.0
    %v470 = vmax.f32 %v445, 0.0
    %v471 = vmax.f32 %v446, 0.0
    %v472 = vmax.f32 %v447, 0.0
    %v498 = vrot.slane %v448, 2
    %v499 = vrot.slane %v448, 4
    %v500 = vrot.slane %v448, 6
    %v501 = vrot.slane %v449, 2
    %v502 = vrot.slane %v449, 4
    %v503 = vrot.slane %v449, 6
    %v504 = vrot.slane %v450, 2
    %v505 = vrot.slane %v450, 4
    %v506 = vrot.slane %v450, 6
    %v507 = vrot.slane %v451, 2
    %v508 = vrot.slane %v451, 4
    %v509 = vrot.slane %v451, 6
    %v510 = vrot.slane %v452, 2
    %v511 = vrot.slane %v452, 4
    %v512 = vrot.slane %v452, 6
    %v513 = vrot.slane %v453, 2
    %v514 = vrot.slane %v453, 4
    %v515 = vrot.slane %v453, 6
    %v516 = vrot.slane %v454, 2
    %v517 = vrot.slane %v454, 4
    %v518 = vrot.slane %v454, 6
    %v519 = vrot.slane %v455, 2
    %v520 = vrot.slane %v455, 4
    %v521 = vrot.slane %v455, 6
    %v522 = vrot.slane %v456, 2
    %v523 = vrot.slane %v456, 4
    %v524 = vrot.slane %v456, 6
    %v525 = vrot.slane %v457, 2
    %v526 = vrot.slane %v457, 4
    %v527 = vrot.slane %v457, 6
    %v528 = vrot.slane %v458, 2
    %v529 = vrot.slane %v458, 4
    %v530 = vrot.slane %v458, 6
    %v531 = vrot.slane %v459, 2
    %v532 = vrot.slane %v459, 4
    %v533 = vrot.slane %v459, 6
    %v534 = vrot.slane %v460, 2
    %v535 = vrot.slane %v460, 4
    %v536 = vrot.slane %v460, 6
    %v537 = vrot.slane %v461, 2
    %v538 = vrot.slane %v461, 4
    %v539 = vrot.slane %v461, 6
    %v540 = vrot.slane %v462, 2
    %v541 = vrot.slane %v462, 4
    %v542 = vrot.slane %v462, 6
    %v543 = vrot.slane %v463, 2
    %v544 = vrot.slane %v463, 4
    %v545 = vrot.slane %v463, 6
    %v546 = vrot.slane %v464, 2
    %v547 = vrot.slane %v464, 4
    %v548 = vrot.slane %v464, 6
    %v549 = vrot.slane %v465, 2
    %v550 = vrot.slane %v465, 4
    %v551 = vrot.slane %v465, 6
    %v552 = vrot.slane %v466, 2
    %v553 = vrot.slane %v466, 4
    %v554 = vrot.slane %v466, 6
    %v555 = vrot.slane %v467, 2
    %v556 = vrot.slane %v467, 4
    %v557 = vrot.slane %v467, 6
    %v558 = vrot.slane %v468, 2
    %v559 = vrot.slane %v468, 4
    %v560 = vrot.slane %v468, 6
    %v561 = vrot.slane %v469, 2
    %v562 = vrot.slane %v469, 4
    %v563 = vrot.slane %v469, 6
    %v564 = vrot.slane %v470, 2
    %v565 = vrot.slane %v470, 4
    %v566 = vrot.slane %v470, 6
    %v567 = vrot.slane %v471, 2
    %v568 = vrot.slane %v471, 4
    %v569 = vrot.slane %v471, 6
    %v570 = vrot.slane %v472, 2
    %v571 = vrot.slane %v472, 4
    %v572 = vrot.slane %v472, 6
    %v648 = vrot.slane %v448, 7
    %v649 = vrot.slane %v648, 2
    %v650 = vrot.slane %v498, 7
    %v651 = vrot.slane %v650, 2
    %v652 = vrot.slane %v499, 7
    %v653 = vrot.slane %v652, 2
    %v654 = vrot.slane %v500, 7
    %v655 = vrot.slane %v654, 2
    %v656 = vrot.slane %v449, 7
    %v657 = vrot.slane %v656, 2
    %v658 = vrot.slane %v501, 7
    %v659 = vrot.slane %v658, 2
    %v660 = vrot.slane %v502, 7
    %v661 = vrot.slane %v660, 2
    %v662 = vrot.slane %v503, 7
    %v663 = vrot.slane %v662, 2
    %v664 = vrot.slane %v450, 7
    %v665 = vrot.slane %v664, 2
    %v666 = vrot.slane %v504, 7
    %v667 = vrot.slane %v666, 2
    %v668 = vrot.slane %v505, 7
    %v669 = vrot.slane %v668, 2
    %v670 = vrot.slane %v506, 7
    %v671 = vrot.slane %v670, 2
    %v672 = vrot.slane %v451, 7
    %v673 = vrot.slane %v672, 2
    %v674 = vrot.slane %v507, 7
    %v675 = vrot.slane %v674, 2
    %v676 = vrot.slane %v508, 7
    %v677 = vrot.slane %v676, 2
    %v678 = vrot.slane %v509, 7
    %v679 = vrot.slane %v678, 2
    %v680 = vrot.slane %v452, 7
    %v681 = vrot.slane %v680, 2
    %v682 = vrot.slane %v510, 7
    %v683 = vrot.slane %v682, 2
    %v684 = vrot.slane %v511, 7
    %v685 = vrot.slane %v684, 2
    %v686 = vrot.slane %v512, 7
    %v687 = vrot.slane %v686, 2
    %v688 = vrot.slane %v453, 7
    %v689 = vrot.slane %v688, 2
    %v690 = vrot.slane %v513, 7
    %v691 = vrot.slane %v690, 2
    %v692 = vrot.slane %v514, 7
    %v693 = vrot.slane %v692, 2
    %v694 = vrot.slane %v515, 7
    %v695 = vrot.slane %v694, 2
    %v696 = vrot.slane %v454, 7
    %v697 = vrot.slane %v696, 2
    %v698 = vrot.slane %v516, 7
    %v699 = vrot.slane %v698, 2
    %v700 = vrot.slane %v517, 7
    %v701 = vrot.slane %v700, 2
    %v702 = vrot.slane %v518, 7
    %v703 = vrot.slane %v702, 2
    %v704 = vrot.slane %v455, 7
    %v705 = vrot.slane %v704, 2
    %v706 = vrot.slane %v519, 7
    %v707 = vrot.slane %v706, 2
    %v708 = vrot.slane %v520, 7
    %v709 = vrot.slane %v708, 2
    %v710 = vrot.slane %v521, 7
    %v711 = vrot.slane %v710, 2
    %v712 = vrot.slane %v456, 7
    %v713 = vrot.slane %v712, 2
    %v714 = vrot.slane %v522, 7
    %v715 = vrot.slane %v714, 2
    %v716 = vrot.slane %v523, 7
    %v717 = vrot.slane %v716, 2
    %v718 = vrot.slane %v524, 7
    %v719 = vrot.slane %v718, 2
    %v720 = vrot.slane %v457, 7
    %v721 = vrot.slane %v720, 2
    %v722 = vrot.slane %v525, 7
    %v723 = vrot.slane %v722, 2
    %v724 = vrot.slane %v526, 7
    %v725 = vrot.slane %v724, 2
    %v726 = vrot.slane %v527, 7
    %v727 = vrot.slane %v726, 2
    %v728 = vrot.slane %v458, 7
    %v729 = vrot.slane %v728, 2
    %v730 = vrot.slane %v528, 7
    %v731 = vrot.slane %v730, 2
    %v732 = vrot.slane %v529, 7
    %v733 = vrot.slane %v732, 2
    %v734 = vrot.slane %v530, 7
    %v735 = vrot.slane %v734, 2
    %v736 = vrot.slane %v459, 7
    %v737 = vrot.slane %v736, 2
    %v738 = vrot.slane %v531, 7
    %v739 = vrot.slane %v738, 2
    %v740 = vrot.slane %v532, 7
    %v741 = vrot.slane %v740, 2
    %v742 = vrot.slane %v533, 7
    %v743 = vrot.slane %v742, 2
    %v744 = vrot.slane %v460, 7
    %v745 = vrot.slane %v744, 2
    %v746 = vrot.slane %v534, 7
    %v747 = vrot.slane %v746, 2
    %v748 = vrot.slane %v535, 7
    %v749 = vrot.slane %v748, 2
    %v750 = vrot.slane %v536, 7
    %v751 = vrot.slane %v750, 2
    %v752 = vrot.slane %v461, 7
    %v753 = vrot.slane %v752, 2
    %v754 = vrot.slane %v537, 7
    %v755 = vrot.slane %v754, 2
    %v756 = vrot.slane %v538, 7
    %v757 = vrot.slane %v756, 2
    %v758 = vrot.slane %v539, 7
    %v759 = vrot.slane %v758, 2
    %v760 = vrot.slane %v462, 7
    %v761 = vrot.slane %v760, 2
    %v762 = vrot.slane %v540, 7
    %v763 = vrot.slane %v762, 2
    %v764 = vrot.slane %v541, 7
    %v765 = vrot.slane %v764, 2
    %v766 = vrot.slane %v542, 7
    %v767 = vrot.slane %v766, 2
    %v768 = vrot.slane %v463, 7
    %v769 = vrot.slane %v768, 2
    %v770 = vrot.slane %v543, 7
    %v771 = vrot.slane %v770, 2
    %v772 = vrot.slane %v544, 7
    %v773 = vrot.slane %v772, 2
    %v774 = vrot.slane %v545, 7
    %v775 = vrot.slane %v774, 2
    %v776 = vrot.slane %v464, 7
    %v777 = vrot.slane %v776, 2
    %v778 = vrot.slane %v546, 7
    %v779 = vrot.slane %v778, 2
    %v780 = vrot.slane %v547, 7
    %v781 = vrot.slane %v780, 2
    %v782 = vrot.slane %v548, 7
    %v783 = vrot.slane %v782, 2
    %v784 = vrot.slane %v465, 7
    %v785 = vrot.slane %v784, 2
    %v786 = vrot.slane %v549, 7
    %v787 = vrot.slane %v786, 2
    %v788 = vrot.slane %v550, 7
    %v789 = vrot.slane %v788, 2
    %v790 = vrot.slane %v551, 7
    %v791 = vrot.slane %v790, 2
    %v792 = vrot.slane %v466, 7
    %v793 = vrot.slane %v792, 2
    %v794 = vrot.slane %v552, 7
    %v795 = vrot.slane %v794, 2
    %v796 = vrot.slane %v553, 7
    %v797 = vrot.slane %v796, 2
    %v798 = vrot.slane %v554, 7
    %v799 = vrot.slane %v798, 2
    %v800 = vrot.slane %v467, 7
    %v801 = vrot.slane %v800, 2
    %v802 = vrot.slane %v555, 7
    %v803 = vrot.slane %v802, 2
    %v804 = vrot.slane %v556, 7
    %v805 = vrot.slane %v804, 2
    %v806 = vrot.slane %v557, 7
    %v807 = vrot.slane %v806, 2
    %v808 = vrot.slane %v468, 7
    %v809 = vrot.slane %v808, 2
    %v810 = vrot.slane %v558, 7
    %v811 = vrot.slane %v810, 2
    %v812 = vrot.slane %v559, 7
    %v813 = vrot.slane %v812, 2
    %v814 = vrot.slane %v560, 7
    %v815 = vrot.slane %v814, 2
    %v816 = vrot.slane %v469, 7
    %v817 = vrot.slane %v816, 2
    %v818 = vrot.slane %v561, 7
    %v819 = vrot.slane %v818, 2
    %v820 = vrot.slane %v562, 7
    %v821 = vrot.slane %v820, 2
    %v822 = vrot.slane %v563, 7
    %v823 = vrot.slane %v822, 2
    %v824 = vrot.slane %v470, 7
    %v825 = vrot.slane %v824, 2
    %v826 = vrot.slane %v564, 7
    %v827 = vrot.slane %v826, 2
    %v828 = vrot.slane %v565, 7
    %v829 = vrot.slane %v828, 2
    %v830 = vrot.slane %v566, 7
    %v831 = vrot.slane %v830, 2
    %v832 = vrot.slane %v471, 7
    %v833 = vrot.slane %v832, 2
    %v834 = vrot.slane %v567, 7
    %v835 = vrot.slane %v834, 2
    %v836 = vrot.slane %v568, 7
    %v837 = vrot.slane %v836, 2
    %v838 = vrot.slane %v569, 7
    %v839 = vrot.slane %v838, 2
    %v840 = vrot.slane %v472, 7
    %v841 = vrot.slane %v840, 2
    %v842 = vrot.slane %v570, 7
    %v843 = vrot.slane %v842, 2
    %v844 = vrot.slane %v571, 7
    %v845 = vrot.slane %v844, 2
    %v846 = vrot.slane %v572, 7
    %v847 = vrot.slane %v846, 2
    %v948 = vmax.f32 %v448, %v649
    %v949 = vmax.f32 %v498, %v651
    %v950 = vmax.f32 %v499, %v653
    %v951 = vmax.f32 %v500, %v655
    %v952 = vmax.f32 %v449, %v657
    %v953 = vmax.f32 %v501, %v659
    %v954 = vmax.f32 %v502, %v661
    %v955 = vmax.f32 %v503, %v663
    %v956 = vmax.f32 %v450, %v665
    %v957 = vmax.f32 %v504, %v667
    %v958 = vmax.f32 %v505, %v669
    %v959 = vmax.f32 %v506, %v671
    %v960 = vmax.f32 %v451, %v673
    %v961 = vmax.f32 %v507, %v675
    %v962 = vmax.f32 %v508, %v677
    %v963 = vmax.f32 %v509, %v679
    %v964 = vmax.f32 %v452, %v681
    %v965 = vmax.f32 %v510, %v683
    %v966 = vmax.f32 %v511, %v685
    %v967 = vmax.f32 %v512, %v687
    %v968 = vmax.f32 %v453, %v689
    %v969 = vmax.f32 %v513, %v691
    %v970 = vmax.f32 %v514, %v693
    %v971 = vmax.f32 %v515, %v695
    %v972 = vmax.f32 %v454, %v697
    %v973 = vmax.f32 %v516, %v699
    %v974 = vmax.f32 %v517, %v701
    %v975 = vmax.f32 %v518, %v703
    %v976 = vmax.f32 %v455, %v705
    %v977 = vmax.f32 %v519, %v707
    %v978 = vmax.f32 %v520, %v709
    %v979 = vmax.f32 %v521, %v711
    %v980 = vmax.f32 %v456, %v713
    %v981 = vmax.f32 %v522, %v715
    %v982 = vmax.f32 %v523, %v717
    %v983 = vmax.f32 %v524, %v719
    %v984 = vmax.f32 %v457, %v721
    %v985 = vmax.f32 %v525, %v723
    %v986 = vmax.f32 %v526, %v725
    %v987 = vmax.f32 %v527, %v727
    %v988 = vmax.f32 %v458, %v729
    %v989 = vmax.f32 %v528, %v731
    %v990 = vmax.f32 %v529, %v733
    %v991 = vmax.f32 %v530, %v735
    %v992 = vmax.f32 %v459, %v737
    %v993 = vmax.f32 %v531, %v739
    %v994 = vmax.f32 %v532, %v741
    %v995 = vmax.f32 %v533, %v743
    %v996 = vmax.f32 %v460, %v745
    %v997 = vmax.f32 %v534, %v747
    %v998 = vmax.f32 %v535, %v749
    %v999 = vmax.f32 %v536, %v751
    %v1000 = vmax.f32 %v461, %v753
    %v1001 = vmax.f32 %v537, %v755
    %v1002 = vmax.f32 %v538, %v757
    %v1003 = vmax.f32 %v539, %v759
    %v1004 = vmax.f32 %v462, %v761
    %v1005 = vmax.f32 %v540, %v763
    %v1006 = vmax.f32 %v541, %v765
    %v1007 = vmax.f32 %v542, %v767
    %v1008 = vmax.f32 %v463, %v769
    %v1009 = vmax.f32 %v543, %v771
    %v1010 = vmax.f32 %v544, %v773
    %v1011 = vmax.f32 %v545, %v775
    %v1012 = vmax.f32 %v464, %v777
    %v1013 = vmax.f32 %v546, %v779
    %v1014 = vmax.f32 %v547, %v781
    %v1015 = vmax.f32 %v548, %v783
    %v1016 = vmax.f32 %v465, %v785
    %v1017 = vmax.f32 %v549, %v787
    %v1018 = vmax.f32 %v550, %v789
    %v1019 = vmax.f32 %v551, %v791
    %v1020 = vmax.f32 %v466, %v793
    %v1021 = vmax.f32 %v552, %v795
    %v1022 = vmax.f32 %v553, %v797
    %v1023 = vmax.f32 %v554, %v799
    %v1024 = vmax.f32 %v467, %v801
    %v1025 = vmax.f32 %v555, %v803
    %v1026 = vmax.f32 %v556, %v805
    %v1027 = vmax.f32 %v557, %v807
    %v1028 = vmax.f32 %v468, %v809
    %v1029 = vmax.f32 %v558, %v811
    %v1030 = vmax.f32 %v559, %v813
    %v1031 = vmax.f32 %v560, %v815
    %v1032 = vmax.f32 %v469, %v817
    %v1033 = vmax.f32 %v561, %v819
    %v1034 = vmax.f32 %v562, %v821
    %v1035 = vmax.f32 %v563, %v823
    %v1036 = vmax.f32 %v470, %v825
    %v1037 = vmax.f32 %v564, %v827
    %v1038 = vmax.f32 %v565, %v829
    %v1039 = vmax.f32 %v566, %v831
    %v1040 = vmax.f32 %v471, %v833
    %v1041 = vmax.f32 %v567, %v835
    %v1042 = vmax.f32 %v568, %v837
    %v1043 = vmax.f32 %v569, %v839
    %v1044 = vmax.f32 %v472, %v841
    %v1045 = vmax.f32 %v570, %v843
    %v1046 = vmax.f32 %v571, %v845
    %v1047 = vmax.f32 %v572, %v847
    %v1147 = vperm.slane %v948, 0
    %v1148 = vperm.slane %v949, 0
    %v1149 = vperm.slane %v950, 0
    %v1150 = vperm.slane %v951, 0
    %v1151 = vperm.slane %v952, 0
    %v1152 = vperm.slane %v953, 0
    %v1153 = vperm.slane %v954, 0
    %v1154 = vperm.slane %v955, 0
    %v1155 = vperm.slane %v956, 0
    %v1156 = vperm.slane %v957, 0
    %v1157 = vperm.slane %v958, 0
    %v1158 = vperm.slane %v959, 0
    %v1159 = vperm.slane %v960, 0
    %v1160 = vperm.slane %v961, 0
    %v1161 = vperm.slane %v962, 0
    %v1162 = vperm.slane %v963, 0
    %v1163 = vperm.slane %v964, 0
    %v1164 = vperm.slane %v965, 0
    %v1165 = vperm.slane %v966, 0
    %v1166 = vperm.slane %v967, 0
    %v1167 = vperm.slane %v968, 0
    %v1168 = vperm.slane %v969, 0
    %v1169 = vperm.slane %v970, 0
    %v1170 = vperm.slane %v971, 0
    %v1171 = vperm.slane %v972, 0
    %v1172 = vperm.slane %v973, 0
    %v1173 = vperm.slane %v974, 0
    %v1174 = vperm.slane %v975, 0
    %v1175 = vperm.slane %v976, 0
    %v1176 = vperm.slane %v977, 0
    %v1177 = vperm.slane %v978, 0
    %v1178 = vperm.slane %v979, 0
    %v1179 = vperm.slane %v980, 0
    %v1180 = vperm.slane %v981, 0
    %v1181 = vperm.slane %v982, 0
    %v1182 = vperm.slane %v983, 0
    %v1183 = vperm.slane %v984, 0
    %v1184 = vperm.slane %v985, 0
    %v1185 = vperm.slane %v986, 0
    %v1186 = vperm.slane %v987, 0
    %v1187 = vperm.slane %v988, 0
    %v1188 = vperm.slane %v989, 0
    %v1189 = vperm.slane %v990, 0
    %v1190 = vperm.slane %v991, 0
    %v1191 = vperm.slane %v992, 0
    %v1192 = vperm.slane %v993, 0
    %v1193 = vperm.slane %v994, 0
    %v1194 = vperm.slane %v995, 0
    %v1195 = vperm.slane %v996, 0
    %v1196 = vperm.slane %v997, 0
    %v1197 = vperm.slane %v998, 0
    %v1198 = vperm.slane %v999, 0
    %v1199 = vperm.slane %v1000, 0
    %v1200 = vperm.slane %v1001, 0
    %v1201 = vperm.slane %v1002, 0
    %v1202 = vperm.slane %v1003, 0
    %v1203 = vperm.slane %v1004, 0
    %v1204 = vperm.slane %v1005, 0
    %v1205 = vperm.slane %v1006, 0
    %v1206 = vperm.slane %v1007, 0
    %v1207 = vperm.slane %v1008, 0
    %v1208 = vperm.slane %v1009, 0
    %v1209 = vperm.slane %v1010, 0
    %v1210 = vperm.slane %v1011, 0
    %v1211 = vperm.slane %v1012, 0
    %v1212 = vperm.slane %v1013, 0
    %v1213 = vperm.slane %v1014, 0
    %v1214 = vperm.slane %v1015, 0
    %v1215 = vperm.slane %v1016, 0
    %v1216 = vperm.slane %v1017, 0
    %v1217 = vperm.slane %v1018, 0
    %v1218 = vperm.slane %v1019, 0
    %v1219 = vperm.slane %v1020, 0
    %v1220 = vperm.slane %v1021, 0
    %v1221 = vperm.slane %v1022, 0
    %v1222 = vperm.slane %v1023, 0
    %v1223 = vperm.slane %v1024, 0
    %v1224 = vperm.slane %v1025, 0
    %v1225 = vperm.slane %v1026, 0
    %v1226 = vperm.slane %v1027, 0
    %v1227 = vperm.slane %v1028, 0
    %v1228 = vperm.slane %v1029, 0
    %v1229 = vperm.slane %v1030, 0
    %v1230 = vperm.slane %v1031, 0
    %v1231 = vperm.slane %v1032, 0
    %v1232 = vperm.slane %v1033, 0
    %v1233 = vperm.slane %v1034, 0
    %v1234 = vperm.slane %v1035, 0
    %v1235 = vperm.slane %v1036, 0
    %v1236 = vperm.slane %v1037, 0
    %v1237 = vperm.slane %v1038, 0
    %v1238 = vperm.slane %v1039, 0
    %v1239 = vperm.slane %v1040, 0
    %v1240 = vperm.slane %v1041, 0
    %v1241 = vperm.slane %v1042, 0
    %v1242 = vperm.slane %v1043, 0
    %v1243 = vperm.slane %v1044, 0
    %v1244 = vperm.slane %v1045, 0
    %v1245 = vperm.slane %v1046, 0
    %vm1246 = vcmask 1042434
    %v1247 = vsel %vm1246, %v1148, %v1147
    %vm1248 = vcmask 1043459
    %v1249 = vsel %vm1248, %v1149, %v1247
    %vm1250 = vcmask 1044484
    %v1251 = vsel %vm1250, %v1150, %v1249
    %vm1252 = vcmask 1045509
    %v1253 = vsel %vm1252, %v1151, %v1251
    %vm1254 = vcmask 1046534
    %v1255 = vsel %vm1254, %v1152, %v1253
    %vm1256 = vcmask 1047559
    %v1257 = vsel %vm1256, %v1153, %v1255
    %vm1258 = vcmask 1041409
    %v1259 = vsel %vm1258, %v1155, %v1154
    %v1260 = vsel %vm1246, %v1156, %v1259
    %v1261 = vsel %vm1248, %v1157, %v1260
    %v1262 = vsel %vm1250, %v1158, %v1261
    %v1263 = vsel %vm1252, %v1159, %v1262
    %v1264 = vsel %vm1254, %v1160, %v1263
    %v1265 = vsel %vm1256, %v1161, %v1264
    %v1266 = vsel %vm1258, %v1163, %v1162
    %v1267 = vsel %vm1246, %v1164, %v1266
    %v1268 = vsel %vm1248, %v1165, %v1267
    %v1269 = vsel %vm1250, %v1166, %v1268
    %v1270 = vsel %vm1252, %v1167, %v1269
    %v1271 = vsel %vm1254, %v1168, %v1270
    %v1272 = vsel %vm1256, %v1169, %v1271
    %v1273 = vsel %vm1258, %v1171, %v1170
    %v1274 = vsel %vm1246, %v1172, %v1273
    %v1275 = vsel %vm1248, %v1173, %v1274
    %v1276 = vsel %vm1250, %v1174, %v1275
    %v1277 = vsel %vm1252, %v1175, %v1276
    %v1278 = vsel %vm1254, %v1176, %v1277
    %v1279 = vsel %vm1256, %v1177, %v1278
    %v1280 = vsel %vm1258, %v1179, %v1178
    %v1281 = vsel %vm1246, %v1180, %v1280
    %v1282 = vsel %vm1248, %v1181, %v1281
    %v1283 = vsel %vm1250, %v1182, %v1282
    %v1284 = vsel %vm1252, %v1183, %v1283
    %v1285 = vsel %vm1254, %v1184, %v1284
    %v1286 = vsel %vm1256, %v1185, %v1285
    %v1287 = vsel %vm1258, %v1187, %v1186
    %v1288 = vsel %vm1246, %v1188, %v1287
    %v1289 = vsel %vm1248, %v1189, %v1288
    %v1290 = vsel %vm1250, %v1190, %v1289
    %v1291 = vsel %vm1252, %v1191, %v1290
    %v1292 = vsel %vm1254, %v1192, %v1291
    %v1293 = vsel %vm1256, %v1193, %v1292
    %v1294 = vsel %vm1258, %v1195, %v1194
    %v1295 = vsel %vm1246, %v1196, %v1294
    %v1296 = vsel %vm1248, %v1197, %v1295
    %v1297 = vsel %vm1250, %v1198, %v1296
    %v1298 = vsel %vm1252, %v1199, %v1297
    %v1299 = vsel %vm1254, %v1200, %v1298
    %v1300 = vsel %vm1256, %v1201, %v1299
    %v1301 = vsel %vm1258, %v1203, %v1202
    %v1302 = vsel %vm1246, %v1204, %v1301
    %v1303 = vsel %vm1248, %v1205, %v1302
    %v1304 = vsel %vm1250, %v1206, %v1303
    %v1305 = vsel %vm1252, %v1207, %v1304
    %v1306 = vsel %vm1254, %v1208, %v1305
    %v1307 = vsel %vm1256, %v1209, %v1306
    %v1308 = vsel %vm1258, %v1211, %v1210
    %v1309 = vsel %vm1246, %v1212, %v1308
    %v1310 = vsel %vm1248, %v1213, %v1309
    %v1311 = vsel %vm1250, %v1214, %v1310
    %v1312 = vsel %vm1252, %v1215, %v1311
    %v1313 = vsel %vm1254, %v1216, %v1312
    %v1314 = vsel %vm1256, %v1217, %v1313
    %v1315 = vsel %vm1258, %v1219, %v1218
    %v1316 = vsel %vm1246, %v1220, %v1315
    %v1317 = vsel %vm1248, %v1221, %v1316
    %v1318 = vsel %vm1250, %v1222, %v1317
    %v1319 = vsel %vm1252, %v1223, %v1318
    %v1320 = vsel %vm1254, %v1224, %v1319
    %v1321 = vsel %vm1256, %v1225, %v1320
    %v1322 = vsel %vm1258, %v1227, %v1226
    %v1323 = vsel %vm1246, %v1228, %v1322
    %v1324 = vsel %vm1248, %v1229, %v1323
    %v1325 = vsel %vm1250, %v1230, %v1324
    %v1326 = vsel %vm1252, %v1231, %v1325
    %v1327 = vsel %vm1254, %v1232, %v1326
    %v1328 = vsel %vm1256, %v1233, %v1327
    %v1329 = vsel %vm1258, %v1235, %v1234
    %v1330 = vsel %vm1246, %v1236, %v1329
    %v1331 = vsel %vm1248, %v1237, %v1330
    %v1332 = vsel %vm1250, %v1238, %v1331
    %v1333 = vsel %vm1252, %v1239, %v1332
    %v1334 = vsel %vm1254, %v1240, %v1333
    %v1335 = vsel %vm1256, %v1241, %v1334
    %v1336 = vsel %vm1258, %v1243, %v1242
    %v1337 = vsel %vm1246, %v1244, %v1336
    %v1338 = vsel %vm1248, %v1245, %v1337
    %v1352 = vsel %vm139, 0.0, %v1257
    %v1354 = vperm.slane %v1047, 0
    %v1355 = vsel %vm1258, %v1149, %v1148
    %v1356 = vsel %vm1246, %v1150, %v1355
    %v1357 = vsel %vm1248, %v1151, %v1356
    %v1358 = vsel %vm1250, %v1152, %v1357
    %v1359 = vsel %vm1252, %v1153, %v1358
    %v1360 = vsel %vm1254, %v1154, %v1359
    %v1361 = vsel %vm1256, %v1155, %v1360
    %v1362 = vsel %vm1258, %v1157, %v1156
    %v1363 = vsel %vm1246, %v1158, %v1362
    %v1364 = vsel %vm1248, %v1159, %v1363
    %v1365 = vsel %vm1250, %v1160, %v1364
    %v1366 = vsel %vm1252, %v1161, %v1365
    %v1367 = vsel %vm1254, %v1162, %v1366
    %v1368 = vsel %vm1256, %v1163, %v1367
    %v1369 = vsel %vm1258, %v1165, %v1164
    %v1370 = vsel %vm1246, %v1166, %v1369
    %v1371 = vsel %vm1248, %v1167, %v1370
    %v1372 = vsel %vm1250, %v1168, %v1371
    %v1373 = vsel %vm1252, %v1169, %v1372
    %v1374 = vsel %vm1254, %v1170, %v1373
    %v1375 = vsel %vm1256, %v1171, %v1374
    %v1376 = vsel %vm1258, %v1173, %v1172
    %v1377 = vsel %vm1246, %v1174, %v1376
    %v1378 = vsel %vm1248, %v1175, %v1377
    %v1379 = vsel %vm1250, %v1176, %v1378
    %v1380 = vsel %vm1252, %v1177, %v1379
    %v1381 = vsel %vm1254, %v1178, %v1380
    %v1382 = vsel %vm1256, %v1179, %v1381
    %v1383 = vsel %vm1258, %v1181, %v1180
    %v1384 = vsel %vm1246, %v1182, %v1383
    %v1385 = vsel %vm1248, %v1183, %v1384
    %v1386 = vsel %vm1250, %v1184, %v1385
    %v1387 = vsel %vm1252, %v1185, %v1386
    %v1388 = vsel %vm1254, %v1186, %v1387
    %v1389 = vsel %vm1256, %v1187, %v1388
    %v1390 = vsel %vm1258, %v1189, %v1188
    %v1391 = vsel %vm1246, %v1190, %v1390
    %v1392 = vsel %vm1248, %v1191, %v1391
    %v1393 = vsel %vm1250, %v1192, %v1392
    %v1394 = vsel %vm1252, %v1193, %v1393
    %v1395 = vsel %vm1254, %v1194, %v1394
    %v1396 = vsel %vm1256, %v1195, %v1395
    %v1397 = vsel %vm1258, %v1197, %v1196
    %v1398 = vsel %vm1246, %v1198, %v1397
    %v1399 = vsel %vm1248, %v1199, %v1398
    %v1400 = vsel %vm1250, %v1200, %v1399
    %v1401 = vsel %vm1252, %v1201, %v1400
    %v1402 = vsel %vm1254, %v1202, %v1401
    %v1403 = vsel %vm1256, %v1203, %v1402
    %v1404 = vsel %vm1258, %v1205, %v1204
    %v1405 = vsel %vm1246, %v1206, %v1404
    %v1406 = vsel %vm1248, %v1207, %v1405
    %v1407 = vsel %vm1250, %v1208, %v1406
    %v1408 = vsel %vm1252, %v1209, %v1407
    %v1409 = vsel %vm1254, %v1210, %v1408
    %v1410 = vsel %vm1256, %v1211, %v1409
    %v1411 = vsel %vm1258, %v1213, %v1212
    %v1412 = vsel %vm1246, %v1214, %v1411
    %v1413 = vsel %vm1248, %v1215, %v1412
    %v1414 = vsel %vm1250, %v1216, %v1413
    %v1415 = vsel %vm1252, %v1217, %v1414
    %v1416 = vsel %vm1254, %v1218, %v1415
    %v1417 = vsel %vm1256, %v1219, %v1416
    %v1418 = vsel %vm1258, %v1221, %v1220
    %v1419 = vsel %vm1246, %v1222, %v1418
    %v1420 = vsel %vm1248, %v1223, %v1419
    %v1421 = vsel %vm1250, %v1224, %v1420
    %v1422 = vsel %vm1252, %v1225, %v1421
    %v1423 = vsel %vm1254, %v1226, %v1422
    %v1424 = vsel %vm1256, %v1227, %v1423
    %v1425 = vsel %vm1258, %v1229, %v1228
    %v1426 = vsel %vm1246, %v1230, %v1425
    %v1427 = vsel %vm1248, %v1231, %v1426
    %v1428 = vsel %vm1250, %v1232, %v1427
    %v1429 = vsel %vm1252, %v1233, %v1428
    %v1430 = vsel %vm1254, %v1234, %v1429
    %v1431 = vsel %vm1256, %v1235, %v1430
    %v1432 = vsel %vm1258, %v1237, %v1236
    %v1433 = vsel %vm1246, %v1238, %v1432
    %v1434 = vsel %vm1248, %v1239, %v1433
    %v1435 = vsel %vm1250, %v1240, %v1434
    %v1436 = vsel %vm1252, %v1241, %v1435
    %v1437 = vsel %vm1254, %v1242, %v1436
    %v1438 = vsel %vm1256, %v1243, %v1437
    %v1439 = vsel %vm1258, %v1245, %v1244
    %v1440 = vsel %vm1246, %v1354, %v1439
    %vm1454 = vcmask 1042432
    %v1455 = vsel %vm1454, %v1440, 0.0
    %v1456 = vsel %vm1258, %v1148, %v1147
    %v1457 = vsel %vm1246, %v1149, %v1456
    %v1458 = vsel %vm1248, %v1150, %v1457
    %v1459 = vsel %vm1250, %v1151, %v1458
    %v1460 = vsel %vm1252, %v1152, %v1459
    %v1461 = vsel %vm1254, %v1153, %v1460
    %v1462 = vsel %vm1256, %v1154, %v1461
    %v1463 = vsel %vm1258, %v1156, %v1155
    %v1464 = vsel %vm1246, %v1157, %v1463
    %v1465 = vsel %vm1248, %v1158, %v1464
    %v1466 = vsel %vm1250, %v1159, %v1465
    %v1467 = vsel %vm1252, %v1160, %v1466
    %v1468 = vsel %vm1254, %v1161, %v1467
    %v1469 = vsel %vm1256, %v1162, %v1468
    %v1470 = vsel %vm1258, %v1164, %v1163
    %v1471 = vsel %vm1246, %v1165, %v1470
    %v1472 = vsel %vm1248, %v1166, %v1471
    %v1473 = vsel %vm1250, %v1167, %v1472
    %v1474 = vsel %vm1252, %v1168, %v1473
    %v1475 = vsel %vm1254, %v1169, %v1474
    %v1476 = vsel %vm1256, %v1170, %v1475
    %v1477 = vsel %vm1258, %v1172, %v1171
    %v1478 = vsel %vm1246, %v1173, %v1477
    %v1479 = vsel %vm1248, %v1174, %v1478
    %v1480 = vsel %vm1250, %v1175, %v1479
    %v1481 = vsel %vm1252, %v1176, %v1480
    %v1482 = vsel %vm1254, %v1177, %v1481
    %v1483 = vsel %vm1256, %v1178, %v1482
    %v1484 = vsel %vm1258, %v1180, %v1179
    %v1485 = vsel %vm1246, %v1181, %v1484
    %v1486 = vsel %vm1248, %v1182, %v1485
    %v1487 = vsel %vm1250, %v1183, %v1486
    %v1488 = vsel %vm1252, %v1184, %v1487
    %v1489 = vsel %vm1254, %v1185, %v1488
    %v1490 = vsel %vm1256, %v1186, %v1489
    %v1491 = vsel %vm1258, %v1188, %v1187
    %v1492 = vsel %vm1246, %v1189, %v1491
    %v1493 = vsel %vm1248, %v1190, %v1492
    %v1494 = vsel %vm1250, %v1191, %v1493
    %v1495 = vsel %vm1252, %v1192, %v1494
    %v1496 = vsel %vm1254, %v1193, %v1495
    %v1497 = vsel %vm1256, %v1194, %v1496
    %v1498 = vsel %vm1258, %v1196, %v1195
    %v1499 = vsel %vm1246, %v1197, %v1498
    %v1500 = vsel %vm1248, %v1198, %v1499
    %v1501 = vsel %vm1250, %v1199, %v1500
    %v1502 = vsel %vm1252, %v1200, %v1501
    %v1503 = vsel %vm1254, %v1201, %v1502
    %v1504 = vsel %vm1256, %v1202, %v1503
    %v1505 = vsel %vm1258, %v1204, %v1203
    %v1506 = vsel %vm1246, %v1205, %v1505
    %v1507 = vsel %vm1248, %v1206, %v1506
    %v1508 = vsel %vm1250, %v1207, %v1507
    %v1509 = vsel %vm1252, %v1208, %v1508
    %v1510 = vsel %vm1254, %v1209, %v1509
    %v1511 = vsel %vm1256, %v1210, %v1510
    %v1512 = vsel %vm1258, %v1212, %v1211
    %v1513 = vsel %vm1246, %v1213, %v1512
    %v1514 = vsel %vm1248, %v1214, %v1513
    %v1515 = vsel %vm1250, %v1215, %v1514
    %v1516 = vsel %vm1252, %v1216, %v1515
    %v1517 = vsel %vm1254, %v1217, %v1516
    %v1518 = vsel %vm1256, %v1218, %v1517
    %v1519 = vsel %vm1258, %v1220, %v1219
    %v1520 = vsel %vm1246, %v1221, %v1519
    %v1521 = vsel %vm1248, %v1222, %v1520
    %v1522 = vsel %vm1250, %v1223, %v1521
    %v1523 = vsel %vm1252, %v1224, %v1522
    %v1524 = vsel %vm1254, %v1225, %v1523
    %v1525 = vsel %vm1256, %v1226, %v1524
    %v1526 = vsel %vm1258, %v1228, %v1227
    %v1527 = vsel %vm1246, %v1229, %v1526
    %v1528 = vsel %vm1248, %v1230, %v1527
    %v1529 = vsel %vm1250, %v1231, %v1528
    %v1530 = vsel %vm1252, %v1232, %v1529
    %v1531 = vsel %vm1254, %v1233, %v1530
    %v1532 = vsel %vm1256, %v1234, %v1531
    %v1533 = vsel %vm1258, %v1236, %v1235
    %v1534 = vsel %vm1246, %v1237, %v1533
    %v1535 = vsel %vm1248, %v1238, %v1534
    %v1536 = vsel %vm1250, %v1239, %v1535
    %v1537 = vsel %vm1252, %v1240, %v1536
    %v1538 = vsel %vm1254, %v1241, %v1537
    %v1539 = vsel %vm1256, %v1242, %v1538
    %v1540 = vsel %vm1258, %v1244, %v1243
    %v1541 = vsel %vm1246, %v1245, %v1540
    %v1542 = vsel %vm1248, %v1354, %v1541
    %v1556 = vld [vmem:[#allocation7] sm:$0xff]
    %v1557 = vld [vmem:[#allocation7 + $0x8] sm:$0xff]
    %v1558 = vld [vmem:[#allocation7 + $0x10] sm:$0xff]
    %v1559 = vld [vmem:[#allocation7 + $0x18] sm:$0xff]
    %v1560 = vld [vmem:[#allocation7 + $0x20] sm:$0xff]
    %v1561 = vld [vmem:[#allocation7 + $0x28] sm:$0xff]
    %v1562 = vld [vmem:[#allocation7 + $0x30] sm:$0xff]
    %v1563 = vld [vmem:[#allocation7 + $0x38] sm:$0xff]
    %v1564 = vld [vmem:[#allocation7 + $0x40] sm:$0xff]
    %v1565 = vld [vmem:[#allocation7 + $0x48] sm:$0xff]
    %v1566 = vld [vmem:[#allocation7 + $0x50] sm:$0xff]
    %v1567 = vld [vmem:[#allocation7 + $0x58] sm:$0xff]
    %v1568 = vld [vmem:[#allocation7 + $0x60] sm:$0xff]
    %v1569 = vld [vmem:[#allocation7 + $0x68] sm:$0xff]
    %v1570 = vld [vmem:[#allocation7 + $0x70] sm:$0xff]
    %v1571 = vld [vmem:[#allocation7 + $0x78] sm:$0xff]
    %v1572 = vld [vmem:[#allocation7 + $0x80] sm:$0xff]
    %v1573 = vld [vmem:[#allocation7 + $0x88] sm:$0xff]
    %v1574 = vld [vmem:[#allocation7 + $0x90] sm:$0xff]
    %v1575 = vld [vmem:[#allocation7 + $0x98] sm:$0xff]
    %v1576 = vld [vmem:[#allocation7 + $0xa0] sm:$0xff]
    %v1577 = vld [vmem:[#allocation7 + $0xa8] sm:$0xff]
    %v1578 = vld [vmem:[#allocation7 + $0xb0] sm:$0xff]
    %v1579 = vld [vmem:[#allocation7 + $0xb8] sm:$0xff]
    %v1580 = vld [vmem:[#allocation7 + $0xc0] sm:$0xff]
    %v1581 = vld [vmem:[#allocation7 + $0xc8] sm:$0xff]
    %v1582 = vld [vmem:[#allocation7 + $0xd0] sm:$0xff]
    %v1583 = vld [vmem:[#allocation7 + $0xd8] sm:$0xff]
    %v1584 = vld [vmem:[#allocation7 + $0xe0] sm:$0xff]
    %v1585 = vld [vmem:[#allocation7 + $0xe8] sm:$0xff]
    %v1586 = vld [vmem:[#allocation7 + $0xf0] sm:$0xff]
    %v1587 = vld [vmem:[#allocation7 + $0xf8] sm:$0xff]
    %v1588 = vld [vmem:[#allocation7 + $0x100] sm:$0xff]
    %v1589 = vld [vmem:[#allocation7 + $0x108] sm:$0xff]
    %v1590 = vld [vmem:[#allocation7 + $0x110] sm:$0xff]
    %v1591 = vld [vmem:[#allocation7 + $0x118] sm:$0xff]
    %v1592 = vld [vmem:[#allocation7 + $0x120] sm:$0xff]
    %v1593 = vld [vmem:[#allocation7 + $0x128] sm:$0xff]
    %v1594 = vld [vmem:[#allocation7 + $0x130] sm:$0xff]
    %v1595 = vld [vmem:[#allocation7 + $0x138] sm:$0xff]
    %v1596 = vld [vmem:[#allocation7 + $0x140] sm:$0xff]
    %v1597 = vld [vmem:[#allocation7 + $0x148] sm:$0xff]
    %v1598 = vld [vmem:[#allocation7 + $0x150] sm:$0xff]
    %v1599 = vld [vmem:[#allocation7 + $0x158] sm:$0xff]
    %v1600 = vld [vmem:[#allocation7 + $0x160] sm:$0xff]
    %v1601 = vld [vmem:[#allocation7 + $0x168] sm:$0xff]
    %v1602 = vld [vmem:[#allocation7 + $0x170] sm:$0xff]
    %v1603 = vld [vmem:[#allocation7 + $0x178] sm:$0xff]
    %v1604 = vld [vmem:[#allocation7 + $0x180] sm:$0xff]
    %v1605 = vld [vmem:[#allocation7 + $0x188] sm:$0xff]
    %v1606 = vld [vmem:[#allocation7 + $0x190] sm:$0xff]
    %v1607 = vld [vmem:[#allocation7 + $0x198] sm:$0xff]
    %v1608 = vld [vmem:[#allocation7 + $0x1a0] sm:$0xff]
    %v1609 = vld [vmem:[#allocation7 + $0x1a8] sm:$0xff]
    %v1610 = vld [vmem:[#allocation7 + $0x1b0] sm:$0xff]
    %v1611 = vld [vmem:[#allocation7 + $0x1b8] sm:$0xff]
    %v1612 = vld [vmem:[#allocation7 + $0x1c0] sm:$0xff]
    %v1613 = vld [vmem:[#allocation7 + $0x1c8] sm:$0xff]
    %v1614 = vld [vmem:[#allocation7 + $0x1d0] sm:$0xff]
    %v1615 = vld [vmem:[#allocation7 + $0x1d8] sm:$0xff]
    %v1616 = vld [vmem:[#allocation7 + $0x1e0] sm:$0xff]
    %v1617 = vld [vmem:[#allocation7 + $0x1e8] sm:$0xff]
    %v1618 = vld [vmem:[#allocation7 + $0x1f0] sm:$0xff]
    %v1619 = vld [vmem:[#allocation7 + $0x1f8] sm:$0xff]
    %v1620 = vld [vmem:[#allocation7 + $0x200] sm:$0xff]
    %v1621 = vld [vmem:[#allocation7 + $0x208] sm:$0xff]
    %v1622 = vld [vmem:[#allocation7 + $0x210] sm:$0xff]
    %v1623 = vld [vmem:[#allocation7 + $0x218] sm:$0xff]
    %v1624 = vld [vmem:[#allocation7 + $0x220] sm:$0xff]
    %v1625 = vld [vmem:[#allocation7 + $0x228] sm:$0xff]
    %v1626 = vld [vmem:[#allocation7 + $0x230] sm:$0xff]
    %v1627 = vld [vmem:[#allocation7 + $0x238] sm:$0xff]
    %v1628 = vld [vmem:[#allocation7 + $0x240] sm:$0xff]
    %v1629 = vld [vmem:[#allocation7 + $0x248] sm:$0xff]
    %v1630 = vld [vmem:[#allocation7 + $0x250] sm:$0xff]
    %v1631 = vld [vmem:[#allocation7 + $0x258] sm:$0xff]
    %v1632 = vld [vmem:[#allocation7 + $0x260] sm:$0xff]
    %v1633 = vld [vmem:[#allocation7 + $0x268] sm:$0xff]
    %v1634 = vld [vmem:[#allocation7 + $0x270] sm:$0xff]
    %v1635 = vld [vmem:[#allocation7 + $0x278] sm:$0xff]
    %v1636 = vld [vmem:[#allocation7 + $0x280] sm:$0xff]
    %v1637 = vld [vmem:[#allocation7 + $0x288] sm:$0xff]
    %v1638 = vld [vmem:[#allocation7 + $0x290] sm:$0xff]
    %v1639 = vld [vmem:[#allocation7 + $0x298] sm:$0xff]
    %v1640 = vld [vmem:[#allocation7 + $0x2a0] sm:$0xff]
    %v1641 = vld [vmem:[#allocation7 + $0x2a8] sm:$0xff]
    %v1642 = vld [vmem:[#allocation7 + $0x2b0] sm:$0xff]
    %v1643 = vld [vmem:[#allocation7 + $0x2b8] sm:$0xff]
    %v1644 = vld [vmem:[#allocation7 + $0x2c0] sm:$0xff]
    %v1645 = vld [vmem:[#allocation7 + $0x2c8] sm:$0xff]
    %v1646 = vld [vmem:[#allocation7 + $0x2d0] sm:$0xff]
    %v1647 = vld [vmem:[#allocation7 + $0x2d8] sm:$0xff]
    %v1648 = vld [vmem:[#allocation7 + $0x2e0] sm:$0xff]
    %v1649 = vld [vmem:[#allocation7 + $0x2e8] sm:$0xff]
    %v1650 = vld [vmem:[#allocation7 + $0x2f0] sm:$0xff]
    %v1651 = vld [vmem:[#allocation7 + $0x2f8] sm:$0xff]
    %v1652 = vld [vmem:[%s4] sm:$0x3]
    %v1654 = vperm.slane %v1652, 0
    %v1655 = vperm.slane %v1652, 1
    %1658 = vmatpush.msra.mxu0 %v1586
    %1659 = vmatpush.msra.mxu0 %v1584
    %1660 = vmatpush.msra.mxu0 %v1582
    %1661 = vmatpush.msra.mxu0 %v1580
    %1662 = vmatpush.msra.mxu0 %v1578
    %1663 = vmatpush.msra.mxu0 %v1576
    %1664 = vmatpush.msra.mxu0 %v1574
    %1665 = vmatpush.msra.mxu0 %v1572
    %1666 = vmatpush.msra.mxu0 %v1570
    %1667 = vmatpush.msra.mxu0 %v1568
    %1668 = vmatpush.msra.mxu0 %v1566
    %1669 = vmatpush.msra.mxu0 %v1564
    %1670 = vmatpush.msra.mxu0 %v1562
    %1671 = vmatpush.msra.mxu0 %v1560
    %1672 = vmatpush.msra.mxu0 %v1558
    %1673 = vmatpush.msra.mxu0 %v1556
    %1674 = vmatmul.f32.gmra.mxu0 %v1352
    %v1675 = vpop.f32.mrf.mxu0
    %v1676 = vadd.f32 %v1654, %v1675
    %1677 = vmatmul.f32.gmra.mxu0 %v1265
    %v1678 = vpop.f32.mrf.mxu0
    %v1679 = vadd.f32 %v1654, %v1678
    %1680 = vmatmul.f32.gmra.mxu0 %v1272
    %v1681 = vpop.f32.mrf.mxu0
    %v1682 = vadd.f32 %v1654, %v1681
    %1683 = vmatmul.f32.gmra.mxu0 %v1279
    %v1684 = vpop.f32.mrf.mxu0
    %v1685 = vadd.f32 %v1654, %v1684
    %1686 = vmatmul.f32.gmra.mxu0 %v1286
    %v1687 = vpop.f32.mrf.mxu0
    %v1688 = vadd.f32 %v1654, %v1687
    %1689 = vmatmul.f32.gmra.mxu0 %v1293
    %v1690 = vpop.f32.mrf.mxu0
    %v1691 = vadd.f32 %v1654, %v1690
    %1692 = vmatmul.f32.gmra.mxu0 %v1300
    %v1693 = vpop.f32.mrf.mxu0
    %v1694 = vadd.f32 %v1654, %v1693
    %1695 = vmatmul.f32.gmra.mxu0 %v1307
    %v1696 = vpop.f32.mrf.mxu0
    %v1697 = vadd.f32 %v1654, %v1696
    %1698 = vmatmul.f32.gmra.mxu0 %v1314
    %v1699 = vpop.f32.mrf.mxu0
    %v1700 = vadd.f32 %v1654, %v1699
    %1701 = vmatmul.f32.gmra.mxu0 %v1321
    %v1702 = vpop.f32.mrf.mxu0
    %v1703 = vadd.f32 %v1654, %v1702
    %1704 = vmatmul.f32.gmra.mxu0 %v1328
    %v1705 = vpop.f32.mrf.mxu0
    %v1706 = vadd.f32 %v1654, %v1705
    %1707 = vmatmul.f32.gmra.mxu0 %v1335
    %v1708 = vpop.f32.mrf.mxu0
    %v1709 = vadd.f32 %v1654, %v1708
    %1710 = vmatmul.f32.gmra.mxu0 %v1338
    %v1711 = vpop.f32.mrf.mxu0
    %v1712 = vadd.f32 %v1654, %v1711
    %1713 = vdwg.mxu0
    %1714 = vmatpush.msra.mxu0 %v1618
    %1715 = vmatpush.msra.mxu0 %v1616
    %1716 = vmatpush.msra.mxu0 %v1614
    %1717 = vmatpush.msra.mxu0 %v1612
    %1718 = vmatpush.msra.mxu0 %v1610
    %1719 = vmatpush.msra.mxu0 %v1608
    %1720 = vmatpush.msra.mxu0 %v1606
    %1721 = vmatpush.msra.mxu0 %v1604
    %1722 = vmatpush.msra.mxu0 %v1602
    %1723 = vmatpush.msra.mxu0 %v1600
    %1724 = vmatpush.msra.mxu0 %v1598
    %1725 = vmatpush.msra.mxu0 %v1596
    %1726 = vmatpush.msra.mxu0 %v1594
    %1727 = vmatpush.msra.mxu0 %v1592
    %1728 = vmatpush.msra.mxu0 %v1590
    %1729 = vmatpush.msra.mxu0 %v1588
    %1730 = vmatmul.f32.gmra.mxu0 %v1462
    %v1731 = vpop.f32.mrf.mxu0
    %v1732 = vadd.f32 %v1676, %v1731
    %1733 = vmatmul.f32.gmra.mxu0 %v1469
    %v1734 = vpop.f32.mrf.mxu0
    %v1735 = vadd.f32 %v1679, %v1734
    %1736 = vmatmul.f32.gmra.mxu0 %v1476
    %v1737 = vpop.f32.mrf.mxu0
    %v1738 = vadd.f32 %v1682, %v1737
    %1739 = vmatmul.f32.gmra.mxu0 %v1483
    %v1740 = vpop.f32.mrf.mxu0
    %v1741 = vadd.f32 %v1685, %v1740
    %1742 = vmatmul.f32.gmra.mxu0 %v1490
    %v1743 = vpop.f32.mrf.mxu0
    %v1744 = vadd.f32 %v1688, %v1743
    %1745 = vmatmul.f32.gmra.mxu0 %v1497
    %v1746 = vpop.f32.mrf.mxu0
    %v1747 = vadd.f32 %v1691, %v1746
    %1748 = vmatmul.f32.gmra.mxu0 %v1504
    %v1749 = vpop.f32.mrf.mxu0
    %v1750 = vadd.f32 %v1694, %v1749
    %1751 = vmatmul.f32.gmra.mxu0 %v1511
    %v1752 = vpop.f32.mrf.mxu0
    %v1753 = vadd.f32 %v1697, %v1752
    %1754 = vmatmul.f32.gmra.mxu0 %v1518
    %v1755 = vpop.f32.mrf.mxu0
    %v1756 = vadd.f32 %v1700, %v1755
    %1757 = vmatmul.f32.gmra.mxu0 %v1525
    %v1758 = vpop.f32.mrf.mxu0
    %v1759 = vadd.f32 %v1703, %v1758
    %1760 = vmatmul.f32.gmra.mxu0 %v1532
    %v1761 = vpop.f32.mrf.mxu0
    %v1762 = vadd.f32 %v1706, %v1761
    %1763 = vmatmul.f32.gmra.mxu0 %v1539
    %v1764 = vpop.f32.mrf.mxu0
    %v1765 = vadd.f32 %v1709, %v1764
    %1766 = vmatmul.f32.gmra.mxu0 %v1542
    %v1767 = vpop.f32.mrf.mxu0
    %v1768 = vadd.f32 %v1712, %v1767
    %1769 = vdwg.mxu0
    %1770 = vmatpush.msra.mxu0 %v1650
    %1771 = vmatpush.msra.mxu0 %v1648
    %1772 = vmatpush.msra.mxu0 %v1646
    %1773 = vmatpush.msra.mxu0 %v1644
    %1774 = vmatpush.msra.mxu0 %v1642
    %1775 = vmatpush.msra.mxu0 %v1640
    %1776 = vmatpush.msra.mxu0 %v1638
    %1777 = vmatpush.msra.mxu0 %v1636
    %1778 = vmatpush.msra.mxu0 %v1634
    %1779 = vmatpush.msra.mxu0 %v1632
    %1780 = vmatpush.msra.mxu0 %v1630
    %1781 = vmatpush.msra.mxu0 %v1628
    %1782 = vmatpush.msra.mxu0 %v1626
    %1783 = vmatpush.msra.mxu0 %v1624
    %1784 = vmatpush.msra.mxu0 %v1622
    %1785 = vmatpush.msra.mxu0 %v1620
    %1786 = vmatmul.f32.gmra.mxu0 %v1361
    %v1787 = vpop.f32.mrf.mxu0
    %v1788 = vadd.f32 %v1732, %v1787
    %1789 = vmatmul.f32.gmra.mxu0 %v1368
    %v1790 = vpop.f32.mrf.mxu0
    %v1791 = vadd.f32 %v1735, %v1790
    %1792 = vmatmul.f32.gmra.mxu0 %v1375
    %v1793 = vpop.f32.mrf.mxu0
    %v1794 = vadd.f32 %v1738, %v1793
    %1795 = vmatmul.f32.gmra.mxu0 %v1382
    %v1796 = vpop.f32.mrf.mxu0
    %v1797 = vadd.f32 %v1741, %v1796
    %1798 = vmatmul.f32.gmra.mxu0 %v1389
    %v1799 = vpop.f32.mrf.mxu0
    %v1800 = vadd.f32 %v1744, %v1799
    %1801 = vmatmul.f32.gmra.mxu0 %v1396
    %v1802 = vpop.f32.mrf.mxu0
    %v1803 = vadd.f32 %v1747, %v1802
    %1804 = vmatmul.f32.gmra.mxu0 %v1403
    %v1805 = vpop.f32.mrf.mxu0
    %v1806 = vadd.f32 %v1750, %v1805
    %1807 = vmatmul.f32.gmra.mxu0 %v1410
    %v1808 = vpop.f32.mrf.mxu0
    %v1809 = vadd.f32 %v1753, %v1808
    %1810 = vmatmul.f32.gmra.mxu0 %v1417
    %v1811 = vpop.f32.mrf.mxu0
    %v1812 = vadd.f32 %v1756, %v1811
    %1813 = vmatmul.f32.gmra.mxu0 %v1424
    %v1814 = vpop.f32.mrf.mxu0
    %v1815 = vadd.f32 %v1759, %v1814
    %1816 = vmatmul.f32.gmra.mxu0 %v1431
    %v1817 = vpop.f32.mrf.mxu0
    %v1818 = vadd.f32 %v1762, %v1817
    %1819 = vmatmul.f32.gmra.mxu0 %v1438
    %v1820 = vpop.f32.mrf.mxu0
    %v1821 = vadd.f32 %v1765, %v1820
    %1822 = vmatmul.f32.gmra.mxu0 %v1455
    %v1823 = vpop.f32.mrf.mxu0
    %v1824 = vadd.f32 %v1768, %v1823
    %1825 = vdwg.mxu0
    %1826 = vmatpush.msra.mxu0 %v1587
    %1827 = vmatpush.msra.mxu0 %v1585
    %1828 = vmatpush.msra.mxu0 %v1583
    %1829 = vmatpush.msra.mxu0 %v1581
    %1830 = vmatpush.msra.mxu0 %v1579
    %1831 = vmatpush.msra.mxu0 %v1577
    %1832 = vmatpush.msra.mxu0 %v1575
    %1833 = vmatpush.msra.mxu0 %v1573
    %1834 = vmatpush.msra.mxu0 %v1571
    %1835 = vmatpush.msra.mxu0 %v1569
    %1836 = vmatpush.msra.mxu0 %v1567
    %1837 = vmatpush.msra.mxu0 %v1565
    %1838 = vmatpush.msra.mxu0 %v1563
    %1839 = vmatpush.msra.mxu0 %v1561
    %1840 = vmatpush.msra.mxu0 %v1559
    %1841 = vmatpush.msra.mxu0 %v1557
    %1842 = vmatmul.f32.gmra.mxu0 %v1352
    %v1843 = vpop.f32.mrf.mxu0
    %v1844 = vadd.f32 %v1655, %v1843
    %1845 = vmatmul.f32.gmra.mxu0 %v1265
    %v1846 = vpop.f32.mrf.mxu0
    %v1847 = vadd.f32 %v1655, %v1846
    %1848 = vmatmul.f32.gmra.mxu0 %v1272
    %v1849 = vpop.f32.mrf.mxu0
    %v1850 = vadd.f32 %v1655, %v1849
    %1851 = vmatmul.f32.gmra.mxu0 %v1279
    %v1852 = vpop.f32.mrf.mxu0
    %v1853 = vadd.f32 %v1655, %v1852
    %1854 = vmatmul.f32.gmra.mxu0 %v1286
    %v1855 = vpop.f32.mrf.mxu0
    %v1856 = vadd.f32 %v1655, %v1855
    %1857 = vmatmul.f32.gmra.mxu0 %v1293
    %v1858 = vpop.f32.mrf.mxu0
    %v1859 = vadd.f32 %v1655, %v1858
    %1860 = vmatmul.f32.gmra.mxu0 %v1300
    %v1861 = vpop.f32.mrf.mxu0
    %v1862 = vadd.f32 %v1655, %v1861
    %1863 = vmatmul.f32.gmra.mxu0 %v1307
    %v1864 = vpop.f32.mrf.mxu0
    %v1865 = vadd.f32 %v1655, %v1864
    %1866 = vmatmul.f32.gmra.mxu0 %v1314
    %v1867 = vpop.f32.mrf.mxu0
    %v1868 = vadd.f32 %v1655, %v1867
    %1869 = vmatmul.f32.gmra.mxu0 %v1321
    %v1870 = vpop.f32.mrf.mxu0
    %v1871 = vadd.f32 %v1655, %v1870
    %1872 = vmatmul.f32.gmra.mxu0 %v1328
    %v1873 = vpop.f32.mrf.mxu0
    %v1874 = vadd.f32 %v1655, %v1873
    %1875 = vmatmul.f32.gmra.mxu0 %v1335
    %v1876 = vpop.f32.mrf.mxu0
    %v1877 = vadd.f32 %v1655, %v1876
    %1878 = vmatmul.f32.gmra.mxu0 %v1338
    %v1879 = vpop.f32.mrf.mxu0
    %v1880 = vadd.f32 %v1655, %v1879
    %1881 = vdwg.mxu0
    %1882 = vmatpush.msra.mxu0 %v1619
    %1883 = vmatpush.msra.mxu0 %v1617
    %1884 = vmatpush.msra.mxu0 %v1615
    %1885 = vmatpush.msra.mxu0 %v1613
    %1886 = vmatpush.msra.mxu0 %v1611
    %1887 = vmatpush.msra.mxu0 %v1609
    %1888 = vmatpush.msra.mxu0 %v1607
    %1889 = vmatpush.msra.mxu0 %v1605
    %1890 = vmatpush.msra.mxu0 %v1603
    %1891 = vmatpush.msra.mxu0 %v1601
    %1892 = vmatpush.msra.mxu0 %v1599
    %1893 = vmatpush.msra.mxu0 %v1597
    %1894 = vmatpush.msra.mxu0 %v1595
    %1895 = vmatpush.msra.mxu0 %v1593
    %1896 = vmatpush.msra.mxu0 %v1591
    %1897 = vmatpush.msra.mxu0 %v1589
    %1898 = vmatmul.f32.gmra.mxu0 %v1462
    %v1899 = vpop.f32.mrf.mxu0
    %v1900 = vadd.f32 %v1844, %v1899
    %1901 = vmatmul.f32.gmra.mxu0 %v1469
    %v1902 = vpop.f32.mrf.mxu0
    %v1903 = vadd.f32 %v1847, %v1902
    %1904 = vmatmul.f32.gmra.mxu0 %v1476
    %v1905 = vpop.f32.mrf.mxu0
    %v1906 = vadd.f32 %v1850, %v1905
    %1907 = vmatmul.f32.gmra.mxu0 %v1483
    %v1908 = vpop.f32.mrf.mxu0
    %v1909 = vadd.f32 %v1853, %v1908
    %1910 = vmatmul.f32.gmra.mxu0 %v1490
    %v1911 = vpop.f32.mrf.mxu0
    %v1912 = vadd.f32 %v1856, %v1911
    %1913 = vmatmul.f32.gmra.mxu0 %v1497
    %v1914 = vpop.f32.mrf.mxu0
    %v1915 = vadd.f32 %v1859, %v1914
    %1916 = vmatmul.f32.gmra.mxu0 %v1504
    %v1917 = vpop.f32.mrf.mxu0
    %v1918 = vadd.f32 %v1862, %v1917
    %1919 = vmatmul.f32.gmra.mxu0 %v1511
    %v1920 = vpop.f32.mrf.mxu0
    %v1921 = vadd.f32 %v1865, %v1920
    %1922 = vmatmul.f32.gmra.mxu0 %v1518
    %v1923 = vpop.f32.mrf.mxu0
    %v1924 = vadd.f32 %v1868, %v1923
    %1925 = vmatmul.f32.gmra.mxu0 %v1525
    %v1926 = vpop.f32.mrf.mxu0
    %v1927 = vadd.f32 %v1871, %v1926
    %1928 = vmatmul.f32.gmra.mxu0 %v1532
    %v1929 = vpop.f32.mrf.mxu0
    %v1930 = vadd.f32 %v1874, %v1929
    %1931 = vmatmul.f32.gmra.mxu0 %v1539
    %v1932 = vpop.f32.mrf.mxu0
    %v1933 = vadd.f32 %v1877, %v1932
    %1934 = vmatmul.f32.gmra.mxu0 %v1542
    %v1935 = vpop.f32.mrf.mxu0
    %v1936 = vadd.f32 %v1880, %v1935
    %1937 = vdwg.mxu0
    %1938 = vmatpush.msra.mxu0 %v1651
    %1939 = vmatpush.msra.mxu0 %v1649
    %1940 = vmatpush.msra.mxu0 %v1647
    %1941 = vmatpush.msra.mxu0 %v1645
    %1942 = vmatpush.msra.mxu0 %v1643
    %1943 = vmatpush.msra.mxu0 %v1641
    %1944 = vmatpush.msra.mxu0 %v1639
    %1945 = vmatpush.msra.mxu0 %v1637
    %1946 = vmatpush.msra.mxu0 %v1635
    %1947 = vmatpush.msra.mxu0 %v1633
    %1948 = vmatpush.msra.mxu0 %v1631
    %1949 = vmatpush.msra.mxu0 %v1629
    %1950 = vmatpush.msra.mxu0 %v1627
    %1951 = vmatpush.msra.mxu0 %v1625
    %1952 = vmatpush.msra.mxu0 %v1623
    %1953 = vmatpush.msra.mxu0 %v1621
    %1954 = vmatmul.f32.gmra.mxu0 %v1361
    %v1955 = vpop.f32.mrf.mxu0
    %v1956 = vadd.f32 %v1900, %v1955
    %1957 = vmatmul.f32.gmra.mxu0 %v1368
    %v1958 = vpop.f32.mrf.mxu0
    %v1959 = vadd.f32 %v1903, %v1958
    %1960 = vmatmul.f32.gmra.mxu0 %v1375
    %v1961 = vpop.f32.mrf.mxu0
    %v1962 = vadd.f32 %v1906, %v1961
    %1963 = vmatmul.f32.gmra.mxu0 %v1382
    %v1964 = vpop.f32.mrf.mxu0
    %v1965 = vadd.f32 %v1909, %v1964
    %1966 = vmatmul.f32.gmra.mxu0 %v1389
    %v1967 = vpop.f32.mrf.mxu0
    %v1968 = vadd.f32 %v1912, %v1967
    %1969 = vmatmul.f32.gmra.mxu0 %v1396
    %v1970 = vpop.f32.mrf.mxu0
    %v1971 = vadd.f32 %v1915, %v1970
    %1972 = vmatmul.f32.gmra.mxu0 %v1403
    %v1973 = vpop.f32.mrf.mxu0
    %v1974 = vadd.f32 %v1918, %v1973
    %1975 = vmatmul.f32.gmra.mxu0 %v1410
    %v1976 = vpop.f32.mrf.mxu0
    %v1977 = vadd.f32 %v1921, %v1976
    %1978 = vmatmul.f32.gmra.mxu0 %v1417
    %v1979 = vpop.f32.mrf.mxu0
    %v1980 = vadd.f32 %v1924, %v1979
    %1981 = vmatmul.f32.gmra.mxu0 %v1424
    %v1982 = vpop.f32.mrf.mxu0
    %v1983 = vadd.f32 %v1927, %v1982
    %1984 = vmatmul.f32.gmra.mxu0 %v1431
    %v1985 = vpop.f32.mrf.mxu0
    %v1986 = vadd.f32 %v1930, %v1985
    %1987 = vmatmul.f32.gmra.mxu0 %v1438
    %v1988 = vpop.f32.mrf.mxu0
    %v1989 = vadd.f32 %v1933, %v1988
    %1990 = vmatmul.f32.gmra.mxu0 %v1455
    %v1991 = vpop.f32.mrf.mxu0
    %v1992 = vadd.f32 %v1936, %v1991
    %1993 = vdwg.mxu0
    %v1994 = vmax.f32 %v1788, 0.0
    %v1995 = vmax.f32 %v1956, 0.0
    %v1996 = vmax.f32 %v1791, 0.0
    %v1997 = vmax.f32 %v1959, 0.0
    %v1998 = vmax.f32 %v1794, 0.0
    %v1999 = vmax.f32 %v1962, 0.0
    %v2000 = vmax.f32 %v1797, 0.0
    %v2001 = vmax.f32 %v1965, 0.0
    %v2002 = vmax.f32 %v1800, 0.0
    %v2003 = vmax.f32 %v1968, 0.0
    %v2004 = vmax.f32 %v1803, 0.0
    %v2005 = vmax.f32 %v1971, 0.0
    %v2006 = vmax.f32 %v1806, 0.0
    %v2007 = vmax.f32 %v1974, 0.0
    %v2008 = vmax.f32 %v1809, 0.0
    %v2009 = vmax.f32 %v1977, 0.0
    %v2010 = vmax.f32 %v1812, 0.0
    %v2011 = vmax.f32 %v1980, 0.0
    %v2012 = vmax.f32 %v1815, 0.0
    %v2013 = vmax.f32 %v1983, 0.0
    %v2014 = vmax.f32 %v1818, 0.0
    %v2015 = vmax.f32 %v1986, 0.0
    %v2016 = vmax.f32 %v1821, 0.0
    %v2017 = vmax.f32 %v1989, 0.0
    %v2018 = vmax.f32 %v1824, 0.0
    %v2019 = vmax.f32 %v1992, 0.0
    %v2046 = vrot.slane %v1995, 6
    %v2047 = vrot.slane %v1997, 6
    %v2048 = vrot.slane %v1999, 6
    %v2049 = vrot.slane %v2001, 6
    %v2050 = vrot.slane %v2003, 6
    %v2051 = vrot.slane %v2005, 6
    %v2052 = vrot.slane %v2007, 6
    %v2053 = vrot.slane %v2009, 6
    %v2054 = vrot.slane %v2011, 6
    %v2055 = vrot.slane %v2013, 6
    %v2056 = vrot.slane %v2015, 6
    %v2057 = vrot.slane %v2017, 6
    %v2058 = vrot.slane %v2019, 6
    %vm2059 = vcmask 1041408
    %v2060 = vsel %vm2059, %v1994, %v2046
    %vm2061 = vcmask 1043458
    %v2062 = vsel %vm2061, %v1994, %v2046
    %v2063 = vrot.slane %v2062, 2
    %vm2064 = vcmask 1045508
    %v2065 = vsel %vm2064, %v1994, %v2046
    %v2066 = vrot.slane %v2065, 4
    %vm2067 = vcmask 1045504
    %v2068 = vsel %vm2067, %v2046, %v1994
    %v2069 = vrot.slane %v2068, 6
    %v2070 = vsel %vm2059, %v1996, %v2047
    %v2071 = vsel %vm2061, %v1996, %v2047
    %v2072 = vrot.slane %v2071, 2
    %v2073 = vsel %vm2064, %v1996, %v2047
    %v2074 = vrot.slane %v2073, 4
    %v2075 = vsel %vm2067, %v2047, %v1996
    %v2076 = vrot.slane %v2075, 6
    %v2077 = vsel %vm2059, %v1998, %v2048
    %v2078 = vsel %vm2061, %v1998, %v2048
    %v2079 = vrot.slane %v2078, 2
    %v2080 = vsel %vm2064, %v1998, %v2048
    %v2081 = vrot.slane %v2080, 4
    %v2082 = vsel %vm2067, %v2048, %v1998
    %v2083 = vrot.slane %v2082, 6
    %v2084 = vsel %vm2059, %v2000, %v2049
    %v2085 = vsel %vm2061, %v2000, %v2049
    %v2086 = vrot.slane %v2085, 2
    %v2087 = vsel %vm2064, %v2000, %v2049
    %v2088 = vrot.slane %v2087, 4
    %v2089 = vsel %vm2067, %v2049, %v2000
    %v2090 = vrot.slane %v2089, 6
    %v2091 = vsel %vm2059, %v2002, %v2050
    %v2092 = vsel %vm2061, %v2002, %v2050
    %v2093 = vrot.slane %v2092, 2
    %v2094 = vsel %vm2064, %v2002, %v2050
    %v2095 = vrot.slane %v2094, 4
    %v2096 = vsel %vm2067, %v2050, %v2002
    %v2097 = vrot.slane %v2096, 6
    %v2098 = vsel %vm2059, %v2004, %v2051
    %v2099 = vsel %vm2061, %v2004, %v2051
    %v2100 = vrot.slane %v2099, 2
    %v2101 = vsel %vm2064, %v2004, %v2051
    %v2102 = vrot.slane %v2101, 4
    %v2103 = vsel %vm2067, %v2051, %v2004
    %v2104 = vrot.slane %v2103, 6
    %v2105 = vsel %vm2059, %v2006, %v2052
    %v2106 = vsel %vm2061, %v2006, %v2052
    %v2107 = vrot.slane %v2106, 2
    %v2108 = vsel %vm2064, %v2006, %v2052
    %v2109 = vrot.slane %v2108, 4
    %v2110 = vsel %vm2067, %v2052, %v2006
    %v2111 = vrot.slane %v2110, 6
    %v2112 = vsel %vm2059, %v2008, %v2053
    %v2113 = vsel %vm2061, %v2008, %v2053
    %v2114 = vrot.slane %v2113, 2
    %v2115 = vsel %vm2064, %v2008, %v2053
    %v2116 = vrot.slane %v2115, 4
    %v2117 = vsel %vm2067, %v2053, %v2008
    %v2118 = vrot.slane %v2117, 6
    %v2119 = vsel %vm2059, %v2010, %v2054
    %v2120 = vsel %vm2061, %v2010, %v2054
    %v2121 = vrot.slane %v2120, 2
    %v2122 = vsel %vm2064, %v2010, %v2054
    %v2123 = vrot.slane %v2122, 4
    %v2124 = vsel %vm2067, %v2054, %v2010
    %v2125 = vrot.slane %v2124, 6
    %v2126 = vsel %vm2059, %v2012, %v2055
    %v2127 = vsel %vm2061, %v2012, %v2055
    %v2128 = vrot.slane %v2127, 2
    %v2129 = vsel %vm2064, %v2012, %v2055
    %v2130 = vrot.slane %v2129, 4
    %v2131 = vsel %vm2067, %v2055, %v2012
    %v2132 = vrot.slane %v2131, 6
    %v2133 = vsel %vm2059, %v2014, %v2056
    %v2134 = vsel %vm2061, %v2014, %v2056
    %v2135 = vrot.slane %v2134, 2
    %v2136 = vsel %vm2064, %v2014, %v2056
    %v2137 = vrot.slane %v2136, 4
    %v2138 = vsel %vm2067, %v2056, %v2014
    %v2139 = vrot.slane %v2138, 6
    %v2140 = vsel %vm2059, %v2016, %v2057
    %v2141 = vsel %vm2061, %v2016, %v2057
    %v2142 = vrot.slane %v2141, 2
    %v2143 = vsel %vm2064, %v2016, %v2057
    %v2144 = vrot.slane %v2143, 4
    %v2145 = vsel %vm2067, %v2057, %v2016
    %v2146 = vrot.slane %v2145, 6
    %v2147 = vsel %vm2059, %v2018, %v2058
    %v2148 = vsel %vm2061, %v2018, %v2058
    %v2149 = vrot.slane %v2148, 2
    %v2200 = vrot.slane %v2060, 7
    %v2201 = vrot.slane %v2200, 2
    %v2202 = vrot.slane %v2063, 7
    %v2203 = vrot.slane %v2202, 2
    %v2204 = vrot.slane %v2066, 7
    %v2205 = vrot.slane %v2204, 2
    %v2206 = vrot.slane %v2069, 7
    %v2207 = vrot.slane %v2206, 2
    %v2208 = vrot.slane %v2070, 7
    %v2209 = vrot.slane %v2208, 2
    %v2210 = vrot.slane %v2072, 7
    %v2211 = vrot.slane %v2210, 2
    %v2212 = vrot.slane %v2074, 7
    %v2213 = vrot.slane %v2212, 2
    %v2214 = vrot.slane %v2076, 7
    %v2215 = vrot.slane %v2214, 2
    %v2216 = vrot.slane %v2077, 7
    %v2217 = vrot.slane %v2216, 2
    %v2218 = vrot.slane %v2079, 7
    %v2219 = vrot.slane %v2218, 2
    %v2220 = vrot.slane %v2081, 7
    %v2221 = vrot.slane %v2220, 2
    %v2222 = vrot.slane %v2083, 7
    %v2223 = vrot.slane %v2222, 2
    %v2224 = vrot.slane %v2084, 7
    %v2225 = vrot.slane %v2224, 2
    %v2226 = vrot.slane %v2086, 7
    %v2227 = vrot.slane %v2226, 2
    %v2228 = vrot.slane %v2088, 7
    %v2229 = vrot.slane %v2228, 2
    %v2230 = vrot.slane %v2090, 7
    %v2231 = vrot.slane %v2230, 2
    %v2232 = vrot.slane %v2091, 7
    %v2233 = vrot.slane %v2232, 2
    %v2234 = vrot.slane %v2093, 7
    %v2235 = vrot.slane %v2234, 2
    %v2236 = vrot.slane %v2095, 7
    %v2237 = vrot.slane %v2236, 2
    %v2238 = vrot.slane %v2097, 7
    %v2239 = vrot.slane %v2238, 2
    %v2240 = vrot.slane %v2098, 7
    %v2241 = vrot.slane %v2240, 2
    %v2242 = vrot.slane %v2100, 7
    %v2243 = vrot.slane %v2242, 2
    %v2244 = vrot.slane %v2102, 7
    %v2245 = vrot.slane %v2244, 2
    %v2246 = vrot.slane %v2104, 7
    %v2247 = vrot.slane %v2246, 2
    %v2248 = vrot.slane %v2105, 7
    %v2249 = vrot.slane %v2248, 2
    %v2250 = vrot.slane %v2107, 7
    %v2251 = vrot.slane %v2250, 2
    %v2252 = vrot.slane %v2109, 7
    %v2253 = vrot.slane %v2252, 2
    %v2254 = vrot.slane %v2111, 7
    %v2255 = vrot.slane %v2254, 2
    %v2256 = vrot.slane %v2112, 7
    %v2257 = vrot.slane %v2256, 2
    %v2258 = vrot.slane %v2114, 7
    %v2259 = vrot.slane %v2258, 2
    %v2260 = vrot.slane %v2116, 7
    %v2261 = vrot.slane %v2260, 2
    %v2262 = vrot.slane %v2118, 7
    %v2263 = vrot.slane %v2262, 2
    %v2264 = vrot.slane %v2119, 7
    %v2265 = vrot.slane %v2264, 2
    %v2266 = vrot.slane %v2121, 7
    %v2267 = vrot.slane %v2266, 2
    %v2268 = vrot.slane %v2123, 7
    %v2269 = vrot.slane %v2268, 2
    %v2270 = vrot.slane %v2125, 7
    %v2271 = vrot.slane %v2270, 2
    %v2272 = vrot.slane %v2126, 7
    %v2273 = vrot.slane %v2272, 2
    %v2274 = vrot.slane %v2128, 7
    %v2275 = vrot.slane %v2274, 2
    %v2276 = vrot.slane %v2130, 7
    %v2277 = vrot.slane %v2276, 2
    %v2278 = vrot.slane %v2132, 7
    %v2279 = vrot.slane %v2278, 2
    %v2280 = vrot.slane %v2133, 7
    %v2281 = vrot.slane %v2280, 2
    %v2282 = vrot.slane %v2135, 7
    %v2283 = vrot.slane %v2282, 2
    %v2284 = vrot.slane %v2137, 7
    %v2285 = vrot.slane %v2284, 2
    %v2286 = vrot.slane %v2139, 7
    %v2287 = vrot.slane %v2286, 2
    %v2288 = vrot.slane %v2140, 7
    %v2289 = vrot.slane %v2288, 2
    %v2290 = vrot.slane %v2142, 7
    %v2291 = vrot.slane %v2290, 2
    %v2292 = vrot.slane %v2144, 7
    %v2293 = vrot.slane %v2292, 2
    %v2294 = vrot.slane %v2146, 7
    %v2295 = vrot.slane %v2294, 2
    %v2296 = vrot.slane %v2147, 7
    %v2297 = vrot.slane %v2296, 2
    %v2298 = vrot.slane %v2149, 7
    %v2299 = vrot.slane %v2298, 2
    %v2350 = vmax.f32 %v2060, %v2201
    %v2351 = vmax.f32 %v2063, %v2203
    %v2352 = vmax.f32 %v2066, %v2205
    %v2353 = vmax.f32 %v2069, %v2207
    %v2354 = vmax.f32 %v2070, %v2209
    %v2355 = vmax.f32 %v2072, %v2211
    %v2356 = vmax.f32 %v2074, %v2213
    %v2357 = vmax.f32 %v2076, %v2215
    %v2358 = vmax.f32 %v2077, %v2217
    %v2359 = vmax.f32 %v2079, %v2219
    %v2360 = vmax.f32 %v2081, %v2221
    %v2361 = vmax.f32 %v2083, %v2223
    %v2362 = vmax.f32 %v2084, %v2225
    %v2363 = vmax.f32 %v2086, %v2227
    %v2364 = vmax.f32 %v2088, %v2229
    %v2365 = vmax.f32 %v2090, %v2231
    %v2366 = vmax.f32 %v2091, %v2233
    %v2367 = vmax.f32 %v2093, %v2235
    %v2368 = vmax.f32 %v2095, %v2237
    %v2369 = vmax.f32 %v2097, %v2239
    %v2370 = vmax.f32 %v2098, %v2241
    %v2371 = vmax.f32 %v2100, %v2243
    %v2372 = vmax.f32 %v2102, %v2245
    %v2373 = vmax.f32 %v2104, %v2247
    %v2374 = vmax.f32 %v2105, %v2249
    %v2375 = vmax.f32 %v2107, %v2251
    %v2376 = vmax.f32 %v2109, %v2253
    %v2377 = vmax.f32 %v2111, %v2255
    %v2378 = vmax.f32 %v2112, %v2257
    %v2379 = vmax.f32 %v2114, %v2259
    %v2380 = vmax.f32 %v2116, %v2261
    %v2381 = vmax.f32 %v2118, %v2263
    %v2382 = vmax.f32 %v2119, %v2265
    %v2383 = vmax.f32 %v2121, %v2267
    %v2384 = vmax.f32 %v2123, %v2269
    %v2385 = vmax.f32 %v2125, %v2271
    %v2386 = vmax.f32 %v2126, %v2273
    %v2387 = vmax.f32 %v2128, %v2275
    %v2388 = vmax.f32 %v2130, %v2277
    %v2389 = vmax.f32 %v2132, %v2279
    %v2390 = vmax.f32 %v2133, %v2281
    %v2391 = vmax.f32 %v2135, %v2283
    %v2392 = vmax.f32 %v2137, %v2285
    %v2393 = vmax.f32 %v2139, %v2287
    %v2394 = vmax.f32 %v2140, %v2289
    %v2395 = vmax.f32 %v2142, %v2291
    %v2396 = vmax.f32 %v2144, %v2293
    %v2397 = vmax.f32 %v2146, %v2295
    %v2398 = vmax.f32 %v2147, %v2297
    %v2399 = vmax.f32 %v2149, %v2299
    %v2400 = vld [vmem:[#allocation8] sm:$0xff]
    %v2401 = vld [vmem:[#allocation8 + $0x8] sm:$0xff]
    %v2402 = vld [vmem:[#allocation8 + $0x10] sm:$0xff]
    %v2403 = vld [vmem:[#allocation8 + $0x18] sm:$0xff]
    %v2404 = vld [vmem:[#allocation8 + $0x20] sm:$0xff]
    %v2405 = vld [vmem:[#allocation8 + $0x28] sm:$0xff]
    %v2406 = vld [vmem:[#allocation8 + $0x30] sm:$0xff]
    %v2407 = vld [vmem:[#allocation8 + $0x38] sm:$0xff]
    %v2408 = vld [vmem:[#allocation8 + $0x40] sm:$0xff]
    %v2409 = vld [vmem:[#allocation8 + $0x48] sm:$0xff]
    %v2410 = vld [vmem:[#allocation8 + $0x50] sm:$0xff]
    %v2411 = vld [vmem:[#allocation8 + $0x58] sm:$0xff]
    %v2412 = vld [vmem:[#allocation8 + $0x60] sm:$0xff]
    %v2413 = vld [vmem:[#allocation8 + $0x68] sm:$0xff]
    %v2414 = vld [vmem:[#allocation8 + $0x70] sm:$0xff]
    %v2415 = vld [vmem:[#allocation8 + $0x78] sm:$0xff]
    %v2416 = vld [vmem:[#allocation8 + $0x80] sm:$0xff]
    %v2417 = vld [vmem:[#allocation8 + $0x88] sm:$0xff]
    %v2418 = vld [vmem:[#allocation8 + $0x90] sm:$0xff]
    %v2419 = vld [vmem:[#allocation8 + $0x98] sm:$0xff]
    %v2420 = vld [vmem:[#allocation8 + $0xa0] sm:$0xff]
    %v2421 = vld [vmem:[#allocation8 + $0xa8] sm:$0xff]
    %v2422 = vld [vmem:[#allocation8 + $0xb0] sm:$0xff]
    %v2423 = vld [vmem:[#allocation8 + $0xb8] sm:$0xff]
    %v2424 = vld [vmem:[#allocation8 + $0xc0] sm:$0xff]
    %v2425 = vld [vmem:[#allocation8 + $0xc8] sm:$0xff]
    %v2426 = vld [vmem:[#allocation8 + $0xd0] sm:$0xff]
    %v2427 = vld [vmem:[#allocation8 + $0xd8] sm:$0xff]
    %v2428 = vld [vmem:[#allocation8 + $0xe0] sm:$0xff]
    %v2429 = vld [vmem:[#allocation8 + $0xe8] sm:$0xff]
    %v2430 = vld [vmem:[#allocation8 + $0xf0] sm:$0xff]
    %v2431 = vld [vmem:[#allocation8 + $0xf8] sm:$0xff]
    %v2432 = vld [vmem:[#allocation8 + $0x100] sm:$0xff]
    %v2433 = vld [vmem:[#allocation8 + $0x108] sm:$0xff]
    %v2434 = vld [vmem:[#allocation8 + $0x110] sm:$0xff]
    %v2435 = vld [vmem:[#allocation8 + $0x118] sm:$0xff]
    %v2436 = vld [vmem:[#allocation8 + $0x120] sm:$0xff]
    %v2437 = vld [vmem:[#allocation8 + $0x128] sm:$0xff]
    %v2438 = vld [vmem:[#allocation8 + $0x130] sm:$0xff]
    %v2439 = vld [vmem:[#allocation8 + $0x138] sm:$0xff]
    %v2440 = vld [vmem:[#allocation8 + $0x140] sm:$0xff]
    %v2441 = vld [vmem:[#allocation8 + $0x148] sm:$0xff]
    %v2442 = vld [vmem:[#allocation8 + $0x150] sm:$0xff]
    %v2443 = vld [vmem:[#allocation8 + $0x158] sm:$0xff]
    %v2444 = vld [vmem:[#allocation8 + $0x160] sm:$0xff]
    %v2445 = vld [vmem:[#allocation8 + $0x168] sm:$0xff]
    %v2446 = vld [vmem:[#allocation8 + $0x170] sm:$0xff]
    %v2447 = vld [vmem:[#allocation8 + $0x178] sm:$0xff]
    %v2448 = vld [vmem:[#allocation8 + $0x180] sm:$0xff]
    %v2449 = vld [vmem:[#allocation8 + $0x188] sm:$0xff]
    %v2450 = vld [vmem:[#allocation8 + $0x190] sm:$0xff]
    %v2451 = vld [vmem:[#allocation8 + $0x198] sm:$0xff]
    %v2452 = vld [vmem:[#allocation8 + $0x1a0] sm:$0xff]
    %v2453 = vld [vmem:[#allocation8 + $0x1a8] sm:$0xff]
    %v2454 = vld [vmem:[#allocation8 + $0x1b0] sm:$0xff]
    %v2455 = vld [vmem:[#allocation8 + $0x1b8] sm:$0xff]
    %v2456 = vld [vmem:[#allocation8 + $0x1c0] sm:$0xff]
    %v2457 = vld [vmem:[#allocation8 + $0x1c8] sm:$0xff]
    %v2458 = vld [vmem:[#allocation8 + $0x1d0] sm:$0xff]
    %v2459 = vld [vmem:[#allocation8 + $0x1d8] sm:$0xff]
    %v2460 = vld [vmem:[#allocation8 + $0x1e0] sm:$0xff]
    %v2461 = vld [vmem:[#allocation8 + $0x1e8] sm:$0xff]
    %v2462 = vld [vmem:[#allocation8 + $0x1f0] sm:$0xff]
    %v2463 = vld [vmem:[#allocation8 + $0x1f8] sm:$0xff]
    %v2464 = vld [vmem:[#allocation8 + $0x200] sm:$0xff]
    %v2465 = vld [vmem:[#allocation8 + $0x208] sm:$0xff]
    %v2466 = vld [vmem:[#allocation8 + $0x210] sm:$0xff]
    %v2467 = vld [vmem:[#allocation8 + $0x218] sm:$0xff]
    %v2468 = vld [vmem:[#allocation8 + $0x220] sm:$0xff]
    %v2469 = vld [vmem:[#allocation8 + $0x228] sm:$0xff]
    %v2470 = vld [vmem:[#allocation8 + $0x230] sm:$0xff]
    %v2471 = vld [vmem:[#allocation8 + $0x238] sm:$0xff]
    %v2472 = vld [vmem:[#allocation8 + $0x240] sm:$0xff]
    %v2473 = vld [vmem:[#allocation8 + $0x248] sm:$0xff]
    %v2474 = vld [vmem:[#allocation8 + $0x250] sm:$0xff]
    %v2475 = vld [vmem:[#allocation8 + $0x258] sm:$0xff]
    %v2476 = vld [vmem:[#allocation8 + $0x260] sm:$0xff]
    %v2477 = vld [vmem:[#allocation8 + $0x268] sm:$0xff]
    %v2478 = vld [vmem:[#allocation8 + $0x270] sm:$0xff]
    %v2479 = vld [vmem:[#allocation8 + $0x278] sm:$0xff]
    %v2480 = vld [vmem:[#allocation8 + $0x280] sm:$0xff]
    %v2481 = vld [vmem:[#allocation8 + $0x288] sm:$0xff]
    %v2482 = vld [vmem:[#allocation8 + $0x290] sm:$0xff]
    %v2483 = vld [vmem:[#allocation8 + $0x298] sm:$0xff]
    %v2484 = vld [vmem:[#allocation8 + $0x2a0] sm:$0xff]
    %v2485 = vld [vmem:[#allocation8 + $0x2a8] sm:$0xff]
    %v2486 = vld [vmem:[#allocation8 + $0x2b0] sm:$0xff]
    %v2487 = vld [vmem:[#allocation8 + $0x2b8] sm:$0xff]
    %v2488 = vld [vmem:[#allocation8 + $0x2c0] sm:$0xff]
    %v2489 = vld [vmem:[#allocation8 + $0x2c8] sm:$0xff]
    %v2490 = vld [vmem:[#allocation8 + $0x2d0] sm:$0xff]
    %v2491 = vld [vmem:[#allocation8 + $0x2d8] sm:$0xff]
    %v2492 = vld [vmem:[#allocation8 + $0x2e0] sm:$0xff]
    %v2493 = vld [vmem:[#allocation8 + $0x2e8] sm:$0xff]
    %v2494 = vld [vmem:[#allocation8 + $0x2f0] sm:$0xff]
    %v2495 = vld [vmem:[#allocation8 + $0x2f8] sm:$0xff]
    %v2496 = vld [vmem:[#allocation8 + $0x300] sm:$0xff]
    %v2497 = vld [vmem:[#allocation8 + $0x308] sm:$0xff]
    %v2498 = vld [vmem:[#allocation8 + $0x310] sm:$0xff]
    %v2499 = vld [vmem:[#allocation8 + $0x318] sm:$0xff]
    %v2500 = vld [vmem:[#allocation8 + $0x320] sm:$0xff]
    %v2501 = vld [vmem:[#allocation8 + $0x328] sm:$0xff]
    %v2502 = vld [vmem:[#allocation8 + $0x330] sm:$0xff]
    %v2503 = vld [vmem:[#allocation8 + $0x338] sm:$0xff]
    %v2504 = vld [vmem:[#allocation8 + $0x340] sm:$0xff]
    %v2505 = vld [vmem:[#allocation8 + $0x348] sm:$0xff]
    %v2506 = vld [vmem:[#allocation8 + $0x350] sm:$0xff]
    %v2507 = vld [vmem:[#allocation8 + $0x358] sm:$0xff]
    %v2508 = vld [vmem:[#allocation8 + $0x360] sm:$0xff]
    %v2509 = vld [vmem:[#allocation8 + $0x368] sm:$0xff]
    %v2510 = vld [vmem:[#allocation8 + $0x370] sm:$0xff]
    %v2511 = vld [vmem:[#allocation8 + $0x378] sm:$0xff]
    %v2512 = vld [vmem:[#allocation8 + $0x380] sm:$0xff]
    %v2513 = vld [vmem:[#allocation8 + $0x388] sm:$0xff]
    %v2514 = vld [vmem:[#allocation8 + $0x390] sm:$0xff]
    %v2515 = vld [vmem:[#allocation8 + $0x398] sm:$0xff]
    %v2516 = vld [vmem:[#allocation8 + $0x3a0] sm:$0xff]
    %v2517 = vld [vmem:[#allocation8 + $0x3a8] sm:$0xff]
    %v2518 = vld [vmem:[#allocation8 + $0x3b0] sm:$0xff]
    %v2519 = vld [vmem:[#allocation8 + $0x3b8] sm:$0xff]
    %v2520 = vld [vmem:[#allocation8 + $0x3c0] sm:$0xff]
    %v2521 = vld [vmem:[#allocation8 + $0x3c8] sm:$0xff]
    %v2522 = vld [vmem:[#allocation8 + $0x3d0] sm:$0xff]
    %v2523 = vld [vmem:[#allocation8 + $0x3d8] sm:$0xff]
    %v2524 = vld [vmem:[#allocation8 + $0x3e0] sm:$0xff]
    %v2525 = vld [vmem:[#allocation8 + $0x3e8] sm:$0xff]
    %v2526 = vld [vmem:[#allocation8 + $0x3f0] sm:$0xff]
    %v2527 = vld [vmem:[#allocation8 + $0x3f8] sm:$0xff]
    %v2528 = vld [vmem:[#allocation8 + $0x400] sm:$0xff]
    %v2529 = vld [vmem:[#allocation8 + $0x408] sm:$0xff]
    %v2530 = vld [vmem:[#allocation8 + $0x410] sm:$0xff]
    %v2531 = vld [vmem:[#allocation8 + $0x418] sm:$0xff]
    %v2532 = vld [vmem:[#allocation8 + $0x420] sm:$0xff]
    %v2533 = vld [vmem:[#allocation8 + $0x428] sm:$0xff]
    %v2534 = vld [vmem:[#allocation8 + $0x430] sm:$0xff]
    %v2535 = vld [vmem:[#allocation8 + $0x438] sm:$0xff]
    %v2536 = vld [vmem:[#allocation8 + $0x440] sm:$0xff]
    %v2537 = vld [vmem:[#allocation8 + $0x448] sm:$0xff]
    %v2538 = vld [vmem:[#allocation8 + $0x450] sm:$0xff]
    %v2539 = vld [vmem:[#allocation8 + $0x458] sm:$0xff]
    %v2540 = vld [vmem:[#allocation8 + $0x460] sm:$0xff]
    %v2541 = vld [vmem:[#allocation8 + $0x468] sm:$0xff]
    %v2542 = vld [vmem:[#allocation8 + $0x470] sm:$0xff]
    %v2543 = vld [vmem:[#allocation8 + $0x478] sm:$0xff]
    %v2544 = vld [vmem:[#allocation8 + $0x480] sm:$0xff]
    %v2545 = vld [vmem:[#allocation8 + $0x488] sm:$0xff]
    %v2546 = vld [vmem:[#allocation8 + $0x490] sm:$0xff]
    %v2547 = vld [vmem:[#allocation8 + $0x498] sm:$0xff]
    %v2548 = vld [vmem:[#allocation8 + $0x4a0] sm:$0xff]
    %v2549 = vld [vmem:[#allocation8 + $0x4a8] sm:$0xff]
    %v2550 = vld [vmem:[#allocation8 + $0x4b0] sm:$0xff]
    %v2551 = vld [vmem:[#allocation8 + $0x4b8] sm:$0xff]
    %v2552 = vld [vmem:[#allocation8 + $0x4c0] sm:$0xff]
    %v2553 = vld [vmem:[#allocation8 + $0x4c8] sm:$0xff]
    %v2554 = vld [vmem:[#allocation8 + $0x4d0] sm:$0xff]
    %v2555 = vld [vmem:[#allocation8 + $0x4d8] sm:$0xff]
    %v2556 = vld [vmem:[#allocation8 + $0x4e0] sm:$0xff]
    %v2557 = vld [vmem:[#allocation8 + $0x4e8] sm:$0xff]
    %v2558 = vld [vmem:[#allocation8 + $0x4f0] sm:$0xff]
    %v2559 = vld [vmem:[#allocation8 + $0x4f8] sm:$0xff]
    %v2560 = vld [vmem:[#allocation8 + $0x500] sm:$0xff]
    %v2561 = vld [vmem:[#allocation8 + $0x508] sm:$0xff]
    %v2562 = vld [vmem:[#allocation8 + $0x510] sm:$0xff]
    %v2563 = vld [vmem:[#allocation8 + $0x518] sm:$0xff]
    %v2564 = vld [vmem:[#allocation8 + $0x520] sm:$0xff]
    %v2565 = vld [vmem:[#allocation8 + $0x528] sm:$0xff]
    %v2566 = vld [vmem:[#allocation8 + $0x530] sm:$0xff]
    %v2567 = vld [vmem:[#allocation8 + $0x538] sm:$0xff]
    %v2568 = vld [vmem:[#allocation8 + $0x540] sm:$0xff]
    %v2569 = vld [vmem:[#allocation8 + $0x548] sm:$0xff]
    %v2570 = vld [vmem:[#allocation8 + $0x550] sm:$0xff]
    %v2571 = vld [vmem:[#allocation8 + $0x558] sm:$0xff]
    %v2572 = vld [vmem:[#allocation8 + $0x560] sm:$0xff]
    %v2573 = vld [vmem:[#allocation8 + $0x568] sm:$0xff]
    %v2574 = vld [vmem:[#allocation8 + $0x570] sm:$0xff]
    %v2575 = vld [vmem:[#allocation8 + $0x578] sm:$0xff]
    %v2576 = vld [vmem:[#allocation8 + $0x580] sm:$0xff]
    %v2577 = vld [vmem:[#allocation8 + $0x588] sm:$0xff]
    %v2578 = vld [vmem:[#allocation8 + $0x590] sm:$0xff]
    %v2579 = vld [vmem:[#allocation8 + $0x598] sm:$0xff]
    %v2580 = vld [vmem:[#allocation8 + $0x5a0] sm:$0xff]
    %v2581 = vld [vmem:[#allocation8 + $0x5a8] sm:$0xff]
    %v2582 = vld [vmem:[#allocation8 + $0x5b0] sm:$0xff]
    %v2583 = vld [vmem:[#allocation8 + $0x5b8] sm:$0xff]
    %v2584 = vld [vmem:[#allocation8 + $0x5c0] sm:$0xff]
    %v2585 = vld [vmem:[#allocation8 + $0x5c8] sm:$0xff]
    %v2586 = vld [vmem:[#allocation8 + $0x5d0] sm:$0xff]
    %v2587 = vld [vmem:[#allocation8 + $0x5d8] sm:$0xff]
    %v2588 = vld [vmem:[#allocation8 + $0x5e0] sm:$0xff]
    %v2589 = vld [vmem:[#allocation8 + $0x5e8] sm:$0xff]
    %v2590 = vld [vmem:[#allocation8 + $0x5f0] sm:$0xff]
    %v2591 = vld [vmem:[#allocation8 + $0x5f8] sm:$0xff]
    %v2592 = vld [vmem:[#allocation8 + $0x600] sm:$0xff]
    %v2593 = vld [vmem:[#allocation8 + $0x608] sm:$0xff]
    %v2594 = vld [vmem:[#allocation8 + $0x610] sm:$0xff]
    %v2595 = vld [vmem:[#allocation8 + $0x618] sm:$0xff]
    %v2596 = vld [vmem:[#allocation8 + $0x620] sm:$0xff]
    %v2597 = vld [vmem:[#allocation8 + $0x628] sm:$0xff]
    %v2598 = vld [vmem:[#allocation8 + $0x630] sm:$0xff]
    %v2599 = vld [vmem:[#allocation8 + $0x638] sm:$0xff]
    %v2600 = vld [vmem:[%s6] sm:$0x1]
    %v2651 = vsel %vm1250, %v2350, %v2350
    %v2652 = vsel %vm1254, %v2350, %v2651
    %v2653 = vrot.slane %v2351, 7
    %v2654 = vsel %vm1258, %v2653, %v2652
    %v2655 = vsel %vm1248, %v2653, %v2654
    %v2656 = vsel %vm1252, %v2653, %v2655
    %v2657 = vsel %vm1256, %v2653, %v2656
    %v2658 = vsel %vm1250, %v2352, %v2352
    %v2659 = vsel %vm1254, %v2352, %v2658
    %v2660 = vrot.slane %v2353, 7
    %v2661 = vsel %vm1258, %v2660, %v2659
    %v2662 = vsel %vm1248, %v2660, %v2661
    %v2663 = vsel %vm1252, %v2660, %v2662
    %v2664 = vsel %vm1256, %v2660, %v2663
    %v2665 = vsel %vm1250, %v2354, %v2354
    %v2666 = vsel %vm1254, %v2354, %v2665
    %v2667 = vrot.slane %v2355, 7
    %v2668 = vsel %vm1258, %v2667, %v2666
    %v2669 = vsel %vm1248, %v2667, %v2668
    %v2670 = vsel %vm1252, %v2667, %v2669
    %v2671 = vsel %vm1256, %v2667, %v2670
    %v2672 = vsel %vm1250, %v2356, %v2356
    %v2673 = vsel %vm1254, %v2356, %v2672
    %v2674 = vrot.slane %v2357, 7
    %v2675 = vsel %vm1258, %v2674, %v2673
    %v2676 = vsel %vm1248, %v2674, %v2675
    %v2677 = vsel %vm1252, %v2674, %v2676
    %v2678 = vsel %vm1256, %v2674, %v2677
    %v2679 = vsel %vm1250, %v2358, %v2358
    %v2680 = vsel %vm1254, %v2358, %v2679
    %v2681 = vrot.slane %v2359, 7
    %v2682 = vsel %vm1258, %v2681, %v2680
    %v2683 = vsel %vm1248, %v2681, %v2682
    %v2684 = vsel %vm1252, %v2681, %v2683
    %v2685 = vsel %vm1256, %v2681, %v2684
    %v2686 = vsel %vm1250, %v2360, %v2360
    %v2687 = vsel %vm1254, %v2360, %v2686
    %v2688 = vrot.slane %v2361, 7
    %v2689 = vsel %vm1258, %v2688, %v2687
    %v2690 = vsel %vm1248, %v2688, %v2689
    %v2691 = vsel %vm1252, %v2688, %v2690
    %v2692 = vsel %vm1256, %v2688, %v2691
    %v2693 = vsel %vm1250, %v2362, %v2362
    %v2694 = vsel %vm1254, %v2362, %v2693
    %v2695 = vrot.slane %v2363, 7
    %v2696 = vsel %vm1258, %v2695, %v2694
    %v2697 = vsel %vm1248, %v2695, %v2696
    %v2698 = vsel %vm1252, %v2695, %v2697
    %v2699 = vsel %vm1256, %v2695, %v2698
    %v2700 = vsel %vm1250, %v2364, %v2364
    %v2701 = vsel %vm1254, %v2364, %v2700
    %v2702 = vrot.slane %v2365, 7
    %v2703 = vsel %vm1258, %v2702, %v2701
    %v2704 = vsel %vm1248, %v2702, %v2703
    %v2705 = vsel %vm1252, %v2702, %v2704
    %v2706 = vsel %vm1256, %v2702, %v2705
    %v2707 = vsel %vm1250, %v2366, %v2366
    %v2708 = vsel %vm1254, %v2366, %v2707
    %v2709 = vrot.slane %v2367, 7
    %v2710 = vsel %vm1258, %v2709, %v2708
    %v2711 = vsel %vm1248, %v2709, %v2710
    %v2712 = vsel %vm1252, %v2709, %v2711
    %v2713 = vsel %vm1256, %v2709, %v2712
    %v2714 = vsel %vm1250, %v2368, %v2368
    %v2715 = vsel %vm1254, %v2368, %v2714
    %v2716 = vrot.slane %v2369, 7
    %v2717 = vsel %vm1258, %v2716, %v2715
    %v2718 = vsel %vm1248, %v2716, %v2717
    %v2719 = vsel %vm1252, %v2716, %v2718
    %v2720 = vsel %vm1256, %v2716, %v2719
    %v2721 = vsel %vm1250, %v2370, %v2370
    %v2722 = vsel %vm1254, %v2370, %v2721
    %v2723 = vrot.slane %v2371, 7
    %v2724 = vsel %vm1258, %v2723, %v2722
    %v2725 = vsel %vm1248, %v2723, %v2724
    %v2726 = vsel %vm1252, %v2723, %v2725
    %v2727 = vsel %vm1256, %v2723, %v2726
    %v2728 = vsel %vm1250, %v2372, %v2372
    %v2729 = vsel %vm1254, %v2372, %v2728
    %v2730 = vrot.slane %v2373, 7
    %v2731 = vsel %vm1258, %v2730, %v2729
    %v2732 = vsel %vm1248, %v2730, %v2731
    %v2733 = vsel %vm1252, %v2730, %v2732
    %v2734 = vsel %vm1256, %v2730, %v2733
    %v2735 = vsel %vm1250, %v2374, %v2374
    %v2736 = vsel %vm1254, %v2374, %v2735
    %v2737 = vrot.slane %v2375, 7
    %v2738 = vsel %vm1258, %v2737, %v2736
    %v2739 = vsel %vm1248, %v2737, %v2738
    %v2740 = vsel %vm1252, %v2737, %v2739
    %v2741 = vsel %vm1256, %v2737, %v2740
    %v2742 = vsel %vm1250, %v2376, %v2376
    %v2743 = vsel %vm1254, %v2376, %v2742
    %v2744 = vrot.slane %v2377, 7
    %v2745 = vsel %vm1258, %v2744, %v2743
    %v2746 = vsel %vm1248, %v2744, %v2745
    %v2747 = vsel %vm1252, %v2744, %v2746
    %v2748 = vsel %vm1256, %v2744, %v2747
    %v2749 = vsel %vm1250, %v2378, %v2378
    %v2750 = vsel %vm1254, %v2378, %v2749
    %v2751 = vrot.slane %v2379, 7
    %v2752 = vsel %vm1258, %v2751, %v2750
    %v2753 = vsel %vm1248, %v2751, %v2752
    %v2754 = vsel %vm1252, %v2751, %v2753
    %v2755 = vsel %vm1256, %v2751, %v2754
    %v2756 = vsel %vm1250, %v2380, %v2380
    %v2757 = vsel %vm1254, %v2380, %v2756
    %v2758 = vrot.slane %v2381, 7
    %v2759 = vsel %vm1258, %v2758, %v2757
    %v2760 = vsel %vm1248, %v2758, %v2759
    %v2761 = vsel %vm1252, %v2758, %v2760
    %v2762 = vsel %vm1256, %v2758, %v2761
    %v2763 = vsel %vm1250, %v2382, %v2382
    %v2764 = vsel %vm1254, %v2382, %v2763
    %v2765 = vrot.slane %v2383, 7
    %v2766 = vsel %vm1258, %v2765, %v2764
    %v2767 = vsel %vm1248, %v2765, %v2766
    %v2768 = vsel %vm1252, %v2765, %v2767
    %v2769 = vsel %vm1256, %v2765, %v2768
    %v2770 = vsel %vm1250, %v2384, %v2384
    %v2771 = vsel %vm1254, %v2384, %v2770
    %v2772 = vrot.slane %v2385, 7
    %v2773 = vsel %vm1258, %v2772, %v2771
    %v2774 = vsel %vm1248, %v2772, %v2773
    %v2775 = vsel %vm1252, %v2772, %v2774
    %v2776 = vsel %vm1256, %v2772, %v2775
    %v2777 = vsel %vm1250, %v2386, %v2386
    %v2778 = vsel %vm1254, %v2386, %v2777
    %v2779 = vrot.slane %v2387, 7
    %v2780 = vsel %vm1258, %v2779, %v2778
    %v2781 = vsel %vm1248, %v2779, %v2780
    %v2782 = vsel %vm1252, %v2779, %v2781
    %v2783 = vsel %vm1256, %v2779, %v2782
    %v2784 = vsel %vm1250, %v2388, %v2388
    %v2785 = vsel %vm1254, %v2388, %v2784
    %v2786 = vrot.slane %v2389, 7
    %v2787 = vsel %vm1258, %v2786, %v2785
    %v2788 = vsel %vm1248, %v2786, %v2787
    %v2789 = vsel %vm1252, %v2786, %v2788
    %v2790 = vsel %vm1256, %v2786, %v2789
    %v2791 = vsel %vm1250, %v2390, %v2390
    %v2792 = vsel %vm1254, %v2390, %v2791
    %v2793 = vrot.slane %v2391, 7
    %v2794 = vsel %vm1258, %v2793, %v2792
    %v2795 = vsel %vm1248, %v2793, %v2794
    %v2796 = vsel %vm1252, %v2793, %v2795
    %v2797 = vsel %vm1256, %v2793, %v2796
    %v2798 = vsel %vm1250, %v2392, %v2392
    %v2799 = vsel %vm1254, %v2392, %v2798
    %v2800 = vrot.slane %v2393, 7
    %v2801 = vsel %vm1258, %v2800, %v2799
    %v2802 = vsel %vm1248, %v2800, %v2801
    %v2803 = vsel %vm1252, %v2800, %v2802
    %v2804 = vsel %vm1256, %v2800, %v2803
    %v2805 = vsel %vm1250, %v2394, %v2394
    %v2806 = vsel %vm1254, %v2394, %v2805
    %v2807 = vrot.slane %v2395, 7
    %v2808 = vsel %vm1258, %v2807, %v2806
    %v2809 = vsel %vm1248, %v2807, %v2808
    %v2810 = vsel %vm1252, %v2807, %v2809
    %v2811 = vsel %vm1256, %v2807, %v2810
    %v2812 = vsel %vm1250, %v2396, %v2396
    %v2813 = vsel %vm1254, %v2396, %v2812
    %v2814 = vrot.slane %v2397, 7
    %v2815 = vsel %vm1258, %v2814, %v2813
    %v2816 = vsel %vm1248, %v2814, %v2815
    %v2817 = vsel %vm1252, %v2814, %v2816
    %v2818 = vsel %vm1256, %v2814, %v2817
    %v2819 = vsel %vm1250, %v2398, %v2398
    %v2820 = vsel %vm1254, %v2398, %v2819
    %v2821 = vrot.slane %v2399, 7
    %v2822 = vsel %vm1258, %v2821, %v2820
    %v2823 = vsel %vm1248, %v2821, %v2822
    %v2824 = vsel %vm1252, %v2821, %v2823
    %v2825 = vsel %vm1256, %v2821, %v2824
    %v2828 = vunpack.c.l.s4 1934713408
    %v2829 = vunpack.c.0.s8 %v2828
    %v2830 = vperm.slane %v2657, %v2829
    %v2831 = vrot.slane %v2830, 4
    %vm2832 = vcmask 1047556
    %v2833 = vsel %vm2832, 0.0, %v2831
    %v2836 = vunpack.c.l.s4 1934713408
    %v2837 = vunpack.c.0.s8 %v2836
    %v2838 = vperm.slane %v2664, %v2837
    %v2839 = vrot.slane %v2838, 4
    %v2840 = vsel %vm2832, 0.0, %v2839
    %v2843 = vunpack.c.l.s4 1934713408
    %v2844 = vunpack.c.0.s8 %v2843
    %v2845 = vperm.slane %v2671, %v2844
    %v2846 = vrot.slane %v2845, 4
    %v2847 = vsel %vm2832, 0.0, %v2846
    %v2850 = vunpack.c.l.s4 1934713408
    %v2851 = vunpack.c.0.s8 %v2850
    %v2852 = vperm.slane %v2678, %v2851
    %v2853 = vrot.slane %v2852, 4
    %v2854 = vsel %vm2832, 0.0, %v2853
    %v2857 = vunpack.c.l.s4 1934713408
    %v2858 = vunpack.c.0.s8 %v2857
    %v2859 = vperm.slane %v2685, %v2858
    %v2860 = vrot.slane %v2859, 4
    %v2861 = vsel %vm2832, 0.0, %v2860
    %v2864 = vunpack.c.l.s4 1934713408
    %v2865 = vunpack.c.0.s8 %v2864
    %v2866 = vperm.slane %v2692, %v2865
    %v2867 = vrot.slane %v2866, 4
    %v2868 = vsel %vm2832, 0.0, %v2867
    %v2871 = vunpack.c.l.s4 1934713408
    %v2872 = vunpack.c.0.s8 %v2871
    %v2873 = vperm.slane %v2699, %v2872
    %v2874 = vrot.slane %v2873, 4
    %v2875 = vsel %vm2832, 0.0, %v2874
    %v2878 = vunpack.c.l.s4 1934713408
    %v2879 = vunpack.c.0.s8 %v2878
    %v2880 = vperm.slane %v2706, %v2879
    %v2881 = vrot.slane %v2880, 4
    %v2882 = vsel %vm2832, 0.0, %v2881
    %v2885 = vunpack.c.l.s4 1934713408
    %v2886 = vunpack.c.0.s8 %v2885
    %v2887 = vperm.slane %v2713, %v2886
    %v2888 = vrot.slane %v2887, 4
    %v2889 = vsel %vm2832, 0.0, %v2888
    %v2892 = vunpack.c.l.s4 1934713408
    %v2893 = vunpack.c.0.s8 %v2892
    %v2894 = vperm.slane %v2720, %v2893
    %v2895 = vrot.slane %v2894, 4
    %v2896 = vsel %vm2832, 0.0, %v2895
    %v2899 = vunpack.c.l.s4 1934713408
    %v2900 = vunpack.c.0.s8 %v2899
    %v2901 = vperm.slane %v2727, %v2900
    %v2902 = vrot.slane %v2901, 4
    %v2903 = vsel %vm2832, 0.0, %v2902
    %v2906 = vunpack.c.l.s4 1934713408
    %v2907 = vunpack.c.0.s8 %v2906
    %v2908 = vperm.slane %v2734, %v2907
    %v2909 = vrot.slane %v2908, 4
    %v2910 = vsel %vm2832, 0.0, %v2909
    %v2913 = vunpack.c.l.s4 1934713408
    %v2914 = vunpack.c.0.s8 %v2913
    %v2915 = vperm.slane %v2741, %v2914
    %v2916 = vrot.slane %v2915, 4
    %v2917 = vsel %vm2832, 0.0, %v2916
    %v2920 = vunpack.c.l.s4 1934713408
    %v2921 = vunpack.c.0.s8 %v2920
    %v2922 = vperm.slane %v2748, %v2921
    %v2923 = vrot.slane %v2922, 4
    %v2924 = vsel %vm2832, 0.0, %v2923
    %v2927 = vunpack.c.l.s4 1934713408
    %v2928 = vunpack.c.0.s8 %v2927
    %v2929 = vperm.slane %v2755, %v2928
    %v2930 = vrot.slane %v2929, 4
    %v2931 = vsel %vm2832, 0.0, %v2930
    %v2934 = vunpack.c.l.s4 1934713408
    %v2935 = vunpack.c.0.s8 %v2934
    %v2936 = vperm.slane %v2762, %v2935
    %v2937 = vrot.slane %v2936, 4
    %v2938 = vsel %vm2832, 0.0, %v2937
    %v2941 = vunpack.c.l.s4 1934713408
    %v2942 = vunpack.c.0.s8 %v2941
    %v2943 = vperm.slane %v2769, %v2942
    %v2944 = vrot.slane %v2943, 4
    %v2945 = vsel %vm2832, 0.0, %v2944
    %v2948 = vunpack.c.l.s4 1934713408
    %v2949 = vunpack.c.0.s8 %v2948
    %v2950 = vperm.slane %v2776, %v2949
    %v2951 = vrot.slane %v2950, 4
    %v2952 = vsel %vm2832, 0.0, %v2951
    %v2955 = vunpack.c.l.s4 1934713408
    %v2956 = vunpack.c.0.s8 %v2955
    %v2957 = vperm.slane %v2783, %v2956
    %v2958 = vrot.slane %v2957, 4
    %v2959 = vsel %vm2832, 0.0, %v2958
    %v2962 = vunpack.c.l.s4 1934713408
    %v2963 = vunpack.c.0.s8 %v2962
    %v2964 = vperm.slane %v2790, %v2963
    %v2965 = vrot.slane %v2964, 4
    %v2966 = vsel %vm2832, 0.0, %v2965
    %v2969 = vunpack.c.l.s4 1934713408
    %v2970 = vunpack.c.0.s8 %v2969
    %v2971 = vperm.slane %v2797, %v2970
    %v2972 = vrot.slane %v2971, 4
    %v2973 = vsel %vm2832, 0.0, %v2972
    %v2976 = vunpack.c.l.s4 1934713408
    %v2977 = vunpack.c.0.s8 %v2976
    %v2978 = vperm.slane %v2804, %v2977
    %v2979 = vrot.slane %v2978, 4
    %v2980 = vsel %vm2832, 0.0, %v2979
    %v2983 = vunpack.c.l.s4 1934713408
    %v2984 = vunpack.c.0.s8 %v2983
    %v2985 = vperm.slane %v2811, %v2984
    %v2986 = vrot.slane %v2985, 4
    %v2987 = vsel %vm2832, 0.0, %v2986
    %v2990 = vunpack.c.l.s4 1934713408
    %v2991 = vunpack.c.0.s8 %v2990
    %v2992 = vperm.slane %v2818, %v2991
    %v2993 = vrot.slane %v2992, 4
    %v2994 = vsel %vm2832, 0.0, %v2993
    %v2997 = vunpack.c.l.s4 1934713408
    %v2998 = vunpack.c.0.s8 %v2997
    %v2999 = vperm.slane %v2825, %v2998
    %v3000 = vrot.slane %v2999, 4
    %v3001 = vsel %vm2832, 0.0, %v3000
    %v3003 = vperm.slane %v2833, 0
    %3004 = vrot.lane.b32.xlu0 %v3003, 32
    %v3005 = vpop.permute.xlu0 %3004
    %v3008 = vperm.slane %v2838, 0
    %3009 = vrot.lane.b32.xlu0 %v3008, 64
    %v3010 = vpop.permute.xlu0 %3009
    %v3013 = vperm.slane %v2840, 0
    %3014 = vrot.lane.b32.xlu0 %v3013, 96
    %v3015 = vpop.permute.xlu0 %3014
    %v3018 = vperm.slane %v2847, 0
    %3019 = vrot.lane.b32.xlu0 %v3018, 32
    %v3020 = vpop.permute.xlu0 %3019
    %v3023 = vperm.slane %v2852, 0
    %3024 = vrot.lane.b32.xlu0 %v3023, 64
    %v3025 = vpop.permute.xlu0 %3024
    %v3028 = vperm.slane %v2854, 0
    %3029 = vrot.lane.b32.xlu0 %v3028, 96
    %v3030 = vpop.permute.xlu0 %3029
    %v3033 = vperm.slane %v2861, 0
    %3034 = vrot.lane.b32.xlu0 %v3033, 32
    %v3035 = vpop.permute.xlu0 %3034
    %v3038 = vperm.slane %v2866, 0
    %3039 = vrot.lane.b32.xlu0 %v3038, 64
    %v3040 = vpop.permute.xlu0 %3039
    %v3043 = vperm.slane %v2868, 0
    %3044 = vrot.lane.b32.xlu0 %v3043, 96
    %v3045 = vpop.permute.xlu0 %3044
    %v3048 = vperm.slane %v2875, 0
    %3049 = vrot.lane.b32.xlu0 %v3048, 32
    %v3050 = vpop.permute.xlu0 %3049
    %v3053 = vperm.slane %v2880, 0
    %3054 = vrot.lane.b32.xlu0 %v3053, 64
    %v3055 = vpop.permute.xlu0 %3054
    %v3058 = vperm.slane %v2882, 0
    %3059 = vrot.lane.b32.xlu0 %v3058, 96
    %v3060 = vpop.permute.xlu0 %3059
    %v3063 = vperm.slane %v2889, 0
    %3064 = vrot.lane.b32.xlu0 %v3063, 32
    %v3065 = vpop.permute.xlu0 %3064
    %v3068 = vperm.slane %v2894, 0
    %3069 = vrot.lane.b32.xlu0 %v3068, 64
    %v3070 = vpop.permute.xlu0 %3069
    %v3073 = vperm.slane %v2896, 0
    %3074 = vrot.lane.b32.xlu0 %v3073, 96
    %v3075 = vpop.permute.xlu0 %3074
    %v3078 = vperm.slane %v2903, 0
    %3079 = vrot.lane.b32.xlu0 %v3078, 32
    %v3080 = vpop.permute.xlu0 %3079
    %v3083 = vperm.slane %v2908, 0
    %3084 = vrot.lane.b32.xlu0 %v3083, 64
    %v3085 = vpop.permute.xlu0 %3084
    %v3088 = vperm.slane %v2910, 0
    %3089 = vrot.lane.b32.xlu0 %v3088, 96
    %v3090 = vpop.permute.xlu0 %3089
    %v3093 = vperm.slane %v2917, 0
    %3094 = vrot.lane.b32.xlu0 %v3093, 32
    %v3095 = vpop.permute.xlu0 %3094
    %v3098 = vperm.slane %v2922, 0
    %3099 = vrot.lane.b32.xlu0 %v3098, 64
    %v3100 = vpop.permute.xlu0 %3099
    %v3103 = vperm.slane %v2924, 0
    %3104 = vrot.lane.b32.xlu0 %v3103, 96
    %v3105 = vpop.permute.xlu0 %3104
    %v3108 = vperm.slane %v2931, 0
    %3109 = vrot.lane.b32.xlu0 %v3108, 32
    %v3110 = vpop.permute.xlu0 %3109
    %v3113 = vperm.slane %v2936, 0
    %3114 = vrot.lane.b32.xlu0 %v3113, 64
    %v3115 = vpop.permute.xlu0 %3114
    %v3118 = vperm.slane %v2938, 0
    %3119 = vrot.lane.b32.xlu0 %v3118, 96
    %v3120 = vpop.permute.xlu0 %3119
    %v3123 = vperm.slane %v2945, 0
    %3124 = vrot.lane.b32.xlu0 %v3123, 32
    %v3125 = vpop.permute.xlu0 %3124
    %v3128 = vperm.slane %v2950, 0
    %3129 = vrot.lane.b32.xlu0 %v3128, 64
    %v3130 = vpop.permute.xlu0 %3129
    %v3133 = vperm.slane %v2952, 0
    %3134 = vrot.lane.b32.xlu0 %v3133, 96
    %v3135 = vpop.permute.xlu0 %3134
    %v3138 = vperm.slane %v2959, 0
    %3139 = vrot.lane.b32.xlu0 %v3138, 32
    %v3140 = vpop.permute.xlu0 %3139
    %v3143 = vperm.slane %v2964, 0
    %3144 = vrot.lane.b32.xlu0 %v3143, 64
    %v3145 = vpop.permute.xlu0 %3144
    %v3148 = vperm.slane %v2966, 0
    %3149 = vrot.lane.b32.xlu0 %v3148, 96
    %v3150 = vpop.permute.xlu0 %3149
    %v3153 = vperm.slane %v2973, 0
    %3154 = vrot.lane.b32.xlu0 %v3153, 32
    %v3155 = vpop.permute.xlu0 %3154
    %v3158 = vperm.slane %v2978, 0
    %3159 = vrot.lane.b32.xlu0 %v3158, 64
    %v3160 = vpop.permute.xlu0 %3159
    %v3163 = vperm.slane %v2980, 0
    %3164 = vrot.lane.b32.xlu0 %v3163, 96
    %v3165 = vpop.permute.xlu0 %3164
    %v3168 = vperm.slane %v2987, 0
    %3169 = vrot.lane.b32.xlu0 %v3168, 32
    %v3170 = vpop.permute.xlu0 %3169
    %v3173 = vperm.slane %v2992, 0
    %3174 = vrot.lane.b32.xlu0 %v3173, 64
    %v3175 = vpop.permute.xlu0 %3174
    %v3178 = vperm.slane %v2994, 0
    %3179 = vrot.lane.b32.xlu0 %v3178, 96
    %v3180 = vpop.permute.xlu0 %3179
    %v3183 = vperm.slane %v3001, 0
    %3184 = vrot.lane.b32.xlu0 %v3183, 32
    %v3185 = vpop.permute.xlu0 %3184
    %vm3187 = vcmask 261120
    %v3188 = vsel %vm3187, %v2830, %v3005
    %vm3189 = vcmask 523264
    %v3190 = vsel %vm3189, %v3188, %v3010
    %vm3191 = vcmask 785408
    %v3192 = vsel %vm3191, %v3190, %v3015
    %v3193 = vsel %vm3187, %v2845, %v3020
    %v3194 = vsel %vm3189, %v3193, %v3025
    %v3195 = vsel %vm3191, %v3194, %v3030
    %v3196 = vsel %vm3187, %v2859, %v3035
    %v3197 = vsel %vm3189, %v3196, %v3040
    %v3198 = vsel %vm3191, %v3197, %v3045
    %v3199 = vsel %vm3187, %v2873, %v3050
    %v3200 = vsel %vm3189, %v3199, %v3055
    %v3201 = vsel %vm3191, %v3200, %v3060
    %v3202 = vsel %vm3187, %v2887, %v3065
    %v3203 = vsel %vm3189, %v3202, %v3070
    %v3204 = vsel %vm3191, %v3203, %v3075
    %v3205 = vsel %vm3187, %v2901, %v3080
    %v3206 = vsel %vm3189, %v3205, %v3085
    %v3207 = vsel %vm3191, %v3206, %v3090
    %v3208 = vsel %vm3187, %v2915, %v3095
    %v3209 = vsel %vm3189, %v3208, %v3100
    %v3210 = vsel %vm3191, %v3209, %v3105
    %v3211 = vsel %vm3187, %v2929, %v3110
    %v3212 = vsel %vm3189, %v3211, %v3115
    %v3213 = vsel %vm3191, %v3212, %v3120
    %v3214 = vsel %vm3187, %v2943, %v3125
    %v3215 = vsel %vm3189, %v3214, %v3130
    %v3216 = vsel %vm3191, %v3215, %v3135
    %v3217 = vsel %vm3187, %v2957, %v3140
    %v3218 = vsel %vm3189, %v3217, %v3145
    %v3219 = vsel %vm3191, %v3218, %v3150
    %v3220 = vsel %vm3187, %v2971, %v3155
    %v3221 = vsel %vm3189, %v3220, %v3160
    %v3222 = vsel %vm3191, %v3221, %v3165
    %v3223 = vsel %vm3187, %v2985, %v3170
    %v3224 = vsel %vm3189, %v3223, %v3175
    %v3225 = vsel %vm3191, %v3224, %v3180
    %v3226 = vsel %vm3187, %v2999, %v3185
    %v3228 = vsel %vm3189, %v3226, 0
    %3230 = vmatpush.msra.mxu0 %v2415
    %3231 = vmatpush.msra.mxu0 %v2414
    %3232 = vmatpush.msra.mxu0 %v2413
    %3233 = vmatpush.msra.mxu0 %v2412
    %3234 = vmatpush.msra.mxu0 %v2411
    %3235 = vmatpush.msra.mxu0 %v2410
    %3236 = vmatpush.msra.mxu0 %v2409
    %3237 = vmatpush.msra.mxu0 %v2408
    %3238 = vmatpush.msra.mxu0 %v2407
    %3239 = vmatpush.msra.mxu0 %v2406
    %3240 = vmatpush.msra.mxu0 %v2405
    %3241 = vmatpush.msra.mxu0 %v2404
    %3242 = vmatpush.msra.mxu0 %v2403
    %3243 = vmatpush.msra.mxu0 %v2402
    %3244 = vmatpush.msra.mxu0 %v2401
    %3245 = vmatpush.msra.mxu0 %v2400
    %3246 = vmatmul.f32.gmra.mxu0 %v3192
    %v3247 = vpop.f32.mrf.mxu0
    %v3248 = vadd.f32 %v2600, %v3247
    %3249 = vdwg.mxu0
    %3250 = vmatpush.msra.mxu0 %v2431
    %3251 = vmatpush.msra.mxu0 %v2430
    %3252 = vmatpush.msra.mxu0 %v2429
    %3253 = vmatpush.msra.mxu0 %v2428
    %3254 = vmatpush.msra.mxu0 %v2427
    %3255 = vmatpush.msra.mxu0 %v2426
    %3256 = vmatpush.msra.mxu0 %v2425
    %3257 = vmatpush.msra.mxu0 %v2424
    %3258 = vmatpush.msra.mxu0 %v2423
    %3259 = vmatpush.msra.mxu0 %v2422
    %3260 = vmatpush.msra.mxu0 %v2421
    %3261 = vmatpush.msra.mxu0 %v2420
    %3262 = vmatpush.msra.mxu0 %v2419
    %3263 = vmatpush.msra.mxu0 %v2418
    %3264 = vmatpush.msra.mxu0 %v2417
    %3265 = vmatpush.msra.mxu0 %v2416
    %3266 = vmatmul.f32.gmra.mxu0 %v3195
    %v3267 = vpop.f32.mrf.mxu0
    %v3268 = vadd.f32 %v3248, %v3267
    %3269 = vdwg.mxu0
    %3270 = vmatpush.msra.mxu0 %v2447
    %3271 = vmatpush.msra.mxu0 %v2446
    %3272 = vmatpush.msra.mxu0 %v2445
    %3273 = vmatpush.msra.mxu0 %v2444
    %3274 = vmatpush.msra.mxu0 %v2443
    %3275 = vmatpush.msra.mxu0 %v2442
    %3276 = vmatpush.msra.mxu0 %v2441
    %3277 = vmatpush.msra.mxu0 %v2440
    %3278 = vmatpush.msra.mxu0 %v2439
    %3279 = vmatpush.msra.mxu0 %v2438
    %3280 = vmatpush.msra.mxu0 %v2437
    %3281 = vmatpush.msra.mxu0 %v2436
    %3282 = vmatpush.msra.mxu0 %v2435
    %3283 = vmatpush.msra.mxu0 %v2434
    %3284 = vmatpush.msra.mxu0 %v2433
    %3285 = vmatpush.msra.mxu0 %v2432
    %3286 = vmatmul.f32.gmra.mxu0 %v3198
    %v3287 = vpop.f32.mrf.mxu0
    %v3288 = vadd.f32 %v3268, %v3287
    %3289 = vdwg.mxu0
    %3290 = vmatpush.msra.mxu0 %v2463
    %3291 = vmatpush.msra.mxu0 %v2462
    %3292 = vmatpush.msra.mxu0 %v2461
    %3293 = vmatpush.msra.mxu0 %v2460
    %3294 = vmatpush.msra.mxu0 %v2459
    %3295 = vmatpush.msra.mxu0 %v2458
    %3296 = vmatpush.msra.mxu0 %v2457
    %3297 = vmatpush.msra.mxu0 %v2456
    %3298 = vmatpush.msra.mxu0 %v2455
    %3299 = vmatpush.msra.mxu0 %v2454
    %3300 = vmatpush.msra.mxu0 %v2453
    %3301 = vmatpush.msra.mxu0 %v2452
    %3302 = vmatpush.msra.mxu0 %v2451
    %3303 = vmatpush.msra.mxu0 %v2450
    %3304 = vmatpush.msra.mxu0 %v2449
    %3305 = vmatpush.msra.mxu0 %v2448
    %3306 = vmatmul.f32.gmra.mxu0 %v3201
    %v3307 = vpop.f32.mrf.mxu0
    %v3308 = vadd.f32 %v3288, %v3307
    %3309 = vdwg.mxu0
    %3310 = vmatpush.msra.mxu0 %v2479
    %3311 = vmatpush.msra.mxu0 %v2478
    %3312 = vmatpush.msra.mxu0 %v2477
    %3313 = vmatpush.msra.mxu0 %v2476
    %3314 = vmatpush.msra.mxu0 %v2475
    %3315 = vmatpush.msra.mxu0 %v2474
    %3316 = vmatpush.msra.mxu0 %v2473
    %3317 = vmatpush.msra.mxu0 %v2472
    %3318 = vmatpush.msra.mxu0 %v2471
    %3319 = vmatpush.msra.mxu0 %v2470
    %3320 = vmatpush.msra.mxu0 %v2469
    %3321 = vmatpush.msra.mxu0 %v2468
    %3322 = vmatpush.msra.mxu0 %v2467
    %3323 = vmatpush.msra.mxu0 %v2466
    %3324 = vmatpush.msra.mxu0 %v2465
    %3325 = vmatpush.msra.mxu0 %v2464
    %3326 = vmatmul.f32.gmra.mxu0 %v3204
    %v3327 = vpop.f32.mrf.mxu0
    %v3328 = vadd.f32 %v3308, %v3327
    %3329 = vdwg.mxu0
    %3330 = vmatpush.msra.mxu0 %v2495
    %3331 = vmatpush.msra.mxu0 %v2494
    %3332 = vmatpush.msra.mxu0 %v2493
    %3333 = vmatpush.msra.mxu0 %v2492
    %3334 = vmatpush.msra.mxu0 %v2491
    %3335 = vmatpush.msra.mxu0 %v2490
    %3336 = vmatpush.msra.mxu0 %v2489
    %3337 = vmatpush.msra.mxu0 %v2488
    %3338 = vmatpush.msra.mxu0 %v2487
    %3339 = vmatpush.msra.mxu0 %v2486
    %3340 = vmatpush.msra.mxu0 %v2485
    %3341 = vmatpush.msra.mxu0 %v2484
    %3342 = vmatpush.msra.mxu0 %v2483
    %3343 = vmatpush.msra.mxu0 %v2482
    %3344 = vmatpush.msra.mxu0 %v2481
    %3345 = vmatpush.msra.mxu0 %v2480
    %3346 = vmatmul.f32.gmra.mxu0 %v3207
    %v3347 = vpop.f32.mrf.mxu0
    %v3348 = vadd.f32 %v3328, %v3347
    %3349 = vdwg.mxu0
    %3350 = vmatpush.msra.mxu0 %v2511
    %3351 = vmatpush.msra.mxu0 %v2510
    %3352 = vmatpush.msra.mxu0 %v2509
    %3353 = vmatpush.msra.mxu0 %v2508
    %3354 = vmatpush.msra.mxu0 %v2507
    %3355 = vmatpush.msra.mxu0 %v2506
    %3356 = vmatpush.msra.mxu0 %v2505
    %3357 = vmatpush.msra.mxu0 %v2504
    %3358 = vmatpush.msra.mxu0 %v2503
    %3359 = vmatpush.msra.mxu0 %v2502
    %3360 = vmatpush.msra.mxu0 %v2501
    %3361 = vmatpush.msra.mxu0 %v2500
    %3362 = vmatpush.msra.mxu0 %v2499
    %3363 = vmatpush.msra.mxu0 %v2498
    %3364 = vmatpush.msra.mxu0 %v2497
    %3365 = vmatpush.msra.mxu0 %v2496
    %3366 = vmatmul.f32.gmra.mxu0 %v3210
    %v3367 = vpop.f32.mrf.mxu0
    %v3368 = vadd.f32 %v3348, %v3367
    %3369 = vdwg.mxu0
    %3370 = vmatpush.msra.mxu0 %v2527
    %3371 = vmatpush.msra.mxu0 %v2526
    %3372 = vmatpush.msra.mxu0 %v2525
    %3373 = vmatpush.msra.mxu0 %v2524
    %3374 = vmatpush.msra.mxu0 %v2523
    %3375 = vmatpush.msra.mxu0 %v2522
    %3376 = vmatpush.msra.mxu0 %v2521
    %3377 = vmatpush.msra.mxu0 %v2520
    %3378 = vmatpush.msra.mxu0 %v2519
    %3379 = vmatpush.msra.mxu0 %v2518
    %3380 = vmatpush.msra.mxu0 %v2517
    %3381 = vmatpush.msra.mxu0 %v2516
    %3382 = vmatpush.msra.mxu0 %v2515
    %3383 = vmatpush.msra.mxu0 %v2514
    %3384 = vmatpush.msra.mxu0 %v2513
    %3385 = vmatpush.msra.mxu0 %v2512
    %3386 = vmatmul.f32.gmra.mxu0 %v3213
    %v3387 = vpop.f32.mrf.mxu0
    %v3388 = vadd.f32 %v3368, %v3387
    %3389 = vdwg.mxu0
    %3390 = vmatpush.msra.mxu0 %v2543
    %3391 = vmatpush.msra.mxu0 %v2542
    %3392 = vmatpush.msra.mxu0 %v2541
    %3393 = vmatpush.msra.mxu0 %v2540
    %3394 = vmatpush.msra.mxu0 %v2539
    %3395 = vmatpush.msra.mxu0 %v2538
    %3396 = vmatpush.msra.mxu0 %v2537
    %3397 = vmatpush.msra.mxu0 %v2536
    %3398 = vmatpush.msra.mxu0 %v2535
    %3399 = vmatpush.msra.mxu0 %v2534
    %3400 = vmatpush.msra.mxu0 %v2533
    %3401 = vmatpush.msra.mxu0 %v2532
    %3402 = vmatpush.msra.mxu0 %v2531
    %3403 = vmatpush.msra.mxu0 %v2530
    %3404 = vmatpush.msra.mxu0 %v2529
    %3405 = vmatpush.msra.mxu0 %v2528
    %3406 = vmatmul.f32.gmra.mxu0 %v3216
    %v3407 = vpop.f32.mrf.mxu0
    %v3408 = vadd.f32 %v3388, %v3407
    %3409 = vdwg.mxu0
    %3410 = vmatpush.msra.mxu0 %v2559
    %3411 = vmatpush.msra.mxu0 %v2558
    %3412 = vmatpush.msra.mxu0 %v2557
    %3413 = vmatpush.msra.mxu0 %v2556
    %3414 = vmatpush.msra.mxu0 %v2555
    %3415 = vmatpush.msra.mxu0 %v2554
    %3416 = vmatpush.msra.mxu0 %v2553
    %3417 = vmatpush.msra.mxu0 %v2552
    %3418 = vmatpush.msra.mxu0 %v2551
    %3419 = vmatpush.msra.mxu0 %v2550
    %3420 = vmatpush.msra.mxu0 %v2549
    %3421 = vmatpush.msra.mxu0 %v2548
    %3422 = vmatpush.msra.mxu0 %v2547
    %3423 = vmatpush.msra.mxu0 %v2546
    %3424 = vmatpush.msra.mxu0 %v2545
    %3425 = vmatpush.msra.mxu0 %v2544
    %3426 = vmatmul.f32.gmra.mxu0 %v3219
    %v3427 = vpop.f32.mrf.mxu0
    %v3428 = vadd.f32 %v3408, %v3427
    %3429 = vdwg.mxu0
    %3430 = vmatpush.msra.mxu0 %v2575
    %3431 = vmatpush.msra.mxu0 %v2574
    %3432 = vmatpush.msra.mxu0 %v2573
    %3433 = vmatpush.msra.mxu0 %v2572
    %3434 = vmatpush.msra.mxu0 %v2571
    %3435 = vmatpush.msra.mxu0 %v2570
    %3436 = vmatpush.msra.mxu0 %v2569
    %3437 = vmatpush.msra.mxu0 %v2568
    %3438 = vmatpush.msra.mxu0 %v2567
    %3439 = vmatpush.msra.mxu0 %v2566
    %3440 = vmatpush.msra.mxu0 %v2565
    %3441 = vmatpush.msra.mxu0 %v2564
    %3442 = vmatpush.msra.mxu0 %v2563
    %3443 = vmatpush.msra.mxu0 %v2562
    %3444 = vmatpush.msra.mxu0 %v2561
    %3445 = vmatpush.msra.mxu0 %v2560
    %3446 = vmatmul.f32.gmra.mxu0 %v3222
    %v3447 = vpop.f32.mrf.mxu0
    %v3448 = vadd.f32 %v3428, %v3447
    %3449 = vdwg.mxu0
    %3450 = vmatpush.msra.mxu0 %v2591
    %3451 = vmatpush.msra.mxu0 %v2590
    %3452 = vmatpush.msra.mxu0 %v2589
    %3453 = vmatpush.msra.mxu0 %v2588
    %3454 = vmatpush.msra.mxu0 %v2587
    %3455 = vmatpush.msra.mxu0 %v2586
    %3456 = vmatpush.msra.mxu0 %v2585
    %3457 = vmatpush.msra.mxu0 %v2584
    %3458 = vmatpush.msra.mxu0 %v2583
    %3459 = vmatpush.msra.mxu0 %v2582
    %3460 = vmatpush.msra.mxu0 %v2581
    %3461 = vmatpush.msra.mxu0 %v2580
    %3462 = vmatpush.msra.mxu0 %v2579
    %3463 = vmatpush.msra.mxu0 %v2578
    %3464 = vmatpush.msra.mxu0 %v2577
    %3465 = vmatpush.msra.mxu0 %v2576
    %3466 = vmatmul.f32.gmra.mxu0 %v3225
    %v3467 = vpop.f32.mrf.mxu0
    %v3468 = vadd.f32 %v3448, %v3467
    %3469 = vdwg.mxu0
    %3470 = vmatpush.msra.mxu0 0.0
    %3471 = vmatpush.msra.mxu0 0.0
    %3472 = vmatpush.msra.mxu0 0.0
    %3473 = vmatpush.msra.mxu0 0.0
    %3474 = vmatpush.msra.mxu0 0.0
    %3475 = vmatpush.msra.mxu0 0.0
    %3476 = vmatpush.msra.mxu0 0.0
    %3477 = vmatpush.msra.mxu0 0.0
    %3478 = vmatpush.msra.mxu0 %v2599
    %3479 = vmatpush.msra.mxu0 %v2598
    %3480 = vmatpush.msra.mxu0 %v2597
    %3481 = vmatpush.msra.mxu0 %v2596
    %3482 = vmatpush.msra.mxu0 %v2595
    %3483 = vmatpush.msra.mxu0 %v2594
    %3484 = vmatpush.msra.mxu0 %v2593
    %3485 = vmatpush.msra.mxu0 %v2592
    %3486 = vmatmul.f32.gmra.mxu0 %v3228
    %v3487 = vpop.f32.mrf.mxu0
    %v3488 = vadd.f32 %v3468, %v3487
    %3489 = vdwg.mxu0
    %v3490 = vmax.f32 %v3488, 0.0
    %3491 = vrot.lane.b32.xlu0 %v2657, 96
    %v3492 = vpop.permute.xlu0 %3491
    %3493 = vrot.lane.b32.xlu0 %v2664, 96
    %v3494 = vpop.permute.xlu0 %3493
    %3495 = vrot.lane.b32.xlu0 %v2671, 96
    %v3496 = vpop.permute.xlu0 %3495
    %3497 = vrot.lane.b32.xlu0 %v2678, 96
    %v3498 = vpop.permute.xlu0 %3497
    %3499 = vrot.lane.b32.xlu0 %v2685, 96
    %v3500 = vpop.permute.xlu0 %3499
    %3501 = vrot.lane.b32.xlu0 %v2692, 96
    %v3502 = vpop.permute.xlu0 %3501
    %3503 = vrot.lane.b32.xlu0 %v2699, 96
    %v3504 = vpop.permute.xlu0 %3503
    %3505 = vrot.lane.b32.xlu0 %v2706, 96
    %v3506 = vpop.permute.xlu0 %3505
    %3507 = vrot.lane.b32.xlu0 %v2713, 96
    %v3508 = vpop.permute.xlu0 %3507
    %3509 = vrot.lane.b32.xlu0 %v2720, 96
    %v3510 = vpop.permute.xlu0 %3509
    %3511 = vrot.lane.b32.xlu0 %v2727, 96
    %v3512 = vpop.permute.xlu0 %3511
    %3513 = vrot.lane.b32.xlu0 %v2734, 96
    %v3514 = vpop.permute.xlu0 %3513
    %3515 = vrot.lane.b32.xlu0 %v2741, 96
    %v3516 = vpop.permute.xlu0 %3515
    %3517 = vrot.lane.b32.xlu0 %v2748, 96
    %v3518 = vpop.permute.xlu0 %3517
    %3519 = vrot.lane.b32.xlu0 %v2755, 96
    %v3520 = vpop.permute.xlu0 %3519
    %3521 = vrot.lane.b32.xlu0 %v2762, 96
    %v3522 = vpop.permute.xlu0 %3521
    %3523 = vrot.lane.b32.xlu0 %v2769, 96
    %v3524 = vpop.permute.xlu0 %3523
    %3525 = vrot.lane.b32.xlu0 %v2776, 96
    %v3526 = vpop.permute.xlu0 %3525
    %3527 = vrot.lane.b32.xlu0 %v2783, 96
    %v3528 = vpop.permute.xlu0 %3527
    %3529 = vrot.lane.b32.xlu0 %v2790, 96
    %v3530 = vpop.permute.xlu0 %3529
    %3531 = vrot.lane.b32.xlu0 %v2797, 96
    %v3532 = vpop.permute.xlu0 %3531
    %3533 = vrot.lane.b32.xlu0 %v2804, 96
    %v3534 = vpop.permute.xlu0 %3533
    %3535 = vrot.lane.b32.xlu0 %v2811, 96
    %v3536 = vpop.permute.xlu0 %3535
    %3537 = vrot.lane.b32.xlu0 %v2818, 96
    %v3538 = vpop.permute.xlu0 %3537
    %3539 = vrot.lane.b32.xlu0 %v2825, 96
    %v3540 = vpop.permute.xlu0 %3539
    %v3543 = vunpack.c.l.s4 1934713408
    %v3544 = vunpack.c.0.s8 %v3543
    %v3545 = vperm.slane %v3492, %v3544
    %v3546 = vrot.slane %v3545, 4
    %v3547 = vsel %vm2832, 0.0, %v3546
    %v3550 = vunpack.c.l.s4 1934713408
    %v3551 = vunpack.c.0.s8 %v3550
    %v3552 = vperm.slane %v3494, %v3551
    %v3553 = vrot.slane %v3552, 4
    %v3554 = vsel %vm2832, 0.0, %v3553
    %v3557 = vunpack.c.l.s4 1934713408
    %v3558 = vunpack.c.0.s8 %v3557
    %v3559 = vperm.slane %v3496, %v3558
    %v3560 = vrot.slane %v3559, 4
    %v3561 = vsel %vm2832, 0.0, %v3560
    %v3564 = vunpack.c.l.s4 1934713408
    %v3565 = vunpack.c.0.s8 %v3564
    %v3566 = vperm.slane %v3498, %v3565
    %v3567 = vrot.slane %v3566, 4
    %v3568 = vsel %vm2832, 0.0, %v3567
    %v3571 = vunpack.c.l.s4 1934713408
    %v3572 = vunpack.c.0.s8 %v3571
    %v3573 = vperm.slane %v3500, %v3572
    %v3574 = vrot.slane %v3573, 4
    %v3575 = vsel %vm2832, 0.0, %v3574
    %v3578 = vunpack.c.l.s4 1934713408
    %v3579 = vunpack.c.0.s8 %v3578
    %v3580 = vperm.slane %v3502, %v3579
    %v3581 = vrot.slane %v3580, 4
    %v3582 = vsel %vm2832, 0.0, %v3581
    %v3585 = vunpack.c.l.s4 1934713408
    %v3586 = vunpack.c.0.s8 %v3585
    %v3587 = vperm.slane %v3504, %v3586
    %v3588 = vrot.slane %v3587, 4
    %v3589 = vsel %vm2832, 0.0, %v3588
    %v3592 = vunpack.c.l.s4 1934713408
    %v3593 = vunpack.c.0.s8 %v3592
    %v3594 = vperm.slane %v3506, %v3593
    %v3595 = vrot.slane %v3594, 4
    %v3596 = vsel %vm2832, 0.0, %v3595
    %v3599 = vunpack.c.l.s4 1934713408
    %v3600 = vunpack.c.0.s8 %v3599
    %v3601 = vperm.slane %v3508, %v3600
    %v3602 = vrot.slane %v3601, 4
    %v3603 = vsel %vm2832, 0.0, %v3602
    %v3606 = vunpack.c.l.s4 1934713408
    %v3607 = vunpack.c.0.s8 %v3606
    %v3608 = vperm.slane %v3510, %v3607
    %v3609 = vrot.slane %v3608, 4
    %v3610 = vsel %vm2832, 0.0, %v3609
    %v3613 = vunpack.c.l.s4 1934713408
    %v3614 = vunpack.c.0.s8 %v3613
    %v3615 = vperm.slane %v3512, %v3614
    %v3616 = vrot.slane %v3615, 4
    %v3617 = vsel %vm2832, 0.0, %v3616
    %v3620 = vunpack.c.l.s4 1934713408
    %v3621 = vunpack.c.0.s8 %v3620
    %v3622 = vperm.slane %v3514, %v3621
    %v3623 = vrot.slane %v3622, 4
    %v3624 = vsel %vm2832, 0.0, %v3623
    %v3627 = vunpack.c.l.s4 1934713408
    %v3628 = vunpack.c.0.s8 %v3627
    %v3629 = vperm.slane %v3516, %v3628
    %v3630 = vrot.slane %v3629, 4
    %v3631 = vsel %vm2832, 0.0, %v3630
    %v3634 = vunpack.c.l.s4 1934713408
    %v3635 = vunpack.c.0.s8 %v3634
    %v3636 = vperm.slane %v3518, %v3635
    %v3637 = vrot.slane %v3636, 4
    %v3638 = vsel %vm2832, 0.0, %v3637
    %v3641 = vunpack.c.l.s4 1934713408
    %v3642 = vunpack.c.0.s8 %v3641
    %v3643 = vperm.slane %v3520, %v3642
    %v3644 = vrot.slane %v3643, 4
    %v3645 = vsel %vm2832, 0.0, %v3644
    %v3648 = vunpack.c.l.s4 1934713408
    %v3649 = vunpack.c.0.s8 %v3648
    %v3650 = vperm.slane %v3522, %v3649
    %v3651 = vrot.slane %v3650, 4
    %v3652 = vsel %vm2832, 0.0, %v3651
    %v3655 = vunpack.c.l.s4 1934713408
    %v3656 = vunpack.c.0.s8 %v3655
    %v3657 = vperm.slane %v3524, %v3656
    %v3658 = vrot.slane %v3657, 4
    %v3659 = vsel %vm2832, 0.0, %v3658
    %v3662 = vunpack.c.l.s4 1934713408
    %v3663 = vunpack.c.0.s8 %v3662
    %v3664 = vperm.slane %v3526, %v3663
    %v3665 = vrot.slane %v3664, 4
    %v3666 = vsel %vm2832, 0.0, %v3665
    %v3669 = vunpack.c.l.s4 1934713408
    %v3670 = vunpack.c.0.s8 %v3669
    %v3671 = vperm.slane %v3528, %v3670
    %v3672 = vrot.slane %v3671, 4
    %v3673 = vsel %vm2832, 0.0, %v3672
    %v3676 = vunpack.c.l.s4 1934713408
    %v3677 = vunpack.c.0.s8 %v3676
    %v3678 = vperm.slane %v3530, %v3677
    %v3679 = vrot.slane %v3678, 4
    %v3680 = vsel %vm2832, 0.0, %v3679
    %v3683 = vunpack.c.l.s4 1934713408
    %v3684 = vunpack.c.0.s8 %v3683
    %v3685 = vperm.slane %v3532, %v3684
    %v3686 = vrot.slane %v3685, 4
    %v3687 = vsel %vm2832, 0.0, %v3686
    %v3690 = vunpack.c.l.s4 1934713408
    %v3691 = vunpack.c.0.s8 %v3690
    %v3692 = vperm.slane %v3534, %v3691
    %v3693 = vrot.slane %v3692, 4
    %v3694 = vsel %vm2832, 0.0, %v3693
    %v3697 = vunpack.c.l.s4 1934713408
    %v3698 = vunpack.c.0.s8 %v3697
    %v3699 = vperm.slane %v3536, %v3698
    %v3700 = vrot.slane %v3699, 4
    %v3701 = vsel %vm2832, 0.0, %v3700
    %v3704 = vunpack.c.l.s4 1934713408
    %v3705 = vunpack.c.0.s8 %v3704
    %v3706 = vperm.slane %v3538, %v3705
    %v3707 = vrot.slane %v3706, 4
    %v3708 = vsel %vm2832, 0.0, %v3707
    %v3711 = vunpack.c.l.s4 1934713408
    %v3712 = vunpack.c.0.s8 %v3711
    %v3713 = vperm.slane %v3540, %v3712
    %v3714 = vrot.slane %v3713, 4
    %v3715 = vsel %vm2832, 0.0, %v3714
    %v3717 = vperm.slane %v3547, 0
    %3718 = vrot.lane.b32.xlu0 %v3717, 32
    %v3719 = vpop.permute.xlu0 %3718
    %v3722 = vperm.slane %v3552, 0
    %3723 = vrot.lane.b32.xlu0 %v3722, 64
    %v3724 = vpop.permute.xlu0 %3723
    %v3727 = vperm.slane %v3554, 0
    %3728 = vrot.lane.b32.xlu0 %v3727, 96
    %v3729 = vpop.permute.xlu0 %3728
    %v3732 = vperm.slane %v3561, 0
    %3733 = vrot.lane.b32.xlu0 %v3732, 32
    %v3734 = vpop.permute.xlu0 %3733
    %v3737 = vperm.slane %v3566, 0
    %3738 = vrot.lane.b32.xlu0 %v3737, 64
    %v3739 = vpop.permute.xlu0 %3738
    %v3742 = vperm.slane %v3568, 0
    %3743 = vrot.lane.b32.xlu0 %v3742, 96
    %v3744 = vpop.permute.xlu0 %3743
    %v3747 = vperm.slane %v3575, 0
    %3748 = vrot.lane.b32.xlu0 %v3747, 32
    %v3749 = vpop.permute.xlu0 %3748
    %v3752 = vperm.slane %v3580, 0
    %3753 = vrot.lane.b32.xlu0 %v3752, 64
    %v3754 = vpop.permute.xlu0 %3753
    %v3757 = vperm.slane %v3582, 0
    %3758 = vrot.lane.b32.xlu0 %v3757, 96
    %v3759 = vpop.permute.xlu0 %3758
    %v3762 = vperm.slane %v3589, 0
    %3763 = vrot.lane.b32.xlu0 %v3762, 32
    %v3764 = vpop.permute.xlu0 %3763
    %v3767 = vperm.slane %v3594, 0
    %3768 = vrot.lane.b32.xlu0 %v3767, 64
    %v3769 = vpop.permute.xlu0 %3768
    %v3772 = vperm.slane %v3596, 0
    %3773 = vrot.lane.b32.xlu0 %v3772, 96
    %v3774 = vpop.permute.xlu0 %3773
    %v3777 = vperm.slane %v3603, 0
    %3778 = vrot.lane.b32.xlu0 %v3777, 32
    %v3779 = vpop.permute.xlu0 %3778
    %v3782 = vperm.slane %v3608, 0
    %3783 = vrot.lane.b32.xlu0 %v3782, 64
    %v3784 = vpop.permute.xlu0 %3783
    %v3787 = vperm.slane %v3610, 0
    %3788 = vrot.lane.b32.xlu0 %v3787, 96
    %v3789 = vpop.permute.xlu0 %3788
    %v3792 = vperm.slane %v3617, 0
    %3793 = vrot.lane.b32.xlu0 %v3792, 32
    %v3794 = vpop.permute.xlu0 %3793
    %v3797 = vperm.slane %v3622, 0
    %3798 = vrot.lane.b32.xlu0 %v3797, 64
    %v3799 = vpop.permute.xlu0 %3798
    %v3802 = vperm.slane %v3624, 0
    %3803 = vrot.lane.b32.xlu0 %v3802, 96
    %v3804 = vpop.permute.xlu0 %3803
    %v3807 = vperm.slane %v3631, 0
    %3808 = vrot.lane.b32.xlu0 %v3807, 32
    %v3809 = vpop.permute.xlu0 %3808
    %v3812 = vperm.slane %v3636, 0
    %3813 = vrot.lane.b32.xlu0 %v3812, 64
    %v3814 = vpop.permute.xlu0 %3813
    %v3817 = vperm.slane %v3638, 0
    %3818 = vrot.lane.b32.xlu0 %v3817, 96
    %v3819 = vpop.permute.xlu0 %3818
    %v3822 = vperm.slane %v3645, 0
    %3823 = vrot.lane.b32.xlu0 %v3822, 32
    %v3824 = vpop.permute.xlu0 %3823
    %v3827 = vperm.slane %v3650, 0
    %3828 = vrot.lane.b32.xlu0 %v3827, 64
    %v3829 = vpop.permute.xlu0 %3828
    %v3832 = vperm.slane %v3652, 0
    %3833 = vrot.lane.b32.xlu0 %v3832, 96
    %v3834 = vpop.permute.xlu0 %3833
    %v3837 = vperm.slane %v3659, 0
    %3838 = vrot.lane.b32.xlu0 %v3837, 32
    %v3839 = vpop.permute.xlu0 %3838
    %v3842 = vperm.slane %v3664, 0
    %3843 = vrot.lane.b32.xlu0 %v3842, 64
    %v3844 = vpop.permute.xlu0 %3843
    %v3847 = vperm.slane %v3666, 0
    %3848 = vrot.lane.b32.xlu0 %v3847, 96
    %v3849 = vpop.permute.xlu0 %3848
    %v3852 = vperm.slane %v3673, 0
    %3853 = vrot.lane.b32.xlu0 %v3852, 32
    %v3854 = vpop.permute.xlu0 %3853
    %v3857 = vperm.slane %v3678, 0
    %3858 = vrot.lane.b32.xlu0 %v3857, 64
    %v3859 = vpop.permute.xlu0 %3858
    %v3862 = vperm.slane %v3680, 0
    %3863 = vrot.lane.b32.xlu0 %v3862, 96
    %v3864 = vpop.permute.xlu0 %3863
    %v3867 = vperm.slane %v3687, 0
    %3868 = vrot.lane.b32.xlu0 %v3867, 32
    %v3869 = vpop.permute.xlu0 %3868
    %v3872 = vperm.slane %v3692, 0
    %3873 = vrot.lane.b32.xlu0 %v3872, 64
    %v3874 = vpop.permute.xlu0 %3873
    %v3877 = vperm.slane %v3694, 0
    %3878 = vrot.lane.b32.xlu0 %v3877, 96
    %v3879 = vpop.permute.xlu0 %3878
    %v3882 = vperm.slane %v3701, 0
    %3883 = vrot.lane.b32.xlu0 %v3882, 32
    %v3884 = vpop.permute.xlu0 %3883
    %v3887 = vperm.slane %v3706, 0
    %3888 = vrot.lane.b32.xlu0 %v3887, 64
    %v3889 = vpop.permute.xlu0 %3888
    %v3892 = vperm.slane %v3708, 0
    %3893 = vrot.lane.b32.xlu0 %v3892, 96
    %v3894 = vpop.permute.xlu0 %3893
    %v3897 = vperm.slane %v3715, 0
    %3898 = vrot.lane.b32.xlu0 %v3897, 32
    %v3899 = vpop.permute.xlu0 %3898
    %v3901 = vsel %vm3187, %v3545, %v3719
    %v3902 = vsel %vm3189, %v3901, %v3724
    %v3903 = vsel %vm3191, %v3902, %v3729
    %v3904 = vsel %vm3187, %v3559, %v3734
    %v3905 = vsel %vm3189, %v3904, %v3739
    %v3906 = vsel %vm3191, %v3905, %v3744
    %v3907 = vsel %vm3187, %v3573, %v3749
    %v3908 = vsel %vm3189, %v3907, %v3754
    %v3909 = vsel %vm3191, %v3908, %v3759
    %v3910 = vsel %vm3187, %v3587, %v3764
    %v3911 = vsel %vm3189, %v3910, %v3769
    %v3912 = vsel %vm3191, %v3911, %v3774
    %v3913 = vsel %vm3187, %v3601, %v3779
    %v3914 = vsel %vm3189, %v3913, %v3784
    %v3915 = vsel %vm3191, %v3914, %v3789
    %v3916 = vsel %vm3187, %v3615, %v3794
    %v3917 = vsel %vm3189, %v3916, %v3799
    %v3918 = vsel %vm3191, %v3917, %v3804
    %v3919 = vsel %vm3187, %v3629, %v3809
    %v3920 = vsel %vm3189, %v3919, %v3814
    %v3921 = vsel %vm3191, %v3920, %v3819
    %v3922 = vsel %vm3187, %v3643, %v3824
    %v3923 = vsel %vm3189, %v3922, %v3829
    %v3924 = vsel %vm3191, %v3923, %v3834
    %v3925 = vsel %vm3187, %v3657, %v3839
    %v3926 = vsel %vm3189, %v3925, %v3844
    %v3927 = vsel %vm3191, %v3926, %v3849
    %v3928 = vsel %vm3187, %v3671, %v3854
    %v3929 = vsel %vm3189, %v3928, %v3859
    %v3930 = vsel %vm3191, %v3929, %v3864
    %v3931 = vsel %vm3187, %v3685, %v3869
    %v3932 = vsel %vm3189, %v3931, %v3874
    %v3933 = vsel %vm3191, %v3932, %v3879
    %v3934 = vsel %vm3187, %v3699, %v3884
    %v3935 = vsel %vm3189, %v3934, %v3889
    %v3936 = vsel %vm3191, %v3935, %v3894
    %v3937 = vsel %vm3187, %v3713, %v3899
    %v3939 = vsel %vm3189, %v3937, 0
    %3941 = vmatpush.msra.mxu0 %v2415
    %3942 = vmatpush.msra.mxu0 %v2414
    %3943 = vmatpush.msra.mxu0 %v2413
    %3944 = vmatpush.msra.mxu0 %v2412
    %3945 = vmatpush.msra.mxu0 %v2411
    %3946 = vmatpush.msra.mxu0 %v2410
    %3947 = vmatpush.msra.mxu0 %v2409
    %3948 = vmatpush.msra.mxu0 %v2408
    %3949 = vmatpush.msra.mxu0 %v2407
    %3950 = vmatpush.msra.mxu0 %v2406
    %3951 = vmatpush.msra.mxu0 %v2405
    %3952 = vmatpush.msra.mxu0 %v2404
    %3953 = vmatpush.msra.mxu0 %v2403
    %3954 = vmatpush.msra.mxu0 %v2402
    %3955 = vmatpush.msra.mxu0 %v2401
    %3956 = vmatpush.msra.mxu0 %v2400
    %3957 = vmatmul.f32.gmra.mxu0 %v3903
    %v3958 = vpop.f32.mrf.mxu0
    %v3959 = vadd.f32 %v2600, %v3958
    %3960 = vdwg.mxu0
    %3961 = vmatpush.msra.mxu0 %v2431
    %3962 = vmatpush.msra.mxu0 %v2430
    %3963 = vmatpush.msra.mxu0 %v2429
    %3964 = vmatpush.msra.mxu0 %v2428
    %3965 = vmatpush.msra.mxu0 %v2427
    %3966 = vmatpush.msra.mxu0 %v2426
    %3967 = vmatpush.msra.mxu0 %v2425
    %3968 = vmatpush.msra.mxu0 %v2424
    %3969 = vmatpush.msra.mxu0 %v2423
    %3970 = vmatpush.msra.mxu0 %v2422
    %3971 = vmatpush.msra.mxu0 %v2421
    %3972 = vmatpush.msra.mxu0 %v2420
    %3973 = vmatpush.msra.mxu0 %v2419
    %3974 = vmatpush.msra.mxu0 %v2418
    %3975 = vmatpush.msra.mxu0 %v2417
    %3976 = vmatpush.msra.mxu0 %v2416
    %3977 = vmatmul.f32.gmra.mxu0 %v3906
    %v3978 = vpop.f32.mrf.mxu0
    %v3979 = vadd.f32 %v3959, %v3978
    %3980 = vdwg.mxu0
    %3981 = vmatpush.msra.mxu0 %v2447
    %3982 = vmatpush.msra.mxu0 %v2446
    %3983 = vmatpush.msra.mxu0 %v2445
    %3984 = vmatpush.msra.mxu0 %v2444
    %3985 = vmatpush.msra.mxu0 %v2443
    %3986 = vmatpush.msra.mxu0 %v2442
    %3987 = vmatpush.msra.mxu0 %v2441
    %3988 = vmatpush.msra.mxu0 %v2440
    %3989 = vmatpush.msra.mxu0 %v2439
    %3990 = vmatpush.msra.mxu0 %v2438
    %3991 = vmatpush.msra.mxu0 %v2437
    %3992 = vmatpush.msra.mxu0 %v2436
    %3993 = vmatpush.msra.mxu0 %v2435
    %3994 = vmatpush.msra.mxu0 %v2434
    %3995 = vmatpush.msra.mxu0 %v2433
    %3996 = vmatpush.msra.mxu0 %v2432
    %3997 = vmatmul.f32.gmra.mxu0 %v3909
    %v3998 = vpop.f32.mrf.mxu0
    %v3999 = vadd.f32 %v3979, %v3998
    %4000 = vdwg.mxu0
    %4001 = vmatpush.msra.mxu0 %v2463
    %4002 = vmatpush.msra.mxu0 %v2462
    %4003 = vmatpush.msra.mxu0 %v2461
    %4004 = vmatpush.msra.mxu0 %v2460
    %4005 = vmatpush.msra.mxu0 %v2459
    %4006 = vmatpush.msra.mxu0 %v2458
    %4007 = vmatpush.msra.mxu0 %v2457
    %4008 = vmatpush.msra.mxu0 %v2456
    %4009 = vmatpush.msra.mxu0 %v2455
    %4010 = vmatpush.msra.mxu0 %v2454
    %4011 = vmatpush.msra.mxu0 %v2453
    %4012 = vmatpush.msra.mxu0 %v2452
    %4013 = vmatpush.msra.mxu0 %v2451
    %4014 = vmatpush.msra.mxu0 %v2450
    %4015 = vmatpush.msra.mxu0 %v2449
    %4016 = vmatpush.msra.mxu0 %v2448
    %4017 = vmatmul.f32.gmra.mxu0 %v3912
    %v4018 = vpop.f32.mrf.mxu0
    %v4019 = vadd.f32 %v3999, %v4018
    %4020 = vdwg.mxu0
    %4021 = vmatpush.msra.mxu0 %v2479
    %4022 = vmatpush.msra.mxu0 %v2478
    %4023 = vmatpush.msra.mxu0 %v2477
    %4024 = vmatpush.msra.mxu0 %v2476
    %4025 = vmatpush.msra.mxu0 %v2475
    %4026 = vmatpush.msra.mxu0 %v2474
    %4027 = vmatpush.msra.mxu0 %v2473
    %4028 = vmatpush.msra.mxu0 %v2472
    %4029 = vmatpush.msra.mxu0 %v2471
    %4030 = vmatpush.msra.mxu0 %v2470
    %4031 = vmatpush.msra.mxu0 %v2469
    %4032 = vmatpush.msra.mxu0 %v2468
    %4033 = vmatpush.msra.mxu0 %v2467
    %4034 = vmatpush.msra.mxu0 %v2466
    %4035 = vmatpush.msra.mxu0 %v2465
    %4036 = vmatpush.msra.mxu0 %v2464
    %4037 = vmatmul.f32.gmra.mxu0 %v3915
    %v4038 = vpop.f32.mrf.mxu0
    %v4039 = vadd.f32 %v4019, %v4038
    %4040 = vdwg.mxu0
    %4041 = vmatpush.msra.mxu0 %v2495
    %4042 = vmatpush.msra.mxu0 %v2494
    %4043 = vmatpush.msra.mxu0 %v2493
    %4044 = vmatpush.msra.mxu0 %v2492
    %4045 = vmatpush.msra.mxu0 %v2491
    %4046 = vmatpush.msra.mxu0 %v2490
    %4047 = vmatpush.msra.mxu0 %v2489
    %4048 = vmatpush.msra.mxu0 %v2488
    %4049 = vmatpush.msra.mxu0 %v2487
    %4050 = vmatpush.msra.mxu0 %v2486
    %4051 = vmatpush.msra.mxu0 %v2485
    %4052 = vmatpush.msra.mxu0 %v2484
    %4053 = vmatpush.msra.mxu0 %v2483
    %4054 = vmatpush.msra.mxu0 %v2482
    %4055 = vmatpush.msra.mxu0 %v2481
    %4056 = vmatpush.msra.mxu0 %v2480
    %4057 = vmatmul.f32.gmra.mxu0 %v3918
    %v4058 = vpop.f32.mrf.mxu0
    %v4059 = vadd.f32 %v4039, %v4058
    %4060 = vdwg.mxu0
    %4061 = vmatpush.msra.mxu0 %v2511
    %4062 = vmatpush.msra.mxu0 %v2510
    %4063 = vmatpush.msra.mxu0 %v2509
    %4064 = vmatpush.msra.mxu0 %v2508
    %4065 = vmatpush.msra.mxu0 %v2507
    %4066 = vmatpush.msra.mxu0 %v2506
    %4067 = vmatpush.msra.mxu0 %v2505
    %4068 = vmatpush.msra.mxu0 %v2504
    %4069 = vmatpush.msra.mxu0 %v2503
    %4070 = vmatpush.msra.mxu0 %v2502
    %4071 = vmatpush.msra.mxu0 %v2501
    %4072 = vmatpush.msra.mxu0 %v2500
    %4073 = vmatpush.msra.mxu0 %v2499
    %4074 = vmatpush.msra.mxu0 %v2498
    %4075 = vmatpush.msra.mxu0 %v2497
    %4076 = vmatpush.msra.mxu0 %v2496
    %4077 = vmatmul.f32.gmra.mxu0 %v3921
    %v4078 = vpop.f32.mrf.mxu0
    %v4079 = vadd.f32 %v4059, %v4078
    %4080 = vdwg.mxu0
    %4081 = vmatpush.msra.mxu0 %v2527
    %4082 = vmatpush.msra.mxu0 %v2526
    %4083 = vmatpush.msra.mxu0 %v2525
    %4084 = vmatpush.msra.mxu0 %v2524
    %4085 = vmatpush.msra.mxu0 %v2523
    %4086 = vmatpush.msra.mxu0 %v2522
    %4087 = vmatpush.msra.mxu0 %v2521
    %4088 = vmatpush.msra.mxu0 %v2520
    %4089 = vmatpush.msra.mxu0 %v2519
    %4090 = vmatpush.msra.mxu0 %v2518
    %4091 = vmatpush.msra.mxu0 %v2517
    %4092 = vmatpush.msra.mxu0 %v2516
    %4093 = vmatpush.msra.mxu0 %v2515
    %4094 = vmatpush.msra.mxu0 %v2514
    %4095 = vmatpush.msra.mxu0 %v2513
    %4096 = vmatpush.msra.mxu0 %v2512
    %4097 = vmatmul.f32.gmra.mxu0 %v3924
    %v4098 = vpop.f32.mrf.mxu0
    %v4099 = vadd.f32 %v4079, %v4098
    %4100 = vdwg.mxu0
    %4101 = vmatpush.msra.mxu0 %v2543
    %4102 = vmatpush.msra.mxu0 %v2542
    %4103 = vmatpush.msra.mxu0 %v2541
    %4104 = vmatpush.msra.mxu0 %v2540
    %4105 = vmatpush.msra.mxu0 %v2539
    %4106 = vmatpush.msra.mxu0 %v2538
    %4107 = vmatpush.msra.mxu0 %v2537
    %4108 = vmatpush.msra.mxu0 %v2536
    %4109 = vmatpush.msra.mxu0 %v2535
    %4110 = vmatpush.msra.mxu0 %v2534
    %4111 = vmatpush.msra.mxu0 %v2533
    %4112 = vmatpush.msra.mxu0 %v2532
    %4113 = vmatpush.msra.mxu0 %v2531
    %4114 = vmatpush.msra.mxu0 %v2530
    %4115 = vmatpush.msra.mxu0 %v2529
    %4116 = vmatpush.msra.mxu0 %v2528
    %4117 = vmatmul.f32.gmra.mxu0 %v3927
    %v4118 = vpop.f32.mrf.mxu0
    %v4119 = vadd.f32 %v4099, %v4118
    %4120 = vdwg.mxu0
    %4121 = vmatpush.msra.mxu0 %v2559
    %4122 = vmatpush.msra.mxu0 %v2558
    %4123 = vmatpush.msra.mxu0 %v2557
    %4124 = vmatpush.msra.mxu0 %v2556
    %4125 = vmatpush.msra.mxu0 %v2555
    %4126 = vmatpush.msra.mxu0 %v2554
    %4127 = vmatpush.msra.mxu0 %v2553
    %4128 = vmatpush.msra.mxu0 %v2552
    %4129 = vmatpush.msra.mxu0 %v2551
    %4130 = vmatpush.msra.mxu0 %v2550
    %4131 = vmatpush.msra.mxu0 %v2549
    %4132 = vmatpush.msra.mxu0 %v2548
    %4133 = vmatpush.msra.mxu0 %v2547
    %4134 = vmatpush.msra.mxu0 %v2546
    %4135 = vmatpush.msra.mxu0 %v2545
    %4136 = vmatpush.msra.mxu0 %v2544
    %4137 = vmatmul.f32.gmra.mxu0 %v3930
    %v4138 = vpop.f32.mrf.mxu0
    %v4139 = vadd.f32 %v4119, %v4138
    %4140 = vdwg.mxu0
    %4141 = vmatpush.msra.mxu0 %v2575
    %4142 = vmatpush.msra.mxu0 %v2574
    %4143 = vmatpush.msra.mxu0 %v2573
    %4144 = vmatpush.msra.mxu0 %v2572
    %4145 = vmatpush.msra.mxu0 %v2571
    %4146 = vmatpush.msra.mxu0 %v2570
    %4147 = vmatpush.msra.mxu0 %v2569
    %4148 = vmatpush.msra.mxu0 %v2568
    %4149 = vmatpush.msra.mxu0 %v2567
    %4150 = vmatpush.msra.mxu0 %v2566
    %4151 = vmatpush.msra.mxu0 %v2565
    %4152 = vmatpush.msra.mxu0 %v2564
    %4153 = vmatpush.msra.mxu0 %v2563
    %4154 = vmatpush.msra.mxu0 %v2562
    %4155 = vmatpush.msra.mxu0 %v2561
    %4156 = vmatpush.msra.mxu0 %v2560
    %4157 = vmatmul.f32.gmra.mxu0 %v3933
    %v4158 = vpop.f32.mrf.mxu0
    %v4159 = vadd.f32 %v4139, %v4158
    %4160 = vdwg.mxu0
    %4161 = vmatpush.msra.mxu0 %v2591
    %4162 = vmatpush.msra.mxu0 %v2590
    %4163 = vmatpush.msra.mxu0 %v2589
    %4164 = vmatpush.msra.mxu0 %v2588
    %4165 = vmatpush.msra.mxu0 %v2587
    %4166 = vmatpush.msra.mxu0 %v2586
    %4167 = vmatpush.msra.mxu0 %v2585
    %4168 = vmatpush.msra.mxu0 %v2584
    %4169 = vmatpush.msra.mxu0 %v2583
    %4170 = vmatpush.msra.mxu0 %v2582
    %4171 = vmatpush.msra.mxu0 %v2581
    %4172 = vmatpush.msra.mxu0 %v2580
    %4173 = vmatpush.msra.mxu0 %v2579
    %4174 = vmatpush.msra.mxu0 %v2578
    %4175 = vmatpush.msra.mxu0 %v2577
    %4176 = vmatpush.msra.mxu0 %v2576
    %4177 = vmatmul.f32.gmra.mxu0 %v3936
    %v4178 = vpop.f32.mrf.mxu0
    %v4179 = vadd.f32 %v4159, %v4178
    %4180 = vdwg.mxu0
    %4181 = vmatpush.msra.mxu0 0.0
    %4182 = vmatpush.msra.mxu0 0.0
    %4183 = vmatpush.msra.mxu0 0.0
    %4184 = vmatpush.msra.mxu0 0.0
    %4185 = vmatpush.msra.mxu0 0.0
    %4186 = vmatpush.msra.mxu0 0.0
    %4187 = vmatpush.msra.mxu0 0.0
    %4188 = vmatpush.msra.mxu0 0.0
    %4189 = vmatpush.msra.mxu0 %v2599
    %4190 = vmatpush.msra.mxu0 %v2598
    %4191 = vmatpush.msra.mxu0 %v2597
    %4192 = vmatpush.msra.mxu0 %v2596
    %4193 = vmatpush.msra.mxu0 %v2595
    %4194 = vmatpush.msra.mxu0 %v2594
    %4195 = vmatpush.msra.mxu0 %v2593
    %4196 = vmatpush.msra.mxu0 %v2592
    %4197 = vmatmul.f32.gmra.mxu0 %v3939
    %v4198 = vpop.f32.mrf.mxu0
    %v4199 = vadd.f32 %v4179, %v4198
    %4200 = vdwg.mxu0
    %v4201 = vmax.f32 %v4199, 0.0
    %4202 = vrot.lane.b32.xlu0 %v2657, 64
    %v4203 = vpop.permute.xlu0 %4202
    %4204 = vrot.lane.b32.xlu0 %v2664, 64
    %v4205 = vpop.permute.xlu0 %4204
    %4206 = vrot.lane.b32.xlu0 %v2671, 64
    %v4207 = vpop.permute.xlu0 %4206
    %4208 = vrot.lane.b32.xlu0 %v2678, 64
    %v4209 = vpop.permute.xlu0 %4208
    %4210 = vrot.lane.b32.xlu0 %v2685, 64
    %v4211 = vpop.permute.xlu0 %4210
    %4212 = vrot.lane.b32.xlu0 %v2692, 64
    %v4213 = vpop.permute.xlu0 %4212
    %4214 = vrot.lane.b32.xlu0 %v2699, 64
    %v4215 = vpop.permute.xlu0 %4214
    %4216 = vrot.lane.b32.xlu0 %v2706, 64
    %v4217 = vpop.permute.xlu0 %4216
    %4218 = vrot.lane.b32.xlu0 %v2713, 64
    %v4219 = vpop.permute.xlu0 %4218
    %4220 = vrot.lane.b32.xlu0 %v2720, 64
    %v4221 = vpop.permute.xlu0 %4220
    %4222 = vrot.lane.b32.xlu0 %v2727, 64
    %v4223 = vpop.permute.xlu0 %4222
    %4224 = vrot.lane.b32.xlu0 %v2734, 64
    %v4225 = vpop.permute.xlu0 %4224
    %4226 = vrot.lane.b32.xlu0 %v2741, 64
    %v4227 = vpop.permute.xlu0 %4226
    %4228 = vrot.lane.b32.xlu0 %v2748, 64
    %v4229 = vpop.permute.xlu0 %4228
    %4230 = vrot.lane.b32.xlu0 %v2755, 64
    %v4231 = vpop.permute.xlu0 %4230
    %4232 = vrot.lane.b32.xlu0 %v2762, 64
    %v4233 = vpop.permute.xlu0 %4232
    %4234 = vrot.lane.b32.xlu0 %v2769, 64
    %v4235 = vpop.permute.xlu0 %4234
    %4236 = vrot.lane.b32.xlu0 %v2776, 64
    %v4237 = vpop.permute.xlu0 %4236
    %4238 = vrot.lane.b32.xlu0 %v2783, 64
    %v4239 = vpop.permute.xlu0 %4238
    %4240 = vrot.lane.b32.xlu0 %v2790, 64
    %v4241 = vpop.permute.xlu0 %4240
    %4242 = vrot.lane.b32.xlu0 %v2797, 64
    %v4243 = vpop.permute.xlu0 %4242
    %4244 = vrot.lane.b32.xlu0 %v2804, 64
    %v4245 = vpop.permute.xlu0 %4244
    %4246 = vrot.lane.b32.xlu0 %v2811, 64
    %v4247 = vpop.permute.xlu0 %4246
    %4248 = vrot.lane.b32.xlu0 %v2818, 64
    %v4249 = vpop.permute.xlu0 %4248
    %4250 = vrot.lane.b32.xlu0 %v2825, 64
    %v4251 = vpop.permute.xlu0 %4250
    %v4254 = vunpack.c.l.s4 1934713408
    %v4255 = vunpack.c.0.s8 %v4254
    %v4256 = vperm.slane %v4203, %v4255
    %v4257 = vrot.slane %v4256, 4
    %v4258 = vsel %vm2832, 0.0, %v4257
    %v4261 = vunpack.c.l.s4 1934713408
    %v4262 = vunpack.c.0.s8 %v4261
    %v4263 = vperm.slane %v4205, %v4262
    %v4264 = vrot.slane %v4263, 4
    %v4265 = vsel %vm2832, 0.0, %v4264
    %v4268 = vunpack.c.l.s4 1934713408
    %v4269 = vunpack.c.0.s8 %v4268
    %v4270 = vperm.slane %v4207, %v4269
    %v4271 = vrot.slane %v4270, 4
    %v4272 = vsel %vm2832, 0.0, %v4271
    %v4275 = vunpack.c.l.s4 1934713408
    %v4276 = vunpack.c.0.s8 %v4275
    %v4277 = vperm.slane %v4209, %v4276
    %v4278 = vrot.slane %v4277, 4
    %v4279 = vsel %vm2832, 0.0, %v4278
    %v4282 = vunpack.c.l.s4 1934713408
    %v4283 = vunpack.c.0.s8 %v4282
    %v4284 = vperm.slane %v4211, %v4283
    %v4285 = vrot.slane %v4284, 4
    %v4286 = vsel %vm2832, 0.0, %v4285
    %v4289 = vunpack.c.l.s4 1934713408
    %v4290 = vunpack.c.0.s8 %v4289
    %v4291 = vperm.slane %v4213, %v4290
    %v4292 = vrot.slane %v4291, 4
    %v4293 = vsel %vm2832, 0.0, %v4292
    %v4296 = vunpack.c.l.s4 1934713408
    %v4297 = vunpack.c.0.s8 %v4296
    %v4298 = vperm.slane %v4215, %v4297
    %v4299 = vrot.slane %v4298, 4
    %v4300 = vsel %vm2832, 0.0, %v4299
    %v4303 = vunpack.c.l.s4 1934713408
    %v4304 = vunpack.c.0.s8 %v4303
    %v4305 = vperm.slane %v4217, %v4304
    %v4306 = vrot.slane %v4305, 4
    %v4307 = vsel %vm2832, 0.0, %v4306
    %v4310 = vunpack.c.l.s4 1934713408
    %v4311 = vunpack.c.0.s8 %v4310
    %v4312 = vperm.slane %v4219, %v4311
    %v4313 = vrot.slane %v4312, 4
    %v4314 = vsel %vm2832, 0.0, %v4313
    %v4317 = vunpack.c.l.s4 1934713408
    %v4318 = vunpack.c.0.s8 %v4317
    %v4319 = vperm.slane %v4221, %v4318
    %v4320 = vrot.slane %v4319, 4
    %v4321 = vsel %vm2832, 0.0, %v4320
    %v4324 = vunpack.c.l.s4 1934713408
    %v4325 = vunpack.c.0.s8 %v4324
    %v4326 = vperm.slane %v4223, %v4325
    %v4327 = vrot.slane %v4326, 4
    %v4328 = vsel %vm2832, 0.0, %v4327
    %v4331 = vunpack.c.l.s4 1934713408
    %v4332 = vunpack.c.0.s8 %v4331
    %v4333 = vperm.slane %v4225, %v4332
    %v4334 = vrot.slane %v4333, 4
    %v4335 = vsel %vm2832, 0.0, %v4334
    %v4338 = vunpack.c.l.s4 1934713408
    %v4339 = vunpack.c.0.s8 %v4338
    %v4340 = vperm.slane %v4227, %v4339
    %v4341 = vrot.slane %v4340, 4
    %v4342 = vsel %vm2832, 0.0, %v4341
    %v4345 = vunpack.c.l.s4 1934713408
    %v4346 = vunpack.c.0.s8 %v4345
    %v4347 = vperm.slane %v4229, %v4346
    %v4348 = vrot.slane %v4347, 4
    %v4349 = vsel %vm2832, 0.0, %v4348
    %v4352 = vunpack.c.l.s4 1934713408
    %v4353 = vunpack.c.0.s8 %v4352
    %v4354 = vperm.slane %v4231, %v4353
    %v4355 = vrot.slane %v4354, 4
    %v4356 = vsel %vm2832, 0.0, %v4355
    %v4359 = vunpack.c.l.s4 1934713408
    %v4360 = vunpack.c.0.s8 %v4359
    %v4361 = vperm.slane %v4233, %v4360
    %v4362 = vrot.slane %v4361, 4
    %v4363 = vsel %vm2832, 0.0, %v4362
    %v4366 = vunpack.c.l.s4 1934713408
    %v4367 = vunpack.c.0.s8 %v4366
    %v4368 = vperm.slane %v4235, %v4367
    %v4369 = vrot.slane %v4368, 4
    %v4370 = vsel %vm2832, 0.0, %v4369
    %v4373 = vunpack.c.l.s4 1934713408
    %v4374 = vunpack.c.0.s8 %v4373
    %v4375 = vperm.slane %v4237, %v4374
    %v4376 = vrot.slane %v4375, 4
    %v4377 = vsel %vm2832, 0.0, %v4376
    %v4380 = vunpack.c.l.s4 1934713408
    %v4381 = vunpack.c.0.s8 %v4380
    %v4382 = vperm.slane %v4239, %v4381
    %v4383 = vrot.slane %v4382, 4
    %v4384 = vsel %vm2832, 0.0, %v4383
    %v4387 = vunpack.c.l.s4 1934713408
    %v4388 = vunpack.c.0.s8 %v4387
    %v4389 = vperm.slane %v4241, %v4388
    %v4390 = vrot.slane %v4389, 4
    %v4391 = vsel %vm2832, 0.0, %v4390
    %v4394 = vunpack.c.l.s4 1934713408
    %v4395 = vunpack.c.0.s8 %v4394
    %v4396 = vperm.slane %v4243, %v4395
    %v4397 = vrot.slane %v4396, 4
    %v4398 = vsel %vm2832, 0.0, %v4397
    %v4401 = vunpack.c.l.s4 1934713408
    %v4402 = vunpack.c.0.s8 %v4401
    %v4403 = vperm.slane %v4245, %v4402
    %v4404 = vrot.slane %v4403, 4
    %v4405 = vsel %vm2832, 0.0, %v4404
    %v4408 = vunpack.c.l.s4 1934713408
    %v4409 = vunpack.c.0.s8 %v4408
    %v4410 = vperm.slane %v4247, %v4409
    %v4411 = vrot.slane %v4410, 4
    %v4412 = vsel %vm2832, 0.0, %v4411
    %v4415 = vunpack.c.l.s4 1934713408
    %v4416 = vunpack.c.0.s8 %v4415
    %v4417 = vperm.slane %v4249, %v4416
    %v4418 = vrot.slane %v4417, 4
    %v4419 = vsel %vm2832, 0.0, %v4418
    %v4422 = vunpack.c.l.s4 1934713408
    %v4423 = vunpack.c.0.s8 %v4422
    %v4424 = vperm.slane %v4251, %v4423
    %v4425 = vrot.slane %v4424, 4
    %v4426 = vsel %vm2832, 0.0, %v4425
    %v4428 = vperm.slane %v4258, 0
    %4429 = vrot.lane.b32.xlu0 %v4428, 32
    %v4430 = vpop.permute.xlu0 %4429
    %v4433 = vperm.slane %v4263, 0
    %4434 = vrot.lane.b32.xlu0 %v4433, 64
    %v4435 = vpop.permute.xlu0 %4434
    %v4438 = vperm.slane %v4265, 0
    %4439 = vrot.lane.b32.xlu0 %v4438, 96
    %v4440 = vpop.permute.xlu0 %4439
    %v4443 = vperm.slane %v4272, 0
    %4444 = vrot.lane.b32.xlu0 %v4443, 32
    %v4445 = vpop.permute.xlu0 %4444
    %v4448 = vperm.slane %v4277, 0
    %4449 = vrot.lane.b32.xlu0 %v4448, 64
    %v4450 = vpop.permute.xlu0 %4449
    %v4453 = vperm.slane %v4279, 0
    %4454 = vrot.lane.b32.xlu0 %v4453, 96
    %v4455 = vpop.permute.xlu0 %4454
    %v4458 = vperm.slane %v4286, 0
    %4459 = vrot.lane.b32.xlu0 %v4458, 32
    %v4460 = vpop.permute.xlu0 %4459
    %v4463 = vperm.slane %v4291, 0
    %4464 = vrot.lane.b32.xlu0 %v4463, 64
    %v4465 = vpop.permute.xlu0 %4464
    %v4468 = vperm.slane %v4293, 0
    %4469 = vrot.lane.b32.xlu0 %v4468, 96
    %v4470 = vpop.permute.xlu0 %4469
    %v4473 = vperm.slane %v4300, 0
    %4474 = vrot.lane.b32.xlu0 %v4473, 32
    %v4475 = vpop.permute.xlu0 %4474
    %v4478 = vperm.slane %v4305, 0
    %4479 = vrot.lane.b32.xlu0 %v4478, 64
    %v4480 = vpop.permute.xlu0 %4479
    %v4483 = vperm.slane %v4307, 0
    %4484 = vrot.lane.b32.xlu0 %v4483, 96
    %v4485 = vpop.permute.xlu0 %4484
    %v4488 = vperm.slane %v4314, 0
    %4489 = vrot.lane.b32.xlu0 %v4488, 32
    %v4490 = vpop.permute.xlu0 %4489
    %v4493 = vperm.slane %v4319, 0
    %4494 = vrot.lane.b32.xlu0 %v4493, 64
    %v4495 = vpop.permute.xlu0 %4494
    %v4498 = vperm.slane %v4321, 0
    %4499 = vrot.lane.b32.xlu0 %v4498, 96
    %v4500 = vpop.permute.xlu0 %4499
    %v4503 = vperm.slane %v4328, 0
    %4504 = vrot.lane.b32.xlu0 %v4503, 32
    %v4505 = vpop.permute.xlu0 %4504
    %v4508 = vperm.slane %v4333, 0
    %4509 = vrot.lane.b32.xlu0 %v4508, 64
    %v4510 = vpop.permute.xlu0 %4509
    %v4513 = vperm.slane %v4335, 0
    %4514 = vrot.lane.b32.xlu0 %v4513, 96
    %v4515 = vpop.permute.xlu0 %4514
    %v4518 = vperm.slane %v4342, 0
    %4519 = vrot.lane.b32.xlu0 %v4518, 32
    %v4520 = vpop.permute.xlu0 %4519
    %v4523 = vperm.slane %v4347, 0
    %4524 = vrot.lane.b32.xlu0 %v4523, 64
    %v4525 = vpop.permute.xlu0 %4524
    %v4528 = vperm.slane %v4349, 0
    %4529 = vrot.lane.b32.xlu0 %v4528, 96
    %v4530 = vpop.permute.xlu0 %4529
    %v4533 = vperm.slane %v4356, 0
    %4534 = vrot.lane.b32.xlu0 %v4533, 32
    %v4535 = vpop.permute.xlu0 %4534
    %v4538 = vperm.slane %v4361, 0
    %4539 = vrot.lane.b32.xlu0 %v4538, 64
    %v4540 = vpop.permute.xlu0 %4539
    %v4543 = vperm.slane %v4363, 0
    %4544 = vrot.lane.b32.xlu0 %v4543, 96
    %v4545 = vpop.permute.xlu0 %4544
    %v4548 = vperm.slane %v4370, 0
    %4549 = vrot.lane.b32.xlu0 %v4548, 32
    %v4550 = vpop.permute.xlu0 %4549
    %v4553 = vperm.slane %v4375, 0
    %4554 = vrot.lane.b32.xlu0 %v4553, 64
    %v4555 = vpop.permute.xlu0 %4554
    %v4558 = vperm.slane %v4377, 0
    %4559 = vrot.lane.b32.xlu0 %v4558, 96
    %v4560 = vpop.permute.xlu0 %4559
    %v4563 = vperm.slane %v4384, 0
    %4564 = vrot.lane.b32.xlu0 %v4563, 32
    %v4565 = vpop.permute.xlu0 %4564
    %v4568 = vperm.slane %v4389, 0
    %4569 = vrot.lane.b32.xlu0 %v4568, 64
    %v4570 = vpop.permute.xlu0 %4569
    %v4573 = vperm.slane %v4391, 0
    %4574 = vrot.lane.b32.xlu0 %v4573, 96
    %v4575 = vpop.permute.xlu0 %4574
    %v4578 = vperm.slane %v4398, 0
    %4579 = vrot.lane.b32.xlu0 %v4578, 32
    %v4580 = vpop.permute.xlu0 %4579
    %v4583 = vperm.slane %v4403, 0
    %4584 = vrot.lane.b32.xlu0 %v4583, 64
    %v4585 = vpop.permute.xlu0 %4584
    %v4588 = vperm.slane %v4405, 0
    %4589 = vrot.lane.b32.xlu0 %v4588, 96
    %v4590 = vpop.permute.xlu0 %4589
    %v4593 = vperm.slane %v4412, 0
    %4594 = vrot.lane.b32.xlu0 %v4593, 32
    %v4595 = vpop.permute.xlu0 %4594
    %v4598 = vperm.slane %v4417, 0
    %4599 = vrot.lane.b32.xlu0 %v4598, 64
    %v4600 = vpop.permute.xlu0 %4599
    %v4603 = vperm.slane %v4419, 0
    %4604 = vrot.lane.b32.xlu0 %v4603, 96
    %v4605 = vpop.permute.xlu0 %4604
    %v4608 = vperm.slane %v4426, 0
    %4609 = vrot.lane.b32.xlu0 %v4608, 32
    %v4610 = vpop.permute.xlu0 %4609
    %v4612 = vsel %vm3187, %v4256, %v4430
    %v4613 = vsel %vm3189, %v4612, %v4435
    %v4614 = vsel %vm3191, %v4613, %v4440
    %v4615 = vsel %vm3187, %v4270, %v4445
    %v4616 = vsel %vm3189, %v4615, %v4450
    %v4617 = vsel %vm3191, %v4616, %v4455
    %v4618 = vsel %vm3187, %v4284, %v4460
    %v4619 = vsel %vm3189, %v4618, %v4465
    %v4620 = vsel %vm3191, %v4619, %v4470
    %v4621 = vsel %vm3187, %v4298, %v4475
    %v4622 = vsel %vm3189, %v4621, %v4480
    %v4623 = vsel %vm3191, %v4622, %v4485
    %v4624 = vsel %vm3187, %v4312, %v4490
    %v4625 = vsel %vm3189, %v4624, %v4495
    %v4626 = vsel %vm3191, %v4625, %v4500
    %v4627 = vsel %vm3187, %v4326, %v4505
    %v4628 = vsel %vm3189, %v4627, %v4510
    %v4629 = vsel %vm3191, %v4628, %v4515
    %v4630 = vsel %vm3187, %v4340, %v4520
    %v4631 = vsel %vm3189, %v4630, %v4525
    %v4632 = vsel %vm3191, %v4631, %v4530
    %v4633 = vsel %vm3187, %v4354, %v4535
    %v4634 = vsel %vm3189, %v4633, %v4540
    %v4635 = vsel %vm3191, %v4634, %v4545
    %v4636 = vsel %vm3187, %v4368, %v4550
    %v4637 = vsel %vm3189, %v4636, %v4555
    %v4638 = vsel %vm3191, %v4637, %v4560
    %v4639 = vsel %vm3187, %v4382, %v4565
    %v4640 = vsel %vm3189, %v4639, %v4570
    %v4641 = vsel %vm3191, %v4640, %v4575
    %v4642 = vsel %vm3187, %v4396, %v4580
    %v4643 = vsel %vm3189, %v4642, %v4585
    %v4644 = vsel %vm3191, %v4643, %v4590
    %v4645 = vsel %vm3187, %v4410, %v4595
    %v4646 = vsel %vm3189, %v4645, %v4600
    %v4647 = vsel %vm3191, %v4646, %v4605
    %v4648 = vsel %vm3187, %v4424, %v4610
    %v4650 = vsel %vm3189, %v4648, 0
    %4652 = vmatpush.msra.mxu0 %v2415
    %4653 = vmatpush.msra.mxu0 %v2414
    %4654 = vmatpush.msra.mxu0 %v2413
    %4655 = vmatpush.msra.mxu0 %v2412
    %4656 = vmatpush.msra.mxu0 %v2411
    %4657 = vmatpush.msra.mxu0 %v2410
    %4658 = vmatpush.msra.mxu0 %v2409
    %4659 = vmatpush.msra.mxu0 %v2408
    %4660 = vmatpush.msra.mxu0 %v2407
    %4661 = vmatpush.msra.mxu0 %v2406
    %4662 = vmatpush.msra.mxu0 %v2405
    %4663 = vmatpush.msra.mxu0 %v2404
    %4664 = vmatpush.msra.mxu0 %v2403
    %4665 = vmatpush.msra.mxu0 %v2402
    %4666 = vmatpush.msra.mxu0 %v2401
    %4667 = vmatpush.msra.mxu0 %v2400
    %4668 = vmatmul.f32.gmra.mxu0 %v4614
    %v4669 = vpop.f32.mrf.mxu0
    %v4670 = vadd.f32 %v2600, %v4669
    %4671 = vdwg.mxu0
    %4672 = vmatpush.msra.mxu0 %v2431
    %4673 = vmatpush.msra.mxu0 %v2430
    %4674 = vmatpush.msra.mxu0 %v2429
    %4675 = vmatpush.msra.mxu0 %v2428
    %4676 = vmatpush.msra.mxu0 %v2427
    %4677 = vmatpush.msra.mxu0 %v2426
    %4678 = vmatpush.msra.mxu0 %v2425
    %4679 = vmatpush.msra.mxu0 %v2424
    %4680 = vmatpush.msra.mxu0 %v2423
    %4681 = vmatpush.msra.mxu0 %v2422
    %4682 = vmatpush.msra.mxu0 %v2421
    %4683 = vmatpush.msra.mxu0 %v2420
    %4684 = vmatpush.msra.mxu0 %v2419
    %4685 = vmatpush.msra.mxu0 %v2418
    %4686 = vmatpush.msra.mxu0 %v2417
    %4687 = vmatpush.msra.mxu0 %v2416
    %4688 = vmatmul.f32.gmra.mxu0 %v4617
    %v4689 = vpop.f32.mrf.mxu0
    %v4690 = vadd.f32 %v4670, %v4689
    %4691 = vdwg.mxu0
    %4692 = vmatpush.msra.mxu0 %v2447
    %4693 = vmatpush.msra.mxu0 %v2446
    %4694 = vmatpush.msra.mxu0 %v2445
    %4695 = vmatpush.msra.mxu0 %v2444
    %4696 = vmatpush.msra.mxu0 %v2443
    %4697 = vmatpush.msra.mxu0 %v2442
    %4698 = vmatpush.msra.mxu0 %v2441
    %4699 = vmatpush.msra.mxu0 %v2440
    %4700 = vmatpush.msra.mxu0 %v2439
    %4701 = vmatpush.msra.mxu0 %v2438
    %4702 = vmatpush.msra.mxu0 %v2437
    %4703 = vmatpush.msra.mxu0 %v2436
    %4704 = vmatpush.msra.mxu0 %v2435
    %4705 = vmatpush.msra.mxu0 %v2434
    %4706 = vmatpush.msra.mxu0 %v2433
    %4707 = vmatpush.msra.mxu0 %v2432
    %4708 = vmatmul.f32.gmra.mxu0 %v4620
    %v4709 = vpop.f32.mrf.mxu0
    %v4710 = vadd.f32 %v4690, %v4709
    %4711 = vdwg.mxu0
    %4712 = vmatpush.msra.mxu0 %v2463
    %4713 = vmatpush.msra.mxu0 %v2462
    %4714 = vmatpush.msra.mxu0 %v2461
    %4715 = vmatpush.msra.mxu0 %v2460
    %4716 = vmatpush.msra.mxu0 %v2459
    %4717 = vmatpush.msra.mxu0 %v2458
    %4718 = vmatpush.msra.mxu0 %v2457
    %4719 = vmatpush.msra.mxu0 %v2456
    %4720 = vmatpush.msra.mxu0 %v2455
    %4721 = vmatpush.msra.mxu0 %v2454
    %4722 = vmatpush.msra.mxu0 %v2453
    %4723 = vmatpush.msra.mxu0 %v2452
    %4724 = vmatpush.msra.mxu0 %v2451
    %4725 = vmatpush.msra.mxu0 %v2450
    %4726 = vmatpush.msra.mxu0 %v2449
    %4727 = vmatpush.msra.mxu0 %v2448
    %4728 = vmatmul.f32.gmra.mxu0 %v4623
    %v4729 = vpop.f32.mrf.mxu0
    %v4730 = vadd.f32 %v4710, %v4729
    %4731 = vdwg.mxu0
    %4732 = vmatpush.msra.mxu0 %v2479
    %4733 = vmatpush.msra.mxu0 %v2478
    %4734 = vmatpush.msra.mxu0 %v2477
    %4735 = vmatpush.msra.mxu0 %v2476
    %4736 = vmatpush.msra.mxu0 %v2475
    %4737 = vmatpush.msra.mxu0 %v2474
    %4738 = vmatpush.msra.mxu0 %v2473
    %4739 = vmatpush.msra.mxu0 %v2472
    %4740 = vmatpush.msra.mxu0 %v2471
    %4741 = vmatpush.msra.mxu0 %v2470
    %4742 = vmatpush.msra.mxu0 %v2469
    %4743 = vmatpush.msra.mxu0 %v2468
    %4744 = vmatpush.msra.mxu0 %v2467
    %4745 = vmatpush.msra.mxu0 %v2466
    %4746 = vmatpush.msra.mxu0 %v2465
    %4747 = vmatpush.msra.mxu0 %v2464
    %4748 = vmatmul.f32.gmra.mxu0 %v4626
    %v4749 = vpop.f32.mrf.mxu0
    %v4750 = vadd.f32 %v4730, %v4749
    %4751 = vdwg.mxu0
    %4752 = vmatpush.msra.mxu0 %v2495
    %4753 = vmatpush.msra.mxu0 %v2494
    %4754 = vmatpush.msra.mxu0 %v2493
    %4755 = vmatpush.msra.mxu0 %v2492
    %4756 = vmatpush.msra.mxu0 %v2491
    %4757 = vmatpush.msra.mxu0 %v2490
    %4758 = vmatpush.msra.mxu0 %v2489
    %4759 = vmatpush.msra.mxu0 %v2488
    %4760 = vmatpush.msra.mxu0 %v2487
    %4761 = vmatpush.msra.mxu0 %v2486
    %4762 = vmatpush.msra.mxu0 %v2485
    %4763 = vmatpush.msra.mxu0 %v2484
    %4764 = vmatpush.msra.mxu0 %v2483
    %4765 = vmatpush.msra.mxu0 %v2482
    %4766 = vmatpush.msra.mxu0 %v2481
    %4767 = vmatpush.msra.mxu0 %v2480
    %4768 = vmatmul.f32.gmra.mxu0 %v4629
    %v4769 = vpop.f32.mrf.mxu0
    %v4770 = vadd.f32 %v4750, %v4769
    %4771 = vdwg.mxu0
    %4772 = vmatpush.msra.mxu0 %v2511
    %4773 = vmatpush.msra.mxu0 %v2510
    %4774 = vmatpush.msra.mxu0 %v2509
    %4775 = vmatpush.msra.mxu0 %v2508
    %4776 = vmatpush.msra.mxu0 %v2507
    %4777 = vmatpush.msra.mxu0 %v2506
    %4778 = vmatpush.msra.mxu0 %v2505
    %4779 = vmatpush.msra.mxu0 %v2504
    %4780 = vmatpush.msra.mxu0 %v2503
    %4781 = vmatpush.msra.mxu0 %v2502
    %4782 = vmatpush.msra.mxu0 %v2501
    %4783 = vmatpush.msra.mxu0 %v2500
    %4784 = vmatpush.msra.mxu0 %v2499
    %4785 = vmatpush.msra.mxu0 %v2498
    %4786 = vmatpush.msra.mxu0 %v2497
    %4787 = vmatpush.msra.mxu0 %v2496
    %4788 = vmatmul.f32.gmra.mxu0 %v4632
    %v4789 = vpop.f32.mrf.mxu0
    %v4790 = vadd.f32 %v4770, %v4789
    %4791 = vdwg.mxu0
    %4792 = vmatpush.msra.mxu0 %v2527
    %4793 = vmatpush.msra.mxu0 %v2526
    %4794 = vmatpush.msra.mxu0 %v2525
    %4795 = vmatpush.msra.mxu0 %v2524
    %4796 = vmatpush.msra.mxu0 %v2523
    %4797 = vmatpush.msra.mxu0 %v2522
    %4798 = vmatpush.msra.mxu0 %v2521
    %4799 = vmatpush.msra.mxu0 %v2520
    %4800 = vmatpush.msra.mxu0 %v2519
    %4801 = vmatpush.msra.mxu0 %v2518
    %4802 = vmatpush.msra.mxu0 %v2517
    %4803 = vmatpush.msra.mxu0 %v2516
    %4804 = vmatpush.msra.mxu0 %v2515
    %4805 = vmatpush.msra.mxu0 %v2514
    %4806 = vmatpush.msra.mxu0 %v2513
    %4807 = vmatpush.msra.mxu0 %v2512
    %4808 = vmatmul.f32.gmra.mxu0 %v4635
    %v4809 = vpop.f32.mrf.mxu0
    %v4810 = vadd.f32 %v4790, %v4809
    %4811 = vdwg.mxu0
    %4812 = vmatpush.msra.mxu0 %v2543
    %4813 = vmatpush.msra.mxu0 %v2542
    %4814 = vmatpush.msra.mxu0 %v2541
    %4815 = vmatpush.msra.mxu0 %v2540
    %4816 = vmatpush.msra.mxu0 %v2539
    %4817 = vmatpush.msra.mxu0 %v2538
    %4818 = vmatpush.msra.mxu0 %v2537
    %4819 = vmatpush.msra.mxu0 %v2536
    %4820 = vmatpush.msra.mxu0 %v2535
    %4821 = vmatpush.msra.mxu0 %v2534
    %4822 = vmatpush.msra.mxu0 %v2533
    %4823 = vmatpush.msra.mxu0 %v2532
    %4824 = vmatpush.msra.mxu0 %v2531
    %4825 = vmatpush.msra.mxu0 %v2530
    %4826 = vmatpush.msra.mxu0 %v2529
    %4827 = vmatpush.msra.mxu0 %v2528
    %4828 = vmatmul.f32.gmra.mxu0 %v4638
    %v4829 = vpop.f32.mrf.mxu0
    %v4830 = vadd.f32 %v4810, %v4829
    %4831 = vdwg.mxu0
    %4832 = vmatpush.msra.mxu0 %v2559
    %4833 = vmatpush.msra.mxu0 %v2558
    %4834 = vmatpush.msra.mxu0 %v2557
    %4835 = vmatpush.msra.mxu0 %v2556
    %4836 = vmatpush.msra.mxu0 %v2555
    %4837 = vmatpush.msra.mxu0 %v2554
    %4838 = vmatpush.msra.mxu0 %v2553
    %4839 = vmatpush.msra.mxu0 %v2552
    %4840 = vmatpush.msra.mxu0 %v2551
    %4841 = vmatpush.msra.mxu0 %v2550
    %4842 = vmatpush.msra.mxu0 %v2549
    %4843 = vmatpush.msra.mxu0 %v2548
    %4844 = vmatpush.msra.mxu0 %v2547
    %4845 = vmatpush.msra.mxu0 %v2546
    %4846 = vmatpush.msra.mxu0 %v2545
    %4847 = vmatpush.msra.mxu0 %v2544
    %4848 = vmatmul.f32.gmra.mxu0 %v4641
    %v4849 = vpop.f32.mrf.mxu0
    %v4850 = vadd.f32 %v4830, %v4849
    %4851 = vdwg.mxu0
    %4852 = vmatpush.msra.mxu0 %v2575
    %4853 = vmatpush.msra.mxu0 %v2574
    %4854 = vmatpush.msra.mxu0 %v2573
    %4855 = vmatpush.msra.mxu0 %v2572
    %4856 = vmatpush.msra.mxu0 %v2571
    %4857 = vmatpush.msra.mxu0 %v2570
    %4858 = vmatpush.msra.mxu0 %v2569
    %4859 = vmatpush.msra.mxu0 %v2568
    %4860 = vmatpush.msra.mxu0 %v2567
    %4861 = vmatpush.msra.mxu0 %v2566
    %4862 = vmatpush.msra.mxu0 %v2565
    %4863 = vmatpush.msra.mxu0 %v2564
    %4864 = vmatpush.msra.mxu0 %v2563
    %4865 = vmatpush.msra.mxu0 %v2562
    %4866 = vmatpush.msra.mxu0 %v2561
    %4867 = vmatpush.msra.mxu0 %v2560
    %4868 = vmatmul.f32.gmra.mxu0 %v4644
    %v4869 = vpop.f32.mrf.mxu0
    %v4870 = vadd.f32 %v4850, %v4869
    %4871 = vdwg.mxu0
    %4872 = vmatpush.msra.mxu0 %v2591
    %4873 = vmatpush.msra.mxu0 %v2590
    %4874 = vmatpush.msra.mxu0 %v2589
    %4875 = vmatpush.msra.mxu0 %v2588
    %4876 = vmatpush.msra.mxu0 %v2587
    %4877 = vmatpush.msra.mxu0 %v2586
    %4878 = vmatpush.msra.mxu0 %v2585
    %4879 = vmatpush.msra.mxu0 %v2584
    %4880 = vmatpush.msra.mxu0 %v2583
    %4881 = vmatpush.msra.mxu0 %v2582
    %4882 = vmatpush.msra.mxu0 %v2581
    %4883 = vmatpush.msra.mxu0 %v2580
    %4884 = vmatpush.msra.mxu0 %v2579
    %4885 = vmatpush.msra.mxu0 %v2578
    %4886 = vmatpush.msra.mxu0 %v2577
    %4887 = vmatpush.msra.mxu0 %v2576
    %4888 = vmatmul.f32.gmra.mxu0 %v4647
    %v4889 = vpop.f32.mrf.mxu0
    %v4890 = vadd.f32 %v4870, %v4889
    %4891 = vdwg.mxu0
    %4892 = vmatpush.msra.mxu0 0.0
    %4893 = vmatpush.msra.mxu0 0.0
    %4894 = vmatpush.msra.mxu0 0.0
    %4895 = vmatpush.msra.mxu0 0.0
    %4896 = vmatpush.msra.mxu0 0.0
    %4897 = vmatpush.msra.mxu0 0.0
    %4898 = vmatpush.msra.mxu0 0.0
    %4899 = vmatpush.msra.mxu0 0.0
    %4900 = vmatpush.msra.mxu0 %v2599
    %4901 = vmatpush.msra.mxu0 %v2598
    %4902 = vmatpush.msra.mxu0 %v2597
    %4903 = vmatpush.msra.mxu0 %v2596
    %4904 = vmatpush.msra.mxu0 %v2595
    %4905 = vmatpush.msra.mxu0 %v2594
    %4906 = vmatpush.msra.mxu0 %v2593
    %4907 = vmatpush.msra.mxu0 %v2592
    %4908 = vmatmul.f32.gmra.mxu0 %v4650
    %v4909 = vpop.f32.mrf.mxu0
    %v4910 = vadd.f32 %v4890, %v4909
    %4911 = vdwg.mxu0
    %v4912 = vmax.f32 %v4910, 0.0
    %4913 = vrot.lane.b32.xlu0 %v2657, 32
    %v4914 = vpop.permute.xlu0 %4913
    %4915 = vrot.lane.b32.xlu0 %v2664, 32
    %v4916 = vpop.permute.xlu0 %4915
    %4917 = vrot.lane.b32.xlu0 %v2671, 32
    %v4918 = vpop.permute.xlu0 %4917
    %4919 = vrot.lane.b32.xlu0 %v2678, 32
    %v4920 = vpop.permute.xlu0 %4919
    %4921 = vrot.lane.b32.xlu0 %v2685, 32
    %v4922 = vpop.permute.xlu0 %4921
    %4923 = vrot.lane.b32.xlu0 %v2692, 32
    %v4924 = vpop.permute.xlu0 %4923
    %4925 = vrot.lane.b32.xlu0 %v2699, 32
    %v4926 = vpop.permute.xlu0 %4925
    %4927 = vrot.lane.b32.xlu0 %v2706, 32
    %v4928 = vpop.permute.xlu0 %4927
    %4929 = vrot.lane.b32.xlu0 %v2713, 32
    %v4930 = vpop.permute.xlu0 %4929
    %4931 = vrot.lane.b32.xlu0 %v2720, 32
    %v4932 = vpop.permute.xlu0 %4931
    %4933 = vrot.lane.b32.xlu0 %v2727, 32
    %v4934 = vpop.permute.xlu0 %4933
    %4935 = vrot.lane.b32.xlu0 %v2734, 32
    %v4936 = vpop.permute.xlu0 %4935
    %4937 = vrot.lane.b32.xlu0 %v2741, 32
    %v4938 = vpop.permute.xlu0 %4937
    %4939 = vrot.lane.b32.xlu0 %v2748, 32
    %v4940 = vpop.permute.xlu0 %4939
    %4941 = vrot.lane.b32.xlu0 %v2755, 32
    %v4942 = vpop.permute.xlu0 %4941
    %4943 = vrot.lane.b32.xlu0 %v2762, 32
    %v4944 = vpop.permute.xlu0 %4943
    %4945 = vrot.lane.b32.xlu0 %v2769, 32
    %v4946 = vpop.permute.xlu0 %4945
    %4947 = vrot.lane.b32.xlu0 %v2776, 32
    %v4948 = vpop.permute.xlu0 %4947
    %4949 = vrot.lane.b32.xlu0 %v2783, 32
    %v4950 = vpop.permute.xlu0 %4949
    %4951 = vrot.lane.b32.xlu0 %v2790, 32
    %v4952 = vpop.permute.xlu0 %4951
    %4953 = vrot.lane.b32.xlu0 %v2797, 32
    %v4954 = vpop.permute.xlu0 %4953
    %4955 = vrot.lane.b32.xlu0 %v2804, 32
    %v4956 = vpop.permute.xlu0 %4955
    %4957 = vrot.lane.b32.xlu0 %v2811, 32
    %v4958 = vpop.permute.xlu0 %4957
    %4959 = vrot.lane.b32.xlu0 %v2818, 32
    %v4960 = vpop.permute.xlu0 %4959
    %4961 = vrot.lane.b32.xlu0 %v2825, 32
    %v4962 = vpop.permute.xlu0 %4961
    %v4965 = vunpack.c.l.s4 1934713408
    %v4966 = vunpack.c.0.s8 %v4965
    %v4967 = vperm.slane %v4914, %v4966
    %v4968 = vrot.slane %v4967, 4
    %v4969 = vsel %vm2832, 0.0, %v4968
    %v4972 = vunpack.c.l.s4 1934713408
    %v4973 = vunpack.c.0.s8 %v4972
    %v4974 = vperm.slane %v4916, %v4973
    %v4975 = vrot.slane %v4974, 4
    %v4976 = vsel %vm2832, 0.0, %v4975
    %v4979 = vunpack.c.l.s4 1934713408
    %v4980 = vunpack.c.0.s8 %v4979
    %v4981 = vperm.slane %v4918, %v4980
    %v4982 = vrot.slane %v4981, 4
    %v4983 = vsel %vm2832, 0.0, %v4982
    %v4986 = vunpack.c.l.s4 1934713408
    %v4987 = vunpack.c.0.s8 %v4986
    %v4988 = vperm.slane %v4920, %v4987
    %v4989 = vrot.slane %v4988, 4
    %v4990 = vsel %vm2832, 0.0, %v4989
    %v4993 = vunpack.c.l.s4 1934713408
    %v4994 = vunpack.c.0.s8 %v4993
    %v4995 = vperm.slane %v4922, %v4994
    %v4996 = vrot.slane %v4995, 4
    %v4997 = vsel %vm2832, 0.0, %v4996
    %v5000 = vunpack.c.l.s4 1934713408
    %v5001 = vunpack.c.0.s8 %v5000
    %v5002 = vperm.slane %v4924, %v5001
    %v5003 = vrot.slane %v5002, 4
    %v5004 = vsel %vm2832, 0.0, %v5003
    %v5007 = vunpack.c.l.s4 1934713408
    %v5008 = vunpack.c.0.s8 %v5007
    %v5009 = vperm.slane %v4926, %v5008
    %v5010 = vrot.slane %v5009, 4
    %v5011 = vsel %vm2832, 0.0, %v5010
    %v5014 = vunpack.c.l.s4 1934713408
    %v5015 = vunpack.c.0.s8 %v5014
    %v5016 = vperm.slane %v4928, %v5015
    %v5017 = vrot.slane %v5016, 4
    %v5018 = vsel %vm2832, 0.0, %v5017
    %v5021 = vunpack.c.l.s4 1934713408
    %v5022 = vunpack.c.0.s8 %v5021
    %v5023 = vperm.slane %v4930, %v5022
    %v5024 = vrot.slane %v5023, 4
    %v5025 = vsel %vm2832, 0.0, %v5024
    %v5028 = vunpack.c.l.s4 1934713408
    %v5029 = vunpack.c.0.s8 %v5028
    %v5030 = vperm.slane %v4932, %v5029
    %v5031 = vrot.slane %v5030, 4
    %v5032 = vsel %vm2832, 0.0, %v5031
    %v5035 = vunpack.c.l.s4 1934713408
    %v5036 = vunpack.c.0.s8 %v5035
    %v5037 = vperm.slane %v4934, %v5036
    %v5038 = vrot.slane %v5037, 4
    %v5039 = vsel %vm2832, 0.0, %v5038
    %v5042 = vunpack.c.l.s4 1934713408
    %v5043 = vunpack.c.0.s8 %v5042
    %v5044 = vperm.slane %v4936, %v5043
    %v5045 = vrot.slane %v5044, 4
    %v5046 = vsel %vm2832, 0.0, %v5045
    %v5049 = vunpack.c.l.s4 1934713408
    %v5050 = vunpack.c.0.s8 %v5049
    %v5051 = vperm.slane %v4938, %v5050
    %v5052 = vrot.slane %v5051, 4
    %v5053 = vsel %vm2832, 0.0, %v5052
    %v5056 = vunpack.c.l.s4 1934713408
    %v5057 = vunpack.c.0.s8 %v5056
    %v5058 = vperm.slane %v4940, %v5057
    %v5059 = vrot.slane %v5058, 4
    %v5060 = vsel %vm2832, 0.0, %v5059
    %v5063 = vunpack.c.l.s4 1934713408
    %v5064 = vunpack.c.0.s8 %v5063
    %v5065 = vperm.slane %v4942, %v5064
    %v5066 = vrot.slane %v5065, 4
    %v5067 = vsel %vm2832, 0.0, %v5066
    %v5070 = vunpack.c.l.s4 1934713408
    %v5071 = vunpack.c.0.s8 %v5070
    %v5072 = vperm.slane %v4944, %v5071
    %v5073 = vrot.slane %v5072, 4
    %v5074 = vsel %vm2832, 0.0, %v5073
    %v5077 = vunpack.c.l.s4 1934713408
    %v5078 = vunpack.c.0.s8 %v5077
    %v5079 = vperm.slane %v4946, %v5078
    %v5080 = vrot.slane %v5079, 4
    %v5081 = vsel %vm2832, 0.0, %v5080
    %v5084 = vunpack.c.l.s4 1934713408
    %v5085 = vunpack.c.0.s8 %v5084
    %v5086 = vperm.slane %v4948, %v5085
    %v5087 = vrot.slane %v5086, 4
    %v5088 = vsel %vm2832, 0.0, %v5087
    %v5091 = vunpack.c.l.s4 1934713408
    %v5092 = vunpack.c.0.s8 %v5091
    %v5093 = vperm.slane %v4950, %v5092
    %v5094 = vrot.slane %v5093, 4
    %v5095 = vsel %vm2832, 0.0, %v5094
    %v5098 = vunpack.c.l.s4 1934713408
    %v5099 = vunpack.c.0.s8 %v5098
    %v5100 = vperm.slane %v4952, %v5099
    %v5101 = vrot.slane %v5100, 4
    %v5102 = vsel %vm2832, 0.0, %v5101
    %v5105 = vunpack.c.l.s4 1934713408
    %v5106 = vunpack.c.0.s8 %v5105
    %v5107 = vperm.slane %v4954, %v5106
    %v5108 = vrot.slane %v5107, 4
    %v5109 = vsel %vm2832, 0.0, %v5108
    %v5112 = vunpack.c.l.s4 1934713408
    %v5113 = vunpack.c.0.s8 %v5112
    %v5114 = vperm.slane %v4956, %v5113
    %v5115 = vrot.slane %v5114, 4
    %v5116 = vsel %vm2832, 0.0, %v5115
    %v5119 = vunpack.c.l.s4 1934713408
    %v5120 = vunpack.c.0.s8 %v5119
    %v5121 = vperm.slane %v4958, %v5120
    %v5122 = vrot.slane %v5121, 4
    %v5123 = vsel %vm2832, 0.0, %v5122
    %v5126 = vunpack.c.l.s4 1934713408
    %v5127 = vunpack.c.0.s8 %v5126
    %v5128 = vperm.slane %v4960, %v5127
    %v5129 = vrot.slane %v5128, 4
    %v5130 = vsel %vm2832, 0.0, %v5129
    %v5133 = vunpack.c.l.s4 1934713408
    %v5134 = vunpack.c.0.s8 %v5133
    %v5135 = vperm.slane %v4962, %v5134
    %v5136 = vrot.slane %v5135, 4
    %v5137 = vsel %vm2832, 0.0, %v5136
    %v5139 = vperm.slane %v4969, 0
    %5140 = vrot.lane.b32.xlu0 %v5139, 32
    %v5141 = vpop.permute.xlu0 %5140
    %v5144 = vperm.slane %v4974, 0
    %5145 = vrot.lane.b32.xlu0 %v5144, 64
    %v5146 = vpop.permute.xlu0 %5145
    %v5149 = vperm.slane %v4976, 0
    %5150 = vrot.lane.b32.xlu0 %v5149, 96
    %v5151 = vpop.permute.xlu0 %5150
    %v5154 = vperm.slane %v4983, 0
    %5155 = vrot.lane.b32.xlu0 %v5154, 32
    %v5156 = vpop.permute.xlu0 %5155
    %v5159 = vperm.slane %v4988, 0
    %5160 = vrot.lane.b32.xlu0 %v5159, 64
    %v5161 = vpop.permute.xlu0 %5160
    %v5164 = vperm.slane %v4990, 0
    %5165 = vrot.lane.b32.xlu0 %v5164, 96
    %v5166 = vpop.permute.xlu0 %5165
    %v5169 = vperm.slane %v4997, 0
    %5170 = vrot.lane.b32.xlu0 %v5169, 32
    %v5171 = vpop.permute.xlu0 %5170
    %v5174 = vperm.slane %v5002, 0
    %5175 = vrot.lane.b32.xlu0 %v5174, 64
    %v5176 = vpop.permute.xlu0 %5175
    %v5179 = vperm.slane %v5004, 0
    %5180 = vrot.lane.b32.xlu0 %v5179, 96
    %v5181 = vpop.permute.xlu0 %5180
    %v5184 = vperm.slane %v5011, 0
    %5185 = vrot.lane.b32.xlu0 %v5184, 32
    %v5186 = vpop.permute.xlu0 %5185
    %v5189 = vperm.slane %v5016, 0
    %5190 = vrot.lane.b32.xlu0 %v5189, 64
    %v5191 = vpop.permute.xlu0 %5190
    %v5194 = vperm.slane %v5018, 0
    %5195 = vrot.lane.b32.xlu0 %v5194, 96
    %v5196 = vpop.permute.xlu0 %5195
    %v5199 = vperm.slane %v5025, 0
    %5200 = vrot.lane.b32.xlu0 %v5199, 32
    %v5201 = vpop.permute.xlu0 %5200
    %v5204 = vperm.slane %v5030, 0
    %5205 = vrot.lane.b32.xlu0 %v5204, 64
    %v5206 = vpop.permute.xlu0 %5205
    %v5209 = vperm.slane %v5032, 0
    %5210 = vrot.lane.b32.xlu0 %v5209, 96
    %v5211 = vpop.permute.xlu0 %5210
    %v5214 = vperm.slane %v5039, 0
    %5215 = vrot.lane.b32.xlu0 %v5214, 32
    %v5216 = vpop.permute.xlu0 %5215
    %v5219 = vperm.slane %v5044, 0
    %5220 = vrot.lane.b32.xlu0 %v5219, 64
    %v5221 = vpop.permute.xlu0 %5220
    %v5224 = vperm.slane %v5046, 0
    %5225 = vrot.lane.b32.xlu0 %v5224, 96
    %v5226 = vpop.permute.xlu0 %5225
    %v5229 = vperm.slane %v5053, 0
    %5230 = vrot.lane.b32.xlu0 %v5229, 32
    %v5231 = vpop.permute.xlu0 %5230
    %v5234 = vperm.slane %v5058, 0
    %5235 = vrot.lane.b32.xlu0 %v5234, 64
    %v5236 = vpop.permute.xlu0 %5235
    %v5239 = vperm.slane %v5060, 0
    %5240 = vrot.lane.b32.xlu0 %v5239, 96
    %v5241 = vpop.permute.xlu0 %5240
    %v5244 = vperm.slane %v5067, 0
    %5245 = vrot.lane.b32.xlu0 %v5244, 32
    %v5246 = vpop.permute.xlu0 %5245
    %v5249 = vperm.slane %v5072, 0
    %5250 = vrot.lane.b32.xlu0 %v5249, 64
    %v5251 = vpop.permute.xlu0 %5250
    %v5254 = vperm.slane %v5074, 0
    %5255 = vrot.lane.b32.xlu0 %v5254, 96
    %v5256 = vpop.permute.xlu0 %5255
    %v5259 = vperm.slane %v5081, 0
    %5260 = vrot.lane.b32.xlu0 %v5259, 32
    %v5261 = vpop.permute.xlu0 %5260
    %v5264 = vperm.slane %v5086, 0
    %5265 = vrot.lane.b32.xlu0 %v5264, 64
    %v5266 = vpop.permute.xlu0 %5265
    %v5269 = vperm.slane %v5088, 0
    %5270 = vrot.lane.b32.xlu0 %v5269, 96
    %v5271 = vpop.permute.xlu0 %5270
    %v5274 = vperm.slane %v5095, 0
    %5275 = vrot.lane.b32.xlu0 %v5274, 32
    %v5276 = vpop.permute.xlu0 %5275
    %v5279 = vperm.slane %v5100, 0
    %5280 = vrot.lane.b32.xlu0 %v5279, 64
    %v5281 = vpop.permute.xlu0 %5280
    %v5284 = vperm.slane %v5102, 0
    %5285 = vrot.lane.b32.xlu0 %v5284, 96
    %v5286 = vpop.permute.xlu0 %5285
    %v5289 = vperm.slane %v5109, 0
    %5290 = vrot.lane.b32.xlu0 %v5289, 32
    %v5291 = vpop.permute.xlu0 %5290
    %v5294 = vperm.slane %v5114, 0
    %5295 = vrot.lane.b32.xlu0 %v5294, 64
    %v5296 = vpop.permute.xlu0 %5295
    %v5299 = vperm.slane %v5116, 0
    %5300 = vrot.lane.b32.xlu0 %v5299, 96
    %v5301 = vpop.permute.xlu0 %5300
    %v5304 = vperm.slane %v5123, 0
    %5305 = vrot.lane.b32.xlu0 %v5304, 32
    %v5306 = vpop.permute.xlu0 %5305
    %v5309 = vperm.slane %v5128, 0
    %5310 = vrot.lane.b32.xlu0 %v5309, 64
    %v5311 = vpop.permute.xlu0 %5310
    %v5314 = vperm.slane %v5130, 0
    %5315 = vrot.lane.b32.xlu0 %v5314, 96
    %v5316 = vpop.permute.xlu0 %5315
    %v5319 = vperm.slane %v5137, 0
    %5320 = vrot.lane.b32.xlu0 %v5319, 32
    %v5321 = vpop.permute.xlu0 %5320
    %v5323 = vsel %vm3187, %v4967, %v5141
    %v5324 = vsel %vm3189, %v5323, %v5146
    %v5325 = vsel %vm3191, %v5324, %v5151
    %v5326 = vsel %vm3187, %v4981, %v5156
    %v5327 = vsel %vm3189, %v5326, %v5161
    %v5328 = vsel %vm3191, %v5327, %v5166
    %v5329 = vsel %vm3187, %v4995, %v5171
    %v5330 = vsel %vm3189, %v5329, %v5176
    %v5331 = vsel %vm3191, %v5330, %v5181
    %v5332 = vsel %vm3187, %v5009, %v5186
    %v5333 = vsel %vm3189, %v5332, %v5191
    %v5334 = vsel %vm3191, %v5333, %v5196
    %v5335 = vsel %vm3187, %v5023, %v5201
    %v5336 = vsel %vm3189, %v5335, %v5206
    %v5337 = vsel %vm3191, %v5336, %v5211
    %v5338 = vsel %vm3187, %v5037, %v5216
    %v5339 = vsel %vm3189, %v5338, %v5221
    %v5340 = vsel %vm3191, %v5339, %v5226
    %v5341 = vsel %vm3187, %v5051, %v5231
    %v5342 = vsel %vm3189, %v5341, %v5236
    %v5343 = vsel %vm3191, %v5342, %v5241
    %v5344 = vsel %vm3187, %v5065, %v5246
    %v5345 = vsel %vm3189, %v5344, %v5251
    %v5346 = vsel %vm3191, %v5345, %v5256
    %v5347 = vsel %vm3187, %v5079, %v5261
    %v5348 = vsel %vm3189, %v5347, %v5266
    %v5349 = vsel %vm3191, %v5348, %v5271
    %v5350 = vsel %vm3187, %v5093, %v5276
    %v5351 = vsel %vm3189, %v5350, %v5281
    %v5352 = vsel %vm3191, %v5351, %v5286
    %v5353 = vsel %vm3187, %v5107, %v5291
    %v5354 = vsel %vm3189, %v5353, %v5296
    %v5355 = vsel %vm3191, %v5354, %v5301
    %v5356 = vsel %vm3187, %v5121, %v5306
    %v5357 = vsel %vm3189, %v5356, %v5311
    %v5358 = vsel %vm3191, %v5357, %v5316
    %v5359 = vsel %vm3187, %v5135, %v5321
    %v5361 = vsel %vm3189, %v5359, 0
    %5363 = vmatpush.msra.mxu0 %v2415
    %5364 = vmatpush.msra.mxu0 %v2414
    %5365 = vmatpush.msra.mxu0 %v2413
    %5366 = vmatpush.msra.mxu0 %v2412
    %5367 = vmatpush.msra.mxu0 %v2411
    %5368 = vmatpush.msra.mxu0 %v2410
    %5369 = vmatpush.msra.mxu0 %v2409
    %5370 = vmatpush.msra.mxu0 %v2408
    %5371 = vmatpush.msra.mxu0 %v2407
    %5372 = vmatpush.msra.mxu0 %v2406
    %5373 = vmatpush.msra.mxu0 %v2405
    %5374 = vmatpush.msra.mxu0 %v2404
    %5375 = vmatpush.msra.mxu0 %v2403
    %5376 = vmatpush.msra.mxu0 %v2402
    %5377 = vmatpush.msra.mxu0 %v2401
    %5378 = vmatpush.msra.mxu0 %v2400
    %5379 = vmatmul.f32.gmra.mxu0 %v5325
    %v5380 = vpop.f32.mrf.mxu0
    %v5381 = vadd.f32 %v2600, %v5380
    %5382 = vdwg.mxu0
    %5383 = vmatpush.msra.mxu0 %v2431
    %5384 = vmatpush.msra.mxu0 %v2430
    %5385 = vmatpush.msra.mxu0 %v2429
    %5386 = vmatpush.msra.mxu0 %v2428
    %5387 = vmatpush.msra.mxu0 %v2427
    %5388 = vmatpush.msra.mxu0 %v2426
    %5389 = vmatpush.msra.mxu0 %v2425
    %5390 = vmatpush.msra.mxu0 %v2424
    %5391 = vmatpush.msra.mxu0 %v2423
    %5392 = vmatpush.msra.mxu0 %v2422
    %5393 = vmatpush.msra.mxu0 %v2421
    %5394 = vmatpush.msra.mxu0 %v2420
    %5395 = vmatpush.msra.mxu0 %v2419
    %5396 = vmatpush.msra.mxu0 %v2418
    %5397 = vmatpush.msra.mxu0 %v2417
    %5398 = vmatpush.msra.mxu0 %v2416
    %5399 = vmatmul.f32.gmra.mxu0 %v5328
    %v5400 = vpop.f32.mrf.mxu0
    %v5401 = vadd.f32 %v5381, %v5400
    %5402 = vdwg.mxu0
    %5403 = vmatpush.msra.mxu0 %v2447
    %5404 = vmatpush.msra.mxu0 %v2446
    %5405 = vmatpush.msra.mxu0 %v2445
    %5406 = vmatpush.msra.mxu0 %v2444
    %5407 = vmatpush.msra.mxu0 %v2443
    %5408 = vmatpush.msra.mxu0 %v2442
    %5409 = vmatpush.msra.mxu0 %v2441
    %5410 = vmatpush.msra.mxu0 %v2440
    %5411 = vmatpush.msra.mxu0 %v2439
    %5412 = vmatpush.msra.mxu0 %v2438
    %5413 = vmatpush.msra.mxu0 %v2437
    %5414 = vmatpush.msra.mxu0 %v2436
    %5415 = vmatpush.msra.mxu0 %v2435
    %5416 = vmatpush.msra.mxu0 %v2434
    %5417 = vmatpush.msra.mxu0 %v2433
    %5418 = vmatpush.msra.mxu0 %v2432
    %5419 = vmatmul.f32.gmra.mxu0 %v5331
    %v5420 = vpop.f32.mrf.mxu0
    %v5421 = vadd.f32 %v5401, %v5420
    %5422 = vdwg.mxu0
    %5423 = vmatpush.msra.mxu0 %v2463
    %5424 = vmatpush.msra.mxu0 %v2462
    %5425 = vmatpush.msra.mxu0 %v2461
    %5426 = vmatpush.msra.mxu0 %v2460
    %5427 = vmatpush.msra.mxu0 %v2459
    %5428 = vmatpush.msra.mxu0 %v2458
    %5429 = vmatpush.msra.mxu0 %v2457
    %5430 = vmatpush.msra.mxu0 %v2456
    %5431 = vmatpush.msra.mxu0 %v2455
    %5432 = vmatpush.msra.mxu0 %v2454
    %5433 = vmatpush.msra.mxu0 %v2453
    %5434 = vmatpush.msra.mxu0 %v2452
    %5435 = vmatpush.msra.mxu0 %v2451
    %5436 = vmatpush.msra.mxu0 %v2450
    %5437 = vmatpush.msra.mxu0 %v2449
    %5438 = vmatpush.msra.mxu0 %v2448
    %5439 = vmatmul.f32.gmra.mxu0 %v5334
    %v5440 = vpop.f32.mrf.mxu0
    %v5441 = vadd.f32 %v5421, %v5440
    %5442 = vdwg.mxu0
    %5443 = vmatpush.msra.mxu0 %v2479
    %5444 = vmatpush.msra.mxu0 %v2478
    %5445 = vmatpush.msra.mxu0 %v2477
    %5446 = vmatpush.msra.mxu0 %v2476
    %5447 = vmatpush.msra.mxu0 %v2475
    %5448 = vmatpush.msra.mxu0 %v2474
    %5449 = vmatpush.msra.mxu0 %v2473
    %5450 = vmatpush.msra.mxu0 %v2472
    %5451 = vmatpush.msra.mxu0 %v2471
    %5452 = vmatpush.msra.mxu0 %v2470
    %5453 = vmatpush.msra.mxu0 %v2469
    %5454 = vmatpush.msra.mxu0 %v2468
    %5455 = vmatpush.msra.mxu0 %v2467
    %5456 = vmatpush.msra.mxu0 %v2466
    %5457 = vmatpush.msra.mxu0 %v2465
    %5458 = vmatpush.msra.mxu0 %v2464
    %5459 = vmatmul.f32.gmra.mxu0 %v5337
    %v5460 = vpop.f32.mrf.mxu0
    %v5461 = vadd.f32 %v5441, %v5460
    %5462 = vdwg.mxu0
    %5463 = vmatpush.msra.mxu0 %v2495
    %5464 = vmatpush.msra.mxu0 %v2494
    %5465 = vmatpush.msra.mxu0 %v2493
    %5466 = vmatpush.msra.mxu0 %v2492
    %5467 = vmatpush.msra.mxu0 %v2491
    %5468 = vmatpush.msra.mxu0 %v2490
    %5469 = vmatpush.msra.mxu0 %v2489
    %5470 = vmatpush.msra.mxu0 %v2488
    %5471 = vmatpush.msra.mxu0 %v2487
    %5472 = vmatpush.msra.mxu0 %v2486
    %5473 = vmatpush.msra.mxu0 %v2485
    %5474 = vmatpush.msra.mxu0 %v2484
    %5475 = vmatpush.msra.mxu0 %v2483
    %5476 = vmatpush.msra.mxu0 %v2482
    %5477 = vmatpush.msra.mxu0 %v2481
    %5478 = vmatpush.msra.mxu0 %v2480
    %5479 = vmatmul.f32.gmra.mxu0 %v5340
    %v5480 = vpop.f32.mrf.mxu0
    %v5481 = vadd.f32 %v5461, %v5480
    %5482 = vdwg.mxu0
    %5483 = vmatpush.msra.mxu0 %v2511
    %5484 = vmatpush.msra.mxu0 %v2510
    %5485 = vmatpush.msra.mxu0 %v2509
    %5486 = vmatpush.msra.mxu0 %v2508
    %5487 = vmatpush.msra.mxu0 %v2507
    %5488 = vmatpush.msra.mxu0 %v2506
    %5489 = vmatpush.msra.mxu0 %v2505
    %5490 = vmatpush.msra.mxu0 %v2504
    %5491 = vmatpush.msra.mxu0 %v2503
    %5492 = vmatpush.msra.mxu0 %v2502
    %5493 = vmatpush.msra.mxu0 %v2501
    %5494 = vmatpush.msra.mxu0 %v2500
    %5495 = vmatpush.msra.mxu0 %v2499
    %5496 = vmatpush.msra.mxu0 %v2498
    %5497 = vmatpush.msra.mxu0 %v2497
    %5498 = vmatpush.msra.mxu0 %v2496
    %5499 = vmatmul.f32.gmra.mxu0 %v5343
    %v5500 = vpop.f32.mrf.mxu0
    %v5501 = vadd.f32 %v5481, %v5500
    %5502 = vdwg.mxu0
    %5503 = vmatpush.msra.mxu0 %v2527
    %5504 = vmatpush.msra.mxu0 %v2526
    %5505 = vmatpush.msra.mxu0 %v2525
    %5506 = vmatpush.msra.mxu0 %v2524
    %5507 = vmatpush.msra.mxu0 %v2523
    %5508 = vmatpush.msra.mxu0 %v2522
    %5509 = vmatpush.msra.mxu0 %v2521
    %5510 = vmatpush.msra.mxu0 %v2520
    %5511 = vmatpush.msra.mxu0 %v2519
    %5512 = vmatpush.msra.mxu0 %v2518
    %5513 = vmatpush.msra.mxu0 %v2517
    %5514 = vmatpush.msra.mxu0 %v2516
    %5515 = vmatpush.msra.mxu0 %v2515
    %5516 = vmatpush.msra.mxu0 %v2514
    %5517 = vmatpush.msra.mxu0 %v2513
    %5518 = vmatpush.msra.mxu0 %v2512
    %5519 = vmatmul.f32.gmra.mxu0 %v5346
    %v5520 = vpop.f32.mrf.mxu0
    %v5521 = vadd.f32 %v5501, %v5520
    %5522 = vdwg.mxu0
    %5523 = vmatpush.msra.mxu0 %v2543
    %5524 = vmatpush.msra.mxu0 %v2542
    %5525 = vmatpush.msra.mxu0 %v2541
    %5526 = vmatpush.msra.mxu0 %v2540
    %5527 = vmatpush.msra.mxu0 %v2539
    %5528 = vmatpush.msra.mxu0 %v2538
    %5529 = vmatpush.msra.mxu0 %v2537
    %5530 = vmatpush.msra.mxu0 %v2536
    %5531 = vmatpush.msra.mxu0 %v2535
    %5532 = vmatpush.msra.mxu0 %v2534
    %5533 = vmatpush.msra.mxu0 %v2533
    %5534 = vmatpush.msra.mxu0 %v2532
    %5535 = vmatpush.msra.mxu0 %v2531
    %5536 = vmatpush.msra.mxu0 %v2530
    %5537 = vmatpush.msra.mxu0 %v2529
    %5538 = vmatpush.msra.mxu0 %v2528
    %5539 = vmatmul.f32.gmra.mxu0 %v5349
    %v5540 = vpop.f32.mrf.mxu0
    %v5541 = vadd.f32 %v5521, %v5540
    %5542 = vdwg.mxu0
    %5543 = vmatpush.msra.mxu0 %v2559
    %5544 = vmatpush.msra.mxu0 %v2558
    %5545 = vmatpush.msra.mxu0 %v2557
    %5546 = vmatpush.msra.mxu0 %v2556
    %5547 = vmatpush.msra.mxu0 %v2555
    %5548 = vmatpush.msra.mxu0 %v2554
    %5549 = vmatpush.msra.mxu0 %v2553
    %5550 = vmatpush.msra.mxu0 %v2552
    %5551 = vmatpush.msra.mxu0 %v2551
    %5552 = vmatpush.msra.mxu0 %v2550
    %5553 = vmatpush.msra.mxu0 %v2549
    %5554 = vmatpush.msra.mxu0 %v2548
    %5555 = vmatpush.msra.mxu0 %v2547
    %5556 = vmatpush.msra.mxu0 %v2546
    %5557 = vmatpush.msra.mxu0 %v2545
    %5558 = vmatpush.msra.mxu0 %v2544
    %5559 = vmatmul.f32.gmra.mxu0 %v5352
    %v5560 = vpop.f32.mrf.mxu0
    %v5561 = vadd.f32 %v5541, %v5560
    %5562 = vdwg.mxu0
    %5563 = vmatpush.msra.mxu0 %v2575
    %5564 = vmatpush.msra.mxu0 %v2574
    %5565 = vmatpush.msra.mxu0 %v2573
    %5566 = vmatpush.msra.mxu0 %v2572
    %5567 = vmatpush.msra.mxu0 %v2571
    %5568 = vmatpush.msra.mxu0 %v2570
    %5569 = vmatpush.msra.mxu0 %v2569
    %5570 = vmatpush.msra.mxu0 %v2568
    %5571 = vmatpush.msra.mxu0 %v2567
    %5572 = vmatpush.msra.mxu0 %v2566
    %5573 = vmatpush.msra.mxu0 %v2565
    %5574 = vmatpush.msra.mxu0 %v2564
    %5575 = vmatpush.msra.mxu0 %v2563
    %5576 = vmatpush.msra.mxu0 %v2562
    %5577 = vmatpush.msra.mxu0 %v2561
    %5578 = vmatpush.msra.mxu0 %v2560
    %5579 = vmatmul.f32.gmra.mxu0 %v5355
    %v5580 = vpop.f32.mrf.mxu0
    %v5581 = vadd.f32 %v5561, %v5580
    %5582 = vdwg.mxu0
    %5583 = vmatpush.msra.mxu0 %v2591
    %5584 = vmatpush.msra.mxu0 %v2590
    %5585 = vmatpush.msra.mxu0 %v2589
    %5586 = vmatpush.msra.mxu0 %v2588
    %5587 = vmatpush.msra.mxu0 %v2587
    %5588 = vmatpush.msra.mxu0 %v2586
    %5589 = vmatpush.msra.mxu0 %v2585
    %5590 = vmatpush.msra.mxu0 %v2584
    %5591 = vmatpush.msra.mxu0 %v2583
    %5592 = vmatpush.msra.mxu0 %v2582
    %5593 = vmatpush.msra.mxu0 %v2581
    %5594 = vmatpush.msra.mxu0 %v2580
    %5595 = vmatpush.msra.mxu0 %v2579
    %5596 = vmatpush.msra.mxu0 %v2578
    %5597 = vmatpush.msra.mxu0 %v2577
    %5598 = vmatpush.msra.mxu0 %v2576
    %5599 = vmatmul.f32.gmra.mxu0 %v5358
    %v5600 = vpop.f32.mrf.mxu0
    %v5601 = vadd.f32 %v5581, %v5600
    %5602 = vdwg.mxu0
    %5603 = vmatpush.msra.mxu0 0.0
    %5604 = vmatpush.msra.mxu0 0.0
    %5605 = vmatpush.msra.mxu0 0.0
    %5606 = vmatpush.msra.mxu0 0.0
    %5607 = vmatpush.msra.mxu0 0.0
    %5608 = vmatpush.msra.mxu0 0.0
    %5609 = vmatpush.msra.mxu0 0.0
    %5610 = vmatpush.msra.mxu0 0.0
    %5611 = vmatpush.msra.mxu0 %v2599
    %5612 = vmatpush.msra.mxu0 %v2598
    %5613 = vmatpush.msra.mxu0 %v2597
    %5614 = vmatpush.msra.mxu0 %v2596
    %5615 = vmatpush.msra.mxu0 %v2595
    %5616 = vmatpush.msra.mxu0 %v2594
    %5617 = vmatpush.msra.mxu0 %v2593
    %5618 = vmatpush.msra.mxu0 %v2592
    %5619 = vmatmul.f32.gmra.mxu0 %v5361
    %v5620 = vpop.f32.mrf.mxu0
    %v5621 = vadd.f32 %v5601, %v5620
    %5622 = vdwg.mxu0
    %v5623 = vmax.f32 %v5621, 0.0
    %v5624 = vrot.slane %v2657, 2
    %v5625 = vrot.slane %v2664, 2
    %v5626 = vrot.slane %v2671, 2
    %v5627 = vrot.slane %v2678, 2
    %v5628 = vrot.slane %v2685, 2
    %v5629 = vrot.slane %v2692, 2
    %v5630 = vrot.slane %v2699, 2
    %v5631 = vrot.slane %v2706, 2
    %v5632 = vrot.slane %v2713, 2
    %v5633 = vrot.slane %v2720, 2
    %v5634 = vrot.slane %v2727, 2
    %v5635 = vrot.slane %v2734, 2
    %v5636 = vrot.slane %v2741, 2
    %v5637 = vrot.slane %v2748, 2
    %v5638 = vrot.slane %v2755, 2
    %v5639 = vrot.slane %v2762, 2
    %v5640 = vrot.slane %v2769, 2
    %v5641 = vrot.slane %v2776, 2
    %v5642 = vrot.slane %v2783, 2
    %v5643 = vrot.slane %v2790, 2
    %v5644 = vrot.slane %v2797, 2
    %v5645 = vrot.slane %v2804, 2
    %v5646 = vrot.slane %v2811, 2
    %v5647 = vrot.slane %v2818, 2
    %v5648 = vrot.slane %v2825, 2
    %v5651 = vunpack.c.l.s4 1934713408
    %v5652 = vunpack.c.0.s8 %v5651
    %v5653 = vperm.slane %v5624, %v5652
    %v5654 = vrot.slane %v5653, 4
    %v5655 = vsel %vm2832, 0.0, %v5654
    %v5658 = vunpack.c.l.s4 1934713408
    %v5659 = vunpack.c.0.s8 %v5658
    %v5660 = vperm.slane %v5625, %v5659
    %v5661 = vrot.slane %v5660, 4
    %v5662 = vsel %vm2832, 0.0, %v5661
    %v5665 = vunpack.c.l.s4 1934713408
    %v5666 = vunpack.c.0.s8 %v5665
    %v5667 = vperm.slane %v5626, %v5666
    %v5668 = vrot.slane %v5667, 4
    %v5669 = vsel %vm2832, 0.0, %v5668
    %v5672 = vunpack.c.l.s4 1934713408
    %v5673 = vunpack.c.0.s8 %v5672
    %v5674 = vperm.slane %v5627, %v5673
    %v5675 = vrot.slane %v5674, 4
    %v5676 = vsel %vm2832, 0.0, %v5675
    %v5679 = vunpack.c.l.s4 1934713408
    %v5680 = vunpack.c.0.s8 %v5679
    %v5681 = vperm.slane %v5628, %v5680
    %v5682 = vrot.slane %v5681, 4
    %v5683 = vsel %vm2832, 0.0, %v5682
    %v5686 = vunpack.c.l.s4 1934713408
    %v5687 = vunpack.c.0.s8 %v5686
    %v5688 = vperm.slane %v5629, %v5687
    %v5689 = vrot.slane %v5688, 4
    %v5690 = vsel %vm2832, 0.0, %v5689
    %v5693 = vunpack.c.l.s4 1934713408
    %v5694 = vunpack.c.0.s8 %v5693
    %v5695 = vperm.slane %v5630, %v5694
    %v5696 = vrot.slane %v5695, 4
    %v5697 = vsel %vm2832, 0.0, %v5696
    %v5700 = vunpack.c.l.s4 1934713408
    %v5701 = vunpack.c.0.s8 %v5700
    %v5702 = vperm.slane %v5631, %v5701
    %v5703 = vrot.slane %v5702, 4
    %v5704 = vsel %vm2832, 0.0, %v5703
    %v5707 = vunpack.c.l.s4 1934713408
    %v5708 = vunpack.c.0.s8 %v5707
    %v5709 = vperm.slane %v5632, %v5708
    %v5710 = vrot.slane %v5709, 4
    %v5711 = vsel %vm2832, 0.0, %v5710
    %v5714 = vunpack.c.l.s4 1934713408
    %v5715 = vunpack.c.0.s8 %v5714
    %v5716 = vperm.slane %v5633, %v5715
    %v5717 = vrot.slane %v5716, 4
    %v5718 = vsel %vm2832, 0.0, %v5717
    %v5721 = vunpack.c.l.s4 1934713408
    %v5722 = vunpack.c.0.s8 %v5721
    %v5723 = vperm.slane %v5634, %v5722
    %v5724 = vrot.slane %v5723, 4
    %v5725 = vsel %vm2832, 0.0, %v5724
    %v5728 = vunpack.c.l.s4 1934713408
    %v5729 = vunpack.c.0.s8 %v5728
    %v5730 = vperm.slane %v5635, %v5729
    %v5731 = vrot.slane %v5730, 4
    %v5732 = vsel %vm2832, 0.0, %v5731
    %v5735 = vunpack.c.l.s4 1934713408
    %v5736 = vunpack.c.0.s8 %v5735
    %v5737 = vperm.slane %v5636, %v5736
    %v5738 = vrot.slane %v5737, 4
    %v5739 = vsel %vm2832, 0.0, %v5738
    %v5742 = vunpack.c.l.s4 1934713408
    %v5743 = vunpack.c.0.s8 %v5742
    %v5744 = vperm.slane %v5637, %v5743
    %v5745 = vrot.slane %v5744, 4
    %v5746 = vsel %vm2832, 0.0, %v5745
    %v5749 = vunpack.c.l.s4 1934713408
    %v5750 = vunpack.c.0.s8 %v5749
    %v5751 = vperm.slane %v5638, %v5750
    %v5752 = vrot.slane %v5751, 4
    %v5753 = vsel %vm2832, 0.0, %v5752
    %v5756 = vunpack.c.l.s4 1934713408
    %v5757 = vunpack.c.0.s8 %v5756
    %v5758 = vperm.slane %v5639, %v5757
    %v5759 = vrot.slane %v5758, 4
    %v5760 = vsel %vm2832, 0.0, %v5759
    %v5763 = vunpack.c.l.s4 1934713408
    %v5764 = vunpack.c.0.s8 %v5763
    %v5765 = vperm.slane %v5640, %v5764
    %v5766 = vrot.slane %v5765, 4
    %v5767 = vsel %vm2832, 0.0, %v5766
    %v5770 = vunpack.c.l.s4 1934713408
    %v5771 = vunpack.c.0.s8 %v5770
    %v5772 = vperm.slane %v5641, %v5771
    %v5773 = vrot.slane %v5772, 4
    %v5774 = vsel %vm2832, 0.0, %v5773
    %v5777 = vunpack.c.l.s4 1934713408
    %v5778 = vunpack.c.0.s8 %v5777
    %v5779 = vperm.slane %v5642, %v5778
    %v5780 = vrot.slane %v5779, 4
    %v5781 = vsel %vm2832, 0.0, %v5780
    %v5784 = vunpack.c.l.s4 1934713408
    %v5785 = vunpack.c.0.s8 %v5784
    %v5786 = vperm.slane %v5643, %v5785
    %v5787 = vrot.slane %v5786, 4
    %v5788 = vsel %vm2832, 0.0, %v5787
    %v5791 = vunpack.c.l.s4 1934713408
    %v5792 = vunpack.c.0.s8 %v5791
    %v5793 = vperm.slane %v5644, %v5792
    %v5794 = vrot.slane %v5793, 4
    %v5795 = vsel %vm2832, 0.0, %v5794
    %v5798 = vunpack.c.l.s4 1934713408
    %v5799 = vunpack.c.0.s8 %v5798
    %v5800 = vperm.slane %v5645, %v5799
    %v5801 = vrot.slane %v5800, 4
    %v5802 = vsel %vm2832, 0.0, %v5801
    %v5805 = vunpack.c.l.s4 1934713408
    %v5806 = vunpack.c.0.s8 %v5805
    %v5807 = vperm.slane %v5646, %v5806
    %v5808 = vrot.slane %v5807, 4
    %v5809 = vsel %vm2832, 0.0, %v5808
    %v5812 = vunpack.c.l.s4 1934713408
    %v5813 = vunpack.c.0.s8 %v5812
    %v5814 = vperm.slane %v5647, %v5813
    %v5815 = vrot.slane %v5814, 4
    %v5816 = vsel %vm2832, 0.0, %v5815
    %v5819 = vunpack.c.l.s4 1934713408
    %v5820 = vunpack.c.0.s8 %v5819
    %v5821 = vperm.slane %v5648, %v5820
    %v5822 = vrot.slane %v5821, 4
    %v5823 = vsel %vm2832, 0.0, %v5822
    %v5825 = vperm.slane %v5655, 0
    %5826 = vrot.lane.b32.xlu0 %v5825, 32
    %v5827 = vpop.permute.xlu0 %5826
    %v5830 = vperm.slane %v5660, 0
    %5831 = vrot.lane.b32.xlu0 %v5830, 64
    %v5832 = vpop.permute.xlu0 %5831
    %v5835 = vperm.slane %v5662, 0
    %5836 = vrot.lane.b32.xlu0 %v5835, 96
    %v5837 = vpop.permute.xlu0 %5836
    %v5840 = vperm.slane %v5669, 0
    %5841 = vrot.lane.b32.xlu0 %v5840, 32
    %v5842 = vpop.permute.xlu0 %5841
    %v5845 = vperm.slane %v5674, 0
    %5846 = vrot.lane.b32.xlu0 %v5845, 64
    %v5847 = vpop.permute.xlu0 %5846
    %v5850 = vperm.slane %v5676, 0
    %5851 = vrot.lane.b32.xlu0 %v5850, 96
    %v5852 = vpop.permute.xlu0 %5851
    %v5855 = vperm.slane %v5683, 0
    %5856 = vrot.lane.b32.xlu0 %v5855, 32
    %v5857 = vpop.permute.xlu0 %5856
    %v5860 = vperm.slane %v5688, 0
    %5861 = vrot.lane.b32.xlu0 %v5860, 64
    %v5862 = vpop.permute.xlu0 %5861
    %v5865 = vperm.slane %v5690, 0
    %5866 = vrot.lane.b32.xlu0 %v5865, 96
    %v5867 = vpop.permute.xlu0 %5866
    %v5870 = vperm.slane %v5697, 0
    %5871 = vrot.lane.b32.xlu0 %v5870, 32
    %v5872 = vpop.permute.xlu0 %5871
    %v5875 = vperm.slane %v5702, 0
    %5876 = vrot.lane.b32.xlu0 %v5875, 64
    %v5877 = vpop.permute.xlu0 %5876
    %v5880 = vperm.slane %v5704, 0
    %5881 = vrot.lane.b32.xlu0 %v5880, 96
    %v5882 = vpop.permute.xlu0 %5881
    %v5885 = vperm.slane %v5711, 0
    %5886 = vrot.lane.b32.xlu0 %v5885, 32
    %v5887 = vpop.permute.xlu0 %5886
    %v5890 = vperm.slane %v5716, 0
    %5891 = vrot.lane.b32.xlu0 %v5890, 64
    %v5892 = vpop.permute.xlu0 %5891
    %v5895 = vperm.slane %v5718, 0
    %5896 = vrot.lane.b32.xlu0 %v5895, 96
    %v5897 = vpop.permute.xlu0 %5896
    %v5900 = vperm.slane %v5725, 0
    %5901 = vrot.lane.b32.xlu0 %v5900, 32
    %v5902 = vpop.permute.xlu0 %5901
    %v5905 = vperm.slane %v5730, 0
    %5906 = vrot.lane.b32.xlu0 %v5905, 64
    %v5907 = vpop.permute.xlu0 %5906
    %v5910 = vperm.slane %v5732, 0
    %5911 = vrot.lane.b32.xlu0 %v5910, 96
    %v5912 = vpop.permute.xlu0 %5911
    %v5915 = vperm.slane %v5739, 0
    %5916 = vrot.lane.b32.xlu0 %v5915, 32
    %v5917 = vpop.permute.xlu0 %5916
    %v5920 = vperm.slane %v5744, 0
    %5921 = vrot.lane.b32.xlu0 %v5920, 64
    %v5922 = vpop.permute.xlu0 %5921
    %v5925 = vperm.slane %v5746, 0
    %5926 = vrot.lane.b32.xlu0 %v5925, 96
    %v5927 = vpop.permute.xlu0 %5926
    %v5930 = vperm.slane %v5753, 0
    %5931 = vrot.lane.b32.xlu0 %v5930, 32
    %v5932 = vpop.permute.xlu0 %5931
    %v5935 = vperm.slane %v5758, 0
    %5936 = vrot.lane.b32.xlu0 %v5935, 64
    %v5937 = vpop.permute.xlu0 %5936
    %v5940 = vperm.slane %v5760, 0
    %5941 = vrot.lane.b32.xlu0 %v5940, 96
    %v5942 = vpop.permute.xlu0 %5941
    %v5945 = vperm.slane %v5767, 0
    %5946 = vrot.lane.b32.xlu0 %v5945, 32
    %v5947 = vpop.permute.xlu0 %5946
    %v5950 = vperm.slane %v5772, 0
    %5951 = vrot.lane.b32.xlu0 %v5950, 64
    %v5952 = vpop.permute.xlu0 %5951
    %v5955 = vperm.slane %v5774, 0
    %5956 = vrot.lane.b32.xlu0 %v5955, 96
    %v5957 = vpop.permute.xlu0 %5956
    %v5960 = vperm.slane %v5781, 0
    %5961 = vrot.lane.b32.xlu0 %v5960, 32
    %v5962 = vpop.permute.xlu0 %5961
    %v5965 = vperm.slane %v5786, 0
    %5966 = vrot.lane.b32.xlu0 %v5965, 64
    %v5967 = vpop.permute.xlu0 %5966
    %v5970 = vperm.slane %v5788, 0
    %5971 = vrot.lane.b32.xlu0 %v5970, 96
    %v5972 = vpop.permute.xlu0 %5971
    %v5975 = vperm.slane %v5795, 0
    %5976 = vrot.lane.b32.xlu0 %v5975, 32
    %v5977 = vpop.permute.xlu0 %5976
    %v5980 = vperm.slane %v5800, 0
    %5981 = vrot.lane.b32.xlu0 %v5980, 64
    %v5982 = vpop.permute.xlu0 %5981
    %v5985 = vperm.slane %v5802, 0
    %5986 = vrot.lane.b32.xlu0 %v5985, 96
    %v5987 = vpop.permute.xlu0 %5986
    %v5990 = vperm.slane %v5809, 0
    %5991 = vrot.lane.b32.xlu0 %v5990, 32
    %v5992 = vpop.permute.xlu0 %5991
    %v5995 = vperm.slane %v5814, 0
    %5996 = vrot.lane.b32.xlu0 %v5995, 64
    %v5997 = vpop.permute.xlu0 %5996
    %v6000 = vperm.slane %v5816, 0
    %6001 = vrot.lane.b32.xlu0 %v6000, 96
    %v6002 = vpop.permute.xlu0 %6001
    %v6005 = vperm.slane %v5823, 0
    %6006 = vrot.lane.b32.xlu0 %v6005, 32
    %v6007 = vpop.permute.xlu0 %6006
    %v6009 = vsel %vm3187, %v5653, %v5827
    %v6010 = vsel %vm3189, %v6009, %v5832
    %v6011 = vsel %vm3191, %v6010, %v5837
    %v6012 = vsel %vm3187, %v5667, %v5842
    %v6013 = vsel %vm3189, %v6012, %v5847
    %v6014 = vsel %vm3191, %v6013, %v5852
    %v6015 = vsel %vm3187, %v5681, %v5857
    %v6016 = vsel %vm3189, %v6015, %v5862
    %v6017 = vsel %vm3191, %v6016, %v5867
    %v6018 = vsel %vm3187, %v5695, %v5872
    %v6019 = vsel %vm3189, %v6018, %v5877
    %v6020 = vsel %vm3191, %v6019, %v5882
    %v6021 = vsel %vm3187, %v5709, %v5887
    %v6022 = vsel %vm3189, %v6021, %v5892
    %v6023 = vsel %vm3191, %v6022, %v5897
    %v6024 = vsel %vm3187, %v5723, %v5902
    %v6025 = vsel %vm3189, %v6024, %v5907
    %v6026 = vsel %vm3191, %v6025, %v5912
    %v6027 = vsel %vm3187, %v5737, %v5917
    %v6028 = vsel %vm3189, %v6027, %v5922
    %v6029 = vsel %vm3191, %v6028, %v5927
    %v6030 = vsel %vm3187, %v5751, %v5932
    %v6031 = vsel %vm3189, %v6030, %v5937
    %v6032 = vsel %vm3191, %v6031, %v5942
    %v6033 = vsel %vm3187, %v5765, %v5947
    %v6034 = vsel %vm3189, %v6033, %v5952
    %v6035 = vsel %vm3191, %v6034, %v5957
    %v6036 = vsel %vm3187, %v5779, %v5962
    %v6037 = vsel %vm3189, %v6036, %v5967
    %v6038 = vsel %vm3191, %v6037, %v5972
    %v6039 = vsel %vm3187, %v5793, %v5977
    %v6040 = vsel %vm3189, %v6039, %v5982
    %v6041 = vsel %vm3191, %v6040, %v5987
    %v6042 = vsel %vm3187, %v5807, %v5992
    %v6043 = vsel %vm3189, %v6042, %v5997
    %v6044 = vsel %vm3191, %v6043, %v6002
    %v6045 = vsel %vm3187, %v5821, %v6007
    %v6047 = vsel %vm3189, %v6045, 0
    %6049 = vmatpush.msra.mxu0 %v2415
    %6050 = vmatpush.msra.mxu0 %v2414
    %6051 = vmatpush.msra.mxu0 %v2413
    %6052 = vmatpush.msra.mxu0 %v2412
    %6053 = vmatpush.msra.mxu0 %v2411
    %6054 = vmatpush.msra.mxu0 %v2410
    %6055 = vmatpush.msra.mxu0 %v2409
    %6056 = vmatpush.msra.mxu0 %v2408
    %6057 = vmatpush.msra.mxu0 %v2407
    %6058 = vmatpush.msra.mxu0 %v2406
    %6059 = vmatpush.msra.mxu0 %v2405
    %6060 = vmatpush.msra.mxu0 %v2404
    %6061 = vmatpush.msra.mxu0 %v2403
    %6062 = vmatpush.msra.mxu0 %v2402
    %6063 = vmatpush.msra.mxu0 %v2401
    %6064 = vmatpush.msra.mxu0 %v2400
    %6065 = vmatmul.f32.gmra.mxu0 %v6011
    %v6066 = vpop.f32.mrf.mxu0
    %v6067 = vadd.f32 %v2600, %v6066
    %6068 = vdwg.mxu0
    %6069 = vmatpush.msra.mxu0 %v2431
    %6070 = vmatpush.msra.mxu0 %v2430
    %6071 = vmatpush.msra.mxu0 %v2429
    %6072 = vmatpush.msra.mxu0 %v2428
    %6073 = vmatpush.msra.mxu0 %v2427
    %6074 = vmatpush.msra.mxu0 %v2426
    %6075 = vmatpush.msra.mxu0 %v2425
    %6076 = vmatpush.msra.mxu0 %v2424
    %6077 = vmatpush.msra.mxu0 %v2423
    %6078 = vmatpush.msra.mxu0 %v2422
    %6079 = vmatpush.msra.mxu0 %v2421
    %6080 = vmatpush.msra.mxu0 %v2420
    %6081 = vmatpush.msra.mxu0 %v2419
    %6082 = vmatpush.msra.mxu0 %v2418
    %6083 = vmatpush.msra.mxu0 %v2417
    %6084 = vmatpush.msra.mxu0 %v2416
    %6085 = vmatmul.f32.gmra.mxu0 %v6014
    %v6086 = vpop.f32.mrf.mxu0
    %v6087 = vadd.f32 %v6067, %v6086
    %6088 = vdwg.mxu0
    %6089 = vmatpush.msra.mxu0 %v2447
    %6090 = vmatpush.msra.mxu0 %v2446
    %6091 = vmatpush.msra.mxu0 %v2445
    %6092 = vmatpush.msra.mxu0 %v2444
    %6093 = vmatpush.msra.mxu0 %v2443
    %6094 = vmatpush.msra.mxu0 %v2442
    %6095 = vmatpush.msra.mxu0 %v2441
    %6096 = vmatpush.msra.mxu0 %v2440
    %6097 = vmatpush.msra.mxu0 %v2439
    %6098 = vmatpush.msra.mxu0 %v2438
    %6099 = vmatpush.msra.mxu0 %v2437
    %6100 = vmatpush.msra.mxu0 %v2436
    %6101 = vmatpush.msra.mxu0 %v2435
    %6102 = vmatpush.msra.mxu0 %v2434
    %6103 = vmatpush.msra.mxu0 %v2433
    %6104 = vmatpush.msra.mxu0 %v2432
    %6105 = vmatmul.f32.gmra.mxu0 %v6017
    %v6106 = vpop.f32.mrf.mxu0
    %v6107 = vadd.f32 %v6087, %v6106
    %6108 = vdwg.mxu0
    %6109 = vmatpush.msra.mxu0 %v2463
    %6110 = vmatpush.msra.mxu0 %v2462
    %6111 = vmatpush.msra.mxu0 %v2461
    %6112 = vmatpush.msra.mxu0 %v2460
    %6113 = vmatpush.msra.mxu0 %v2459
    %6114 = vmatpush.msra.mxu0 %v2458
    %6115 = vmatpush.msra.mxu0 %v2457
    %6116 = vmatpush.msra.mxu0 %v2456
    %6117 = vmatpush.msra.mxu0 %v2455
    %6118 = vmatpush.msra.mxu0 %v2454
    %6119 = vmatpush.msra.mxu0 %v2453
    %6120 = vmatpush.msra.mxu0 %v2452
    %6121 = vmatpush.msra.mxu0 %v2451
    %6122 = vmatpush.msra.mxu0 %v2450
    %6123 = vmatpush.msra.mxu0 %v2449
    %6124 = vmatpush.msra.mxu0 %v2448
    %6125 = vmatmul.f32.gmra.mxu0 %v6020
    %v6126 = vpop.f32.mrf.mxu0
    %v6127 = vadd.f32 %v6107, %v6126
    %6128 = vdwg.mxu0
    %6129 = vmatpush.msra.mxu0 %v2479
    %6130 = vmatpush.msra.mxu0 %v2478
    %6131 = vmatpush.msra.mxu0 %v2477
    %6132 = vmatpush.msra.mxu0 %v2476
    %6133 = vmatpush.msra.mxu0 %v2475
    %6134 = vmatpush.msra.mxu0 %v2474
    %6135 = vmatpush.msra.mxu0 %v2473
    %6136 = vmatpush.msra.mxu0 %v2472
    %6137 = vmatpush.msra.mxu0 %v2471
    %6138 = vmatpush.msra.mxu0 %v2470
    %6139 = vmatpush.msra.mxu0 %v2469
    %6140 = vmatpush.msra.mxu0 %v2468
    %6141 = vmatpush.msra.mxu0 %v2467
    %6142 = vmatpush.msra.mxu0 %v2466
    %6143 = vmatpush.msra.mxu0 %v2465
    %6144 = vmatpush.msra.mxu0 %v2464
    %6145 = vmatmul.f32.gmra.mxu0 %v6023
    %v6146 = vpop.f32.mrf.mxu0
    %v6147 = vadd.f32 %v6127, %v6146
    %6148 = vdwg.mxu0
    %6149 = vmatpush.msra.mxu0 %v2495
    %6150 = vmatpush.msra.mxu0 %v2494
    %6151 = vmatpush.msra.mxu0 %v2493
    %6152 = vmatpush.msra.mxu0 %v2492
    %6153 = vmatpush.msra.mxu0 %v2491
    %6154 = vmatpush.msra.mxu0 %v2490
    %6155 = vmatpush.msra.mxu0 %v2489
    %6156 = vmatpush.msra.mxu0 %v2488
    %6157 = vmatpush.msra.mxu0 %v2487
    %6158 = vmatpush.msra.mxu0 %v2486
    %6159 = vmatpush.msra.mxu0 %v2485
    %6160 = vmatpush.msra.mxu0 %v2484
    %6161 = vmatpush.msra.mxu0 %v2483
    %6162 = vmatpush.msra.mxu0 %v2482
    %6163 = vmatpush.msra.mxu0 %v2481
    %6164 = vmatpush.msra.mxu0 %v2480
    %6165 = vmatmul.f32.gmra.mxu0 %v6026
    %v6166 = vpop.f32.mrf.mxu0
    %v6167 = vadd.f32 %v6147, %v6166
    %6168 = vdwg.mxu0
    %6169 = vmatpush.msra.mxu0 %v2511
    %6170 = vmatpush.msra.mxu0 %v2510
    %6171 = vmatpush.msra.mxu0 %v2509
    %6172 = vmatpush.msra.mxu0 %v2508
    %6173 = vmatpush.msra.mxu0 %v2507
    %6174 = vmatpush.msra.mxu0 %v2506
    %6175 = vmatpush.msra.mxu0 %v2505
    %6176 = vmatpush.msra.mxu0 %v2504
    %6177 = vmatpush.msra.mxu0 %v2503
    %6178 = vmatpush.msra.mxu0 %v2502
    %6179 = vmatpush.msra.mxu0 %v2501
    %6180 = vmatpush.msra.mxu0 %v2500
    %6181 = vmatpush.msra.mxu0 %v2499
    %6182 = vmatpush.msra.mxu0 %v2498
    %6183 = vmatpush.msra.mxu0 %v2497
    %6184 = vmatpush.msra.mxu0 %v2496
    %6185 = vmatmul.f32.gmra.mxu0 %v6029
    %v6186 = vpop.f32.mrf.mxu0
    %v6187 = vadd.f32 %v6167, %v6186
    %6188 = vdwg.mxu0
    %6189 = vmatpush.msra.mxu0 %v2527
    %6190 = vmatpush.msra.mxu0 %v2526
    %6191 = vmatpush.msra.mxu0 %v2525
    %6192 = vmatpush.msra.mxu0 %v2524
    %6193 = vmatpush.msra.mxu0 %v2523
    %6194 = vmatpush.msra.mxu0 %v2522
    %6195 = vmatpush.msra.mxu0 %v2521
    %6196 = vmatpush.msra.mxu0 %v2520
    %6197 = vmatpush.msra.mxu0 %v2519
    %6198 = vmatpush.msra.mxu0 %v2518
    %6199 = vmatpush.msra.mxu0 %v2517
    %6200 = vmatpush.msra.mxu0 %v2516
    %6201 = vmatpush.msra.mxu0 %v2515
    %6202 = vmatpush.msra.mxu0 %v2514
    %6203 = vmatpush.msra.mxu0 %v2513
    %6204 = vmatpush.msra.mxu0 %v2512
    %6205 = vmatmul.f32.gmra.mxu0 %v6032
    %v6206 = vpop.f32.mrf.mxu0
    %v6207 = vadd.f32 %v6187, %v6206
    %6208 = vdwg.mxu0
    %6209 = vmatpush.msra.mxu0 %v2543
    %6210 = vmatpush.msra.mxu0 %v2542
    %6211 = vmatpush.msra.mxu0 %v2541
    %6212 = vmatpush.msra.mxu0 %v2540
    %6213 = vmatpush.msra.mxu0 %v2539
    %6214 = vmatpush.msra.mxu0 %v2538
    %6215 = vmatpush.msra.mxu0 %v2537
    %6216 = vmatpush.msra.mxu0 %v2536
    %6217 = vmatpush.msra.mxu0 %v2535
    %6218 = vmatpush.msra.mxu0 %v2534
    %6219 = vmatpush.msra.mxu0 %v2533
    %6220 = vmatpush.msra.mxu0 %v2532
    %6221 = vmatpush.msra.mxu0 %v2531
    %6222 = vmatpush.msra.mxu0 %v2530
    %6223 = vmatpush.msra.mxu0 %v2529
    %6224 = vmatpush.msra.mxu0 %v2528
    %6225 = vmatmul.f32.gmra.mxu0 %v6035
    %v6226 = vpop.f32.mrf.mxu0
    %v6227 = vadd.f32 %v6207, %v6226
    %6228 = vdwg.mxu0
    %6229 = vmatpush.msra.mxu0 %v2559
    %6230 = vmatpush.msra.mxu0 %v2558
    %6231 = vmatpush.msra.mxu0 %v2557
    %6232 = vmatpush.msra.mxu0 %v2556
    %6233 = vmatpush.msra.mxu0 %v2555
    %6234 = vmatpush.msra.mxu0 %v2554
    %6235 = vmatpush.msra.mxu0 %v2553
    %6236 = vmatpush.msra.mxu0 %v2552
    %6237 = vmatpush.msra.mxu0 %v2551
    %6238 = vmatpush.msra.mxu0 %v2550
    %6239 = vmatpush.msra.mxu0 %v2549
    %6240 = vmatpush.msra.mxu0 %v2548
    %6241 = vmatpush.msra.mxu0 %v2547
    %6242 = vmatpush.msra.mxu0 %v2546
    %6243 = vmatpush.msra.mxu0 %v2545
    %6244 = vmatpush.msra.mxu0 %v2544
    %6245 = vmatmul.f32.gmra.mxu0 %v6038
    %v6246 = vpop.f32.mrf.mxu0
    %v6247 = vadd.f32 %v6227, %v6246
    %6248 = vdwg.mxu0
    %6249 = vmatpush.msra.mxu0 %v2575
    %6250 = vmatpush.msra.mxu0 %v2574
    %6251 = vmatpush.msra.mxu0 %v2573
    %6252 = vmatpush.msra.mxu0 %v2572
    %6253 = vmatpush.msra.mxu0 %v2571
    %6254 = vmatpush.msra.mxu0 %v2570
    %6255 = vmatpush.msra.mxu0 %v2569
    %6256 = vmatpush.msra.mxu0 %v2568
    %6257 = vmatpush.msra.mxu0 %v2567
    %6258 = vmatpush.msra.mxu0 %v2566
    %6259 = vmatpush.msra.mxu0 %v2565
    %6260 = vmatpush.msra.mxu0 %v2564
    %6261 = vmatpush.msra.mxu0 %v2563
    %6262 = vmatpush.msra.mxu0 %v2562
    %6263 = vmatpush.msra.mxu0 %v2561
    %6264 = vmatpush.msra.mxu0 %v2560
    %6265 = vmatmul.f32.gmra.mxu0 %v6041
    %v6266 = vpop.f32.mrf.mxu0
    %v6267 = vadd.f32 %v6247, %v6266
    %6268 = vdwg.mxu0
    %6269 = vmatpush.msra.mxu0 %v2591
    %6270 = vmatpush.msra.mxu0 %v2590
    %6271 = vmatpush.msra.mxu0 %v2589
    %6272 = vmatpush.msra.mxu0 %v2588
    %6273 = vmatpush.msra.mxu0 %v2587
    %6274 = vmatpush.msra.mxu0 %v2586
    %6275 = vmatpush.msra.mxu0 %v2585
    %6276 = vmatpush.msra.mxu0 %v2584
    %6277 = vmatpush.msra.mxu0 %v2583
    %6278 = vmatpush.msra.mxu0 %v2582
    %6279 = vmatpush.msra.mxu0 %v2581
    %6280 = vmatpush.msra.mxu0 %v2580
    %6281 = vmatpush.msra.mxu0 %v2579
    %6282 = vmatpush.msra.mxu0 %v2578
    %6283 = vmatpush.msra.mxu0 %v2577
    %6284 = vmatpush.msra.mxu0 %v2576
    %6285 = vmatmul.f32.gmra.mxu0 %v6044
    %v6286 = vpop.f32.mrf.mxu0
    %v6287 = vadd.f32 %v6267, %v6286
    %6288 = vdwg.mxu0
    %6289 = vmatpush.msra.mxu0 0.0
    %6290 = vmatpush.msra.mxu0 0.0
    %6291 = vmatpush.msra.mxu0 0.0
    %6292 = vmatpush.msra.mxu0 0.0
    %6293 = vmatpush.msra.mxu0 0.0
    %6294 = vmatpush.msra.mxu0 0.0
    %6295 = vmatpush.msra.mxu0 0.0
    %6296 = vmatpush.msra.mxu0 0.0
    %6297 = vmatpush.msra.mxu0 %v2599
    %6298 = vmatpush.msra.mxu0 %v2598
    %6299 = vmatpush.msra.mxu0 %v2597
    %6300 = vmatpush.msra.mxu0 %v2596
    %6301 = vmatpush.msra.mxu0 %v2595
    %6302 = vmatpush.msra.mxu0 %v2594
    %6303 = vmatpush.msra.mxu0 %v2593
    %6304 = vmatpush.msra.mxu0 %v2592
    %6305 = vmatmul.f32.gmra.mxu0 %v6047
    %v6306 = vpop.f32.mrf.mxu0
    %v6307 = vadd.f32 %v6287, %v6306
    %6308 = vdwg.mxu0
    %v6309 = vmax.f32 %v6307, 0.0
    %v6310 = vrot.slane %v3492, 2
    %v6311 = vrot.slane %v3494, 2
    %v6312 = vrot.slane %v3496, 2
    %v6313 = vrot.slane %v3498, 2
    %v6314 = vrot.slane %v3500, 2
    %v6315 = vrot.slane %v3502, 2
    %v6316 = vrot.slane %v3504, 2
    %v6317 = vrot.slane %v3506, 2
    %v6318 = vrot.slane %v3508, 2
    %v6319 = vrot.slane %v3510, 2
    %v6320 = vrot.slane %v3512, 2
    %v6321 = vrot.slane %v3514, 2
    %v6322 = vrot.slane %v3516, 2
    %v6323 = vrot.slane %v3518, 2
    %v6324 = vrot.slane %v3520, 2
    %v6325 = vrot.slane %v3522, 2
    %v6326 = vrot.slane %v3524, 2
    %v6327 = vrot.slane %v3526, 2
    %v6328 = vrot.slane %v3528, 2
    %v6329 = vrot.slane %v3530, 2
    %v6330 = vrot.slane %v3532, 2
    %v6331 = vrot.slane %v3534, 2
    %v6332 = vrot.slane %v3536, 2
    %v6333 = vrot.slane %v3538, 2
    %v6334 = vrot.slane %v3540, 2
    %v6337 = vunpack.c.l.s4 1934713408
    %v6338 = vunpack.c.0.s8 %v6337
    %v6339 = vperm.slane %v6310, %v6338
    %v6340 = vrot.slane %v6339, 4
    %v6341 = vsel %vm2832, 0.0, %v6340
    %v6344 = vunpack.c.l.s4 1934713408
    %v6345 = vunpack.c.0.s8 %v6344
    %v6346 = vperm.slane %v6311, %v6345
    %v6347 = vrot.slane %v6346, 4
    %v6348 = vsel %vm2832, 0.0, %v6347
    %v6351 = vunpack.c.l.s4 1934713408
    %v6352 = vunpack.c.0.s8 %v6351
    %v6353 = vperm.slane %v6312, %v6352
    %v6354 = vrot.slane %v6353, 4
    %v6355 = vsel %vm2832, 0.0, %v6354
    %v6358 = vunpack.c.l.s4 1934713408
    %v6359 = vunpack.c.0.s8 %v6358
    %v6360 = vperm.slane %v6313, %v6359
    %v6361 = vrot.slane %v6360, 4
    %v6362 = vsel %vm2832, 0.0, %v6361
    %v6365 = vunpack.c.l.s4 1934713408
    %v6366 = vunpack.c.0.s8 %v6365
    %v6367 = vperm.slane %v6314, %v6366
    %v6368 = vrot.slane %v6367, 4
    %v6369 = vsel %vm2832, 0.0, %v6368
    %v6372 = vunpack.c.l.s4 1934713408
    %v6373 = vunpack.c.0.s8 %v6372
    %v6374 = vperm.slane %v6315, %v6373
    %v6375 = vrot.slane %v6374, 4
    %v6376 = vsel %vm2832, 0.0, %v6375
    %v6379 = vunpack.c.l.s4 1934713408
    %v6380 = vunpack.c.0.s8 %v6379
    %v6381 = vperm.slane %v6316, %v6380
    %v6382 = vrot.slane %v6381, 4
    %v6383 = vsel %vm2832, 0.0, %v6382
    %v6386 = vunpack.c.l.s4 1934713408
    %v6387 = vunpack.c.0.s8 %v6386
    %v6388 = vperm.slane %v6317, %v6387
    %v6389 = vrot.slane %v6388, 4
    %v6390 = vsel %vm2832, 0.0, %v6389
    %v6393 = vunpack.c.l.s4 1934713408
    %v6394 = vunpack.c.0.s8 %v6393
    %v6395 = vperm.slane %v6318, %v6394
    %v6396 = vrot.slane %v6395, 4
    %v6397 = vsel %vm2832, 0.0, %v6396
    %v6400 = vunpack.c.l.s4 1934713408
    %v6401 = vunpack.c.0.s8 %v6400
    %v6402 = vperm.slane %v6319, %v6401
    %v6403 = vrot.slane %v6402, 4
    %v6404 = vsel %vm2832, 0.0, %v6403
    %v6407 = vunpack.c.l.s4 1934713408
    %v6408 = vunpack.c.0.s8 %v6407
    %v6409 = vperm.slane %v6320, %v6408
    %v6410 = vrot.slane %v6409, 4
    %v6411 = vsel %vm2832, 0.0, %v6410
    %v6414 = vunpack.c.l.s4 1934713408
    %v6415 = vunpack.c.0.s8 %v6414
    %v6416 = vperm.slane %v6321, %v6415
    %v6417 = vrot.slane %v6416, 4
    %v6418 = vsel %vm2832, 0.0, %v6417
    %v6421 = vunpack.c.l.s4 1934713408
    %v6422 = vunpack.c.0.s8 %v6421
    %v6423 = vperm.slane %v6322, %v6422
    %v6424 = vrot.slane %v6423, 4
    %v6425 = vsel %vm2832, 0.0, %v6424
    %v6428 = vunpack.c.l.s4 1934713408
    %v6429 = vunpack.c.0.s8 %v6428
    %v6430 = vperm.slane %v6323, %v6429
    %v6431 = vrot.slane %v6430, 4
    %v6432 = vsel %vm2832, 0.0, %v6431
    %v6435 = vunpack.c.l.s4 1934713408
    %v6436 = vunpack.c.0.s8 %v6435
    %v6437 = vperm.slane %v6324, %v6436
    %v6438 = vrot.slane %v6437, 4
    %v6439 = vsel %vm2832, 0.0, %v6438
    %v6442 = vunpack.c.l.s4 1934713408
    %v6443 = vunpack.c.0.s8 %v6442
    %v6444 = vperm.slane %v6325, %v6443
    %v6445 = vrot.slane %v6444, 4
    %v6446 = vsel %vm2832, 0.0, %v6445
    %v6449 = vunpack.c.l.s4 1934713408
    %v6450 = vunpack.c.0.s8 %v6449
    %v6451 = vperm.slane %v6326, %v6450
    %v6452 = vrot.slane %v6451, 4
    %v6453 = vsel %vm2832, 0.0, %v6452
    %v6456 = vunpack.c.l.s4 1934713408
    %v6457 = vunpack.c.0.s8 %v6456
    %v6458 = vperm.slane %v6327, %v6457
    %v6459 = vrot.slane %v6458, 4
    %v6460 = vsel %vm2832, 0.0, %v6459
    %v6463 = vunpack.c.l.s4 1934713408
    %v6464 = vunpack.c.0.s8 %v6463
    %v6465 = vperm.slane %v6328, %v6464
    %v6466 = vrot.slane %v6465, 4
    %v6467 = vsel %vm2832, 0.0, %v6466
    %v6470 = vunpack.c.l.s4 1934713408
    %v6471 = vunpack.c.0.s8 %v6470
    %v6472 = vperm.slane %v6329, %v6471
    %v6473 = vrot.slane %v6472, 4
    %v6474 = vsel %vm2832, 0.0, %v6473
    %v6477 = vunpack.c.l.s4 1934713408
    %v6478 = vunpack.c.0.s8 %v6477
    %v6479 = vperm.slane %v6330, %v6478
    %v6480 = vrot.slane %v6479, 4
    %v6481 = vsel %vm2832, 0.0, %v6480
    %v6484 = vunpack.c.l.s4 1934713408
    %v6485 = vunpack.c.0.s8 %v6484
    %v6486 = vperm.slane %v6331, %v6485
    %v6487 = vrot.slane %v6486, 4
    %v6488 = vsel %vm2832, 0.0, %v6487
    %v6491 = vunpack.c.l.s4 1934713408
    %v6492 = vunpack.c.0.s8 %v6491
    %v6493 = vperm.slane %v6332, %v6492
    %v6494 = vrot.slane %v6493, 4
    %v6495 = vsel %vm2832, 0.0, %v6494
    %v6498 = vunpack.c.l.s4 1934713408
    %v6499 = vunpack.c.0.s8 %v6498
    %v6500 = vperm.slane %v6333, %v6499
    %v6501 = vrot.slane %v6500, 4
    %v6502 = vsel %vm2832, 0.0, %v6501
    %v6505 = vunpack.c.l.s4 1934713408
    %v6506 = vunpack.c.0.s8 %v6505
    %v6507 = vperm.slane %v6334, %v6506
    %v6508 = vrot.slane %v6507, 4
    %v6509 = vsel %vm2832, 0.0, %v6508
    %v6511 = vperm.slane %v6341, 0
    %6512 = vrot.lane.b32.xlu0 %v6511, 32
    %v6513 = vpop.permute.xlu0 %6512
    %v6516 = vperm.slane %v6346, 0
    %6517 = vrot.lane.b32.xlu0 %v6516, 64
    %v6518 = vpop.permute.xlu0 %6517
    %v6521 = vperm.slane %v6348, 0
    %6522 = vrot.lane.b32.xlu0 %v6521, 96
    %v6523 = vpop.permute.xlu0 %6522
    %v6526 = vperm.slane %v6355, 0
    %6527 = vrot.lane.b32.xlu0 %v6526, 32
    %v6528 = vpop.permute.xlu0 %6527
    %v6531 = vperm.slane %v6360, 0
    %6532 = vrot.lane.b32.xlu0 %v6531, 64
    %v6533 = vpop.permute.xlu0 %6532
    %v6536 = vperm.slane %v6362, 0
    %6537 = vrot.lane.b32.xlu0 %v6536, 96
    %v6538 = vpop.permute.xlu0 %6537
    %v6541 = vperm.slane %v6369, 0
    %6542 = vrot.lane.b32.xlu0 %v6541, 32
    %v6543 = vpop.permute.xlu0 %6542
    %v6546 = vperm.slane %v6374, 0
    %6547 = vrot.lane.b32.xlu0 %v6546, 64
    %v6548 = vpop.permute.xlu0 %6547
    %v6551 = vperm.slane %v6376, 0
    %6552 = vrot.lane.b32.xlu0 %v6551, 96
    %v6553 = vpop.permute.xlu0 %6552
    %v6556 = vperm.slane %v6383, 0
    %6557 = vrot.lane.b32.xlu0 %v6556, 32
    %v6558 = vpop.permute.xlu0 %6557
    %v6561 = vperm.slane %v6388, 0
    %6562 = vrot.lane.b32.xlu0 %v6561, 64
    %v6563 = vpop.permute.xlu0 %6562
    %v6566 = vperm.slane %v6390, 0
    %6567 = vrot.lane.b32.xlu0 %v6566, 96
    %v6568 = vpop.permute.xlu0 %6567
    %v6571 = vperm.slane %v6397, 0
    %6572 = vrot.lane.b32.xlu0 %v6571, 32
    %v6573 = vpop.permute.xlu0 %6572
    %v6576 = vperm.slane %v6402, 0
    %6577 = vrot.lane.b32.xlu0 %v6576, 64
    %v6578 = vpop.permute.xlu0 %6577
    %v6581 = vperm.slane %v6404, 0
    %6582 = vrot.lane.b32.xlu0 %v6581, 96
    %v6583 = vpop.permute.xlu0 %6582
    %v6586 = vperm.slane %v6411, 0
    %6587 = vrot.lane.b32.xlu0 %v6586, 32
    %v6588 = vpop.permute.xlu0 %6587
    %v6591 = vperm.slane %v6416, 0
    %6592 = vrot.lane.b32.xlu0 %v6591, 64
    %v6593 = vpop.permute.xlu0 %6592
    %v6596 = vperm.slane %v6418, 0
    %6597 = vrot.lane.b32.xlu0 %v6596, 96
    %v6598 = vpop.permute.xlu0 %6597
    %v6601 = vperm.slane %v6425, 0
    %6602 = vrot.lane.b32.xlu0 %v6601, 32
    %v6603 = vpop.permute.xlu0 %6602
    %v6606 = vperm.slane %v6430, 0
    %6607 = vrot.lane.b32.xlu0 %v6606, 64
    %v6608 = vpop.permute.xlu0 %6607
    %v6611 = vperm.slane %v6432, 0
    %6612 = vrot.lane.b32.xlu0 %v6611, 96
    %v6613 = vpop.permute.xlu0 %6612
    %v6616 = vperm.slane %v6439, 0
    %6617 = vrot.lane.b32.xlu0 %v6616, 32
    %v6618 = vpop.permute.xlu0 %6617
    %v6621 = vperm.slane %v6444, 0
    %6622 = vrot.lane.b32.xlu0 %v6621, 64
    %v6623 = vpop.permute.xlu0 %6622
    %v6626 = vperm.slane %v6446, 0
    %6627 = vrot.lane.b32.xlu0 %v6626, 96
    %v6628 = vpop.permute.xlu0 %6627
    %v6631 = vperm.slane %v6453, 0
    %6632 = vrot.lane.b32.xlu0 %v6631, 32
    %v6633 = vpop.permute.xlu0 %6632
    %v6636 = vperm.slane %v6458, 0
    %6637 = vrot.lane.b32.xlu0 %v6636, 64
    %v6638 = vpop.permute.xlu0 %6637
    %v6641 = vperm.slane %v6460, 0
    %6642 = vrot.lane.b32.xlu0 %v6641, 96
    %v6643 = vpop.permute.xlu0 %6642
    %v6646 = vperm.slane %v6467, 0
    %6647 = vrot.lane.b32.xlu0 %v6646, 32
    %v6648 = vpop.permute.xlu0 %6647
    %v6651 = vperm.slane %v6472, 0
    %6652 = vrot.lane.b32.xlu0 %v6651, 64
    %v6653 = vpop.permute.xlu0 %6652
    %v6656 = vperm.slane %v6474, 0
    %6657 = vrot.lane.b32.xlu0 %v6656, 96
    %v6658 = vpop.permute.xlu0 %6657
    %v6661 = vperm.slane %v6481, 0
    %6662 = vrot.lane.b32.xlu0 %v6661, 32
    %v6663 = vpop.permute.xlu0 %6662
    %v6666 = vperm.slane %v6486, 0
    %6667 = vrot.lane.b32.xlu0 %v6666, 64
    %v6668 = vpop.permute.xlu0 %6667
    %v6671 = vperm.slane %v6488, 0
    %6672 = vrot.lane.b32.xlu0 %v6671, 96
    %v6673 = vpop.permute.xlu0 %6672
    %v6676 = vperm.slane %v6495, 0
    %6677 = vrot.lane.b32.xlu0 %v6676, 32
    %v6678 = vpop.permute.xlu0 %6677
    %v6681 = vperm.slane %v6500, 0
    %6682 = vrot.lane.b32.xlu0 %v6681, 64
    %v6683 = vpop.permute.xlu0 %6682
    %v6686 = vperm.slane %v6502, 0
    %6687 = vrot.lane.b32.xlu0 %v6686, 96
    %v6688 = vpop.permute.xlu0 %6687
    %v6691 = vperm.slane %v6509, 0
    %6692 = vrot.lane.b32.xlu0 %v6691, 32
    %v6693 = vpop.permute.xlu0 %6692
    %v6695 = vsel %vm3187, %v6339, %v6513
    %v6696 = vsel %vm3189, %v6695, %v6518
    %v6697 = vsel %vm3191, %v6696, %v6523
    %v6698 = vsel %vm3187, %v6353, %v6528
    %v6699 = vsel %vm3189, %v6698, %v6533
    %v6700 = vsel %vm3191, %v6699, %v6538
    %v6701 = vsel %vm3187, %v6367, %v6543
    %v6702 = vsel %vm3189, %v6701, %v6548
    %v6703 = vsel %vm3191, %v6702, %v6553
    %v6704 = vsel %vm3187, %v6381, %v6558
    %v6705 = vsel %vm3189, %v6704, %v6563
    %v6706 = vsel %vm3191, %v6705, %v6568
    %v6707 = vsel %vm3187, %v6395, %v6573
    %v6708 = vsel %vm3189, %v6707, %v6578
    %v6709 = vsel %vm3191, %v6708, %v6583
    %v6710 = vsel %vm3187, %v6409, %v6588
    %v6711 = vsel %vm3189, %v6710, %v6593
    %v6712 = vsel %vm3191, %v6711, %v6598
    %v6713 = vsel %vm3187, %v6423, %v6603
    %v6714 = vsel %vm3189, %v6713, %v6608
    %v6715 = vsel %vm3191, %v6714, %v6613
    %v6716 = vsel %vm3187, %v6437, %v6618
    %v6717 = vsel %vm3189, %v6716, %v6623
    %v6718 = vsel %vm3191, %v6717, %v6628
    %v6719 = vsel %vm3187, %v6451, %v6633
    %v6720 = vsel %vm3189, %v6719, %v6638
    %v6721 = vsel %vm3191, %v6720, %v6643
    %v6722 = vsel %vm3187, %v6465, %v6648
    %v6723 = vsel %vm3189, %v6722, %v6653
    %v6724 = vsel %vm3191, %v6723, %v6658
    %v6725 = vsel %vm3187, %v6479, %v6663
    %v6726 = vsel %vm3189, %v6725, %v6668
    %v6727 = vsel %vm3191, %v6726, %v6673
    %v6728 = vsel %vm3187, %v6493, %v6678
    %v6729 = vsel %vm3189, %v6728, %v6683
    %v6730 = vsel %vm3191, %v6729, %v6688
    %v6731 = vsel %vm3187, %v6507, %v6693
    %v6733 = vsel %vm3189, %v6731, 0
    %6735 = vmatpush.msra.mxu0 %v2415
    %6736 = vmatpush.msra.mxu0 %v2414
    %6737 = vmatpush.msra.mxu0 %v2413
    %6738 = vmatpush.msra.mxu0 %v2412
    %6739 = vmatpush.msra.mxu0 %v2411
    %6740 = vmatpush.msra.mxu0 %v2410
    %6741 = vmatpush.msra.mxu0 %v2409
    %6742 = vmatpush.msra.mxu0 %v2408
    %6743 = vmatpush.msra.mxu0 %v2407
    %6744 = vmatpush.msra.mxu0 %v2406
    %6745 = vmatpush.msra.mxu0 %v2405
    %6746 = vmatpush.msra.mxu0 %v2404
    %6747 = vmatpush.msra.mxu0 %v2403
    %6748 = vmatpush.msra.mxu0 %v2402
    %6749 = vmatpush.msra.mxu0 %v2401
    %6750 = vmatpush.msra.mxu0 %v2400
    %6751 = vmatmul.f32.gmra.mxu0 %v6697
    %v6752 = vpop.f32.mrf.mxu0
    %v6753 = vadd.f32 %v2600, %v6752
    %6754 = vdwg.mxu0
    %6755 = vmatpush.msra.mxu0 %v2431
    %6756 = vmatpush.msra.mxu0 %v2430
    %6757 = vmatpush.msra.mxu0 %v2429
    %6758 = vmatpush.msra.mxu0 %v2428
    %6759 = vmatpush.msra.mxu0 %v2427
    %6760 = vmatpush.msra.mxu0 %v2426
    %6761 = vmatpush.msra.mxu0 %v2425
    %6762 = vmatpush.msra.mxu0 %v2424
    %6763 = vmatpush.msra.mxu0 %v2423
    %6764 = vmatpush.msra.mxu0 %v2422
    %6765 = vmatpush.msra.mxu0 %v2421
    %6766 = vmatpush.msra.mxu0 %v2420
    %6767 = vmatpush.msra.mxu0 %v2419
    %6768 = vmatpush.msra.mxu0 %v2418
    %6769 = vmatpush.msra.mxu0 %v2417
    %6770 = vmatpush.msra.mxu0 %v2416
    %6771 = vmatmul.f32.gmra.mxu0 %v6700
    %v6772 = vpop.f32.mrf.mxu0
    %v6773 = vadd.f32 %v6753, %v6772
    %6774 = vdwg.mxu0
    %6775 = vmatpush.msra.mxu0 %v2447
    %6776 = vmatpush.msra.mxu0 %v2446
    %6777 = vmatpush.msra.mxu0 %v2445
    %6778 = vmatpush.msra.mxu0 %v2444
    %6779 = vmatpush.msra.mxu0 %v2443
    %6780 = vmatpush.msra.mxu0 %v2442
    %6781 = vmatpush.msra.mxu0 %v2441
    %6782 = vmatpush.msra.mxu0 %v2440
    %6783 = vmatpush.msra.mxu0 %v2439
    %6784 = vmatpush.msra.mxu0 %v2438
    %6785 = vmatpush.msra.mxu0 %v2437
    %6786 = vmatpush.msra.mxu0 %v2436
    %6787 = vmatpush.msra.mxu0 %v2435
    %6788 = vmatpush.msra.mxu0 %v2434
    %6789 = vmatpush.msra.mxu0 %v2433
    %6790 = vmatpush.msra.mxu0 %v2432
    %6791 = vmatmul.f32.gmra.mxu0 %v6703
    %v6792 = vpop.f32.mrf.mxu0
    %v6793 = vadd.f32 %v6773, %v6792
    %6794 = vdwg.mxu0
    %6795 = vmatpush.msra.mxu0 %v2463
    %6796 = vmatpush.msra.mxu0 %v2462
    %6797 = vmatpush.msra.mxu0 %v2461
    %6798 = vmatpush.msra.mxu0 %v2460
    %6799 = vmatpush.msra.mxu0 %v2459
    %6800 = vmatpush.msra.mxu0 %v2458
    %6801 = vmatpush.msra.mxu0 %v2457
    %6802 = vmatpush.msra.mxu0 %v2456
    %6803 = vmatpush.msra.mxu0 %v2455
    %6804 = vmatpush.msra.mxu0 %v2454
    %6805 = vmatpush.msra.mxu0 %v2453
    %6806 = vmatpush.msra.mxu0 %v2452
    %6807 = vmatpush.msra.mxu0 %v2451
    %6808 = vmatpush.msra.mxu0 %v2450
    %6809 = vmatpush.msra.mxu0 %v2449
    %6810 = vmatpush.msra.mxu0 %v2448
    %6811 = vmatmul.f32.gmra.mxu0 %v6706
    %v6812 = vpop.f32.mrf.mxu0
    %v6813 = vadd.f32 %v6793, %v6812
    %6814 = vdwg.mxu0
    %6815 = vmatpush.msra.mxu0 %v2479
    %6816 = vmatpush.msra.mxu0 %v2478
    %6817 = vmatpush.msra.mxu0 %v2477
    %6818 = vmatpush.msra.mxu0 %v2476
    %6819 = vmatpush.msra.mxu0 %v2475
    %6820 = vmatpush.msra.mxu0 %v2474
    %6821 = vmatpush.msra.mxu0 %v2473
    %6822 = vmatpush.msra.mxu0 %v2472
    %6823 = vmatpush.msra.mxu0 %v2471
    %6824 = vmatpush.msra.mxu0 %v2470
    %6825 = vmatpush.msra.mxu0 %v2469
    %6826 = vmatpush.msra.mxu0 %v2468
    %6827 = vmatpush.msra.mxu0 %v2467
    %6828 = vmatpush.msra.mxu0 %v2466
    %6829 = vmatpush.msra.mxu0 %v2465
    %6830 = vmatpush.msra.mxu0 %v2464
    %6831 = vmatmul.f32.gmra.mxu0 %v6709
    %v6832 = vpop.f32.mrf.mxu0
    %v6833 = vadd.f32 %v6813, %v6832
    %6834 = vdwg.mxu0
    %6835 = vmatpush.msra.mxu0 %v2495
    %6836 = vmatpush.msra.mxu0 %v2494
    %6837 = vmatpush.msra.mxu0 %v2493
    %6838 = vmatpush.msra.mxu0 %v2492
    %6839 = vmatpush.msra.mxu0 %v2491
    %6840 = vmatpush.msra.mxu0 %v2490
    %6841 = vmatpush.msra.mxu0 %v2489
    %6842 = vmatpush.msra.mxu0 %v2488
    %6843 = vmatpush.msra.mxu0 %v2487
    %6844 = vmatpush.msra.mxu0 %v2486
    %6845 = vmatpush.msra.mxu0 %v2485
    %6846 = vmatpush.msra.mxu0 %v2484
    %6847 = vmatpush.msra.mxu0 %v2483
    %6848 = vmatpush.msra.mxu0 %v2482
    %6849 = vmatpush.msra.mxu0 %v2481
    %6850 = vmatpush.msra.mxu0 %v2480
    %6851 = vmatmul.f32.gmra.mxu0 %v6712
    %v6852 = vpop.f32.mrf.mxu0
    %v6853 = vadd.f32 %v6833, %v6852
    %6854 = vdwg.mxu0
    %6855 = vmatpush.msra.mxu0 %v2511
    %6856 = vmatpush.msra.mxu0 %v2510
    %6857 = vmatpush.msra.mxu0 %v2509
    %6858 = vmatpush.msra.mxu0 %v2508
    %6859 = vmatpush.msra.mxu0 %v2507
    %6860 = vmatpush.msra.mxu0 %v2506
    %6861 = vmatpush.msra.mxu0 %v2505
    %6862 = vmatpush.msra.mxu0 %v2504
    %6863 = vmatpush.msra.mxu0 %v2503
    %6864 = vmatpush.msra.mxu0 %v2502
    %6865 = vmatpush.msra.mxu0 %v2501
    %6866 = vmatpush.msra.mxu0 %v2500
    %6867 = vmatpush.msra.mxu0 %v2499
    %6868 = vmatpush.msra.mxu0 %v2498
    %6869 = vmatpush.msra.mxu0 %v2497
    %6870 = vmatpush.msra.mxu0 %v2496
    %6871 = vmatmul.f32.gmra.mxu0 %v6715
    %v6872 = vpop.f32.mrf.mxu0
    %v6873 = vadd.f32 %v6853, %v6872
    %6874 = vdwg.mxu0
    %6875 = vmatpush.msra.mxu0 %v2527
    %6876 = vmatpush.msra.mxu0 %v2526
    %6877 = vmatpush.msra.mxu0 %v2525
    %6878 = vmatpush.msra.mxu0 %v2524
    %6879 = vmatpush.msra.mxu0 %v2523
    %6880 = vmatpush.msra.mxu0 %v2522
    %6881 = vmatpush.msra.mxu0 %v2521
    %6882 = vmatpush.msra.mxu0 %v2520
    %6883 = vmatpush.msra.mxu0 %v2519
    %6884 = vmatpush.msra.mxu0 %v2518
    %6885 = vmatpush.msra.mxu0 %v2517
    %6886 = vmatpush.msra.mxu0 %v2516
    %6887 = vmatpush.msra.mxu0 %v2515
    %6888 = vmatpush.msra.mxu0 %v2514
    %6889 = vmatpush.msra.mxu0 %v2513
    %6890 = vmatpush.msra.mxu0 %v2512
    %6891 = vmatmul.f32.gmra.mxu0 %v6718
    %v6892 = vpop.f32.mrf.mxu0
    %v6893 = vadd.f32 %v6873, %v6892
    %6894 = vdwg.mxu0
    %6895 = vmatpush.msra.mxu0 %v2543
    %6896 = vmatpush.msra.mxu0 %v2542
    %6897 = vmatpush.msra.mxu0 %v2541
    %6898 = vmatpush.msra.mxu0 %v2540
    %6899 = vmatpush.msra.mxu0 %v2539
    %6900 = vmatpush.msra.mxu0 %v2538
    %6901 = vmatpush.msra.mxu0 %v2537
    %6902 = vmatpush.msra.mxu0 %v2536
    %6903 = vmatpush.msra.mxu0 %v2535
    %6904 = vmatpush.msra.mxu0 %v2534
    %6905 = vmatpush.msra.mxu0 %v2533
    %6906 = vmatpush.msra.mxu0 %v2532
    %6907 = vmatpush.msra.mxu0 %v2531
    %6908 = vmatpush.msra.mxu0 %v2530
    %6909 = vmatpush.msra.mxu0 %v2529
    %6910 = vmatpush.msra.mxu0 %v2528
    %6911 = vmatmul.f32.gmra.mxu0 %v6721
    %v6912 = vpop.f32.mrf.mxu0
    %v6913 = vadd.f32 %v6893, %v6912
    %6914 = vdwg.mxu0
    %6915 = vmatpush.msra.mxu0 %v2559
    %6916 = vmatpush.msra.mxu0 %v2558
    %6917 = vmatpush.msra.mxu0 %v2557
    %6918 = vmatpush.msra.mxu0 %v2556
    %6919 = vmatpush.msra.mxu0 %v2555
    %6920 = vmatpush.msra.mxu0 %v2554
    %6921 = vmatpush.msra.mxu0 %v2553
    %6922 = vmatpush.msra.mxu0 %v2552
    %6923 = vmatpush.msra.mxu0 %v2551
    %6924 = vmatpush.msra.mxu0 %v2550
    %6925 = vmatpush.msra.mxu0 %v2549
    %6926 = vmatpush.msra.mxu0 %v2548
    %6927 = vmatpush.msra.mxu0 %v2547
    %6928 = vmatpush.msra.mxu0 %v2546
    %6929 = vmatpush.msra.mxu0 %v2545
    %6930 = vmatpush.msra.mxu0 %v2544
    %6931 = vmatmul.f32.gmra.mxu0 %v6724
    %v6932 = vpop.f32.mrf.mxu0
    %v6933 = vadd.f32 %v6913, %v6932
    %6934 = vdwg.mxu0
    %6935 = vmatpush.msra.mxu0 %v2575
    %6936 = vmatpush.msra.mxu0 %v2574
    %6937 = vmatpush.msra.mxu0 %v2573
    %6938 = vmatpush.msra.mxu0 %v2572
    %6939 = vmatpush.msra.mxu0 %v2571
    %6940 = vmatpush.msra.mxu0 %v2570
    %6941 = vmatpush.msra.mxu0 %v2569
    %6942 = vmatpush.msra.mxu0 %v2568
    %6943 = vmatpush.msra.mxu0 %v2567
    %6944 = vmatpush.msra.mxu0 %v2566
    %6945 = vmatpush.msra.mxu0 %v2565
    %6946 = vmatpush.msra.mxu0 %v2564
    %6947 = vmatpush.msra.mxu0 %v2563
    %6948 = vmatpush.msra.mxu0 %v2562
    %6949 = vmatpush.msra.mxu0 %v2561
    %6950 = vmatpush.msra.mxu0 %v2560
    %6951 = vmatmul.f32.gmra.mxu0 %v6727
    %v6952 = vpop.f32.mrf.mxu0
    %v6953 = vadd.f32 %v6933, %v6952
    %6954 = vdwg.mxu0
    %6955 = vmatpush.msra.mxu0 %v2591
    %6956 = vmatpush.msra.mxu0 %v2590
    %6957 = vmatpush.msra.mxu0 %v2589
    %6958 = vmatpush.msra.mxu0 %v2588
    %6959 = vmatpush.msra.mxu0 %v2587
    %6960 = vmatpush.msra.mxu0 %v2586
    %6961 = vmatpush.msra.mxu0 %v2585
    %6962 = vmatpush.msra.mxu0 %v2584
    %6963 = vmatpush.msra.mxu0 %v2583
    %6964 = vmatpush.msra.mxu0 %v2582
    %6965 = vmatpush.msra.mxu0 %v2581
    %6966 = vmatpush.msra.mxu0 %v2580
    %6967 = vmatpush.msra.mxu0 %v2579
    %6968 = vmatpush.msra.mxu0 %v2578
    %6969 = vmatpush.msra.mxu0 %v2577
    %6970 = vmatpush.msra.mxu0 %v2576
    %6971 = vmatmul.f32.gmra.mxu0 %v6730
    %v6972 = vpop.f32.mrf.mxu0
    %v6973 = vadd.f32 %v6953, %v6972
    %6974 = vdwg.mxu0
    %6975 = vmatpush.msra.mxu0 0.0
    %6976 = vmatpush.msra.mxu0 0.0
    %6977 = vmatpush.msra.mxu0 0.0
    %6978 = vmatpush.msra.mxu0 0.0
    %6979 = vmatpush.msra.mxu0 0.0
    %6980 = vmatpush.msra.mxu0 0.0
    %6981 = vmatpush.msra.mxu0 0.0
    %6982 = vmatpush.msra.mxu0 0.0
    %6983 = vmatpush.msra.mxu0 %v2599
    %6984 = vmatpush.msra.mxu0 %v2598
    %6985 = vmatpush.msra.mxu0 %v2597
    %6986 = vmatpush.msra.mxu0 %v2596
    %6987 = vmatpush.msra.mxu0 %v2595
    %6988 = vmatpush.msra.mxu0 %v2594
    %6989 = vmatpush.msra.mxu0 %v2593
    %6990 = vmatpush.msra.mxu0 %v2592
    %6991 = vmatmul.f32.gmra.mxu0 %v6733
    %v6992 = vpop.f32.mrf.mxu0
    %v6993 = vadd.f32 %v6973, %v6992
    %6994 = vdwg.mxu0
    %v6995 = vmax.f32 %v6993, 0.0
    %v6996 = vrot.slane %v4203, 2
    %v6997 = vrot.slane %v4205, 2
    %v6998 = vrot.slane %v4207, 2
    %v6999 = vrot.slane %v4209, 2
    %v7000 = vrot.slane %v4211, 2
    %v7001 = vrot.slane %v4213, 2
    %v7002 = vrot.slane %v4215, 2
    %v7003 = vrot.slane %v4217, 2
    %v7004 = vrot.slane %v4219, 2
    %v7005 = vrot.slane %v4221, 2
    %v7006 = vrot.slane %v4223, 2
    %v7007 = vrot.slane %v4225, 2
    %v7008 = vrot.slane %v4227, 2
    %v7009 = vrot.slane %v4229, 2
    %v7010 = vrot.slane %v4231, 2
    %v7011 = vrot.slane %v4233, 2
    %v7012 = vrot.slane %v4235, 2
    %v7013 = vrot.slane %v4237, 2
    %v7014 = vrot.slane %v4239, 2
    %v7015 = vrot.slane %v4241, 2
    %v7016 = vrot.slane %v4243, 2
    %v7017 = vrot.slane %v4245, 2
    %v7018 = vrot.slane %v4247, 2
    %v7019 = vrot.slane %v4249, 2
    %v7020 = vrot.slane %v4251, 2
    %v7023 = vunpack.c.l.s4 1934713408
    %v7024 = vunpack.c.0.s8 %v7023
    %v7025 = vperm.slane %v6996, %v7024
    %v7026 = vrot.slane %v7025, 4
    %v7027 = vsel %vm2832, 0.0, %v7026
    %v7030 = vunpack.c.l.s4 1934713408
    %v7031 = vunpack.c.0.s8 %v7030
    %v7032 = vperm.slane %v6997, %v7031
    %v7033 = vrot.slane %v7032, 4
    %v7034 = vsel %vm2832, 0.0, %v7033
    %v7037 = vunpack.c.l.s4 1934713408
    %v7038 = vunpack.c.0.s8 %v7037
    %v7039 = vperm.slane %v6998, %v7038
    %v7040 = vrot.slane %v7039, 4
    %v7041 = vsel %vm2832, 0.0, %v7040
    %v7044 = vunpack.c.l.s4 1934713408
    %v7045 = vunpack.c.0.s8 %v7044
    %v7046 = vperm.slane %v6999, %v7045
    %v7047 = vrot.slane %v7046, 4
    %v7048 = vsel %vm2832, 0.0, %v7047
    %v7051 = vunpack.c.l.s4 1934713408
    %v7052 = vunpack.c.0.s8 %v7051
    %v7053 = vperm.slane %v7000, %v7052
    %v7054 = vrot.slane %v7053, 4
    %v7055 = vsel %vm2832, 0.0, %v7054
    %v7058 = vunpack.c.l.s4 1934713408
    %v7059 = vunpack.c.0.s8 %v7058
    %v7060 = vperm.slane %v7001, %v7059
    %v7061 = vrot.slane %v7060, 4
    %v7062 = vsel %vm2832, 0.0, %v7061
    %v7065 = vunpack.c.l.s4 1934713408
    %v7066 = vunpack.c.0.s8 %v7065
    %v7067 = vperm.slane %v7002, %v7066
    %v7068 = vrot.slane %v7067, 4
    %v7069 = vsel %vm2832, 0.0, %v7068
    %v7072 = vunpack.c.l.s4 1934713408
    %v7073 = vunpack.c.0.s8 %v7072
    %v7074 = vperm.slane %v7003, %v7073
    %v7075 = vrot.slane %v7074, 4
    %v7076 = vsel %vm2832, 0.0, %v7075
    %v7079 = vunpack.c.l.s4 1934713408
    %v7080 = vunpack.c.0.s8 %v7079
    %v7081 = vperm.slane %v7004, %v7080
    %v7082 = vrot.slane %v7081, 4
    %v7083 = vsel %vm2832, 0.0, %v7082
    %v7086 = vunpack.c.l.s4 1934713408
    %v7087 = vunpack.c.0.s8 %v7086
    %v7088 = vperm.slane %v7005, %v7087
    %v7089 = vrot.slane %v7088, 4
    %v7090 = vsel %vm2832, 0.0, %v7089
    %v7093 = vunpack.c.l.s4 1934713408
    %v7094 = vunpack.c.0.s8 %v7093
    %v7095 = vperm.slane %v7006, %v7094
    %v7096 = vrot.slane %v7095, 4
    %v7097 = vsel %vm2832, 0.0, %v7096
    %v7100 = vunpack.c.l.s4 1934713408
    %v7101 = vunpack.c.0.s8 %v7100
    %v7102 = vperm.slane %v7007, %v7101
    %v7103 = vrot.slane %v7102, 4
    %v7104 = vsel %vm2832, 0.0, %v7103
    %v7107 = vunpack.c.l.s4 1934713408
    %v7108 = vunpack.c.0.s8 %v7107
    %v7109 = vperm.slane %v7008, %v7108
    %v7110 = vrot.slane %v7109, 4
    %v7111 = vsel %vm2832, 0.0, %v7110
    %v7114 = vunpack.c.l.s4 1934713408
    %v7115 = vunpack.c.0.s8 %v7114
    %v7116 = vperm.slane %v7009, %v7115
    %v7117 = vrot.slane %v7116, 4
    %v7118 = vsel %vm2832, 0.0, %v7117
    %v7121 = vunpack.c.l.s4 1934713408
    %v7122 = vunpack.c.0.s8 %v7121
    %v7123 = vperm.slane %v7010, %v7122
    %v7124 = vrot.slane %v7123, 4
    %v7125 = vsel %vm2832, 0.0, %v7124
    %v7128 = vunpack.c.l.s4 1934713408
    %v7129 = vunpack.c.0.s8 %v7128
    %v7130 = vperm.slane %v7011, %v7129
    %v7131 = vrot.slane %v7130, 4
    %v7132 = vsel %vm2832, 0.0, %v7131
    %v7135 = vunpack.c.l.s4 1934713408
    %v7136 = vunpack.c.0.s8 %v7135
    %v7137 = vperm.slane %v7012, %v7136
    %v7138 = vrot.slane %v7137, 4
    %v7139 = vsel %vm2832, 0.0, %v7138
    %v7142 = vunpack.c.l.s4 1934713408
    %v7143 = vunpack.c.0.s8 %v7142
    %v7144 = vperm.slane %v7013, %v7143
    %v7145 = vrot.slane %v7144, 4
    %v7146 = vsel %vm2832, 0.0, %v7145
    %v7149 = vunpack.c.l.s4 1934713408
    %v7150 = vunpack.c.0.s8 %v7149
    %v7151 = vperm.slane %v7014, %v7150
    %v7152 = vrot.slane %v7151, 4
    %v7153 = vsel %vm2832, 0.0, %v7152
    %v7156 = vunpack.c.l.s4 1934713408
    %v7157 = vunpack.c.0.s8 %v7156
    %v7158 = vperm.slane %v7015, %v7157
    %v7159 = vrot.slane %v7158, 4
    %v7160 = vsel %vm2832, 0.0, %v7159
    %v7163 = vunpack.c.l.s4 1934713408
    %v7164 = vunpack.c.0.s8 %v7163
    %v7165 = vperm.slane %v7016, %v7164
    %v7166 = vrot.slane %v7165, 4
    %v7167 = vsel %vm2832, 0.0, %v7166
    %v7170 = vunpack.c.l.s4 1934713408
    %v7171 = vunpack.c.0.s8 %v7170
    %v7172 = vperm.slane %v7017, %v7171
    %v7173 = vrot.slane %v7172, 4
    %v7174 = vsel %vm2832, 0.0, %v7173
    %v7177 = vunpack.c.l.s4 1934713408
    %v7178 = vunpack.c.0.s8 %v7177
    %v7179 = vperm.slane %v7018, %v7178
    %v7180 = vrot.slane %v7179, 4
    %v7181 = vsel %vm2832, 0.0, %v7180
    %v7184 = vunpack.c.l.s4 1934713408
    %v7185 = vunpack.c.0.s8 %v7184
    %v7186 = vperm.slane %v7019, %v7185
    %v7187 = vrot.slane %v7186, 4
    %v7188 = vsel %vm2832, 0.0, %v7187
    %v7191 = vunpack.c.l.s4 1934713408
    %v7192 = vunpack.c.0.s8 %v7191
    %v7193 = vperm.slane %v7020, %v7192
    %v7194 = vrot.slane %v7193, 4
    %v7195 = vsel %vm2832, 0.0, %v7194
    %v7197 = vperm.slane %v7027, 0
    %7198 = vrot.lane.b32.xlu0 %v7197, 32
    %v7199 = vpop.permute.xlu0 %7198
    %v7202 = vperm.slane %v7032, 0
    %7203 = vrot.lane.b32.xlu0 %v7202, 64
    %v7204 = vpop.permute.xlu0 %7203
    %v7207 = vperm.slane %v7034, 0
    %7208 = vrot.lane.b32.xlu0 %v7207, 96
    %v7209 = vpop.permute.xlu0 %7208
    %v7212 = vperm.slane %v7041, 0
    %7213 = vrot.lane.b32.xlu0 %v7212, 32
    %v7214 = vpop.permute.xlu0 %7213
    %v7217 = vperm.slane %v7046, 0
    %7218 = vrot.lane.b32.xlu0 %v7217, 64
    %v7219 = vpop.permute.xlu0 %7218
    %v7222 = vperm.slane %v7048, 0
    %7223 = vrot.lane.b32.xlu0 %v7222, 96
    %v7224 = vpop.permute.xlu0 %7223
    %v7227 = vperm.slane %v7055, 0
    %7228 = vrot.lane.b32.xlu0 %v7227, 32
    %v7229 = vpop.permute.xlu0 %7228
    %v7232 = vperm.slane %v7060, 0
    %7233 = vrot.lane.b32.xlu0 %v7232, 64
    %v7234 = vpop.permute.xlu0 %7233
    %v7237 = vperm.slane %v7062, 0
    %7238 = vrot.lane.b32.xlu0 %v7237, 96
    %v7239 = vpop.permute.xlu0 %7238
    %v7242 = vperm.slane %v7069, 0
    %7243 = vrot.lane.b32.xlu0 %v7242, 32
    %v7244 = vpop.permute.xlu0 %7243
    %v7247 = vperm.slane %v7074, 0
    %7248 = vrot.lane.b32.xlu0 %v7247, 64
    %v7249 = vpop.permute.xlu0 %7248
    %v7252 = vperm.slane %v7076, 0
    %7253 = vrot.lane.b32.xlu0 %v7252, 96
    %v7254 = vpop.permute.xlu0 %7253
    %v7257 = vperm.slane %v7083, 0
    %7258 = vrot.lane.b32.xlu0 %v7257, 32
    %v7259 = vpop.permute.xlu0 %7258
    %v7262 = vperm.slane %v7088, 0
    %7263 = vrot.lane.b32.xlu0 %v7262, 64
    %v7264 = vpop.permute.xlu0 %7263
    %v7267 = vperm.slane %v7090, 0
    %7268 = vrot.lane.b32.xlu0 %v7267, 96
    %v7269 = vpop.permute.xlu0 %7268
    %v7272 = vperm.slane %v7097, 0
    %7273 = vrot.lane.b32.xlu0 %v7272, 32
    %v7274 = vpop.permute.xlu0 %7273
    %v7277 = vperm.slane %v7102, 0
    %7278 = vrot.lane.b32.xlu0 %v7277, 64
    %v7279 = vpop.permute.xlu0 %7278
    %v7282 = vperm.slane %v7104, 0
    %7283 = vrot.lane.b32.xlu0 %v7282, 96
    %v7284 = vpop.permute.xlu0 %7283
    %v7287 = vperm.slane %v7111, 0
    %7288 = vrot.lane.b32.xlu0 %v7287, 32
    %v7289 = vpop.permute.xlu0 %7288
    %v7292 = vperm.slane %v7116, 0
    %7293 = vrot.lane.b32.xlu0 %v7292, 64
    %v7294 = vpop.permute.xlu0 %7293
    %v7297 = vperm.slane %v7118, 0
    %7298 = vrot.lane.b32.xlu0 %v7297, 96
    %v7299 = vpop.permute.xlu0 %7298
    %v7302 = vperm.slane %v7125, 0
    %7303 = vrot.lane.b32.xlu0 %v7302, 32
    %v7304 = vpop.permute.xlu0 %7303
    %v7307 = vperm.slane %v7130, 0
    %7308 = vrot.lane.b32.xlu0 %v7307, 64
    %v7309 = vpop.permute.xlu0 %7308
    %v7312 = vperm.slane %v7132, 0
    %7313 = vrot.lane.b32.xlu0 %v7312, 96
    %v7314 = vpop.permute.xlu0 %7313
    %v7317 = vperm.slane %v7139, 0
    %7318 = vrot.lane.b32.xlu0 %v7317, 32
    %v7319 = vpop.permute.xlu0 %7318
    %v7322 = vperm.slane %v7144, 0
    %7323 = vrot.lane.b32.xlu0 %v7322, 64
    %v7324 = vpop.permute.xlu0 %7323
    %v7327 = vperm.slane %v7146, 0
    %7328 = vrot.lane.b32.xlu0 %v7327, 96
    %v7329 = vpop.permute.xlu0 %7328
    %v7332 = vperm.slane %v7153, 0
    %7333 = vrot.lane.b32.xlu0 %v7332, 32
    %v7334 = vpop.permute.xlu0 %7333
    %v7337 = vperm.slane %v7158, 0
    %7338 = vrot.lane.b32.xlu0 %v7337, 64
    %v7339 = vpop.permute.xlu0 %7338
    %v7342 = vperm.slane %v7160, 0
    %7343 = vrot.lane.b32.xlu0 %v7342, 96
    %v7344 = vpop.permute.xlu0 %7343
    %v7347 = vperm.slane %v7167, 0
    %7348 = vrot.lane.b32.xlu0 %v7347, 32
    %v7349 = vpop.permute.xlu0 %7348
    %v7352 = vperm.slane %v7172, 0
    %7353 = vrot.lane.b32.xlu0 %v7352, 64
    %v7354 = vpop.permute.xlu0 %7353
    %v7357 = vperm.slane %v7174, 0
    %7358 = vrot.lane.b32.xlu0 %v7357, 96
    %v7359 = vpop.permute.xlu0 %7358
    %v7362 = vperm.slane %v7181, 0
    %7363 = vrot.lane.b32.xlu0 %v7362, 32
    %v7364 = vpop.permute.xlu0 %7363
    %v7367 = vperm.slane %v7186, 0
    %7368 = vrot.lane.b32.xlu0 %v7367, 64
    %v7369 = vpop.permute.xlu0 %7368
    %v7372 = vperm.slane %v7188, 0
    %7373 = vrot.lane.b32.xlu0 %v7372, 96
    %v7374 = vpop.permute.xlu0 %7373
    %v7377 = vperm.slane %v7195, 0
    %7378 = vrot.lane.b32.xlu0 %v7377, 32
    %v7379 = vpop.permute.xlu0 %7378
    %v7381 = vsel %vm3187, %v7025, %v7199
    %v7382 = vsel %vm3189, %v7381, %v7204
    %v7383 = vsel %vm3191, %v7382, %v7209
    %v7384 = vsel %vm3187, %v7039, %v7214
    %v7385 = vsel %vm3189, %v7384, %v7219
    %v7386 = vsel %vm3191, %v7385, %v7224
    %v7387 = vsel %vm3187, %v7053, %v7229
    %v7388 = vsel %vm3189, %v7387, %v7234
    %v7389 = vsel %vm3191, %v7388, %v7239
    %v7390 = vsel %vm3187, %v7067, %v7244
    %v7391 = vsel %vm3189, %v7390, %v7249
    %v7392 = vsel %vm3191, %v7391, %v7254
    %v7393 = vsel %vm3187, %v7081, %v7259
    %v7394 = vsel %vm3189, %v7393, %v7264
    %v7395 = vsel %vm3191, %v7394, %v7269
    %v7396 = vsel %vm3187, %v7095, %v7274
    %v7397 = vsel %vm3189, %v7396, %v7279
    %v7398 = vsel %vm3191, %v7397, %v7284
    %v7399 = vsel %vm3187, %v7109, %v7289
    %v7400 = vsel %vm3189, %v7399, %v7294
    %v7401 = vsel %vm3191, %v7400, %v7299
    %v7402 = vsel %vm3187, %v7123, %v7304
    %v7403 = vsel %vm3189, %v7402, %v7309
    %v7404 = vsel %vm3191, %v7403, %v7314
    %v7405 = vsel %vm3187, %v7137, %v7319
    %v7406 = vsel %vm3189, %v7405, %v7324
    %v7407 = vsel %vm3191, %v7406, %v7329
    %v7408 = vsel %vm3187, %v7151, %v7334
    %v7409 = vsel %vm3189, %v7408, %v7339
    %v7410 = vsel %vm3191, %v7409, %v7344
    %v7411 = vsel %vm3187, %v7165, %v7349
    %v7412 = vsel %vm3189, %v7411, %v7354
    %v7413 = vsel %vm3191, %v7412, %v7359
    %v7414 = vsel %vm3187, %v7179, %v7364
    %v7415 = vsel %vm3189, %v7414, %v7369
    %v7416 = vsel %vm3191, %v7415, %v7374
    %v7417 = vsel %vm3187, %v7193, %v7379
    %v7419 = vsel %vm3189, %v7417, 0
    %7421 = vmatpush.msra.mxu0 %v2415
    %7422 = vmatpush.msra.mxu0 %v2414
    %7423 = vmatpush.msra.mxu0 %v2413
    %7424 = vmatpush.msra.mxu0 %v2412
    %7425 = vmatpush.msra.mxu0 %v2411
    %7426 = vmatpush.msra.mxu0 %v2410
    %7427 = vmatpush.msra.mxu0 %v2409
    %7428 = vmatpush.msra.mxu0 %v2408
    %7429 = vmatpush.msra.mxu0 %v2407
    %7430 = vmatpush.msra.mxu0 %v2406
    %7431 = vmatpush.msra.mxu0 %v2405
    %7432 = vmatpush.msra.mxu0 %v2404
    %7433 = vmatpush.msra.mxu0 %v2403
    %7434 = vmatpush.msra.mxu0 %v2402
    %7435 = vmatpush.msra.mxu0 %v2401
    %7436 = vmatpush.msra.mxu0 %v2400
    %7437 = vmatmul.f32.gmra.mxu0 %v7383
    %v7438 = vpop.f32.mrf.mxu0
    %v7439 = vadd.f32 %v2600, %v7438
    %7440 = vdwg.mxu0
    %7441 = vmatpush.msra.mxu0 %v2431
    %7442 = vmatpush.msra.mxu0 %v2430
    %7443 = vmatpush.msra.mxu0 %v2429
    %7444 = vmatpush.msra.mxu0 %v2428
    %7445 = vmatpush.msra.mxu0 %v2427
    %7446 = vmatpush.msra.mxu0 %v2426
    %7447 = vmatpush.msra.mxu0 %v2425
    %7448 = vmatpush.msra.mxu0 %v2424
    %7449 = vmatpush.msra.mxu0 %v2423
    %7450 = vmatpush.msra.mxu0 %v2422
    %7451 = vmatpush.msra.mxu0 %v2421
    %7452 = vmatpush.msra.mxu0 %v2420
    %7453 = vmatpush.msra.mxu0 %v2419
    %7454 = vmatpush.msra.mxu0 %v2418
    %7455 = vmatpush.msra.mxu0 %v2417
    %7456 = vmatpush.msra.mxu0 %v2416
    %7457 = vmatmul.f32.gmra.mxu0 %v7386
    %v7458 = vpop.f32.mrf.mxu0
    %v7459 = vadd.f32 %v7439, %v7458
    %7460 = vdwg.mxu0
    %7461 = vmatpush.msra.mxu0 %v2447
    %7462 = vmatpush.msra.mxu0 %v2446
    %7463 = vmatpush.msra.mxu0 %v2445
    %7464 = vmatpush.msra.mxu0 %v2444
    %7465 = vmatpush.msra.mxu0 %v2443
    %7466 = vmatpush.msra.mxu0 %v2442
    %7467 = vmatpush.msra.mxu0 %v2441
    %7468 = vmatpush.msra.mxu0 %v2440
    %7469 = vmatpush.msra.mxu0 %v2439
    %7470 = vmatpush.msra.mxu0 %v2438
    %7471 = vmatpush.msra.mxu0 %v2437
    %7472 = vmatpush.msra.mxu0 %v2436
    %7473 = vmatpush.msra.mxu0 %v2435
    %7474 = vmatpush.msra.mxu0 %v2434
    %7475 = vmatpush.msra.mxu0 %v2433
    %7476 = vmatpush.msra.mxu0 %v2432
    %7477 = vmatmul.f32.gmra.mxu0 %v7389
    %v7478 = vpop.f32.mrf.mxu0
    %v7479 = vadd.f32 %v7459, %v7478
    %7480 = vdwg.mxu0
    %7481 = vmatpush.msra.mxu0 %v2463
    %7482 = vmatpush.msra.mxu0 %v2462
    %7483 = vmatpush.msra.mxu0 %v2461
    %7484 = vmatpush.msra.mxu0 %v2460
    %7485 = vmatpush.msra.mxu0 %v2459
    %7486 = vmatpush.msra.mxu0 %v2458
    %7487 = vmatpush.msra.mxu0 %v2457
    %7488 = vmatpush.msra.mxu0 %v2456
    %7489 = vmatpush.msra.mxu0 %v2455
    %7490 = vmatpush.msra.mxu0 %v2454
    %7491 = vmatpush.msra.mxu0 %v2453
    %7492 = vmatpush.msra.mxu0 %v2452
    %7493 = vmatpush.msra.mxu0 %v2451
    %7494 = vmatpush.msra.mxu0 %v2450
    %7495 = vmatpush.msra.mxu0 %v2449
    %7496 = vmatpush.msra.mxu0 %v2448
    %7497 = vmatmul.f32.gmra.mxu0 %v7392
    %v7498 = vpop.f32.mrf.mxu0
    %v7499 = vadd.f32 %v7479, %v7498
    %7500 = vdwg.mxu0
    %7501 = vmatpush.msra.mxu0 %v2479
    %7502 = vmatpush.msra.mxu0 %v2478
    %7503 = vmatpush.msra.mxu0 %v2477
    %7504 = vmatpush.msra.mxu0 %v2476
    %7505 = vmatpush.msra.mxu0 %v2475
    %7506 = vmatpush.msra.mxu0 %v2474
    %7507 = vmatpush.msra.mxu0 %v2473
    %7508 = vmatpush.msra.mxu0 %v2472
    %7509 = vmatpush.msra.mxu0 %v2471
    %7510 = vmatpush.msra.mxu0 %v2470
    %7511 = vmatpush.msra.mxu0 %v2469
    %7512 = vmatpush.msra.mxu0 %v2468
    %7513 = vmatpush.msra.mxu0 %v2467
    %7514 = vmatpush.msra.mxu0 %v2466
    %7515 = vmatpush.msra.mxu0 %v2465
    %7516 = vmatpush.msra.mxu0 %v2464
    %7517 = vmatmul.f32.gmra.mxu0 %v7395
    %v7518 = vpop.f32.mrf.mxu0
    %v7519 = vadd.f32 %v7499, %v7518
    %7520 = vdwg.mxu0
    %7521 = vmatpush.msra.mxu0 %v2495
    %7522 = vmatpush.msra.mxu0 %v2494
    %7523 = vmatpush.msra.mxu0 %v2493
    %7524 = vmatpush.msra.mxu0 %v2492
    %7525 = vmatpush.msra.mxu0 %v2491
    %7526 = vmatpush.msra.mxu0 %v2490
    %7527 = vmatpush.msra.mxu0 %v2489
    %7528 = vmatpush.msra.mxu0 %v2488
    %7529 = vmatpush.msra.mxu0 %v2487
    %7530 = vmatpush.msra.mxu0 %v2486
    %7531 = vmatpush.msra.mxu0 %v2485
    %7532 = vmatpush.msra.mxu0 %v2484
    %7533 = vmatpush.msra.mxu0 %v2483
    %7534 = vmatpush.msra.mxu0 %v2482
    %7535 = vmatpush.msra.mxu0 %v2481
    %7536 = vmatpush.msra.mxu0 %v2480
    %7537 = vmatmul.f32.gmra.mxu0 %v7398
    %v7538 = vpop.f32.mrf.mxu0
    %v7539 = vadd.f32 %v7519, %v7538
    %7540 = vdwg.mxu0
    %7541 = vmatpush.msra.mxu0 %v2511
    %7542 = vmatpush.msra.mxu0 %v2510
    %7543 = vmatpush.msra.mxu0 %v2509
    %7544 = vmatpush.msra.mxu0 %v2508
    %7545 = vmatpush.msra.mxu0 %v2507
    %7546 = vmatpush.msra.mxu0 %v2506
    %7547 = vmatpush.msra.mxu0 %v2505
    %7548 = vmatpush.msra.mxu0 %v2504
    %7549 = vmatpush.msra.mxu0 %v2503
    %7550 = vmatpush.msra.mxu0 %v2502
    %7551 = vmatpush.msra.mxu0 %v2501
    %7552 = vmatpush.msra.mxu0 %v2500
    %7553 = vmatpush.msra.mxu0 %v2499
    %7554 = vmatpush.msra.mxu0 %v2498
    %7555 = vmatpush.msra.mxu0 %v2497
    %7556 = vmatpush.msra.mxu0 %v2496
    %7557 = vmatmul.f32.gmra.mxu0 %v7401
    %v7558 = vpop.f32.mrf.mxu0
    %v7559 = vadd.f32 %v7539, %v7558
    %7560 = vdwg.mxu0
    %7561 = vmatpush.msra.mxu0 %v2527
    %7562 = vmatpush.msra.mxu0 %v2526
    %7563 = vmatpush.msra.mxu0 %v2525
    %7564 = vmatpush.msra.mxu0 %v2524
    %7565 = vmatpush.msra.mxu0 %v2523
    %7566 = vmatpush.msra.mxu0 %v2522
    %7567 = vmatpush.msra.mxu0 %v2521
    %7568 = vmatpush.msra.mxu0 %v2520
    %7569 = vmatpush.msra.mxu0 %v2519
    %7570 = vmatpush.msra.mxu0 %v2518
    %7571 = vmatpush.msra.mxu0 %v2517
    %7572 = vmatpush.msra.mxu0 %v2516
    %7573 = vmatpush.msra.mxu0 %v2515
    %7574 = vmatpush.msra.mxu0 %v2514
    %7575 = vmatpush.msra.mxu0 %v2513
    %7576 = vmatpush.msra.mxu0 %v2512
    %7577 = vmatmul.f32.gmra.mxu0 %v7404
    %v7578 = vpop.f32.mrf.mxu0
    %v7579 = vadd.f32 %v7559, %v7578
    %7580 = vdwg.mxu0
    %7581 = vmatpush.msra.mxu0 %v2543
    %7582 = vmatpush.msra.mxu0 %v2542
    %7583 = vmatpush.msra.mxu0 %v2541
    %7584 = vmatpush.msra.mxu0 %v2540
    %7585 = vmatpush.msra.mxu0 %v2539
    %7586 = vmatpush.msra.mxu0 %v2538
    %7587 = vmatpush.msra.mxu0 %v2537
    %7588 = vmatpush.msra.mxu0 %v2536
    %7589 = vmatpush.msra.mxu0 %v2535
    %7590 = vmatpush.msra.mxu0 %v2534
    %7591 = vmatpush.msra.mxu0 %v2533
    %7592 = vmatpush.msra.mxu0 %v2532
    %7593 = vmatpush.msra.mxu0 %v2531
    %7594 = vmatpush.msra.mxu0 %v2530
    %7595 = vmatpush.msra.mxu0 %v2529
    %7596 = vmatpush.msra.mxu0 %v2528
    %7597 = vmatmul.f32.gmra.mxu0 %v7407
    %v7598 = vpop.f32.mrf.mxu0
    %v7599 = vadd.f32 %v7579, %v7598
    %7600 = vdwg.mxu0
    %7601 = vmatpush.msra.mxu0 %v2559
    %7602 = vmatpush.msra.mxu0 %v2558
    %7603 = vmatpush.msra.mxu0 %v2557
    %7604 = vmatpush.msra.mxu0 %v2556
    %7605 = vmatpush.msra.mxu0 %v2555
    %7606 = vmatpush.msra.mxu0 %v2554
    %7607 = vmatpush.msra.mxu0 %v2553
    %7608 = vmatpush.msra.mxu0 %v2552
    %7609 = vmatpush.msra.mxu0 %v2551
    %7610 = vmatpush.msra.mxu0 %v2550
    %7611 = vmatpush.msra.mxu0 %v2549
    %7612 = vmatpush.msra.mxu0 %v2548
    %7613 = vmatpush.msra.mxu0 %v2547
    %7614 = vmatpush.msra.mxu0 %v2546
    %7615 = vmatpush.msra.mxu0 %v2545
    %7616 = vmatpush.msra.mxu0 %v2544
    %7617 = vmatmul.f32.gmra.mxu0 %v7410
    %v7618 = vpop.f32.mrf.mxu0
    %v7619 = vadd.f32 %v7599, %v7618
    %7620 = vdwg.mxu0
    %7621 = vmatpush.msra.mxu0 %v2575
    %7622 = vmatpush.msra.mxu0 %v2574
    %7623 = vmatpush.msra.mxu0 %v2573
    %7624 = vmatpush.msra.mxu0 %v2572
    %7625 = vmatpush.msra.mxu0 %v2571
    %7626 = vmatpush.msra.mxu0 %v2570
    %7627 = vmatpush.msra.mxu0 %v2569
    %7628 = vmatpush.msra.mxu0 %v2568
    %7629 = vmatpush.msra.mxu0 %v2567
    %7630 = vmatpush.msra.mxu0 %v2566
    %7631 = vmatpush.msra.mxu0 %v2565
    %7632 = vmatpush.msra.mxu0 %v2564
    %7633 = vmatpush.msra.mxu0 %v2563
    %7634 = vmatpush.msra.mxu0 %v2562
    %7635 = vmatpush.msra.mxu0 %v2561
    %7636 = vmatpush.msra.mxu0 %v2560
    %7637 = vmatmul.f32.gmra.mxu0 %v7413
    %v7638 = vpop.f32.mrf.mxu0
    %v7639 = vadd.f32 %v7619, %v7638
    %7640 = vdwg.mxu0
    %7641 = vmatpush.msra.mxu0 %v2591
    %7642 = vmatpush.msra.mxu0 %v2590
    %7643 = vmatpush.msra.mxu0 %v2589
    %7644 = vmatpush.msra.mxu0 %v2588
    %7645 = vmatpush.msra.mxu0 %v2587
    %7646 = vmatpush.msra.mxu0 %v2586
    %7647 = vmatpush.msra.mxu0 %v2585
    %7648 = vmatpush.msra.mxu0 %v2584
    %7649 = vmatpush.msra.mxu0 %v2583
    %7650 = vmatpush.msra.mxu0 %v2582
    %7651 = vmatpush.msra.mxu0 %v2581
    %7652 = vmatpush.msra.mxu0 %v2580
    %7653 = vmatpush.msra.mxu0 %v2579
    %7654 = vmatpush.msra.mxu0 %v2578
    %7655 = vmatpush.msra.mxu0 %v2577
    %7656 = vmatpush.msra.mxu0 %v2576
    %7657 = vmatmul.f32.gmra.mxu0 %v7416
    %v7658 = vpop.f32.mrf.mxu0
    %v7659 = vadd.f32 %v7639, %v7658
    %7660 = vdwg.mxu0
    %7661 = vmatpush.msra.mxu0 0.0
    %7662 = vmatpush.msra.mxu0 0.0
    %7663 = vmatpush.msra.mxu0 0.0
    %7664 = vmatpush.msra.mxu0 0.0
    %7665 = vmatpush.msra.mxu0 0.0
    %7666 = vmatpush.msra.mxu0 0.0
    %7667 = vmatpush.msra.mxu0 0.0
    %7668 = vmatpush.msra.mxu0 0.0
    %7669 = vmatpush.msra.mxu0 %v2599
    %7670 = vmatpush.msra.mxu0 %v2598
    %7671 = vmatpush.msra.mxu0 %v2597
    %7672 = vmatpush.msra.mxu0 %v2596
    %7673 = vmatpush.msra.mxu0 %v2595
    %7674 = vmatpush.msra.mxu0 %v2594
    %7675 = vmatpush.msra.mxu0 %v2593
    %7676 = vmatpush.msra.mxu0 %v2592
    %7677 = vmatmul.f32.gmra.mxu0 %v7419
    %v7678 = vpop.f32.mrf.mxu0
    %v7679 = vadd.f32 %v7659, %v7678
    %7680 = vdwg.mxu0
    %v7681 = vmax.f32 %v7679, 0.0
    %v7682 = vrot.slane %v4914, 2
    %v7683 = vrot.slane %v4916, 2
    %v7684 = vrot.slane %v4918, 2
    %v7685 = vrot.slane %v4920, 2
    %v7686 = vrot.slane %v4922, 2
    %v7687 = vrot.slane %v4924, 2
    %v7688 = vrot.slane %v4926, 2
    %v7689 = vrot.slane %v4928, 2
    %v7690 = vrot.slane %v4930, 2
    %v7691 = vrot.slane %v4932, 2
    %v7692 = vrot.slane %v4934, 2
    %v7693 = vrot.slane %v4936, 2
    %v7694 = vrot.slane %v4938, 2
    %v7695 = vrot.slane %v4940, 2
    %v7696 = vrot.slane %v4942, 2
    %v7697 = vrot.slane %v4944, 2
    %v7698 = vrot.slane %v4946, 2
    %v7699 = vrot.slane %v4948, 2
    %v7700 = vrot.slane %v4950, 2
    %v7701 = vrot.slane %v4952, 2
    %v7702 = vrot.slane %v4954, 2
    %v7703 = vrot.slane %v4956, 2
    %v7704 = vrot.slane %v4958, 2
    %v7705 = vrot.slane %v4960, 2
    %v7706 = vrot.slane %v4962, 2
    %v7709 = vunpack.c.l.s4 1934713408
    %v7710 = vunpack.c.0.s8 %v7709
    %v7711 = vperm.slane %v7682, %v7710
    %v7712 = vrot.slane %v7711, 4
    %v7713 = vsel %vm2832, 0.0, %v7712
    %v7716 = vunpack.c.l.s4 1934713408
    %v7717 = vunpack.c.0.s8 %v7716
    %v7718 = vperm.slane %v7683, %v7717
    %v7719 = vrot.slane %v7718, 4
    %v7720 = vsel %vm2832, 0.0, %v7719
    %v7723 = vunpack.c.l.s4 1934713408
    %v7724 = vunpack.c.0.s8 %v7723
    %v7725 = vperm.slane %v7684, %v7724
    %v7726 = vrot.slane %v7725, 4
    %v7727 = vsel %vm2832, 0.0, %v7726
    %v7730 = vunpack.c.l.s4 1934713408
    %v7731 = vunpack.c.0.s8 %v7730
    %v7732 = vperm.slane %v7685, %v7731
    %v7733 = vrot.slane %v7732, 4
    %v7734 = vsel %vm2832, 0.0, %v7733
    %v7737 = vunpack.c.l.s4 1934713408
    %v7738 = vunpack.c.0.s8 %v7737
    %v7739 = vperm.slane %v7686, %v7738
    %v7740 = vrot.slane %v7739, 4
    %v7741 = vsel %vm2832, 0.0, %v7740
    %v7744 = vunpack.c.l.s4 1934713408
    %v7745 = vunpack.c.0.s8 %v7744
    %v7746 = vperm.slane %v7687, %v7745
    %v7747 = vrot.slane %v7746, 4
    %v7748 = vsel %vm2832, 0.0, %v7747
    %v7751 = vunpack.c.l.s4 1934713408
    %v7752 = vunpack.c.0.s8 %v7751
    %v7753 = vperm.slane %v7688, %v7752
    %v7754 = vrot.slane %v7753, 4
    %v7755 = vsel %vm2832, 0.0, %v7754
    %v7758 = vunpack.c.l.s4 1934713408
    %v7759 = vunpack.c.0.s8 %v7758
    %v7760 = vperm.slane %v7689, %v7759
    %v7761 = vrot.slane %v7760, 4
    %v7762 = vsel %vm2832, 0.0, %v7761
    %v7765 = vunpack.c.l.s4 1934713408
    %v7766 = vunpack.c.0.s8 %v7765
    %v7767 = vperm.slane %v7690, %v7766
    %v7768 = vrot.slane %v7767, 4
    %v7769 = vsel %vm2832, 0.0, %v7768
    %v7772 = vunpack.c.l.s4 1934713408
    %v7773 = vunpack.c.0.s8 %v7772
    %v7774 = vperm.slane %v7691, %v7773
    %v7775 = vrot.slane %v7774, 4
    %v7776 = vsel %vm2832, 0.0, %v7775
    %v7779 = vunpack.c.l.s4 1934713408
    %v7780 = vunpack.c.0.s8 %v7779
    %v7781 = vperm.slane %v7692, %v7780
    %v7782 = vrot.slane %v7781, 4
    %v7783 = vsel %vm2832, 0.0, %v7782
    %v7786 = vunpack.c.l.s4 1934713408
    %v7787 = vunpack.c.0.s8 %v7786
    %v7788 = vperm.slane %v7693, %v7787
    %v7789 = vrot.slane %v7788, 4
    %v7790 = vsel %vm2832, 0.0, %v7789
    %v7793 = vunpack.c.l.s4 1934713408
    %v7794 = vunpack.c.0.s8 %v7793
    %v7795 = vperm.slane %v7694, %v7794
    %v7796 = vrot.slane %v7795, 4
    %v7797 = vsel %vm2832, 0.0, %v7796
    %v7800 = vunpack.c.l.s4 1934713408
    %v7801 = vunpack.c.0.s8 %v7800
    %v7802 = vperm.slane %v7695, %v7801
    %v7803 = vrot.slane %v7802, 4
    %v7804 = vsel %vm2832, 0.0, %v7803
    %v7807 = vunpack.c.l.s4 1934713408
    %v7808 = vunpack.c.0.s8 %v7807
    %v7809 = vperm.slane %v7696, %v7808
    %v7810 = vrot.slane %v7809, 4
    %v7811 = vsel %vm2832, 0.0, %v7810
    %v7814 = vunpack.c.l.s4 1934713408
    %v7815 = vunpack.c.0.s8 %v7814
    %v7816 = vperm.slane %v7697, %v7815
    %v7817 = vrot.slane %v7816, 4
    %v7818 = vsel %vm2832, 0.0, %v7817
    %v7821 = vunpack.c.l.s4 1934713408
    %v7822 = vunpack.c.0.s8 %v7821
    %v7823 = vperm.slane %v7698, %v7822
    %v7824 = vrot.slane %v7823, 4
    %v7825 = vsel %vm2832, 0.0, %v7824
    %v7828 = vunpack.c.l.s4 1934713408
    %v7829 = vunpack.c.0.s8 %v7828
    %v7830 = vperm.slane %v7699, %v7829
    %v7831 = vrot.slane %v7830, 4
    %v7832 = vsel %vm2832, 0.0, %v7831
    %v7835 = vunpack.c.l.s4 1934713408
    %v7836 = vunpack.c.0.s8 %v7835
    %v7837 = vperm.slane %v7700, %v7836
    %v7838 = vrot.slane %v7837, 4
    %v7839 = vsel %vm2832, 0.0, %v7838
    %v7842 = vunpack.c.l.s4 1934713408
    %v7843 = vunpack.c.0.s8 %v7842
    %v7844 = vperm.slane %v7701, %v7843
    %v7845 = vrot.slane %v7844, 4
    %v7846 = vsel %vm2832, 0.0, %v7845
    %v7849 = vunpack.c.l.s4 1934713408
    %v7850 = vunpack.c.0.s8 %v7849
    %v7851 = vperm.slane %v7702, %v7850
    %v7852 = vrot.slane %v7851, 4
    %v7853 = vsel %vm2832, 0.0, %v7852
    %v7856 = vunpack.c.l.s4 1934713408
    %v7857 = vunpack.c.0.s8 %v7856
    %v7858 = vperm.slane %v7703, %v7857
    %v7859 = vrot.slane %v7858, 4
    %v7860 = vsel %vm2832, 0.0, %v7859
    %v7863 = vunpack.c.l.s4 1934713408
    %v7864 = vunpack.c.0.s8 %v7863
    %v7865 = vperm.slane %v7704, %v7864
    %v7866 = vrot.slane %v7865, 4
    %v7867 = vsel %vm2832, 0.0, %v7866
    %v7870 = vunpack.c.l.s4 1934713408
    %v7871 = vunpack.c.0.s8 %v7870
    %v7872 = vperm.slane %v7705, %v7871
    %v7873 = vrot.slane %v7872, 4
    %v7874 = vsel %vm2832, 0.0, %v7873
    %v7877 = vunpack.c.l.s4 1934713408
    %v7878 = vunpack.c.0.s8 %v7877
    %v7879 = vperm.slane %v7706, %v7878
    %v7880 = vrot.slane %v7879, 4
    %v7881 = vsel %vm2832, 0.0, %v7880
    %v7883 = vperm.slane %v7713, 0
    %7884 = vrot.lane.b32.xlu0 %v7883, 32
    %v7885 = vpop.permute.xlu0 %7884
    %v7888 = vperm.slane %v7718, 0
    %7889 = vrot.lane.b32.xlu0 %v7888, 64
    %v7890 = vpop.permute.xlu0 %7889
    %v7893 = vperm.slane %v7720, 0
    %7894 = vrot.lane.b32.xlu0 %v7893, 96
    %v7895 = vpop.permute.xlu0 %7894
    %v7898 = vperm.slane %v7727, 0
    %7899 = vrot.lane.b32.xlu0 %v7898, 32
    %v7900 = vpop.permute.xlu0 %7899
    %v7903 = vperm.slane %v7732, 0
    %7904 = vrot.lane.b32.xlu0 %v7903, 64
    %v7905 = vpop.permute.xlu0 %7904
    %v7908 = vperm.slane %v7734, 0
    %7909 = vrot.lane.b32.xlu0 %v7908, 96
    %v7910 = vpop.permute.xlu0 %7909
    %v7913 = vperm.slane %v7741, 0
    %7914 = vrot.lane.b32.xlu0 %v7913, 32
    %v7915 = vpop.permute.xlu0 %7914
    %v7918 = vperm.slane %v7746, 0
    %7919 = vrot.lane.b32.xlu0 %v7918, 64
    %v7920 = vpop.permute.xlu0 %7919
    %v7923 = vperm.slane %v7748, 0
    %7924 = vrot.lane.b32.xlu0 %v7923, 96
    %v7925 = vpop.permute.xlu0 %7924
    %v7928 = vperm.slane %v7755, 0
    %7929 = vrot.lane.b32.xlu0 %v7928, 32
    %v7930 = vpop.permute.xlu0 %7929
    %v7933 = vperm.slane %v7760, 0
    %7934 = vrot.lane.b32.xlu0 %v7933, 64
    %v7935 = vpop.permute.xlu0 %7934
    %v7938 = vperm.slane %v7762, 0
    %7939 = vrot.lane.b32.xlu0 %v7938, 96
    %v7940 = vpop.permute.xlu0 %7939
    %v7943 = vperm.slane %v7769, 0
    %7944 = vrot.lane.b32.xlu0 %v7943, 32
    %v7945 = vpop.permute.xlu0 %7944
    %v7948 = vperm.slane %v7774, 0
    %7949 = vrot.lane.b32.xlu0 %v7948, 64
    %v7950 = vpop.permute.xlu0 %7949
    %v7953 = vperm.slane %v7776, 0
    %7954 = vrot.lane.b32.xlu0 %v7953, 96
    %v7955 = vpop.permute.xlu0 %7954
    %v7958 = vperm.slane %v7783, 0
    %7959 = vrot.lane.b32.xlu0 %v7958, 32
    %v7960 = vpop.permute.xlu0 %7959
    %v7963 = vperm.slane %v7788, 0
    %7964 = vrot.lane.b32.xlu0 %v7963, 64
    %v7965 = vpop.permute.xlu0 %7964
    %v7968 = vperm.slane %v7790, 0
    %7969 = vrot.lane.b32.xlu0 %v7968, 96
    %v7970 = vpop.permute.xlu0 %7969
    %v7973 = vperm.slane %v7797, 0
    %7974 = vrot.lane.b32.xlu0 %v7973, 32
    %v7975 = vpop.permute.xlu0 %7974
    %v7978 = vperm.slane %v7802, 0
    %7979 = vrot.lane.b32.xlu0 %v7978, 64
    %v7980 = vpop.permute.xlu0 %7979
    %v7983 = vperm.slane %v7804, 0
    %7984 = vrot.lane.b32.xlu0 %v7983, 96
    %v7985 = vpop.permute.xlu0 %7984
    %v7988 = vperm.slane %v7811, 0
    %7989 = vrot.lane.b32.xlu0 %v7988, 32
    %v7990 = vpop.permute.xlu0 %7989
    %v7993 = vperm.slane %v7816, 0
    %7994 = vrot.lane.b32.xlu0 %v7993, 64
    %v7995 = vpop.permute.xlu0 %7994
    %v7998 = vperm.slane %v7818, 0
    %7999 = vrot.lane.b32.xlu0 %v7998, 96
    %v8000 = vpop.permute.xlu0 %7999
    %v8003 = vperm.slane %v7825, 0
    %8004 = vrot.lane.b32.xlu0 %v8003, 32
    %v8005 = vpop.permute.xlu0 %8004
    %v8008 = vperm.slane %v7830, 0
    %8009 = vrot.lane.b32.xlu0 %v8008, 64
    %v8010 = vpop.permute.xlu0 %8009
    %v8013 = vperm.slane %v7832, 0
    %8014 = vrot.lane.b32.xlu0 %v8013, 96
    %v8015 = vpop.permute.xlu0 %8014
    %v8018 = vperm.slane %v7839, 0
    %8019 = vrot.lane.b32.xlu0 %v8018, 32
    %v8020 = vpop.permute.xlu0 %8019
    %v8023 = vperm.slane %v7844, 0
    %8024 = vrot.lane.b32.xlu0 %v8023, 64
    %v8025 = vpop.permute.xlu0 %8024
    %v8028 = vperm.slane %v7846, 0
    %8029 = vrot.lane.b32.xlu0 %v8028, 96
    %v8030 = vpop.permute.xlu0 %8029
    %v8033 = vperm.slane %v7853, 0
    %8034 = vrot.lane.b32.xlu0 %v8033, 32
    %v8035 = vpop.permute.xlu0 %8034
    %v8038 = vperm.slane %v7858, 0
    %8039 = vrot.lane.b32.xlu0 %v8038, 64
    %v8040 = vpop.permute.xlu0 %8039
    %v8043 = vperm.slane %v7860, 0
    %8044 = vrot.lane.b32.xlu0 %v8043, 96
    %v8045 = vpop.permute.xlu0 %8044
    %v8048 = vperm.slane %v7867, 0
    %8049 = vrot.lane.b32.xlu0 %v8048, 32
    %v8050 = vpop.permute.xlu0 %8049
    %v8053 = vperm.slane %v7872, 0
    %8054 = vrot.lane.b32.xlu0 %v8053, 64
    %v8055 = vpop.permute.xlu0 %8054
    %v8058 = vperm.slane %v7874, 0
    %8059 = vrot.lane.b32.xlu0 %v8058, 96
    %v8060 = vpop.permute.xlu0 %8059
    %v8063 = vperm.slane %v7881, 0
    %8064 = vrot.lane.b32.xlu0 %v8063, 32
    %v8065 = vpop.permute.xlu0 %8064
    %v8067 = vsel %vm3187, %v7711, %v7885
    %v8068 = vsel %vm3189, %v8067, %v7890
    %v8069 = vsel %vm3191, %v8068, %v7895
    %v8070 = vsel %vm3187, %v7725, %v7900
    %v8071 = vsel %vm3189, %v8070, %v7905
    %v8072 = vsel %vm3191, %v8071, %v7910
    %v8073 = vsel %vm3187, %v7739, %v7915
    %v8074 = vsel %vm3189, %v8073, %v7920
    %v8075 = vsel %vm3191, %v8074, %v7925
    %v8076 = vsel %vm3187, %v7753, %v7930
    %v8077 = vsel %vm3189, %v8076, %v7935
    %v8078 = vsel %vm3191, %v8077, %v7940
    %v8079 = vsel %vm3187, %v7767, %v7945
    %v8080 = vsel %vm3189, %v8079, %v7950
    %v8081 = vsel %vm3191, %v8080, %v7955
    %v8082 = vsel %vm3187, %v7781, %v7960
    %v8083 = vsel %vm3189, %v8082, %v7965
    %v8084 = vsel %vm3191, %v8083, %v7970
    %v8085 = vsel %vm3187, %v7795, %v7975
    %v8086 = vsel %vm3189, %v8085, %v7980
    %v8087 = vsel %vm3191, %v8086, %v7985
    %v8088 = vsel %vm3187, %v7809, %v7990
    %v8089 = vsel %vm3189, %v8088, %v7995
    %v8090 = vsel %vm3191, %v8089, %v8000
    %v8091 = vsel %vm3187, %v7823, %v8005
    %v8092 = vsel %vm3189, %v8091, %v8010
    %v8093 = vsel %vm3191, %v8092, %v8015
    %v8094 = vsel %vm3187, %v7837, %v8020
    %v8095 = vsel %vm3189, %v8094, %v8025
    %v8096 = vsel %vm3191, %v8095, %v8030
    %v8097 = vsel %vm3187, %v7851, %v8035
    %v8098 = vsel %vm3189, %v8097, %v8040
    %v8099 = vsel %vm3191, %v8098, %v8045
    %v8100 = vsel %vm3187, %v7865, %v8050
    %v8101 = vsel %vm3189, %v8100, %v8055
    %v8102 = vsel %vm3191, %v8101, %v8060
    %v8103 = vsel %vm3187, %v7879, %v8065
    %v8105 = vsel %vm3189, %v8103, 0
    %8107 = vmatpush.msra.mxu0 %v2415
    %8108 = vmatpush.msra.mxu0 %v2414
    %8109 = vmatpush.msra.mxu0 %v2413
    %8110 = vmatpush.msra.mxu0 %v2412
    %8111 = vmatpush.msra.mxu0 %v2411
    %8112 = vmatpush.msra.mxu0 %v2410
    %8113 = vmatpush.msra.mxu0 %v2409
    %8114 = vmatpush.msra.mxu0 %v2408
    %8115 = vmatpush.msra.mxu0 %v2407
    %8116 = vmatpush.msra.mxu0 %v2406
    %8117 = vmatpush.msra.mxu0 %v2405
    %8118 = vmatpush.msra.mxu0 %v2404
    %8119 = vmatpush.msra.mxu0 %v2403
    %8120 = vmatpush.msra.mxu0 %v2402
    %8121 = vmatpush.msra.mxu0 %v2401
    %8122 = vmatpush.msra.mxu0 %v2400
    %8123 = vmatmul.f32.gmra.mxu0 %v8069
    %v8124 = vpop.f32.mrf.mxu0
    %v8125 = vadd.f32 %v2600, %v8124
    %8126 = vdwg.mxu0
    %8127 = vmatpush.msra.mxu0 %v2431
    %8128 = vmatpush.msra.mxu0 %v2430
    %8129 = vmatpush.msra.mxu0 %v2429
    %8130 = vmatpush.msra.mxu0 %v2428
    %8131 = vmatpush.msra.mxu0 %v2427
    %8132 = vmatpush.msra.mxu0 %v2426
    %8133 = vmatpush.msra.mxu0 %v2425
    %8134 = vmatpush.msra.mxu0 %v2424
    %8135 = vmatpush.msra.mxu0 %v2423
    %8136 = vmatpush.msra.mxu0 %v2422
    %8137 = vmatpush.msra.mxu0 %v2421
    %8138 = vmatpush.msra.mxu0 %v2420
    %8139 = vmatpush.msra.mxu0 %v2419
    %8140 = vmatpush.msra.mxu0 %v2418
    %8141 = vmatpush.msra.mxu0 %v2417
    %8142 = vmatpush.msra.mxu0 %v2416
    %8143 = vmatmul.f32.gmra.mxu0 %v8072
    %v8144 = vpop.f32.mrf.mxu0
    %v8145 = vadd.f32 %v8125, %v8144
    %8146 = vdwg.mxu0
    %8147 = vmatpush.msra.mxu0 %v2447
    %8148 = vmatpush.msra.mxu0 %v2446
    %8149 = vmatpush.msra.mxu0 %v2445
    %8150 = vmatpush.msra.mxu0 %v2444
    %8151 = vmatpush.msra.mxu0 %v2443
    %8152 = vmatpush.msra.mxu0 %v2442
    %8153 = vmatpush.msra.mxu0 %v2441
    %8154 = vmatpush.msra.mxu0 %v2440
    %8155 = vmatpush.msra.mxu0 %v2439
    %8156 = vmatpush.msra.mxu0 %v2438
    %8157 = vmatpush.msra.mxu0 %v2437
    %8158 = vmatpush.msra.mxu0 %v2436
    %8159 = vmatpush.msra.mxu0 %v2435
    %8160 = vmatpush.msra.mxu0 %v2434
    %8161 = vmatpush.msra.mxu0 %v2433
    %8162 = vmatpush.msra.mxu0 %v2432
    %8163 = vmatmul.f32.gmra.mxu0 %v8075
    %v8164 = vpop.f32.mrf.mxu0
    %v8165 = vadd.f32 %v8145, %v8164
    %8166 = vdwg.mxu0
    %8167 = vmatpush.msra.mxu0 %v2463
    %8168 = vmatpush.msra.mxu0 %v2462
    %8169 = vmatpush.msra.mxu0 %v2461
    %8170 = vmatpush.msra.mxu0 %v2460
    %8171 = vmatpush.msra.mxu0 %v2459
    %8172 = vmatpush.msra.mxu0 %v2458
    %8173 = vmatpush.msra.mxu0 %v2457
    %8174 = vmatpush.msra.mxu0 %v2456
    %8175 = vmatpush.msra.mxu0 %v2455
    %8176 = vmatpush.msra.mxu0 %v2454
    %8177 = vmatpush.msra.mxu0 %v2453
    %8178 = vmatpush.msra.mxu0 %v2452
    %8179 = vmatpush.msra.mxu0 %v2451
    %8180 = vmatpush.msra.mxu0 %v2450
    %8181 = vmatpush.msra.mxu0 %v2449
    %8182 = vmatpush.msra.mxu0 %v2448
    %8183 = vmatmul.f32.gmra.mxu0 %v8078
    %v8184 = vpop.f32.mrf.mxu0
    %v8185 = vadd.f32 %v8165, %v8184
    %8186 = vdwg.mxu0
    %8187 = vmatpush.msra.mxu0 %v2479
    %8188 = vmatpush.msra.mxu0 %v2478
    %8189 = vmatpush.msra.mxu0 %v2477
    %8190 = vmatpush.msra.mxu0 %v2476
    %8191 = vmatpush.msra.mxu0 %v2475
    %8192 = vmatpush.msra.mxu0 %v2474
    %8193 = vmatpush.msra.mxu0 %v2473
    %8194 = vmatpush.msra.mxu0 %v2472
    %8195 = vmatpush.msra.mxu0 %v2471
    %8196 = vmatpush.msra.mxu0 %v2470
    %8197 = vmatpush.msra.mxu0 %v2469
    %8198 = vmatpush.msra.mxu0 %v2468
    %8199 = vmatpush.msra.mxu0 %v2467
    %8200 = vmatpush.msra.mxu0 %v2466
    %8201 = vmatpush.msra.mxu0 %v2465
    %8202 = vmatpush.msra.mxu0 %v2464
    %8203 = vmatmul.f32.gmra.mxu0 %v8081
    %v8204 = vpop.f32.mrf.mxu0
    %v8205 = vadd.f32 %v8185, %v8204
    %8206 = vdwg.mxu0
    %8207 = vmatpush.msra.mxu0 %v2495
    %8208 = vmatpush.msra.mxu0 %v2494
    %8209 = vmatpush.msra.mxu0 %v2493
    %8210 = vmatpush.msra.mxu0 %v2492
    %8211 = vmatpush.msra.mxu0 %v2491
    %8212 = vmatpush.msra.mxu0 %v2490
    %8213 = vmatpush.msra.mxu0 %v2489
    %8214 = vmatpush.msra.mxu0 %v2488
    %8215 = vmatpush.msra.mxu0 %v2487
    %8216 = vmatpush.msra.mxu0 %v2486
    %8217 = vmatpush.msra.mxu0 %v2485
    %8218 = vmatpush.msra.mxu0 %v2484
    %8219 = vmatpush.msra.mxu0 %v2483
    %8220 = vmatpush.msra.mxu0 %v2482
    %8221 = vmatpush.msra.mxu0 %v2481
    %8222 = vmatpush.msra.mxu0 %v2480
    %8223 = vmatmul.f32.gmra.mxu0 %v8084
    %v8224 = vpop.f32.mrf.mxu0
    %v8225 = vadd.f32 %v8205, %v8224
    %8226 = vdwg.mxu0
    %8227 = vmatpush.msra.mxu0 %v2511
    %8228 = vmatpush.msra.mxu0 %v2510
    %8229 = vmatpush.msra.mxu0 %v2509
    %8230 = vmatpush.msra.mxu0 %v2508
    %8231 = vmatpush.msra.mxu0 %v2507
    %8232 = vmatpush.msra.mxu0 %v2506
    %8233 = vmatpush.msra.mxu0 %v2505
    %8234 = vmatpush.msra.mxu0 %v2504
    %8235 = vmatpush.msra.mxu0 %v2503
    %8236 = vmatpush.msra.mxu0 %v2502
    %8237 = vmatpush.msra.mxu0 %v2501
    %8238 = vmatpush.msra.mxu0 %v2500
    %8239 = vmatpush.msra.mxu0 %v2499
    %8240 = vmatpush.msra.mxu0 %v2498
    %8241 = vmatpush.msra.mxu0 %v2497
    %8242 = vmatpush.msra.mxu0 %v2496
    %8243 = vmatmul.f32.gmra.mxu0 %v8087
    %v8244 = vpop.f32.mrf.mxu0
    %v8245 = vadd.f32 %v8225, %v8244
    %8246 = vdwg.mxu0
    %8247 = vmatpush.msra.mxu0 %v2527
    %8248 = vmatpush.msra.mxu0 %v2526
    %8249 = vmatpush.msra.mxu0 %v2525
    %8250 = vmatpush.msra.mxu0 %v2524
    %8251 = vmatpush.msra.mxu0 %v2523
    %8252 = vmatpush.msra.mxu0 %v2522
    %8253 = vmatpush.msra.mxu0 %v2521
    %8254 = vmatpush.msra.mxu0 %v2520
    %8255 = vmatpush.msra.mxu0 %v2519
    %8256 = vmatpush.msra.mxu0 %v2518
    %8257 = vmatpush.msra.mxu0 %v2517
    %8258 = vmatpush.msra.mxu0 %v2516
    %8259 = vmatpush.msra.mxu0 %v2515
    %8260 = vmatpush.msra.mxu0 %v2514
    %8261 = vmatpush.msra.mxu0 %v2513
    %8262 = vmatpush.msra.mxu0 %v2512
    %8263 = vmatmul.f32.gmra.mxu0 %v8090
    %v8264 = vpop.f32.mrf.mxu0
    %v8265 = vadd.f32 %v8245, %v8264
    %8266 = vdwg.mxu0
    %8267 = vmatpush.msra.mxu0 %v2543
    %8268 = vmatpush.msra.mxu0 %v2542
    %8269 = vmatpush.msra.mxu0 %v2541
    %8270 = vmatpush.msra.mxu0 %v2540
    %8271 = vmatpush.msra.mxu0 %v2539
    %8272 = vmatpush.msra.mxu0 %v2538
    %8273 = vmatpush.msra.mxu0 %v2537
    %8274 = vmatpush.msra.mxu0 %v2536
    %8275 = vmatpush.msra.mxu0 %v2535
    %8276 = vmatpush.msra.mxu0 %v2534
    %8277 = vmatpush.msra.mxu0 %v2533
    %8278 = vmatpush.msra.mxu0 %v2532
    %8279 = vmatpush.msra.mxu0 %v2531
    %8280 = vmatpush.msra.mxu0 %v2530
    %8281 = vmatpush.msra.mxu0 %v2529
    %8282 = vmatpush.msra.mxu0 %v2528
    %8283 = vmatmul.f32.gmra.mxu0 %v8093
    %v8284 = vpop.f32.mrf.mxu0
    %v8285 = vadd.f32 %v8265, %v8284
    %8286 = vdwg.mxu0
    %8287 = vmatpush.msra.mxu0 %v2559
    %8288 = vmatpush.msra.mxu0 %v2558
    %8289 = vmatpush.msra.mxu0 %v2557
    %8290 = vmatpush.msra.mxu0 %v2556
    %8291 = vmatpush.msra.mxu0 %v2555
    %8292 = vmatpush.msra.mxu0 %v2554
    %8293 = vmatpush.msra.mxu0 %v2553
    %8294 = vmatpush.msra.mxu0 %v2552
    %8295 = vmatpush.msra.mxu0 %v2551
    %8296 = vmatpush.msra.mxu0 %v2550
    %8297 = vmatpush.msra.mxu0 %v2549
    %8298 = vmatpush.msra.mxu0 %v2548
    %8299 = vmatpush.msra.mxu0 %v2547
    %8300 = vmatpush.msra.mxu0 %v2546
    %8301 = vmatpush.msra.mxu0 %v2545
    %8302 = vmatpush.msra.mxu0 %v2544
    %8303 = vmatmul.f32.gmra.mxu0 %v8096
    %v8304 = vpop.f32.mrf.mxu0
    %v8305 = vadd.f32 %v8285, %v8304
    %8306 = vdwg.mxu0
    %8307 = vmatpush.msra.mxu0 %v2575
    %8308 = vmatpush.msra.mxu0 %v2574
    %8309 = vmatpush.msra.mxu0 %v2573
    %8310 = vmatpush.msra.mxu0 %v2572
    %8311 = vmatpush.msra.mxu0 %v2571
    %8312 = vmatpush.msra.mxu0 %v2570
    %8313 = vmatpush.msra.mxu0 %v2569
    %8314 = vmatpush.msra.mxu0 %v2568
    %8315 = vmatpush.msra.mxu0 %v2567
    %8316 = vmatpush.msra.mxu0 %v2566
    %8317 = vmatpush.msra.mxu0 %v2565
    %8318 = vmatpush.msra.mxu0 %v2564
    %8319 = vmatpush.msra.mxu0 %v2563
    %8320 = vmatpush.msra.mxu0 %v2562
    %8321 = vmatpush.msra.mxu0 %v2561
    %8322 = vmatpush.msra.mxu0 %v2560
    %8323 = vmatmul.f32.gmra.mxu0 %v8099
    %v8324 = vpop.f32.mrf.mxu0
    %v8325 = vadd.f32 %v8305, %v8324
    %8326 = vdwg.mxu0
    %8327 = vmatpush.msra.mxu0 %v2591
    %8328 = vmatpush.msra.mxu0 %v2590
    %8329 = vmatpush.msra.mxu0 %v2589
    %8330 = vmatpush.msra.mxu0 %v2588
    %8331 = vmatpush.msra.mxu0 %v2587
    %8332 = vmatpush.msra.mxu0 %v2586
    %8333 = vmatpush.msra.mxu0 %v2585
    %8334 = vmatpush.msra.mxu0 %v2584
    %8335 = vmatpush.msra.mxu0 %v2583
    %8336 = vmatpush.msra.mxu0 %v2582
    %8337 = vmatpush.msra.mxu0 %v2581
    %8338 = vmatpush.msra.mxu0 %v2580
    %8339 = vmatpush.msra.mxu0 %v2579
    %8340 = vmatpush.msra.mxu0 %v2578
    %8341 = vmatpush.msra.mxu0 %v2577
    %8342 = vmatpush.msra.mxu0 %v2576
    %8343 = vmatmul.f32.gmra.mxu0 %v8102
    %v8344 = vpop.f32.mrf.mxu0
    %v8345 = vadd.f32 %v8325, %v8344
    %8346 = vdwg.mxu0
    %8347 = vmatpush.msra.mxu0 0.0
    %8348 = vmatpush.msra.mxu0 0.0
    %8349 = vmatpush.msra.mxu0 0.0
    %8350 = vmatpush.msra.mxu0 0.0
    %8351 = vmatpush.msra.mxu0 0.0
    %8352 = vmatpush.msra.mxu0 0.0
    %8353 = vmatpush.msra.mxu0 0.0
    %8354 = vmatpush.msra.mxu0 0.0
    %8355 = vmatpush.msra.mxu0 %v2599
    %8356 = vmatpush.msra.mxu0 %v2598
    %8357 = vmatpush.msra.mxu0 %v2597
    %8358 = vmatpush.msra.mxu0 %v2596
    %8359 = vmatpush.msra.mxu0 %v2595
    %8360 = vmatpush.msra.mxu0 %v2594
    %8361 = vmatpush.msra.mxu0 %v2593
    %8362 = vmatpush.msra.mxu0 %v2592
    %8363 = vmatmul.f32.gmra.mxu0 %v8105
    %v8364 = vpop.f32.mrf.mxu0
    %v8365 = vadd.f32 %v8345, %v8364
    %8366 = vdwg.mxu0
    %v8367 = vmax.f32 %v8365, 0.0
    %v8369 = vrot.slane %v4201, 7
    %v8372 = vrot.slane %v4912, 6
    %v8375 = vrot.slane %v5623, 5
    %v8378 = vrot.slane %v6309, 4
    %v8381 = vrot.slane %v6995, 3
    %v8384 = vrot.slane %v7681, 2
    %v8387 = vrot.slane %v8367, 1
    %v8389 = vsel %vm139, %v3490, %v8369
    %v8390 = vsel %vm2059, %v8389, %v8372
    %v8391 = vsel %vm1454, %v8390, %v8375
    %vm8392 = vcmask 1043456
    %v8393 = vsel %vm8392, %v8391, %v8378
    %vm8394 = vcmask 1044480
    %v8395 = vsel %vm8394, %v8393, %v8381
    %v8396 = vsel %vm2067, %v8395, %v8384
    %v8397 = vsel %vm215, %v8396, %v8387
    %8398 = vst [vmem:[#allocation10] sm:$0xff] %v8397
    // Predicated region
    $region46: #{tpu_custom_call.1} parent=1 // pred_check
      _
    $region47: #{tpu_custom_call.1} parent=1 // pred_check_branch
      %8400 = sbr.rel (0) target = $region49
    $region48: #{tpu_custom_call.1} parent=1 // pred_region
      %8402 = vsyncadd [#allocation4], 0
      %s8404 = sshll.u32 [#allocation10], 4
      %s8405 = int_to_ptr.vmem [resolvable:$true] %s8404
      %s8406 = sshll.u32 %s7, 4
      %s8407 = int_to_ptr.hbm [resolvable:$true] %s8406
      %8409 = dma.vmem_to_hbm [thread:$0]  %s8405, 128, %s8407, [#allocation4]
    $region49: #{tpu_custom_call.1} parent=1 // pred_fallthru
      _
    // Predicated region
    $region50: #{tpu_custom_call.1} parent=1 // pred_check
      _
    $region51: #{tpu_custom_call.1} parent=1 // pred_check_branch
      %8411 = sbr.rel (0) target = $region53
    $region52: #{tpu_custom_call.1} parent=1 // pred_region
      %8413 = dma.done [#allocation4], 128
    $region53: #{tpu_custom_call.1} parent=1 // pred_fallthru
      _
    %8414 = vsyncpa [#allocation3], 1
    %8415 = vsyncpa [#allocation6], 1
    %8416 = vsyncpa [#allocation9], 1
    %8417 = vsyncpa [#allocation4], 1

</llo_original>
